<compile_context>
chip_gen: v5e
topology: v5e:2x2
jax: 0.10.0
libtpu: 0.0.40
codegen_flags: <defaults>
</compile_context>

<pallas_src>
import functools

import jax
import jax.numpy as jnp
from jax import lax
from jax.experimental import pallas as pl
from jax.experimental.pallas import tpu as pltpu

UPSCALE = 4
NUM_CHANNELS = 3
C1, C2, C3 = 28, 28, 16
CUP = NUM_CHANNELS * UPSCALE ** 2          # 48
BN_EPS = 1e-5

_COL0 = 8   # sublane-aligned column where the un-padded interior starts


# --------------------------------------------------------------------------
# Fused Pallas kernel: the entire network for one image
# --------------------------------------------------------------------------
def _fused_lwsrcnn_kernel(x_ref,
                          w1_ref, b1_ref, s1_ref, t1_ref,
                          w2_ref, b2_ref, s2_ref, t2_ref,
                          w3_ref, b3_ref, s3_ref, t3_ref,
                          wu_ref, bu_ref,
                          o_ref,
                          scr5, scr3a, scr3b,
                          *, H, W):
    HW = H * W

    # Zero the padded scratch buffers once per image.  The conv helper only
    # ever (over)writes their interior, so the halo region stays zero.
    scr5[...] = jnp.zeros(scr5.shape, scr5.dtype)
    scr3a[...] = jnp.zeros(scr3a.shape, scr3a.dtype)
    scr3b[...] = jnp.zeros(scr3b.shape, scr3b.dtype)

    def conv(scr_ref, y_hwc, w_ref, K):
        """'same' KxK conv as K*K MXU matmuls over composed bf16 weights.

        scr_ref : (H + 2*pad, _COL0 + W + pad, Cin) zeroed VMEM scratch
        y_hwc   : (H, W, Cin) f32 activation
        w_ref   : (K, K, Cin, Cout) bf16 composed weights
        returns : (H*W, Cout) f32
        """
        pad = K // 2
        cin = y_hwc.shape[-1]
        # Place the activation in the interior of the zero halo (column
        # origin _COL0 keeps the sublane store aligned / unmasked).
        scr_ref[pad:pad + H, _COL0:_COL0 + W, :] = y_hwc
        xp = scr_ref[...]                                # zeros outside interior
        acc = None
        for kh in range(K):
            for kw in range(K):
                c0 = _COL0 - pad + kw
                patch = xp[kh:kh + H, c0:c0 + W, :]
                patch = patch.reshape(HW, cin).astype(jnp.bfloat16)
                tap = jnp.dot(patch, w_ref[kh, kw],
                              preferred_element_type=jnp.float32)
                acc = tap if acc is None else acc + tap  # init with first tap
        return acc

    def bias_relu_bn(y, b_ref, s_ref, t_ref):
        y = jnp.maximum(y + b_ref[...], 0.0)             # conv bias + ReLU
        return y * s_ref[...] + t_ref[...]               # BatchNorm (eval) affine

    x = x_ref[0].astype(jnp.float32)                     # (H, W, 3)

    # feature extraction: DSConv(3->28, k=5, pad=2) + ReLU + BN
    y = bias_relu_bn(conv(scr5, x, w1_ref, 5), b1_ref, s1_ref, t1_ref)
    # mapping 1: DSConv(28->28, k=3, pad=1) + ReLU + BN
    y = bias_relu_bn(conv(scr3a, y.reshape(H, W, -1), w2_ref, 3),
                     b2_ref, s2_ref, t2_ref)
    # mapping 2: DSConv(28->16, k=3, pad=1) + ReLU + BN
    y = bias_relu_bn(conv(scr3a, y.reshape(H, W, -1), w3_ref, 3),
                     b3_ref, s3_ref, t3_ref)
    # upscaling head: standard 3x3 conv (16 -> 48) + bias
    y = conv(scr3b, y.reshape(H, W, -1), wu_ref, 3) + bu_ref[...]   # (HW, 48)

    o_ref[0] = y.astype(o_ref.dtype)                     # (H*W, 48)


# --------------------------------------------------------------------------
# Parameter plumbing (PyTorch layouts -> kernel layouts)
# --------------------------------------------------------------------------
def _compose_dsconv(dw, pw):
    """(Cin,1,K,K) depthwise + (Cout,Cin,1,1) pointwise -> (K,K,Cin,Cout) bf16."""
    dw_kkc = jnp.transpose(dw[:, 0], (1, 2, 0))          # (K, K, Cin)
    pw_cc = pw[:, :, 0, 0].T                             # (Cin, Cout)
    return (dw_kkc[:, :, :, None] * pw_cc[None, None]).astype(jnp.bfloat16)


def _bn_affine(bn):
    gamma, beta, mean, var = bn
    scale = gamma / jnp.sqrt(var + BN_EPS)
    shift = beta - mean * scale
    return scale[None, :], shift[None, :]


def lwsrcnn_forward(x_nchw, p):
    """Forward pass.  Input NCHW (N, 3, H, W) -> output NCHW (N, 3, 4H, 4W)."""
    x = jnp.transpose(x_nchw, (0, 2, 3, 1)).astype(jnp.float32)   # NHWC
    N, H, W, _ = x.shape
    HW = H * W

    w1 = _compose_dsconv(p["dw1_w"], p["pw1_w"])
    w2 = _compose_dsconv(p["dw2_w"], p["pw2_w"])
    w3 = _compose_dsconv(p["dw3_w"], p["pw3_w"])
    wu = jnp.transpose(p["up_w"], (2, 3, 1, 0)).astype(jnp.bfloat16)
    s1, t1 = _bn_affine(p["bn1"])
    s2, t2 = _bn_affine(p["bn2"])
    s3, t3 = _bn_affine(p["bn3"])
    b1 = p["pw1_b"][None, :]
    b2 = p["pw2_b"][None, :]
    b3 = p["pw3_b"][None, :]
    bu = p["up_b"][None, :]

    kernel = functools.partial(_fused_lwsrcnn_kernel, H=H, W=W)

    def vec_spec(c):
        return pl.BlockSpec((1, c), lambda n: (0, 0))

    out = pl.pallas_call(
        kernel,
        out_shape=jax.ShapeDtypeStruct((N, HW, CUP), jnp.float32),
        grid=(N,),
        in_specs=[
            pl.BlockSpec((1, H, W, NUM_CHANNELS), lambda n: (n, 0, 0, 0)),
            pl.BlockSpec((5, 5, NUM_CHANNELS, C1), lambda n: (0, 0, 0, 0)),
            vec_spec(C1), vec_spec(C1), vec_spec(C1),
            pl.BlockSpec((3, 3, C1, C2), lambda n: (0, 0, 0, 0)),
            vec_spec(C2), vec_spec(C2), vec_spec(C2),
            pl.BlockSpec((3, 3, C2, C3), lambda n: (0, 0, 0, 0)),
            vec_spec(C3), vec_spec(C3), vec_spec(C3),
            pl.BlockSpec((3, 3, C3, CUP), lambda n: (0, 0, 0, 0)),
            vec_spec(CUP),
        ],
        out_specs=pl.BlockSpec((1, HW, CUP), lambda n: (n, 0, 0)),
        scratch_shapes=[
            pltpu.VMEM((H + 4, _COL0 + W + 2, NUM_CHANNELS), jnp.float32),
            pltpu.VMEM((H + 2, _COL0 + W + 1, C1), jnp.float32),
            pltpu.VMEM((H + 2, _COL0 + W + 1, C3), jnp.float32),
        ],
        compiler_params=pltpu.CompilerParams(
            dimension_semantics=("parallel",)),
    )(x, w1, b1, s1, t1, w2, b2, s2, t2, w3, b3, s3, t3, wu, bu)

    # (N, H*W, 48) -> PixelShuffle(4) -> NCHW (pure reshape/transpose glue).
    r, C = UPSCALE, NUM_CHANNELS
    y = out.reshape(N, H, W, C, r, r)               # channel = c*r*r + i*r + j
    y = jnp.transpose(y, (0, 3, 1, 4, 2, 5))        # (N, C, H, r, W, r)
    return y.reshape(N, C, H * r, W * r)


# --------------------------------------------------------------------------
# Deterministic parameters (PyTorch layouts)
# --------------------------------------------------------------------------
def _bn_params(key, c):
    k0, k1, k2, k3 = jax.random.split(key, 4)
    gamma = 1.0 + 0.1 * jax.random.normal(k0, (c,), jnp.float32)
    beta = 0.05 * jax.random.normal(k1, (c,), jnp.float32)
    mean = 0.05 * jax.random.normal(k2, (c,), jnp.float32)
    var = jax.random.uniform(k3, (c,), jnp.float32, 0.5, 1.5)
    return (gamma, beta, mean, var)


def init_params(key):
    ks = jax.random.split(key, 16)
    n = lambda k, s, sc=0.1: sc * jax.random.normal(k, s, jnp.float32)
    p = {}
    # feature_extraction: DSConv(3 -> 28, k=5, pad=2) + ReLU + BN(28)
    p["dw1_w"] = n(ks[0], (3, 1, 5, 5))
    p["pw1_w"] = n(ks[1], (28, 3, 1, 1))
    p["pw1_b"] = n(ks[2], (28,), 0.05)
    p["bn1"] = _bn_params(ks[3], 28)
    # mapping block 1: DSConv(28 -> 28, k=3, pad=1) + ReLU + BN(28)
    p["dw2_w"] = n(ks[4], (28, 1, 3, 3))
    p["pw2_w"] = n(ks[5], (28, 28, 1, 1))
    p["pw2_b"] = n(ks[6], (28,), 0.05)
    p["bn2"] = _bn_params(ks[7], 28)
    # mapping block 2: DSConv(28 -> 16, k=3, pad=1) + ReLU + BN(16)
    p["dw3_w"] = n(ks[8], (28, 1, 3, 3))
    p["pw3_w"] = n(ks[9], (16, 28, 1, 1))
    p["pw3_b"] = n(ks[10], (16,), 0.05)
    p["bn3"] = _bn_params(ks[11], 16)
    # upscaling: Conv2d(16 -> 3 * 4^2 = 48, k=3, pad=1) + PixelShuffle(4)
    p["up_w"] = n(ks[12], (CUP, 16, 3, 3))
    p["up_b"] = n(ks[13], (CUP,), 0.05)
    return p


# --------------------------------------------------------------------------
# Pure-JAX reference (f32, HIGHEST precision) for correctness checking
# --------------------------------------------------------------------------
def ref_forward(x, p):
    dn = ("NCHW", "OIHW", "NCHW")

    def conv(x, w, b=None, pad=0, groups=1):
        y = lax.conv_general_dilated(x, w, (1, 1), [(pad, pad), (pad, pad)],
                                     dimension_numbers=dn,
                                     feature_group_count=groups,
                                     precision=lax.Precision.HIGHEST)
        if b is not None:
            y = y + b[None, :, None, None]
        return y

    def bn(x, bnp):
        g, b, m, v = bnp
        inv = g / jnp.sqrt(v + BN_EPS)
        return (x - m[None, :, None, None]) * inv[None, :, None, None] \
            + b[None, :, None, None]

    x = conv(x, p["dw1_w"], pad=2, groups=3)
    x = conv(x, p["pw1_w"], p["pw1_b"])
    x = bn(jnp.maximum(x, 0.0), p["bn1"])
    x = conv(x, p["dw2_w"], pad=1, groups=28)
    x = conv(x, p["pw2_w"], p["pw2_b"])
    x = bn(jnp.maximum(x, 0.0), p["bn2"])
    x = conv(x, p["dw3_w"], pad=1, groups=28)
    x = conv(x, p["pw3_w"], p["pw3_b"])
    x = bn(jnp.maximum(x, 0.0), p["bn3"])
    x = conv(x, p["up_w"], p["up_b"], pad=1)
    # PixelShuffle(4)
    N, Crr, H, W = x.shape
    r = UPSCALE
    C = Crr // (r * r)
    x = x.reshape(N, C, r, r, H, W)
    x = jnp.transpose(x, (0, 1, 4, 2, 5, 3))
    return x.reshape(N, C, H * r, W * r)


# --------------------------------------------------------------------------
if __name__ == "__main__":
    key = jax.random.PRNGKey(0)
    pkey, xkey = jax.random.split(key)
    params = init_params(pkey)
    x = jax.random.normal(xkey, (2, NUM_CHANNELS, 16, 16), jnp.float32)

    out = jax.block_until_ready(jax.jit(lwsrcnn_forward)(x, params))
    assert out.shape == (2, NUM_CHANNELS, 64, 64), out.shape

    ref = jax.block_until_ready(ref_forward(x, params))
    err = float(jnp.max(jnp.abs(out - ref)))
    # bf16 MXU passes (per the perf review) -> compare at bf16-level tolerance.
    assert jnp.allclose(out, ref, atol=2e-2, rtol=2e-2), f"max abs err {err}"

    print("KERNEL_OK")
</pallas_src>

<mosaic_0001>
module attributes {stable_mosaic.version = 11 : i64} {
  func.func @_fused_lwsrcnn_kernel(%arg0: i32, %arg1: memref<1x16x16x3xf32, #tpu.memory_space<vmem>>, %arg2: memref<5x5x3x28xbf16, #tpu.memory_space<vmem>>, %arg3: memref<1x28xf32, #tpu.memory_space<vmem>>, %arg4: memref<1x28xf32, #tpu.memory_space<vmem>>, %arg5: memref<1x28xf32, #tpu.memory_space<vmem>>, %arg6: memref<3x3x28x28xbf16, #tpu.memory_space<vmem>>, %arg7: memref<1x28xf32, #tpu.memory_space<vmem>>, %arg8: memref<1x28xf32, #tpu.memory_space<vmem>>, %arg9: memref<1x28xf32, #tpu.memory_space<vmem>>, %arg10: memref<3x3x28x16xbf16, #tpu.memory_space<vmem>>, %arg11: memref<1x16xf32, #tpu.memory_space<vmem>>, %arg12: memref<1x16xf32, #tpu.memory_space<vmem>>, %arg13: memref<1x16xf32, #tpu.memory_space<vmem>>, %arg14: memref<3x3x16x48xbf16, #tpu.memory_space<vmem>>, %arg15: memref<1x48xf32, #tpu.memory_space<vmem>>, %arg16: memref<1x256x48xf32, #tpu.memory_space<vmem>>, %arg17: memref<20x26x3xf32, #tpu.memory_space<vmem>>, %arg18: memref<18x25x28xf32, #tpu.memory_space<vmem>>, %arg19: memref<18x25x16xf32, #tpu.memory_space<vmem>>) attributes {dimension_semantics = [#tpu.dimension_semantics<parallel>], iteration_bounds = array<i64: 2>, scalar_prefetch = 0 : i64, scratch_operands = 3 : i64, tpu.core_type = #tpu.core_type<tc>, window_params = [{transform_indices = @transform_0, window_bounds = array<i64: 1, 16, 16, 3>}, {pipeline_mode = #tpu.pipeline_mode<synchronous>, transform_indices = @transform_1, window_bounds = array<i64: 5, 5, 3, 28>}, {pipeline_mode = #tpu.pipeline_mode<synchronous>, transform_indices = @transform_2, window_bounds = array<i64: 1, 28>}, {pipeline_mode = #tpu.pipeline_mode<synchronous>, transform_indices = @transform_3, window_bounds = array<i64: 1, 28>}, {pipeline_mode = #tpu.pipeline_mode<synchronous>, transform_indices = @transform_4, window_bounds = array<i64: 1, 28>}, {pipeline_mode = #tpu.pipeline_mode<synchronous>, transform_indices = @transform_5, window_bounds = array<i64: 3, 3, 28, 28>}, {pipeline_mode = #tpu.pipeline_mode<synchronous>, transform_indices = @transform_6, window_bounds = array<i64: 1, 28>}, {pipeline_mode = #tpu.pipeline_mode<synchronous>, transform_indices = @transform_7, window_bounds = array<i64: 1, 28>}, {pipeline_mode = #tpu.pipeline_mode<synchronous>, transform_indices = @transform_8, window_bounds = array<i64: 1, 28>}, {pipeline_mode = #tpu.pipeline_mode<synchronous>, transform_indices = @transform_9, window_bounds = array<i64: 3, 3, 28, 16>}, {pipeline_mode = #tpu.pipeline_mode<synchronous>, transform_indices = @transform_10, window_bounds = array<i64: 1, 16>}, {pipeline_mode = #tpu.pipeline_mode<synchronous>, transform_indices = @transform_11, window_bounds = array<i64: 1, 16>}, {pipeline_mode = #tpu.pipeline_mode<synchronous>, transform_indices = @transform_12, window_bounds = array<i64: 1, 16>}, {pipeline_mode = #tpu.pipeline_mode<synchronous>, transform_indices = @transform_13, window_bounds = array<i64: 3, 3, 16, 48>}, {pipeline_mode = #tpu.pipeline_mode<synchronous>, transform_indices = @transform_14, window_bounds = array<i64: 1, 48>}, {transform_indices = @transform_15, window_bounds = array<i64: 1, 256, 48>}]} {
    %cst = arith.constant 0.000000e+00 : f32
    %0 = vector.broadcast %cst : f32 to vector<20x26x3xf32>
    %c0 = arith.constant 0 : index
    %c0_0 = arith.constant 0 : index
    %c0_1 = arith.constant 0 : index
    %1 = vector.load %arg17[%c0, %c0_0, %c0_1] : memref<20x26x3xf32, #tpu.memory_space<vmem>>, vector<20x26x3xf32>
    tpu.vector_store %arg17[%c0, %c0_0, %c0_1], %0 {strides = array<i32>} : memref<20x26x3xf32, #tpu.memory_space<vmem>>, vector<20x26x3xf32>,
    %cst_2 = arith.constant 0.000000e+00 : f32
    %2 = vector.broadcast %cst_2 : f32 to vector<18x25x28xf32>
    %c0_3 = arith.constant 0 : index
    %c0_4 = arith.constant 0 : index
    %c0_5 = arith.constant 0 : index
    %3 = vector.load %arg18[%c0_3, %c0_4, %c0_5] : memref<18x25x28xf32, #tpu.memory_space<vmem>>, vector<18x25x28xf32>
    tpu.vector_store %arg18[%c0_3, %c0_4, %c0_5], %2 {strides = array<i32>} : memref<18x25x28xf32, #tpu.memory_space<vmem>>, vector<18x25x28xf32>,
    %cst_6 = arith.constant 0.000000e+00 : f32
    %4 = vector.broadcast %cst_6 : f32 to vector<18x25x16xf32>
    %c0_7 = arith.constant 0 : index
    %c0_8 = arith.constant 0 : index
    %c0_9 = arith.constant 0 : index
    %5 = vector.load %arg19[%c0_7, %c0_8, %c0_9] : memref<18x25x16xf32, #tpu.memory_space<vmem>>, vector<18x25x16xf32>
    tpu.vector_store %arg19[%c0_7, %c0_8, %c0_9], %4 {strides = array<i32>} : memref<18x25x16xf32, #tpu.memory_space<vmem>>, vector<18x25x16xf32>,
    %c0_10 = arith.constant 0 : index
    %c0_11 = arith.constant 0 : index
    %c0_12 = arith.constant 0 : index
    %c0_13 = arith.constant 0 : index
    %6 = vector.load %arg1[%c0_10, %c0_11, %c0_12, %c0_13] : memref<1x16x16x3xf32, #tpu.memory_space<vmem>>, vector<1x16x16x3xf32>
    %7 = vector.shape_cast %6 : vector<1x16x16x3xf32> to vector<16x16x3xf32>
    %c2 = arith.constant 2 : index
    %c8 = arith.constant 8 : index
    %c0_14 = arith.constant 0 : index
    %8 = vector.load %arg17[%c2, %c8, %c0_14] : memref<20x26x3xf32, #tpu.memory_space<vmem>>, vector<16x16x3xf32>
    tpu.vector_store %arg17[%c2, %c8, %c0_14], %7 {strides = array<i32>} : memref<20x26x3xf32, #tpu.memory_space<vmem>>, vector<16x16x3xf32>,
    %c0_15 = arith.constant 0 : index
    %c0_16 = arith.constant 0 : index
    %c0_17 = arith.constant 0 : index
    %9 = vector.load %arg17[%c0_15, %c0_16, %c0_17] : memref<20x26x3xf32, #tpu.memory_space<vmem>>, vector<20x26x3xf32>
    %10 = vector.extract_strided_slice %9 {offsets = [0, 6, 0], sizes = [16, 16, 3], strides = [1, 1, 1]} : vector<20x26x3xf32> to vector<16x16x3xf32>
    %11 = vector.shape_cast %10 : vector<16x16x3xf32> to vector<256x3xf32>
    %12 = arith.truncf %11 : vector<256x3xf32> to vector<256x3xbf16>
    %c0_18 = arith.constant 0 : index
    %c0_19 = arith.constant 0 : index
    %c0_20 = arith.constant 0 : index
    %c0_21 = arith.constant 0 : index
    %13 = vector.load %arg2[%c0_18, %c0_19, %c0_20, %c0_21] : memref<5x5x3x28xbf16, #tpu.memory_space<vmem>>, vector<1x1x3x28xbf16>
    %14 = vector.shape_cast %13 : vector<1x1x3x28xbf16> to vector<3x28xbf16>
    %cst_22 = arith.constant dense<0.000000e+00> : vector<256x28xf32>
    %15 = tpu.matmul %12, %14, %cst_22 {dimension_numbers = #tpu.dot_dimension_numbers<[1], [0], [0], [1], [0, 0, 1, 1], [], []>} : vector<256x3xbf16>, vector<3x28xbf16>, vector<256x28xf32> -> vector<256x28xf32>
    %16 = vector.extract_strided_slice %9 {offsets = [0, 7, 0], sizes = [16, 16, 3], strides = [1, 1, 1]} : vector<20x26x3xf32> to vector<16x16x3xf32>
    %17 = vector.shape_cast %16 : vector<16x16x3xf32> to vector<256x3xf32>
    %18 = arith.truncf %17 : vector<256x3xf32> to vector<256x3xbf16>
    %c0_23 = arith.constant 0 : index
    %c1 = arith.constant 1 : index
    %c0_24 = arith.constant 0 : index
    %c0_25 = arith.constant 0 : index
    %19 = vector.load %arg2[%c0_23, %c1, %c0_24, %c0_25] : memref<5x5x3x28xbf16, #tpu.memory_space<vmem>>, vector<1x1x3x28xbf16>
    %20 = vector.shape_cast %19 : vector<1x1x3x28xbf16> to vector<3x28xbf16>
    %cst_26 = arith.constant dense<0.000000e+00> : vector<256x28xf32>
    %21 = tpu.matmul %18, %20, %cst_26 {dimension_numbers = #tpu.dot_dimension_numbers<[1], [0], [0], [1], [0, 0, 1, 1], [], []>} : vector<256x3xbf16>, vector<3x28xbf16>, vector<256x28xf32> -> vector<256x28xf32>
    %22 = arith.addf %15, %21 : vector<256x28xf32>
    %23 = vector.extract_strided_slice %9 {offsets = [0, 8, 0], sizes = [16, 16, 3], strides = [1, 1, 1]} : vector<20x26x3xf32> to vector<16x16x3xf32>
    %24 = vector.shape_cast %23 : vector<16x16x3xf32> to vector<256x3xf32>
    %25 = arith.truncf %24 : vector<256x3xf32> to vector<256x3xbf16>
    %c0_27 = arith.constant 0 : index
    %c2_28 = arith.constant 2 : index
    %c0_29 = arith.constant 0 : index
    %c0_30 = arith.constant 0 : index
    %26 = vector.load %arg2[%c0_27, %c2_28, %c0_29, %c0_30] : memref<5x5x3x28xbf16, #tpu.memory_space<vmem>>, vector<1x1x3x28xbf16>
    %27 = vector.shape_cast %26 : vector<1x1x3x28xbf16> to vector<3x28xbf16>
    %cst_31 = arith.constant dense<0.000000e+00> : vector<256x28xf32>
    %28 = tpu.matmul %25, %27, %cst_31 {dimension_numbers = #tpu.dot_dimension_numbers<[1], [0], [0], [1], [0, 0, 1, 1], [], []>} : vector<256x3xbf16>, vector<3x28xbf16>, vector<256x28xf32> -> vector<256x28xf32>
    %29 = arith.addf %22, %28 : vector<256x28xf32>
    %30 = vector.extract_strided_slice %9 {offsets = [0, 9, 0], sizes = [16, 16, 3], strides = [1, 1, 1]} : vector<20x26x3xf32> to vector<16x16x3xf32>
    %31 = vector.shape_cast %30 : vector<16x16x3xf32> to vector<256x3xf32>
    %32 = arith.truncf %31 : vector<256x3xf32> to vector<256x3xbf16>
    %c0_32 = arith.constant 0 : index
    %c3 = arith.constant 3 : index
    %c0_33 = arith.constant 0 : index
    %c0_34 = arith.constant 0 : index
    %33 = vector.load %arg2[%c0_32, %c3, %c0_33, %c0_34] : memref<5x5x3x28xbf16, #tpu.memory_space<vmem>>, vector<1x1x3x28xbf16>
    %34 = vector.shape_cast %33 : vector<1x1x3x28xbf16> to vector<3x28xbf16>
    %cst_35 = arith.constant dense<0.000000e+00> : vector<256x28xf32>
    %35 = tpu.matmul %32, %34, %cst_35 {dimension_numbers = #tpu.dot_dimension_numbers<[1], [0], [0], [1], [0, 0, 1, 1], [], []>} : vector<256x3xbf16>, vector<3x28xbf16>, vector<256x28xf32> -> vector<256x28xf32>
    %36 = arith.addf %29, %35 : vector<256x28xf32>
    %37 = vector.extract_strided_slice %9 {offsets = [0, 10, 0], sizes = [16, 16, 3], strides = [1, 1, 1]} : vector<20x26x3xf32> to vector<16x16x3xf32>
    %38 = vector.shape_cast %37 : vector<16x16x3xf32> to vector<256x3xf32>
    %39 = arith.truncf %38 : vector<256x3xf32> to vector<256x3xbf16>
    %c0_36 = arith.constant 0 : index
    %c4 = arith.constant 4 : index
    %c0_37 = arith.constant 0 : index
    %c0_38 = arith.constant 0 : index
    %40 = vector.load %arg2[%c0_36, %c4, %c0_37, %c0_38] : memref<5x5x3x28xbf16, #tpu.memory_space<vmem>>, vector<1x1x3x28xbf16>
    %41 = vector.shape_cast %40 : vector<1x1x3x28xbf16> to vector<3x28xbf16>
    %cst_39 = arith.constant dense<0.000000e+00> : vector<256x28xf32>
    %42 = tpu.matmul %39, %41, %cst_39 {dimension_numbers = #tpu.dot_dimension_numbers<[1], [0], [0], [1], [0, 0, 1, 1], [], []>} : vector<256x3xbf16>, vector<3x28xbf16>, vector<256x28xf32> -> vector<256x28xf32>
    %43 = arith.addf %36, %42 : vector<256x28xf32>
    %44 = vector.extract_strided_slice %9 {offsets = [1, 6, 0], sizes = [16, 16, 3], strides = [1, 1, 1]} : vector<20x26x3xf32> to vector<16x16x3xf32>
    %45 = vector.shape_cast %44 : vector<16x16x3xf32> to vector<256x3xf32>
    %46 = arith.truncf %45 : vector<256x3xf32> to vector<256x3xbf16>
    %c1_40 = arith.constant 1 : index
    %c0_41 = arith.constant 0 : index
    %c0_42 = arith.constant 0 : index
    %c0_43 = arith.constant 0 : index
    %47 = vector.load %arg2[%c1_40, %c0_41, %c0_42, %c0_43] : memref<5x5x3x28xbf16, #tpu.memory_space<vmem>>, vector<1x1x3x28xbf16>
    %48 = vector.shape_cast %47 : vector<1x1x3x28xbf16> to vector<3x28xbf16>
    %cst_44 = arith.constant dense<0.000000e+00> : vector<256x28xf32>
    %49 = tpu.matmul %46, %48, %cst_44 {dimension_numbers = #tpu.dot_dimension_numbers<[1], [0], [0], [1], [0, 0, 1, 1], [], []>} : vector<256x3xbf16>, vector<3x28xbf16>, vector<256x28xf32> -> vector<256x28xf32>
    %50 = arith.addf %43, %49 : vector<256x28xf32>
    %51 = vector.extract_strided_slice %9 {offsets = [1, 7, 0], sizes = [16, 16, 3], strides = [1, 1, 1]} : vector<20x26x3xf32> to vector<16x16x3xf32>
    %52 = vector.shape_cast %51 : vector<16x16x3xf32> to vector<256x3xf32>
    %53 = arith.truncf %52 : vector<256x3xf32> to vector<256x3xbf16>
    %c1_45 = arith.constant 1 : index
    %c1_46 = arith.constant 1 : index
    %c0_47 = arith.constant 0 : index
    %c0_48 = arith.constant 0 : index
    %54 = vector.load %arg2[%c1_45, %c1_46, %c0_47, %c0_48] : memref<5x5x3x28xbf16, #tpu.memory_space<vmem>>, vector<1x1x3x28xbf16>
    %55 = vector.shape_cast %54 : vector<1x1x3x28xbf16> to vector<3x28xbf16>
    %cst_49 = arith.constant dense<0.000000e+00> : vector<256x28xf32>
    %56 = tpu.matmul %53, %55, %cst_49 {dimension_numbers = #tpu.dot_dimension_numbers<[1], [0], [0], [1], [0, 0, 1, 1], [], []>} : vector<256x3xbf16>, vector<3x28xbf16>, vector<256x28xf32> -> vector<256x28xf32>
    %57 = arith.addf %50, %56 : vector<256x28xf32>
    %58 = vector.extract_strided_slice %9 {offsets = [1, 8, 0], sizes = [16, 16, 3], strides = [1, 1, 1]} : vector<20x26x3xf32> to vector<16x16x3xf32>
    %59 = vector.shape_cast %58 : vector<16x16x3xf32> to vector<256x3xf32>
    %60 = arith.truncf %59 : vector<256x3xf32> to vector<256x3xbf16>
    %c1_50 = arith.constant 1 : index
    %c2_51 = arith.constant 2 : index
    %c0_52 = arith.constant 0 : index
    %c0_53 = arith.constant 0 : index
    %61 = vector.load %arg2[%c1_50, %c2_51, %c0_52, %c0_53] : memref<5x5x3x28xbf16, #tpu.memory_space<vmem>>, vector<1x1x3x28xbf16>
    %62 = vector.shape_cast %61 : vector<1x1x3x28xbf16> to vector<3x28xbf16>
    %cst_54 = arith.constant dense<0.000000e+00> : vector<256x28xf32>
    %63 = tpu.matmul %60, %62, %cst_54 {dimension_numbers = #tpu.dot_dimension_numbers<[1], [0], [0], [1], [0, 0, 1, 1], [], []>} : vector<256x3xbf16>, vector<3x28xbf16>, vector<256x28xf32> -> vector<256x28xf32>
    %64 = arith.addf %57, %63 : vector<256x28xf32>
    %65 = vector.extract_strided_slice %9 {offsets = [1, 9, 0], sizes = [16, 16, 3], strides = [1, 1, 1]} : vector<20x26x3xf32> to vector<16x16x3xf32>
    %66 = vector.shape_cast %65 : vector<16x16x3xf32> to vector<256x3xf32>
    %67 = arith.truncf %66 : vector<256x3xf32> to vector<256x3xbf16>
    %c1_55 = arith.constant 1 : index
    %c3_56 = arith.constant 3 : index
    %c0_57 = arith.constant 0 : index
    %c0_58 = arith.constant 0 : index
    %68 = vector.load %arg2[%c1_55, %c3_56, %c0_57, %c0_58] : memref<5x5x3x28xbf16, #tpu.memory_space<vmem>>, vector<1x1x3x28xbf16>
    %69 = vector.shape_cast %68 : vector<1x1x3x28xbf16> to vector<3x28xbf16>
    %cst_59 = arith.constant dense<0.000000e+00> : vector<256x28xf32>
    %70 = tpu.matmul %67, %69, %cst_59 {dimension_numbers = #tpu.dot_dimension_numbers<[1], [0], [0], [1], [0, 0, 1, 1], [], []>} : vector<256x3xbf16>, vector<3x28xbf16>, vector<256x28xf32> -> vector<256x28xf32>
    %71 = arith.addf %64, %70 : vector<256x28xf32>
    %72 = vector.extract_strided_slice %9 {offsets = [1, 10, 0], sizes = [16, 16, 3], strides = [1, 1, 1]} : vector<20x26x3xf32> to vector<16x16x3xf32>
    %73 = vector.shape_cast %72 : vector<16x16x3xf32> to vector<256x3xf32>
    %74 = arith.truncf %73 : vector<256x3xf32> to vector<256x3xbf16>
    %c1_60 = arith.constant 1 : index
    %c4_61 = arith.constant 4 : index
    %c0_62 = arith.constant 0 : index
    %c0_63 = arith.constant 0 : index
    %75 = vector.load %arg2[%c1_60, %c4_61, %c0_62, %c0_63] : memref<5x5x3x28xbf16, #tpu.memory_space<vmem>>, vector<1x1x3x28xbf16>
    %76 = vector.shape_cast %75 : vector<1x1x3x28xbf16> to vector<3x28xbf16>
    %cst_64 = arith.constant dense<0.000000e+00> : vector<256x28xf32>
    %77 = tpu.matmul %74, %76, %cst_64 {dimension_numbers = #tpu.dot_dimension_numbers<[1], [0], [0], [1], [0, 0, 1, 1], [], []>} : vector<256x3xbf16>, vector<3x28xbf16>, vector<256x28xf32> -> vector<256x28xf32>
    %78 = arith.addf %71, %77 : vector<256x28xf32>
    %79 = vector.extract_strided_slice %9 {offsets = [2, 6, 0], sizes = [16, 16, 3], strides = [1, 1, 1]} : vector<20x26x3xf32> to vector<16x16x3xf32>
    %80 = vector.shape_cast %79 : vector<16x16x3xf32> to vector<256x3xf32>
    %81 = arith.truncf %80 : vector<256x3xf32> to vector<256x3xbf16>
    %c2_65 = arith.constant 2 : index
    %c0_66 = arith.constant 0 : index
    %c0_67 = arith.constant 0 : index
    %c0_68 = arith.constant 0 : index
    %82 = vector.load %arg2[%c2_65, %c0_66, %c0_67, %c0_68] : memref<5x5x3x28xbf16, #tpu.memory_space<vmem>>, vector<1x1x3x28xbf16>
    %83 = vector.shape_cast %82 : vector<1x1x3x28xbf16> to vector<3x28xbf16>
    %cst_69 = arith.constant dense<0.000000e+00> : vector<256x28xf32>
    %84 = tpu.matmul %81, %83, %cst_69 {dimension_numbers = #tpu.dot_dimension_numbers<[1], [0], [0], [1], [0, 0, 1, 1], [], []>} : vector<256x3xbf16>, vector<3x28xbf16>, vector<256x28xf32> -> vector<256x28xf32>
    %85 = arith.addf %78, %84 : vector<256x28xf32>
    %86 = vector.extract_strided_slice %9 {offsets = [2, 7, 0], sizes = [16, 16, 3], strides = [1, 1, 1]} : vector<20x26x3xf32> to vector<16x16x3xf32>
    %87 = vector.shape_cast %86 : vector<16x16x3xf32> to vector<256x3xf32>
    %88 = arith.truncf %87 : vector<256x3xf32> to vector<256x3xbf16>
    %c2_70 = arith.constant 2 : index
    %c1_71 = arith.constant 1 : index
    %c0_72 = arith.constant 0 : index
    %c0_73 = arith.constant 0 : index
    %89 = vector.load %arg2[%c2_70, %c1_71, %c0_72, %c0_73] : memref<5x5x3x28xbf16, #tpu.memory_space<vmem>>, vector<1x1x3x28xbf16>
    %90 = vector.shape_cast %89 : vector<1x1x3x28xbf16> to vector<3x28xbf16>
    %cst_74 = arith.constant dense<0.000000e+00> : vector<256x28xf32>
    %91 = tpu.matmul %88, %90, %cst_74 {dimension_numbers = #tpu.dot_dimension_numbers<[1], [0], [0], [1], [0, 0, 1, 1], [], []>} : vector<256x3xbf16>, vector<3x28xbf16>, vector<256x28xf32> -> vector<256x28xf32>
    %92 = arith.addf %85, %91 : vector<256x28xf32>
    %93 = vector.extract_strided_slice %9 {offsets = [2, 8, 0], sizes = [16, 16, 3], strides = [1, 1, 1]} : vector<20x26x3xf32> to vector<16x16x3xf32>
    %94 = vector.shape_cast %93 : vector<16x16x3xf32> to vector<256x3xf32>
    %95 = arith.truncf %94 : vector<256x3xf32> to vector<256x3xbf16>
    %c2_75 = arith.constant 2 : index
    %c2_76 = arith.constant 2 : index
    %c0_77 = arith.constant 0 : index
    %c0_78 = arith.constant 0 : index
    %96 = vector.load %arg2[%c2_75, %c2_76, %c0_77, %c0_78] : memref<5x5x3x28xbf16, #tpu.memory_space<vmem>>, vector<1x1x3x28xbf16>
    %97 = vector.shape_cast %96 : vector<1x1x3x28xbf16> to vector<3x28xbf16>
    %cst_79 = arith.constant dense<0.000000e+00> : vector<256x28xf32>
    %98 = tpu.matmul %95, %97, %cst_79 {dimension_numbers = #tpu.dot_dimension_numbers<[1], [0], [0], [1], [0, 0, 1, 1], [], []>} : vector<256x3xbf16>, vector<3x28xbf16>, vector<256x28xf32> -> vector<256x28xf32>
    %99 = arith.addf %92, %98 : vector<256x28xf32>
    %100 = vector.extract_strided_slice %9 {offsets = [2, 9, 0], sizes = [16, 16, 3], strides = [1, 1, 1]} : vector<20x26x3xf32> to vector<16x16x3xf32>
    %101 = vector.shape_cast %100 : vector<16x16x3xf32> to vector<256x3xf32>
    %102 = arith.truncf %101 : vector<256x3xf32> to vector<256x3xbf16>
    %c2_80 = arith.constant 2 : index
    %c3_81 = arith.constant 3 : index
    %c0_82 = arith.constant 0 : index
    %c0_83 = arith.constant 0 : index
    %103 = vector.load %arg2[%c2_80, %c3_81, %c0_82, %c0_83] : memref<5x5x3x28xbf16, #tpu.memory_space<vmem>>, vector<1x1x3x28xbf16>
    %104 = vector.shape_cast %103 : vector<1x1x3x28xbf16> to vector<3x28xbf16>
    %cst_84 = arith.constant dense<0.000000e+00> : vector<256x28xf32>
    %105 = tpu.matmul %102, %104, %cst_84 {dimension_numbers = #tpu.dot_dimension_numbers<[1], [0], [0], [1], [0, 0, 1, 1], [], []>} : vector<256x3xbf16>, vector<3x28xbf16>, vector<256x28xf32> -> vector<256x28xf32>
    %106 = arith.addf %99, %105 : vector<256x28xf32>
    %107 = vector.extract_strided_slice %9 {offsets = [2, 10, 0], sizes = [16, 16, 3], strides = [1, 1, 1]} : vector<20x26x3xf32> to vector<16x16x3xf32>
    %108 = vector.shape_cast %107 : vector<16x16x3xf32> to vector<256x3xf32>
    %109 = arith.truncf %108 : vector<256x3xf32> to vector<256x3xbf16>
    %c2_85 = arith.constant 2 : index
    %c4_86 = arith.constant 4 : index
    %c0_87 = arith.constant 0 : index
    %c0_88 = arith.constant 0 : index
    %110 = vector.load %arg2[%c2_85, %c4_86, %c0_87, %c0_88] : memref<5x5x3x28xbf16, #tpu.memory_space<vmem>>, vector<1x1x3x28xbf16>
    %111 = vector.shape_cast %110 : vector<1x1x3x28xbf16> to vector<3x28xbf16>
    %cst_89 = arith.constant dense<0.000000e+00> : vector<256x28xf32>
    %112 = tpu.matmul %109, %111, %cst_89 {dimension_numbers = #tpu.dot_dimension_numbers<[1], [0], [0], [1], [0, 0, 1, 1], [], []>} : vector<256x3xbf16>, vector<3x28xbf16>, vector<256x28xf32> -> vector<256x28xf32>
    %113 = arith.addf %106, %112 : vector<256x28xf32>
    %114 = vector.extract_strided_slice %9 {offsets = [3, 6, 0], sizes = [16, 16, 3], strides = [1, 1, 1]} : vector<20x26x3xf32> to vector<16x16x3xf32>
    %115 = vector.shape_cast %114 : vector<16x16x3xf32> to vector<256x3xf32>
    %116 = arith.truncf %115 : vector<256x3xf32> to vector<256x3xbf16>
    %c3_90 = arith.constant 3 : index
    %c0_91 = arith.constant 0 : index
    %c0_92 = arith.constant 0 : index
    %c0_93 = arith.constant 0 : index
    %117 = vector.load %arg2[%c3_90, %c0_91, %c0_92, %c0_93] : memref<5x5x3x28xbf16, #tpu.memory_space<vmem>>, vector<1x1x3x28xbf16>
    %118 = vector.shape_cast %117 : vector<1x1x3x28xbf16> to vector<3x28xbf16>
    %cst_94 = arith.constant dense<0.000000e+00> : vector<256x28xf32>
    %119 = tpu.matmul %116, %118, %cst_94 {dimension_numbers = #tpu.dot_dimension_numbers<[1], [0], [0], [1], [0, 0, 1, 1], [], []>} : vector<256x3xbf16>, vector<3x28xbf16>, vector<256x28xf32> -> vector<256x28xf32>
    %120 = arith.addf %113, %119 : vector<256x28xf32>
    %121 = vector.extract_strided_slice %9 {offsets = [3, 7, 0], sizes = [16, 16, 3], strides = [1, 1, 1]} : vector<20x26x3xf32> to vector<16x16x3xf32>
    %122 = vector.shape_cast %121 : vector<16x16x3xf32> to vector<256x3xf32>
    %123 = arith.truncf %122 : vector<256x3xf32> to vector<256x3xbf16>
    %c3_95 = arith.constant 3 : index
    %c1_96 = arith.constant 1 : index
    %c0_97 = arith.constant 0 : index
    %c0_98 = arith.constant 0 : index
    %124 = vector.load %arg2[%c3_95, %c1_96, %c0_97, %c0_98] : memref<5x5x3x28xbf16, #tpu.memory_space<vmem>>, vector<1x1x3x28xbf16>
    %125 = vector.shape_cast %124 : vector<1x1x3x28xbf16> to vector<3x28xbf16>
    %cst_99 = arith.constant dense<0.000000e+00> : vector<256x28xf32>
    %126 = tpu.matmul %123, %125, %cst_99 {dimension_numbers = #tpu.dot_dimension_numbers<[1], [0], [0], [1], [0, 0, 1, 1], [], []>} : vector<256x3xbf16>, vector<3x28xbf16>, vector<256x28xf32> -> vector<256x28xf32>
    %127 = arith.addf %120, %126 : vector<256x28xf32>
    %128 = vector.extract_strided_slice %9 {offsets = [3, 8, 0], sizes = [16, 16, 3], strides = [1, 1, 1]} : vector<20x26x3xf32> to vector<16x16x3xf32>
    %129 = vector.shape_cast %128 : vector<16x16x3xf32> to vector<256x3xf32>
    %130 = arith.truncf %129 : vector<256x3xf32> to vector<256x3xbf16>
    %c3_100 = arith.constant 3 : index
    %c2_101 = arith.constant 2 : index
    %c0_102 = arith.constant 0 : index
    %c0_103 = arith.constant 0 : index
    %131 = vector.load %arg2[%c3_100, %c2_101, %c0_102, %c0_103] : memref<5x5x3x28xbf16, #tpu.memory_space<vmem>>, vector<1x1x3x28xbf16>
    %132 = vector.shape_cast %131 : vector<1x1x3x28xbf16> to vector<3x28xbf16>
    %cst_104 = arith.constant dense<0.000000e+00> : vector<256x28xf32>
    %133 = tpu.matmul %130, %132, %cst_104 {dimension_numbers = #tpu.dot_dimension_numbers<[1], [0], [0], [1], [0, 0, 1, 1], [], []>} : vector<256x3xbf16>, vector<3x28xbf16>, vector<256x28xf32> -> vector<256x28xf32>
    %134 = arith.addf %127, %133 : vector<256x28xf32>
    %135 = vector.extract_strided_slice %9 {offsets = [3, 9, 0], sizes = [16, 16, 3], strides = [1, 1, 1]} : vector<20x26x3xf32> to vector<16x16x3xf32>
    %136 = vector.shape_cast %135 : vector<16x16x3xf32> to vector<256x3xf32>
    %137 = arith.truncf %136 : vector<256x3xf32> to vector<256x3xbf16>
    %c3_105 = arith.constant 3 : index
    %c3_106 = arith.constant 3 : index
    %c0_107 = arith.constant 0 : index
    %c0_108 = arith.constant 0 : index
    %138 = vector.load %arg2[%c3_105, %c3_106, %c0_107, %c0_108] : memref<5x5x3x28xbf16, #tpu.memory_space<vmem>>, vector<1x1x3x28xbf16>
    %139 = vector.shape_cast %138 : vector<1x1x3x28xbf16> to vector<3x28xbf16>
    %cst_109 = arith.constant dense<0.000000e+00> : vector<256x28xf32>
    %140 = tpu.matmul %137, %139, %cst_109 {dimension_numbers = #tpu.dot_dimension_numbers<[1], [0], [0], [1], [0, 0, 1, 1], [], []>} : vector<256x3xbf16>, vector<3x28xbf16>, vector<256x28xf32> -> vector<256x28xf32>
    %141 = arith.addf %134, %140 : vector<256x28xf32>
    %142 = vector.extract_strided_slice %9 {offsets = [3, 10, 0], sizes = [16, 16, 3], strides = [1, 1, 1]} : vector<20x26x3xf32> to vector<16x16x3xf32>
    %143 = vector.shape_cast %142 : vector<16x16x3xf32> to vector<256x3xf32>
    %144 = arith.truncf %143 : vector<256x3xf32> to vector<256x3xbf16>
    %c3_110 = arith.constant 3 : index
    %c4_111 = arith.constant 4 : index
    %c0_112 = arith.constant 0 : index
    %c0_113 = arith.constant 0 : index
    %145 = vector.load %arg2[%c3_110, %c4_111, %c0_112, %c0_113] : memref<5x5x3x28xbf16, #tpu.memory_space<vmem>>, vector<1x1x3x28xbf16>
    %146 = vector.shape_cast %145 : vector<1x1x3x28xbf16> to vector<3x28xbf16>
    %cst_114 = arith.constant dense<0.000000e+00> : vector<256x28xf32>
    %147 = tpu.matmul %144, %146, %cst_114 {dimension_numbers = #tpu.dot_dimension_numbers<[1], [0], [0], [1], [0, 0, 1, 1], [], []>} : vector<256x3xbf16>, vector<3x28xbf16>, vector<256x28xf32> -> vector<256x28xf32>
    %148 = arith.addf %141, %147 : vector<256x28xf32>
    %149 = vector.extract_strided_slice %9 {offsets = [4, 6, 0], sizes = [16, 16, 3], strides = [1, 1, 1]} : vector<20x26x3xf32> to vector<16x16x3xf32>
    %150 = vector.shape_cast %149 : vector<16x16x3xf32> to vector<256x3xf32>
    %151 = arith.truncf %150 : vector<256x3xf32> to vector<256x3xbf16>
    %c4_115 = arith.constant 4 : index
    %c0_116 = arith.constant 0 : index
    %c0_117 = arith.constant 0 : index
    %c0_118 = arith.constant 0 : index
    %152 = vector.load %arg2[%c4_115, %c0_116, %c0_117, %c0_118] : memref<5x5x3x28xbf16, #tpu.memory_space<vmem>>, vector<1x1x3x28xbf16>
    %153 = vector.shape_cast %152 : vector<1x1x3x28xbf16> to vector<3x28xbf16>
    %cst_119 = arith.constant dense<0.000000e+00> : vector<256x28xf32>
    %154 = tpu.matmul %151, %153, %cst_119 {dimension_numbers = #tpu.dot_dimension_numbers<[1], [0], [0], [1], [0, 0, 1, 1], [], []>} : vector<256x3xbf16>, vector<3x28xbf16>, vector<256x28xf32> -> vector<256x28xf32>
    %155 = arith.addf %148, %154 : vector<256x28xf32>
    %156 = vector.extract_strided_slice %9 {offsets = [4, 7, 0], sizes = [16, 16, 3], strides = [1, 1, 1]} : vector<20x26x3xf32> to vector<16x16x3xf32>
    %157 = vector.shape_cast %156 : vector<16x16x3xf32> to vector<256x3xf32>
    %158 = arith.truncf %157 : vector<256x3xf32> to vector<256x3xbf16>
    %c4_120 = arith.constant 4 : index
    %c1_121 = arith.constant 1 : index
    %c0_122 = arith.constant 0 : index
    %c0_123 = arith.constant 0 : index
    %159 = vector.load %arg2[%c4_120, %c1_121, %c0_122, %c0_123] : memref<5x5x3x28xbf16, #tpu.memory_space<vmem>>, vector<1x1x3x28xbf16>
    %160 = vector.shape_cast %159 : vector<1x1x3x28xbf16> to vector<3x28xbf16>
    %cst_124 = arith.constant dense<0.000000e+00> : vector<256x28xf32>
    %161 = tpu.matmul %158, %160, %cst_124 {dimension_numbers = #tpu.dot_dimension_numbers<[1], [0], [0], [1], [0, 0, 1, 1], [], []>} : vector<256x3xbf16>, vector<3x28xbf16>, vector<256x28xf32> -> vector<256x28xf32>
    %162 = arith.addf %155, %161 : vector<256x28xf32>
    %163 = vector.extract_strided_slice %9 {offsets = [4, 8, 0], sizes = [16, 16, 3], strides = [1, 1, 1]} : vector<20x26x3xf32> to vector<16x16x3xf32>
    %164 = vector.shape_cast %163 : vector<16x16x3xf32> to vector<256x3xf32>
    %165 = arith.truncf %164 : vector<256x3xf32> to vector<256x3xbf16>
    %c4_125 = arith.constant 4 : index
    %c2_126 = arith.constant 2 : index
    %c0_127 = arith.constant 0 : index
    %c0_128 = arith.constant 0 : index
    %166 = vector.load %arg2[%c4_125, %c2_126, %c0_127, %c0_128] : memref<5x5x3x28xbf16, #tpu.memory_space<vmem>>, vector<1x1x3x28xbf16>
    %167 = vector.shape_cast %166 : vector<1x1x3x28xbf16> to vector<3x28xbf16>
    %cst_129 = arith.constant dense<0.000000e+00> : vector<256x28xf32>
    %168 = tpu.matmul %165, %167, %cst_129 {dimension_numbers = #tpu.dot_dimension_numbers<[1], [0], [0], [1], [0, 0, 1, 1], [], []>} : vector<256x3xbf16>, vector<3x28xbf16>, vector<256x28xf32> -> vector<256x28xf32>
    %169 = arith.addf %162, %168 : vector<256x28xf32>
    %170 = vector.extract_strided_slice %9 {offsets = [4, 9, 0], sizes = [16, 16, 3], strides = [1, 1, 1]} : vector<20x26x3xf32> to vector<16x16x3xf32>
    %171 = vector.shape_cast %170 : vector<16x16x3xf32> to vector<256x3xf32>
    %172 = arith.truncf %171 : vector<256x3xf32> to vector<256x3xbf16>
    %c4_130 = arith.constant 4 : index
    %c3_131 = arith.constant 3 : index
    %c0_132 = arith.constant 0 : index
    %c0_133 = arith.constant 0 : index
    %173 = vector.load %arg2[%c4_130, %c3_131, %c0_132, %c0_133] : memref<5x5x3x28xbf16, #tpu.memory_space<vmem>>, vector<1x1x3x28xbf16>
    %174 = vector.shape_cast %173 : vector<1x1x3x28xbf16> to vector<3x28xbf16>
    %cst_134 = arith.constant dense<0.000000e+00> : vector<256x28xf32>
    %175 = tpu.matmul %172, %174, %cst_134 {dimension_numbers = #tpu.dot_dimension_numbers<[1], [0], [0], [1], [0, 0, 1, 1], [], []>} : vector<256x3xbf16>, vector<3x28xbf16>, vector<256x28xf32> -> vector<256x28xf32>
    %176 = arith.addf %169, %175 : vector<256x28xf32>
    %177 = vector.extract_strided_slice %9 {offsets = [4, 10, 0], sizes = [16, 16, 3], strides = [1, 1, 1]} : vector<20x26x3xf32> to vector<16x16x3xf32>
    %178 = vector.shape_cast %177 : vector<16x16x3xf32> to vector<256x3xf32>
    %179 = arith.truncf %178 : vector<256x3xf32> to vector<256x3xbf16>
    %c4_135 = arith.constant 4 : index
    %c4_136 = arith.constant 4 : index
    %c0_137 = arith.constant 0 : index
    %c0_138 = arith.constant 0 : index
    %180 = vector.load %arg2[%c4_135, %c4_136, %c0_137, %c0_138] : memref<5x5x3x28xbf16, #tpu.memory_space<vmem>>, vector<1x1x3x28xbf16>
    %181 = vector.shape_cast %180 : vector<1x1x3x28xbf16> to vector<3x28xbf16>
    %cst_139 = arith.constant dense<0.000000e+00> : vector<256x28xf32>
    %182 = tpu.matmul %179, %181, %cst_139 {dimension_numbers = #tpu.dot_dimension_numbers<[1], [0], [0], [1], [0, 0, 1, 1], [], []>} : vector<256x3xbf16>, vector<3x28xbf16>, vector<256x28xf32> -> vector<256x28xf32>
    %183 = arith.addf %176, %182 : vector<256x28xf32>
    %c0_140 = arith.constant 0 : index
    %c0_141 = arith.constant 0 : index
    %184 = vector.load %arg3[%c0_140, %c0_141] : memref<1x28xf32, #tpu.memory_space<vmem>>, vector<1x28xf32>
    %185 = vector.broadcast %184 : vector<1x28xf32> to vector<256x28xf32>
    %186 = arith.addf %183, %185 : vector<256x28xf32>
    %cst_142 = arith.constant 0.000000e+00 : f32
    %187 = vector.broadcast %cst_142 : f32 to vector<256x28xf32>
    %188 = arith.maximumf %186, %187 : vector<256x28xf32>
    %c0_143 = arith.constant 0 : index
    %c0_144 = arith.constant 0 : index
    %189 = vector.load %arg4[%c0_143, %c0_144] : memref<1x28xf32, #tpu.memory_space<vmem>>, vector<1x28xf32>
    %190 = vector.broadcast %189 : vector<1x28xf32> to vector<256x28xf32>
    %191 = arith.mulf %188, %190 : vector<256x28xf32>
    %c0_145 = arith.constant 0 : index
    %c0_146 = arith.constant 0 : index
    %192 = vector.load %arg5[%c0_145, %c0_146] : memref<1x28xf32, #tpu.memory_space<vmem>>, vector<1x28xf32>
    %193 = vector.broadcast %192 : vector<1x28xf32> to vector<256x28xf32>
    %194 = arith.addf %191, %193 : vector<256x28xf32>
    %195 = vector.shape_cast %194 : vector<256x28xf32> to vector<16x16x28xf32>
    %c1_147 = arith.constant 1 : index
    %c8_148 = arith.constant 8 : index
    %c0_149 = arith.constant 0 : index
    %196 = vector.load %arg18[%c1_147, %c8_148, %c0_149] : memref<18x25x28xf32, #tpu.memory_space<vmem>>, vector<16x16x28xf32>
    tpu.vector_store %arg18[%c1_147, %c8_148, %c0_149], %195 {strides = array<i32>} : memref<18x25x28xf32, #tpu.memory_space<vmem>>, vector<16x16x28xf32>,
    %c0_150 = arith.constant 0 : index
    %c0_151 = arith.constant 0 : index
    %c0_152 = arith.constant 0 : index
    %197 = vector.load %arg18[%c0_150, %c0_151, %c0_152] : memref<18x25x28xf32, #tpu.memory_space<vmem>>, vector<18x25x28xf32>
    %198 = vector.extract_strided_slice %197 {offsets = [0, 7, 0], sizes = [16, 16, 28], strides = [1, 1, 1]} : vector<18x25x28xf32> to vector<16x16x28xf32>
    %199 = vector.shape_cast %198 : vector<16x16x28xf32> to vector<256x28xf32>
    %200 = arith.truncf %199 : vector<256x28xf32> to vector<256x28xbf16>
    %c0_153 = arith.constant 0 : index
    %c0_154 = arith.constant 0 : index
    %c0_155 = arith.constant 0 : index
    %c0_156 = arith.constant 0 : index
    %201 = vector.load %arg6[%c0_153, %c0_154, %c0_155, %c0_156] : memref<3x3x28x28xbf16, #tpu.memory_space<vmem>>, vector<1x1x28x28xbf16>
    %202 = vector.shape_cast %201 : vector<1x1x28x28xbf16> to vector<28x28xbf16>
    %cst_157 = arith.constant dense<0.000000e+00> : vector<256x28xf32>
    %203 = tpu.matmul %200, %202, %cst_157 {dimension_numbers = #tpu.dot_dimension_numbers<[1], [0], [0], [1], [0, 0, 1, 1], [], []>} : vector<256x28xbf16>, vector<28x28xbf16>, vector<256x28xf32> -> vector<256x28xf32>
    %204 = vector.extract_strided_slice %197 {offsets = [0, 8, 0], sizes = [16, 16, 28], strides = [1, 1, 1]} : vector<18x25x28xf32> to vector<16x16x28xf32>
    %205 = vector.shape_cast %204 : vector<16x16x28xf32> to vector<256x28xf32>
    %206 = arith.truncf %205 : vector<256x28xf32> to vector<256x28xbf16>
    %c0_158 = arith.constant 0 : index
    %c1_159 = arith.constant 1 : index
    %c0_160 = arith.constant 0 : index
    %c0_161 = arith.constant 0 : index
    %207 = vector.load %arg6[%c0_158, %c1_159, %c0_160, %c0_161] : memref<3x3x28x28xbf16, #tpu.memory_space<vmem>>, vector<1x1x28x28xbf16>
    %208 = vector.shape_cast %207 : vector<1x1x28x28xbf16> to vector<28x28xbf16>
    %cst_162 = arith.constant dense<0.000000e+00> : vector<256x28xf32>
    %209 = tpu.matmul %206, %208, %cst_162 {dimension_numbers = #tpu.dot_dimension_numbers<[1], [0], [0], [1], [0, 0, 1, 1], [], []>} : vector<256x28xbf16>, vector<28x28xbf16>, vector<256x28xf32> -> vector<256x28xf32>
    %210 = arith.addf %203, %209 : vector<256x28xf32>
    %211 = vector.extract_strided_slice %197 {offsets = [0, 9, 0], sizes = [16, 16, 28], strides = [1, 1, 1]} : vector<18x25x28xf32> to vector<16x16x28xf32>
    %212 = vector.shape_cast %211 : vector<16x16x28xf32> to vector<256x28xf32>
    %213 = arith.truncf %212 : vector<256x28xf32> to vector<256x28xbf16>
    %c0_163 = arith.constant 0 : index
    %c2_164 = arith.constant 2 : index
    %c0_165 = arith.constant 0 : index
    %c0_166 = arith.constant 0 : index
    %214 = vector.load %arg6[%c0_163, %c2_164, %c0_165, %c0_166] : memref<3x3x28x28xbf16, #tpu.memory_space<vmem>>, vector<1x1x28x28xbf16>
    %215 = vector.shape_cast %214 : vector<1x1x28x28xbf16> to vector<28x28xbf16>
    %cst_167 = arith.constant dense<0.000000e+00> : vector<256x28xf32>
    %216 = tpu.matmul %213, %215, %cst_167 {dimension_numbers = #tpu.dot_dimension_numbers<[1], [0], [0], [1], [0, 0, 1, 1], [], []>} : vector<256x28xbf16>, vector<28x28xbf16>, vector<256x28xf32> -> vector<256x28xf32>
    %217 = arith.addf %210, %216 : vector<256x28xf32>
    %218 = vector.extract_strided_slice %197 {offsets = [1, 7, 0], sizes = [16, 16, 28], strides = [1, 1, 1]} : vector<18x25x28xf32> to vector<16x16x28xf32>
    %219 = vector.shape_cast %218 : vector<16x16x28xf32> to vector<256x28xf32>
    %220 = arith.truncf %219 : vector<256x28xf32> to vector<256x28xbf16>
    %c1_168 = arith.constant 1 : index
    %c0_169 = arith.constant 0 : index
    %c0_170 = arith.constant 0 : index
    %c0_171 = arith.constant 0 : index
    %221 = vector.load %arg6[%c1_168, %c0_169, %c0_170, %c0_171] : memref<3x3x28x28xbf16, #tpu.memory_space<vmem>>, vector<1x1x28x28xbf16>
    %222 = vector.shape_cast %221 : vector<1x1x28x28xbf16> to vector<28x28xbf16>
    %cst_172 = arith.constant dense<0.000000e+00> : vector<256x28xf32>
    %223 = tpu.matmul %220, %222, %cst_172 {dimension_numbers = #tpu.dot_dimension_numbers<[1], [0], [0], [1], [0, 0, 1, 1], [], []>} : vector<256x28xbf16>, vector<28x28xbf16>, vector<256x28xf32> -> vector<256x28xf32>
    %224 = arith.addf %217, %223 : vector<256x28xf32>
    %225 = vector.extract_strided_slice %197 {offsets = [1, 8, 0], sizes = [16, 16, 28], strides = [1, 1, 1]} : vector<18x25x28xf32> to vector<16x16x28xf32>
    %226 = vector.shape_cast %225 : vector<16x16x28xf32> to vector<256x28xf32>
    %227 = arith.truncf %226 : vector<256x28xf32> to vector<256x28xbf16>
    %c1_173 = arith.constant 1 : index
    %c1_174 = arith.constant 1 : index
    %c0_175 = arith.constant 0 : index
    %c0_176 = arith.constant 0 : index
    %228 = vector.load %arg6[%c1_173, %c1_174, %c0_175, %c0_176] : memref<3x3x28x28xbf16, #tpu.memory_space<vmem>>, vector<1x1x28x28xbf16>
    %229 = vector.shape_cast %228 : vector<1x1x28x28xbf16> to vector<28x28xbf16>
    %cst_177 = arith.constant dense<0.000000e+00> : vector<256x28xf32>
    %230 = tpu.matmul %227, %229, %cst_177 {dimension_numbers = #tpu.dot_dimension_numbers<[1], [0], [0], [1], [0, 0, 1, 1], [], []>} : vector<256x28xbf16>, vector<28x28xbf16>, vector<256x28xf32> -> vector<256x28xf32>
    %231 = arith.addf %224, %230 : vector<256x28xf32>
    %232 = vector.extract_strided_slice %197 {offsets = [1, 9, 0], sizes = [16, 16, 28], strides = [1, 1, 1]} : vector<18x25x28xf32> to vector<16x16x28xf32>
    %233 = vector.shape_cast %232 : vector<16x16x28xf32> to vector<256x28xf32>
    %234 = arith.truncf %233 : vector<256x28xf32> to vector<256x28xbf16>
    %c1_178 = arith.constant 1 : index
    %c2_179 = arith.constant 2 : index
    %c0_180 = arith.constant 0 : index
    %c0_181 = arith.constant 0 : index
    %235 = vector.load %arg6[%c1_178, %c2_179, %c0_180, %c0_181] : memref<3x3x28x28xbf16, #tpu.memory_space<vmem>>, vector<1x1x28x28xbf16>
    %236 = vector.shape_cast %235 : vector<1x1x28x28xbf16> to vector<28x28xbf16>
    %cst_182 = arith.constant dense<0.000000e+00> : vector<256x28xf32>
    %237 = tpu.matmul %234, %236, %cst_182 {dimension_numbers = #tpu.dot_dimension_numbers<[1], [0], [0], [1], [0, 0, 1, 1], [], []>} : vector<256x28xbf16>, vector<28x28xbf16>, vector<256x28xf32> -> vector<256x28xf32>
    %238 = arith.addf %231, %237 : vector<256x28xf32>
    %239 = vector.extract_strided_slice %197 {offsets = [2, 7, 0], sizes = [16, 16, 28], strides = [1, 1, 1]} : vector<18x25x28xf32> to vector<16x16x28xf32>
    %240 = vector.shape_cast %239 : vector<16x16x28xf32> to vector<256x28xf32>
    %241 = arith.truncf %240 : vector<256x28xf32> to vector<256x28xbf16>
    %c2_183 = arith.constant 2 : index
    %c0_184 = arith.constant 0 : index
    %c0_185 = arith.constant 0 : index
    %c0_186 = arith.constant 0 : index
    %242 = vector.load %arg6[%c2_183, %c0_184, %c0_185, %c0_186] : memref<3x3x28x28xbf16, #tpu.memory_space<vmem>>, vector<1x1x28x28xbf16>
    %243 = vector.shape_cast %242 : vector<1x1x28x28xbf16> to vector<28x28xbf16>
    %cst_187 = arith.constant dense<0.000000e+00> : vector<256x28xf32>
    %244 = tpu.matmul %241, %243, %cst_187 {dimension_numbers = #tpu.dot_dimension_numbers<[1], [0], [0], [1], [0, 0, 1, 1], [], []>} : vector<256x28xbf16>, vector<28x28xbf16>, vector<256x28xf32> -> vector<256x28xf32>
    %245 = arith.addf %238, %244 : vector<256x28xf32>
    %246 = vector.extract_strided_slice %197 {offsets = [2, 8, 0], sizes = [16, 16, 28], strides = [1, 1, 1]} : vector<18x25x28xf32> to vector<16x16x28xf32>
    %247 = vector.shape_cast %246 : vector<16x16x28xf32> to vector<256x28xf32>
    %248 = arith.truncf %247 : vector<256x28xf32> to vector<256x28xbf16>
    %c2_188 = arith.constant 2 : index
    %c1_189 = arith.constant 1 : index
    %c0_190 = arith.constant 0 : index
    %c0_191 = arith.constant 0 : index
    %249 = vector.load %arg6[%c2_188, %c1_189, %c0_190, %c0_191] : memref<3x3x28x28xbf16, #tpu.memory_space<vmem>>, vector<1x1x28x28xbf16>
    %250 = vector.shape_cast %249 : vector<1x1x28x28xbf16> to vector<28x28xbf16>
    %cst_192 = arith.constant dense<0.000000e+00> : vector<256x28xf32>
    %251 = tpu.matmul %248, %250, %cst_192 {dimension_numbers = #tpu.dot_dimension_numbers<[1], [0], [0], [1], [0, 0, 1, 1], [], []>} : vector<256x28xbf16>, vector<28x28xbf16>, vector<256x28xf32> -> vector<256x28xf32>
    %252 = arith.addf %245, %251 : vector<256x28xf32>
    %253 = vector.extract_strided_slice %197 {offsets = [2, 9, 0], sizes = [16, 16, 28], strides = [1, 1, 1]} : vector<18x25x28xf32> to vector<16x16x28xf32>
    %254 = vector.shape_cast %253 : vector<16x16x28xf32> to vector<256x28xf32>
    %255 = arith.truncf %254 : vector<256x28xf32> to vector<256x28xbf16>
    %c2_193 = arith.constant 2 : index
    %c2_194 = arith.constant 2 : index
    %c0_195 = arith.constant 0 : index
    %c0_196 = arith.constant 0 : index
    %256 = vector.load %arg6[%c2_193, %c2_194, %c0_195, %c0_196] : memref<3x3x28x28xbf16, #tpu.memory_space<vmem>>, vector<1x1x28x28xbf16>
    %257 = vector.shape_cast %256 : vector<1x1x28x28xbf16> to vector<28x28xbf16>
    %cst_197 = arith.constant dense<0.000000e+00> : vector<256x28xf32>
    %258 = tpu.matmul %255, %257, %cst_197 {dimension_numbers = #tpu.dot_dimension_numbers<[1], [0], [0], [1], [0, 0, 1, 1], [], []>} : vector<256x28xbf16>, vector<28x28xbf16>, vector<256x28xf32> -> vector<256x28xf32>
    %259 = arith.addf %252, %258 : vector<256x28xf32>
    %c0_198 = arith.constant 0 : index
    %c0_199 = arith.constant 0 : index
    %260 = vector.load %arg7[%c0_198, %c0_199] : memref<1x28xf32, #tpu.memory_space<vmem>>, vector<1x28xf32>
    %261 = vector.broadcast %260 : vector<1x28xf32> to vector<256x28xf32>
    %262 = arith.addf %259, %261 : vector<256x28xf32>
    %cst_200 = arith.constant 0.000000e+00 : f32
    %263 = vector.broadcast %cst_200 : f32 to vector<256x28xf32>
    %264 = arith.maximumf %262, %263 : vector<256x28xf32>
    %c0_201 = arith.constant 0 : index
    %c0_202 = arith.constant 0 : index
    %265 = vector.load %arg8[%c0_201, %c0_202] : memref<1x28xf32, #tpu.memory_space<vmem>>, vector<1x28xf32>
    %266 = vector.broadcast %265 : vector<1x28xf32> to vector<256x28xf32>
    %267 = arith.mulf %264, %266 : vector<256x28xf32>
    %c0_203 = arith.constant 0 : index
    %c0_204 = arith.constant 0 : index
    %268 = vector.load %arg9[%c0_203, %c0_204] : memref<1x28xf32, #tpu.memory_space<vmem>>, vector<1x28xf32>
    %269 = vector.broadcast %268 : vector<1x28xf32> to vector<256x28xf32>
    %270 = arith.addf %267, %269 : vector<256x28xf32>
    %271 = vector.shape_cast %270 : vector<256x28xf32> to vector<16x16x28xf32>
    %c1_205 = arith.constant 1 : index
    %c8_206 = arith.constant 8 : index
    %c0_207 = arith.constant 0 : index
    %272 = vector.load %arg18[%c1_205, %c8_206, %c0_207] : memref<18x25x28xf32, #tpu.memory_space<vmem>>, vector<16x16x28xf32>
    tpu.vector_store %arg18[%c1_205, %c8_206, %c0_207], %271 {strides = array<i32>} : memref<18x25x28xf32, #tpu.memory_space<vmem>>, vector<16x16x28xf32>,
    %c0_208 = arith.constant 0 : index
    %c0_209 = arith.constant 0 : index
    %c0_210 = arith.constant 0 : index
    %273 = vector.load %arg18[%c0_208, %c0_209, %c0_210] : memref<18x25x28xf32, #tpu.memory_space<vmem>>, vector<18x25x28xf32>
    %274 = vector.extract_strided_slice %273 {offsets = [0, 7, 0], sizes = [16, 16, 28], strides = [1, 1, 1]} : vector<18x25x28xf32> to vector<16x16x28xf32>
    %275 = vector.shape_cast %274 : vector<16x16x28xf32> to vector<256x28xf32>
    %276 = arith.truncf %275 : vector<256x28xf32> to vector<256x28xbf16>
    %c0_211 = arith.constant 0 : index
    %c0_212 = arith.constant 0 : index
    %c0_213 = arith.constant 0 : index
    %c0_214 = arith.constant 0 : index
    %277 = vector.load %arg10[%c0_211, %c0_212, %c0_213, %c0_214] : memref<3x3x28x16xbf16, #tpu.memory_space<vmem>>, vector<1x1x28x16xbf16>
    %278 = vector.shape_cast %277 : vector<1x1x28x16xbf16> to vector<28x16xbf16>
    %cst_215 = arith.constant dense<0.000000e+00> : vector<256x16xf32>
    %279 = tpu.matmul %276, %278, %cst_215 {dimension_numbers = #tpu.dot_dimension_numbers<[1], [0], [0], [1], [0, 0, 1, 1], [], []>} : vector<256x28xbf16>, vector<28x16xbf16>, vector<256x16xf32> -> vector<256x16xf32>
    %280 = vector.extract_strided_slice %273 {offsets = [0, 8, 0], sizes = [16, 16, 28], strides = [1, 1, 1]} : vector<18x25x28xf32> to vector<16x16x28xf32>
    %281 = vector.shape_cast %280 : vector<16x16x28xf32> to vector<256x28xf32>
    %282 = arith.truncf %281 : vector<256x28xf32> to vector<256x28xbf16>
    %c0_216 = arith.constant 0 : index
    %c1_217 = arith.constant 1 : index
    %c0_218 = arith.constant 0 : index
    %c0_219 = arith.constant 0 : index
    %283 = vector.load %arg10[%c0_216, %c1_217, %c0_218, %c0_219] : memref<3x3x28x16xbf16, #tpu.memory_space<vmem>>, vector<1x1x28x16xbf16>
    %284 = vector.shape_cast %283 : vector<1x1x28x16xbf16> to vector<28x16xbf16>
    %cst_220 = arith.constant dense<0.000000e+00> : vector<256x16xf32>
    %285 = tpu.matmul %282, %284, %cst_220 {dimension_numbers = #tpu.dot_dimension_numbers<[1], [0], [0], [1], [0, 0, 1, 1], [], []>} : vector<256x28xbf16>, vector<28x16xbf16>, vector<256x16xf32> -> vector<256x16xf32>
    %286 = arith.addf %279, %285 : vector<256x16xf32>
    %287 = vector.extract_strided_slice %273 {offsets = [0, 9, 0], sizes = [16, 16, 28], strides = [1, 1, 1]} : vector<18x25x28xf32> to vector<16x16x28xf32>
    %288 = vector.shape_cast %287 : vector<16x16x28xf32> to vector<256x28xf32>
    %289 = arith.truncf %288 : vector<256x28xf32> to vector<256x28xbf16>
    %c0_221 = arith.constant 0 : index
    %c2_222 = arith.constant 2 : index
    %c0_223 = arith.constant 0 : index
    %c0_224 = arith.constant 0 : index
    %290 = vector.load %arg10[%c0_221, %c2_222, %c0_223, %c0_224] : memref<3x3x28x16xbf16, #tpu.memory_space<vmem>>, vector<1x1x28x16xbf16>
    %291 = vector.shape_cast %290 : vector<1x1x28x16xbf16> to vector<28x16xbf16>
    %cst_225 = arith.constant dense<0.000000e+00> : vector<256x16xf32>
    %292 = tpu.matmul %289, %291, %cst_225 {dimension_numbers = #tpu.dot_dimension_numbers<[1], [0], [0], [1], [0, 0, 1, 1], [], []>} : vector<256x28xbf16>, vector<28x16xbf16>, vector<256x16xf32> -> vector<256x16xf32>
    %293 = arith.addf %286, %292 : vector<256x16xf32>
    %294 = vector.extract_strided_slice %273 {offsets = [1, 7, 0], sizes = [16, 16, 28], strides = [1, 1, 1]} : vector<18x25x28xf32> to vector<16x16x28xf32>
    %295 = vector.shape_cast %294 : vector<16x16x28xf32> to vector<256x28xf32>
    %296 = arith.truncf %295 : vector<256x28xf32> to vector<256x28xbf16>
    %c1_226 = arith.constant 1 : index
    %c0_227 = arith.constant 0 : index
    %c0_228 = arith.constant 0 : index
    %c0_229 = arith.constant 0 : index
    %297 = vector.load %arg10[%c1_226, %c0_227, %c0_228, %c0_229] : memref<3x3x28x16xbf16, #tpu.memory_space<vmem>>, vector<1x1x28x16xbf16>
    %298 = vector.shape_cast %297 : vector<1x1x28x16xbf16> to vector<28x16xbf16>
    %cst_230 = arith.constant dense<0.000000e+00> : vector<256x16xf32>
    %299 = tpu.matmul %296, %298, %cst_230 {dimension_numbers = #tpu.dot_dimension_numbers<[1], [0], [0], [1], [0, 0, 1, 1], [], []>} : vector<256x28xbf16>, vector<28x16xbf16>, vector<256x16xf32> -> vector<256x16xf32>
    %300 = arith.addf %293, %299 : vector<256x16xf32>
    %301 = vector.extract_strided_slice %273 {offsets = [1, 8, 0], sizes = [16, 16, 28], strides = [1, 1, 1]} : vector<18x25x28xf32> to vector<16x16x28xf32>
    %302 = vector.shape_cast %301 : vector<16x16x28xf32> to vector<256x28xf32>
    %303 = arith.truncf %302 : vector<256x28xf32> to vector<256x28xbf16>
    %c1_231 = arith.constant 1 : index
    %c1_232 = arith.constant 1 : index
    %c0_233 = arith.constant 0 : index
    %c0_234 = arith.constant 0 : index
    %304 = vector.load %arg10[%c1_231, %c1_232, %c0_233, %c0_234] : memref<3x3x28x16xbf16, #tpu.memory_space<vmem>>, vector<1x1x28x16xbf16>
    %305 = vector.shape_cast %304 : vector<1x1x28x16xbf16> to vector<28x16xbf16>
    %cst_235 = arith.constant dense<0.000000e+00> : vector<256x16xf32>
    %306 = tpu.matmul %303, %305, %cst_235 {dimension_numbers = #tpu.dot_dimension_numbers<[1], [0], [0], [1], [0, 0, 1, 1], [], []>} : vector<256x28xbf16>, vector<28x16xbf16>, vector<256x16xf32> -> vector<256x16xf32>
    %307 = arith.addf %300, %306 : vector<256x16xf32>
    %308 = vector.extract_strided_slice %273 {offsets = [1, 9, 0], sizes = [16, 16, 28], strides = [1, 1, 1]} : vector<18x25x28xf32> to vector<16x16x28xf32>
    %309 = vector.shape_cast %308 : vector<16x16x28xf32> to vector<256x28xf32>
    %310 = arith.truncf %309 : vector<256x28xf32> to vector<256x28xbf16>
    %c1_236 = arith.constant 1 : index
    %c2_237 = arith.constant 2 : index
    %c0_238 = arith.constant 0 : index
    %c0_239 = arith.constant 0 : index
    %311 = vector.load %arg10[%c1_236, %c2_237, %c0_238, %c0_239] : memref<3x3x28x16xbf16, #tpu.memory_space<vmem>>, vector<1x1x28x16xbf16>
    %312 = vector.shape_cast %311 : vector<1x1x28x16xbf16> to vector<28x16xbf16>
    %cst_240 = arith.constant dense<0.000000e+00> : vector<256x16xf32>
    %313 = tpu.matmul %310, %312, %cst_240 {dimension_numbers = #tpu.dot_dimension_numbers<[1], [0], [0], [1], [0, 0, 1, 1], [], []>} : vector<256x28xbf16>, vector<28x16xbf16>, vector<256x16xf32> -> vector<256x16xf32>
    %314 = arith.addf %307, %313 : vector<256x16xf32>
    %315 = vector.extract_strided_slice %273 {offsets = [2, 7, 0], sizes = [16, 16, 28], strides = [1, 1, 1]} : vector<18x25x28xf32> to vector<16x16x28xf32>
    %316 = vector.shape_cast %315 : vector<16x16x28xf32> to vector<256x28xf32>
    %317 = arith.truncf %316 : vector<256x28xf32> to vector<256x28xbf16>
    %c2_241 = arith.constant 2 : index
    %c0_242 = arith.constant 0 : index
    %c0_243 = arith.constant 0 : index
    %c0_244 = arith.constant 0 : index
    %318 = vector.load %arg10[%c2_241, %c0_242, %c0_243, %c0_244] : memref<3x3x28x16xbf16, #tpu.memory_space<vmem>>, vector<1x1x28x16xbf16>
    %319 = vector.shape_cast %318 : vector<1x1x28x16xbf16> to vector<28x16xbf16>
    %cst_245 = arith.constant dense<0.000000e+00> : vector<256x16xf32>
    %320 = tpu.matmul %317, %319, %cst_245 {dimension_numbers = #tpu.dot_dimension_numbers<[1], [0], [0], [1], [0, 0, 1, 1], [], []>} : vector<256x28xbf16>, vector<28x16xbf16>, vector<256x16xf32> -> vector<256x16xf32>
    %321 = arith.addf %314, %320 : vector<256x16xf32>
    %322 = vector.extract_strided_slice %273 {offsets = [2, 8, 0], sizes = [16, 16, 28], strides = [1, 1, 1]} : vector<18x25x28xf32> to vector<16x16x28xf32>
    %323 = vector.shape_cast %322 : vector<16x16x28xf32> to vector<256x28xf32>
    %324 = arith.truncf %323 : vector<256x28xf32> to vector<256x28xbf16>
    %c2_246 = arith.constant 2 : index
    %c1_247 = arith.constant 1 : index
    %c0_248 = arith.constant 0 : index
    %c0_249 = arith.constant 0 : index
    %325 = vector.load %arg10[%c2_246, %c1_247, %c0_248, %c0_249] : memref<3x3x28x16xbf16, #tpu.memory_space<vmem>>, vector<1x1x28x16xbf16>
    %326 = vector.shape_cast %325 : vector<1x1x28x16xbf16> to vector<28x16xbf16>
    %cst_250 = arith.constant dense<0.000000e+00> : vector<256x16xf32>
    %327 = tpu.matmul %324, %326, %cst_250 {dimension_numbers = #tpu.dot_dimension_numbers<[1], [0], [0], [1], [0, 0, 1, 1], [], []>} : vector<256x28xbf16>, vector<28x16xbf16>, vector<256x16xf32> -> vector<256x16xf32>
    %328 = arith.addf %321, %327 : vector<256x16xf32>
    %329 = vector.extract_strided_slice %273 {offsets = [2, 9, 0], sizes = [16, 16, 28], strides = [1, 1, 1]} : vector<18x25x28xf32> to vector<16x16x28xf32>
    %330 = vector.shape_cast %329 : vector<16x16x28xf32> to vector<256x28xf32>
    %331 = arith.truncf %330 : vector<256x28xf32> to vector<256x28xbf16>
    %c2_251 = arith.constant 2 : index
    %c2_252 = arith.constant 2 : index
    %c0_253 = arith.constant 0 : index
    %c0_254 = arith.constant 0 : index
    %332 = vector.load %arg10[%c2_251, %c2_252, %c0_253, %c0_254] : memref<3x3x28x16xbf16, #tpu.memory_space<vmem>>, vector<1x1x28x16xbf16>
    %333 = vector.shape_cast %332 : vector<1x1x28x16xbf16> to vector<28x16xbf16>
    %cst_255 = arith.constant dense<0.000000e+00> : vector<256x16xf32>
    %334 = tpu.matmul %331, %333, %cst_255 {dimension_numbers = #tpu.dot_dimension_numbers<[1], [0], [0], [1], [0, 0, 1, 1], [], []>} : vector<256x28xbf16>, vector<28x16xbf16>, vector<256x16xf32> -> vector<256x16xf32>
    %335 = arith.addf %328, %334 : vector<256x16xf32>
    %c0_256 = arith.constant 0 : index
    %c0_257 = arith.constant 0 : index
    %336 = vector.load %arg11[%c0_256, %c0_257] : memref<1x16xf32, #tpu.memory_space<vmem>>, vector<1x16xf32>
    %337 = vector.broadcast %336 : vector<1x16xf32> to vector<256x16xf32>
    %338 = arith.addf %335, %337 : vector<256x16xf32>
    %cst_258 = arith.constant 0.000000e+00 : f32
    %339 = vector.broadcast %cst_258 : f32 to vector<256x16xf32>
    %340 = arith.maximumf %338, %339 : vector<256x16xf32>
    %c0_259 = arith.constant 0 : index
    %c0_260 = arith.constant 0 : index
    %341 = vector.load %arg12[%c0_259, %c0_260] : memref<1x16xf32, #tpu.memory_space<vmem>>, vector<1x16xf32>
    %342 = vector.broadcast %341 : vector<1x16xf32> to vector<256x16xf32>
    %343 = arith.mulf %340, %342 : vector<256x16xf32>
    %c0_261 = arith.constant 0 : index
    %c0_262 = arith.constant 0 : index
    %344 = vector.load %arg13[%c0_261, %c0_262] : memref<1x16xf32, #tpu.memory_space<vmem>>, vector<1x16xf32>
    %345 = vector.broadcast %344 : vector<1x16xf32> to vector<256x16xf32>
    %346 = arith.addf %343, %345 : vector<256x16xf32>
    %347 = vector.shape_cast %346 : vector<256x16xf32> to vector<16x16x16xf32>
    %c1_263 = arith.constant 1 : index
    %c8_264 = arith.constant 8 : index
    %c0_265 = arith.constant 0 : index
    %348 = vector.load %arg19[%c1_263, %c8_264, %c0_265] : memref<18x25x16xf32, #tpu.memory_space<vmem>>, vector<16x16x16xf32>
    tpu.vector_store %arg19[%c1_263, %c8_264, %c0_265], %347 {strides = array<i32>} : memref<18x25x16xf32, #tpu.memory_space<vmem>>, vector<16x16x16xf32>,
    %c0_266 = arith.constant 0 : index
    %c0_267 = arith.constant 0 : index
    %c0_268 = arith.constant 0 : index
    %349 = vector.load %arg19[%c0_266, %c0_267, %c0_268] : memref<18x25x16xf32, #tpu.memory_space<vmem>>, vector<18x25x16xf32>
    %350 = vector.extract_strided_slice %349 {offsets = [0, 7, 0], sizes = [16, 16, 16], strides = [1, 1, 1]} : vector<18x25x16xf32> to vector<16x16x16xf32>
    %351 = vector.shape_cast %350 : vector<16x16x16xf32> to vector<256x16xf32>
    %352 = arith.truncf %351 : vector<256x16xf32> to vector<256x16xbf16>
    %c0_269 = arith.constant 0 : index
    %c0_270 = arith.constant 0 : index
    %c0_271 = arith.constant 0 : index
    %c0_272 = arith.constant 0 : index
    %353 = vector.load %arg14[%c0_269, %c0_270, %c0_271, %c0_272] : memref<3x3x16x48xbf16, #tpu.memory_space<vmem>>, vector<1x1x16x48xbf16>
    %354 = vector.shape_cast %353 : vector<1x1x16x48xbf16> to vector<16x48xbf16>
    %cst_273 = arith.constant dense<0.000000e+00> : vector<256x48xf32>
    %355 = tpu.matmul %352, %354, %cst_273 {dimension_numbers = #tpu.dot_dimension_numbers<[1], [0], [0], [1], [0, 0, 1, 1], [], []>} : vector<256x16xbf16>, vector<16x48xbf16>, vector<256x48xf32> -> vector<256x48xf32>
    %356 = vector.extract_strided_slice %349 {offsets = [0, 8, 0], sizes = [16, 16, 16], strides = [1, 1, 1]} : vector<18x25x16xf32> to vector<16x16x16xf32>
    %357 = vector.shape_cast %356 : vector<16x16x16xf32> to vector<256x16xf32>
    %358 = arith.truncf %357 : vector<256x16xf32> to vector<256x16xbf16>
    %c0_274 = arith.constant 0 : index
    %c1_275 = arith.constant 1 : index
    %c0_276 = arith.constant 0 : index
    %c0_277 = arith.constant 0 : index
    %359 = vector.load %arg14[%c0_274, %c1_275, %c0_276, %c0_277] : memref<3x3x16x48xbf16, #tpu.memory_space<vmem>>, vector<1x1x16x48xbf16>
    %360 = vector.shape_cast %359 : vector<1x1x16x48xbf16> to vector<16x48xbf16>
    %cst_278 = arith.constant dense<0.000000e+00> : vector<256x48xf32>
    %361 = tpu.matmul %358, %360, %cst_278 {dimension_numbers = #tpu.dot_dimension_numbers<[1], [0], [0], [1], [0, 0, 1, 1], [], []>} : vector<256x16xbf16>, vector<16x48xbf16>, vector<256x48xf32> -> vector<256x48xf32>
    %362 = arith.addf %355, %361 : vector<256x48xf32>
    %363 = vector.extract_strided_slice %349 {offsets = [0, 9, 0], sizes = [16, 16, 16], strides = [1, 1, 1]} : vector<18x25x16xf32> to vector<16x16x16xf32>
    %364 = vector.shape_cast %363 : vector<16x16x16xf32> to vector<256x16xf32>
    %365 = arith.truncf %364 : vector<256x16xf32> to vector<256x16xbf16>
    %c0_279 = arith.constant 0 : index
    %c2_280 = arith.constant 2 : index
    %c0_281 = arith.constant 0 : index
    %c0_282 = arith.constant 0 : index
    %366 = vector.load %arg14[%c0_279, %c2_280, %c0_281, %c0_282] : memref<3x3x16x48xbf16, #tpu.memory_space<vmem>>, vector<1x1x16x48xbf16>
    %367 = vector.shape_cast %366 : vector<1x1x16x48xbf16> to vector<16x48xbf16>
    %cst_283 = arith.constant dense<0.000000e+00> : vector<256x48xf32>
    %368 = tpu.matmul %365, %367, %cst_283 {dimension_numbers = #tpu.dot_dimension_numbers<[1], [0], [0], [1], [0, 0, 1, 1], [], []>} : vector<256x16xbf16>, vector<16x48xbf16>, vector<256x48xf32> -> vector<256x48xf32>
    %369 = arith.addf %362, %368 : vector<256x48xf32>
    %370 = vector.extract_strided_slice %349 {offsets = [1, 7, 0], sizes = [16, 16, 16], strides = [1, 1, 1]} : vector<18x25x16xf32> to vector<16x16x16xf32>
    %371 = vector.shape_cast %370 : vector<16x16x16xf32> to vector<256x16xf32>
    %372 = arith.truncf %371 : vector<256x16xf32> to vector<256x16xbf16>
    %c1_284 = arith.constant 1 : index
    %c0_285 = arith.constant 0 : index
    %c0_286 = arith.constant 0 : index
    %c0_287 = arith.constant 0 : index
    %373 = vector.load %arg14[%c1_284, %c0_285, %c0_286, %c0_287] : memref<3x3x16x48xbf16, #tpu.memory_space<vmem>>, vector<1x1x16x48xbf16>
    %374 = vector.shape_cast %373 : vector<1x1x16x48xbf16> to vector<16x48xbf16>
    %cst_288 = arith.constant dense<0.000000e+00> : vector<256x48xf32>
    %375 = tpu.matmul %372, %374, %cst_288 {dimension_numbers = #tpu.dot_dimension_numbers<[1], [0], [0], [1], [0, 0, 1, 1], [], []>} : vector<256x16xbf16>, vector<16x48xbf16>, vector<256x48xf32> -> vector<256x48xf32>
    %376 = arith.addf %369, %375 : vector<256x48xf32>
    %377 = vector.extract_strided_slice %349 {offsets = [1, 8, 0], sizes = [16, 16, 16], strides = [1, 1, 1]} : vector<18x25x16xf32> to vector<16x16x16xf32>
    %378 = vector.shape_cast %377 : vector<16x16x16xf32> to vector<256x16xf32>
    %379 = arith.truncf %378 : vector<256x16xf32> to vector<256x16xbf16>
    %c1_289 = arith.constant 1 : index
    %c1_290 = arith.constant 1 : index
    %c0_291 = arith.constant 0 : index
    %c0_292 = arith.constant 0 : index
    %380 = vector.load %arg14[%c1_289, %c1_290, %c0_291, %c0_292] : memref<3x3x16x48xbf16, #tpu.memory_space<vmem>>, vector<1x1x16x48xbf16>
    %381 = vector.shape_cast %380 : vector<1x1x16x48xbf16> to vector<16x48xbf16>
    %cst_293 = arith.constant dense<0.000000e+00> : vector<256x48xf32>
    %382 = tpu.matmul %379, %381, %cst_293 {dimension_numbers = #tpu.dot_dimension_numbers<[1], [0], [0], [1], [0, 0, 1, 1], [], []>} : vector<256x16xbf16>, vector<16x48xbf16>, vector<256x48xf32> -> vector<256x48xf32>
    %383 = arith.addf %376, %382 : vector<256x48xf32>
    %384 = vector.extract_strided_slice %349 {offsets = [1, 9, 0], sizes = [16, 16, 16], strides = [1, 1, 1]} : vector<18x25x16xf32> to vector<16x16x16xf32>
    %385 = vector.shape_cast %384 : vector<16x16x16xf32> to vector<256x16xf32>
    %386 = arith.truncf %385 : vector<256x16xf32> to vector<256x16xbf16>
    %c1_294 = arith.constant 1 : index
    %c2_295 = arith.constant 2 : index
    %c0_296 = arith.constant 0 : index
    %c0_297 = arith.constant 0 : index
    %387 = vector.load %arg14[%c1_294, %c2_295, %c0_296, %c0_297] : memref<3x3x16x48xbf16, #tpu.memory_space<vmem>>, vector<1x1x16x48xbf16>
    %388 = vector.shape_cast %387 : vector<1x1x16x48xbf16> to vector<16x48xbf16>
    %cst_298 = arith.constant dense<0.000000e+00> : vector<256x48xf32>
    %389 = tpu.matmul %386, %388, %cst_298 {dimension_numbers = #tpu.dot_dimension_numbers<[1], [0], [0], [1], [0, 0, 1, 1], [], []>} : vector<256x16xbf16>, vector<16x48xbf16>, vector<256x48xf32> -> vector<256x48xf32>
    %390 = arith.addf %383, %389 : vector<256x48xf32>
    %391 = vector.extract_strided_slice %349 {offsets = [2, 7, 0], sizes = [16, 16, 16], strides = [1, 1, 1]} : vector<18x25x16xf32> to vector<16x16x16xf32>
    %392 = vector.shape_cast %391 : vector<16x16x16xf32> to vector<256x16xf32>
    %393 = arith.truncf %392 : vector<256x16xf32> to vector<256x16xbf16>
    %c2_299 = arith.constant 2 : index
    %c0_300 = arith.constant 0 : index
    %c0_301 = arith.constant 0 : index
    %c0_302 = arith.constant 0 : index
    %394 = vector.load %arg14[%c2_299, %c0_300, %c0_301, %c0_302] : memref<3x3x16x48xbf16, #tpu.memory_space<vmem>>, vector<1x1x16x48xbf16>
    %395 = vector.shape_cast %394 : vector<1x1x16x48xbf16> to vector<16x48xbf16>
    %cst_303 = arith.constant dense<0.000000e+00> : vector<256x48xf32>
    %396 = tpu.matmul %393, %395, %cst_303 {dimension_numbers = #tpu.dot_dimension_numbers<[1], [0], [0], [1], [0, 0, 1, 1], [], []>} : vector<256x16xbf16>, vector<16x48xbf16>, vector<256x48xf32> -> vector<256x48xf32>
    %397 = arith.addf %390, %396 : vector<256x48xf32>
    %398 = vector.extract_strided_slice %349 {offsets = [2, 8, 0], sizes = [16, 16, 16], strides = [1, 1, 1]} : vector<18x25x16xf32> to vector<16x16x16xf32>
    %399 = vector.shape_cast %398 : vector<16x16x16xf32> to vector<256x16xf32>
    %400 = arith.truncf %399 : vector<256x16xf32> to vector<256x16xbf16>
    %c2_304 = arith.constant 2 : index
    %c1_305 = arith.constant 1 : index
    %c0_306 = arith.constant 0 : index
    %c0_307 = arith.constant 0 : index
    %401 = vector.load %arg14[%c2_304, %c1_305, %c0_306, %c0_307] : memref<3x3x16x48xbf16, #tpu.memory_space<vmem>>, vector<1x1x16x48xbf16>
    %402 = vector.shape_cast %401 : vector<1x1x16x48xbf16> to vector<16x48xbf16>
    %cst_308 = arith.constant dense<0.000000e+00> : vector<256x48xf32>
    %403 = tpu.matmul %400, %402, %cst_308 {dimension_numbers = #tpu.dot_dimension_numbers<[1], [0], [0], [1], [0, 0, 1, 1], [], []>} : vector<256x16xbf16>, vector<16x48xbf16>, vector<256x48xf32> -> vector<256x48xf32>
    %404 = arith.addf %397, %403 : vector<256x48xf32>
    %405 = vector.extract_strided_slice %349 {offsets = [2, 9, 0], sizes = [16, 16, 16], strides = [1, 1, 1]} : vector<18x25x16xf32> to vector<16x16x16xf32>
    %406 = vector.shape_cast %405 : vector<16x16x16xf32> to vector<256x16xf32>
    %407 = arith.truncf %406 : vector<256x16xf32> to vector<256x16xbf16>
    %c2_309 = arith.constant 2 : index
    %c2_310 = arith.constant 2 : index
    %c0_311 = arith.constant 0 : index
    %c0_312 = arith.constant 0 : index
    %408 = vector.load %arg14[%c2_309, %c2_310, %c0_311, %c0_312] : memref<3x3x16x48xbf16, #tpu.memory_space<vmem>>, vector<1x1x16x48xbf16>
    %409 = vector.shape_cast %408 : vector<1x1x16x48xbf16> to vector<16x48xbf16>
    %cst_313 = arith.constant dense<0.000000e+00> : vector<256x48xf32>
    %410 = tpu.matmul %407, %409, %cst_313 {dimension_numbers = #tpu.dot_dimension_numbers<[1], [0], [0], [1], [0, 0, 1, 1], [], []>} : vector<256x16xbf16>, vector<16x48xbf16>, vector<256x48xf32> -> vector<256x48xf32>
    %411 = arith.addf %404, %410 : vector<256x48xf32>
    %c0_314 = arith.constant 0 : index
    %c0_315 = arith.constant 0 : index
    %412 = vector.load %arg15[%c0_314, %c0_315] : memref<1x48xf32, #tpu.memory_space<vmem>>, vector<1x48xf32>
    %413 = vector.broadcast %412 : vector<1x48xf32> to vector<256x48xf32>
    %414 = arith.addf %411, %413 : vector<256x48xf32>
    %c0_316 = arith.constant 0 : index
    %c0_317 = arith.constant 0 : index
    %c0_318 = arith.constant 0 : index
    %415 = vector.load %arg16[%c0_316, %c0_317, %c0_318] : memref<1x256x48xf32, #tpu.memory_space<vmem>>, vector<1x256x48xf32>
    %416 = vector.shape_cast %415 : vector<1x256x48xf32> to vector<256x48xf32>
    %417 = vector.shape_cast %414 : vector<256x48xf32> to vector<1x256x48xf32>
    tpu.vector_store %arg16[%c0_316, %c0_317, %c0_318], %417 {strides = array<i32>} : memref<1x256x48xf32, #tpu.memory_space<vmem>>, vector<1x256x48xf32>,
    return
  }
  func.func @transform_0(%arg0: i32) -> (i32, i32, i32, i32) {
    %c0_i32 = arith.constant 0 : i32
    %c0_i32_0 = arith.constant 0 : i32
    %c0_i32_1 = arith.constant 0 : i32
    %c0_i32_2 = arith.constant 0 : i32
    return %arg0, %c0_i32, %c0_i32_0, %c0_i32_1 : i32, i32, i32, i32
  }
  func.func @transform_1(%arg0: i32) -> (i32, i32, i32, i32) {
    %c0_i32 = arith.constant 0 : i32
    %c0_i32_0 = arith.constant 0 : i32
    %c0_i32_1 = arith.constant 0 : i32
    %c0_i32_2 = arith.constant 0 : i32
    %c0_i32_3 = arith.constant 0 : i32
    return %c0_i32, %c0_i32_0, %c0_i32_1, %c0_i32_2 : i32, i32, i32, i32
  }
  func.func @transform_2(%arg0: i32) -> (i32, i32) {
    %c0_i32 = arith.constant 0 : i32
    %c0_i32_0 = arith.constant 0 : i32
    %c0_i32_1 = arith.constant 0 : i32
    return %c0_i32, %c0_i32_0 : i32, i32
  }
  func.func @transform_3(%arg0: i32) -> (i32, i32) {
    %c0_i32 = arith.constant 0 : i32
    %c0_i32_0 = arith.constant 0 : i32
    %c0_i32_1 = arith.constant 0 : i32
    return %c0_i32, %c0_i32_0 : i32, i32
  }
  func.func @transform_4(%arg0: i32) -> (i32, i32) {
    %c0_i32 = arith.constant 0 : i32
    %c0_i32_0 = arith.constant 0 : i32
    %c0_i32_1 = arith.constant 0 : i32
    return %c0_i32, %c0_i32_0 : i32, i32
  }
  func.func @transform_5(%arg0: i32) -> (i32, i32, i32, i32) {
    %c0_i32 = arith.constant 0 : i32
    %c0_i32_0 = arith.constant 0 : i32
    %c0_i32_1 = arith.constant 0 : i32
    %c0_i32_2 = arith.constant 0 : i32
    %c0_i32_3 = arith.constant 0 : i32
    return %c0_i32, %c0_i32_0, %c0_i32_1, %c0_i32_2 : i32, i32, i32, i32
  }
  func.func @transform_6(%arg0: i32) -> (i32, i32) {
    %c0_i32 = arith.constant 0 : i32
    %c0_i32_0 = arith.constant 0 : i32
    %c0_i32_1 = arith.constant 0 : i32
    return %c0_i32, %c0_i32_0 : i32, i32
  }
  func.func @transform_7(%arg0: i32) -> (i32, i32) {
    %c0_i32 = arith.constant 0 : i32
    %c0_i32_0 = arith.constant 0 : i32
    %c0_i32_1 = arith.constant 0 : i32
    return %c0_i32, %c0_i32_0 : i32, i32
  }
  func.func @transform_8(%arg0: i32) -> (i32, i32) {
    %c0_i32 = arith.constant 0 : i32
    %c0_i32_0 = arith.constant 0 : i32
    %c0_i32_1 = arith.constant 0 : i32
    return %c0_i32, %c0_i32_0 : i32, i32
  }
  func.func @transform_9(%arg0: i32) -> (i32, i32, i32, i32) {
    %c0_i32 = arith.constant 0 : i32
    %c0_i32_0 = arith.constant 0 : i32
    %c0_i32_1 = arith.constant 0 : i32
    %c0_i32_2 = arith.constant 0 : i32
    %c0_i32_3 = arith.constant 0 : i32
    return %c0_i32, %c0_i32_0, %c0_i32_1, %c0_i32_2 : i32, i32, i32, i32
  }
  func.func @transform_10(%arg0: i32) -> (i32, i32) {
    %c0_i32 = arith.constant 0 : i32
    %c0_i32_0 = arith.constant 0 : i32
    %c0_i32_1 = arith.constant 0 : i32
    return %c0_i32, %c0_i32_0 : i32, i32
  }
  func.func @transform_11(%arg0: i32) -> (i32, i32) {
    %c0_i32 = arith.constant 0 : i32
    %c0_i32_0 = arith.constant 0 : i32
    %c0_i32_1 = arith.constant 0 : i32
    return %c0_i32, %c0_i32_0 : i32, i32
  }
  func.func @transform_12(%arg0: i32) -> (i32, i32) {
    %c0_i32 = arith.constant 0 : i32
    %c0_i32_0 = arith.constant 0 : i32
    %c0_i32_1 = arith.constant 0 : i32
    return %c0_i32, %c0_i32_0 : i32, i32
  }
  func.func @transform_13(%arg0: i32) -> (i32, i32, i32, i32) {
    %c0_i32 = arith.constant 0 : i32
    %c0_i32_0 = arith.constant 0 : i32
    %c0_i32_1 = arith.constant 0 : i32
    %c0_i32_2 = arith.constant 0 : i32
    %c0_i32_3 = arith.constant 0 : i32
    return %c0_i32, %c0_i32_0, %c0_i32_1, %c0_i32_2 : i32, i32, i32, i32
  }
  func.func @transform_14(%arg0: i32) -> (i32, i32) {
    %c0_i32 = arith.constant 0 : i32
    %c0_i32_0 = arith.constant 0 : i32
    %c0_i32_1 = arith.constant 0 : i32
    return %c0_i32, %c0_i32_0 : i32, i32
  }
  func.func @transform_15(%arg0: i32) -> (i32, i32, i32) {
    %c0_i32 = arith.constant 0 : i32
    %c0_i32_0 = arith.constant 0 : i32
    %c0_i32_1 = arith.constant 0 : i32
    return %arg0, %c0_i32, %c0_i32_0 : i32, i32, i32
  }
}

</mosaic_0001>

<llo_original>
// kernel: lwsrcnn_forward.1
$region0: #{lwsrcnn_forward.1}
  #allocation0 [shape = 'u32[]', space=smem, size = 0x4, offset = 0x4, fixed_abs, tag = 'smem constant byte address 0x4 - core index']
  #allocation1 [shape = 'u32[72,128]{1,0:T(1,128)}', space=vmem, size = 0x9000, scoped, tag = 'internal scratch']
  #allocation2 [shape = 'f32[20,26,3]{2,1,0:T(8,128)}', space=vmem, size = 0x50000, scoped, tag = 'scratch operand']
  #allocation3 [shape = 'f32[18,25,28]{2,1,0:T(8,128)}', space=vmem, size = 0x48000, scoped, tag = 'scratch operand']
  #allocation4 [shape = 'f32[18,25,16]{2,1,0:T(8,128)}', space=vmem, size = 0x48000, scoped, tag = 'scratch operand']
  %s0 = inlined_call_operand.vmem [shape: f32[2,16,16,3], index: 0, kind: input, shape index: {}]
  %s1 = inlined_call_operand.vmem [shape: bf16[5,5,3,28], index: 1, kind: input, shape index: {}]
  %s2 = inlined_call_operand.hbm [shape: f32[1,28], index: 2, kind: input, shape index: {}]
  %s3 = inlined_call_operand.vmem [shape: f32[1,28], index: 3, kind: input, shape index: {}]
  %s4 = inlined_call_operand.vmem [shape: f32[1,28], index: 4, kind: input, shape index: {}]
  %s5 = inlined_call_operand.vmem [shape: bf16[3,3,28,28], index: 5, kind: input, shape index: {}]
  %s6 = inlined_call_operand.hbm [shape: f32[1,28], index: 6, kind: input, shape index: {}]
  %s7 = inlined_call_operand.vmem [shape: f32[1,28], index: 7, kind: input, shape index: {}]
  %s8 = inlined_call_operand.vmem [shape: f32[1,28], index: 8, kind: input, shape index: {}]
  %s9 = inlined_call_operand.vmem [shape: bf16[3,3,28,16], index: 9, kind: input, shape index: {}]
  %s10 = inlined_call_operand.hbm [shape: f32[1,16], index: 10, kind: input, shape index: {}]
  %s11 = inlined_call_operand.vmem [shape: f32[1,16], index: 11, kind: input, shape index: {}]
  %s12 = inlined_call_operand.vmem [shape: f32[1,16], index: 12, kind: input, shape index: {}]
  %s13 = inlined_call_operand.vmem [shape: bf16[3,3,16,48], index: 13, kind: input, shape index: {}]
  %s14 = inlined_call_operand.hbm [shape: f32[1,48], index: 14, kind: input, shape index: {}]
  %s15 = inlined_call_operand.vmem [shape: f32[2,256,48], index: 15, kind: output, shape index: {}]
  %s16 = sld [smem:[#allocation0]]
  $region109: #{lwsrcnn_forward.1} parent=0
    _
  %s18 = ssub.s32 1, %s16
  %s19 = scalar_select 0, %s18, %s16
  $region1: #{lwsrcnn_forward.1} parent=0
    #allocation5 [shape = 'u8[512]{0}', space=vmem, size = 0x400, scoped, tag = 'input window, operand 2, single buffered']
    #allocation6 [shape = 's32[2]{0}', space=sflag, size = 0x8, scoped, tag = 'scoped memory for lwsrcnn_forward.1']
    #allocation7 [shape = 'u8[512]{0}', space=vmem, size = 0x400, scoped, tag = 'input window, operand 6, single buffered']
    #allocation8 [shape = 's32[1]{0}', space=sflag, size = 0x4, scoped, tag = 'scoped memory for lwsrcnn_forward.1']
    #allocation9 [shape = 'u8[512]{0}', space=vmem, size = 0x400, scoped, tag = 'input window, operand 10, single buffered']
    #allocation10 [shape = 'u8[512]{0}', space=vmem, size = 0x400, scoped, tag = 'input window, operand 14, single buffered']
    #allocation11 [shape = 's32[1]{0}', space=sflag, size = 0x4, scoped, tag = 'scoped memory for lwsrcnn_forward.1']
    %20 = vsyncpa [#allocation6], 0
    %21 = vsyncpa [#allocation8], 0
    %22 = vsyncpa [#allocation11], 0
    loop: start=0, step=1, limit=4
    $region2: #{lwsrcnn_forward.1} parent=1 // loop_pre_header
      _
    $region3: #{lwsrcnn_forward.1} parent=1 // loop_header
      %s24 = sphi 0, %s28
      %p25 = scmp.ge.s32.totalorder %s24, 4
      %s34 = sphi 0, %s36
      %s37 = sphi 0, %s34
      %s38 = sphi 0, %s37
      %s54 = sphi 0, %s38
      %s58 = sphi 0, %s58
      %s60 = sphi 0, %s58
      %s61 = sphi 0, %s60
      %s75 = sphi 0, %s61
      %s79 = sphi 0, %s79
      %s81 = sphi 0, %s79
      %s82 = sphi 0, %s81
      %s96 = sphi 0, %s82
      %s100 = sphi 0, %s100
      %s102 = sphi 0, %s100
      %s103 = sphi 0, %s102
      %s117 = sphi 0, %s103
      %s121 = sphi 0, %s121
      %s123 = sphi 0, %s121
      %s124 = sphi 0, %s123
      %s138 = sphi 0, %s124
      %s142 = sphi 0, %s142
      %s144 = sphi 0, %s142
      %s145 = sphi 0, %s144
      %s159 = sphi 0, %s145
      %s163 = sphi 0, %s163
      %s165 = sphi 0, %s163
      %s166 = sphi 0, %s165
      %s180 = sphi 0, %s166
      %s184 = sphi 0, %s184
      %s186 = sphi 0, %s184
      %s187 = sphi 0, %s186
      %s201 = sphi 0, %s187
      %s205 = sphi 0, %s205
      %s207 = sphi 0, %s205
      %s208 = sphi 0, %s207
      %s222 = sphi 0, %s208
      %s226 = sphi 0, %s226
      %s228 = sphi 0, %s226
      %s229 = sphi 0, %s228
      %s243 = sphi 0, %s229
      %s247 = sphi 0, %s247
      %s249 = sphi 0, %s247
      %s250 = sphi 0, %s249
      %s264 = sphi 0, %s250
      %s268 = sphi 0, %s268
      %s270 = sphi 0, %s268
      %s271 = sphi 0, %s270
      %s285 = sphi 0, %s271
      %s289 = sphi 0, %s289
      %s291 = sphi 0, %s289
      %s292 = sphi 0, %s291
      %s306 = sphi 0, %s292
      %s310 = sphi 0, %s310
      %s312 = sphi 0, %s310
      %s313 = sphi 0, %s312
      %s327 = sphi 0, %s313
      %s331 = sphi 0, %s331
      %s333 = sphi 0, %s331
      %s334 = sphi 0, %s333
      %s348 = sphi 0, %s334
      %s354 = sphi 0, %s356
      %s357 = sphi 0, %s354
      %s358 = sphi 0, %s357
      %s374 = sphi 0, %s358
    $region4: #{lwsrcnn_forward.1} parent=1 // loop_header_branch
      %27 = sbr.rel (%p25) target = $region8
    $region5: #{lwsrcnn_forward.1} parent=1 // loop_body
      %s29 = ssub.s32 %s24, 1
      %s30 = ssub.s32 %s24, 2
      %s31 = sadd.s32 %s24, 1
      %s32 = ssub.s32 %s24, %s31
      %p33 = scmp.eq.s32.totalorder %s32, 0
      %s35 = sadd.s32 %s34, 1
      %s36 = scalar_select %p33, %s34, %s35
      %p39 = pneg %p33
      %p40 = scmp.eq.s32.totalorder %s24, 1
      %p41 = por %p39, %p40
      %p42 = scmp.ne.s32.totalorder %s34, %s37
      %p43 = scmp.eq.s32.totalorder %s24, 0
      %p44 = por %p42, %p43
      %p45 = scmp.ne.s32.totalorder %s34, %s37
      %p46 = scmp.eq.s32.totalorder %s29, 1
      %p47 = por %p45, %p46
      %p48 = scmp.ne.s32.totalorder %s37, %s38
      %p49 = scmp.eq.s32.totalorder %s29, 0
      %p50 = por %p48, %p49
      %p51 = scmp.ne.s32.totalorder %s37, %s38
      %p52 = scmp.eq.s32.totalorder %s30, 1
      %p53 = por %p51, %p52
      %p55 = scmp.ne.s32.totalorder %s38, %s54
      %p56 = scmp.eq.s32.totalorder %s30, 0
      %p57 = por %p55, %p56
      %s59 = sadd.s32 %s58, 1
      %p62 = scmp.eq.s32.totalorder %s24, 1
      %p63 = scmp.ne.s32.totalorder %s58, %s60
      %p64 = scmp.eq.s32.totalorder %s24, 0
      %p65 = por %p63, %p64
      %p66 = scmp.ne.s32.totalorder %s58, %s60
      %p67 = scmp.eq.s32.totalorder %s29, 1
      %p68 = por %p66, %p67
      %p69 = scmp.ne.s32.totalorder %s60, %s61
      %p70 = scmp.eq.s32.totalorder %s29, 0
      %p71 = por %p69, %p70
      %p72 = scmp.ne.s32.totalorder %s60, %s61
      %p73 = scmp.eq.s32.totalorder %s30, 1
      %p74 = por %p72, %p73
      %p76 = scmp.ne.s32.totalorder %s61, %s75
      %p77 = scmp.eq.s32.totalorder %s30, 0
      %p78 = por %p76, %p77
      %s80 = sadd.s32 %s79, 1
      %p83 = scmp.eq.s32.totalorder %s24, 1
      %p84 = scmp.ne.s32.totalorder %s79, %s81
      %p85 = scmp.eq.s32.totalorder %s24, 0
      %p86 = por %p84, %p85
      %p87 = scmp.ne.s32.totalorder %s79, %s81
      %p88 = scmp.eq.s32.totalorder %s29, 1
      %p89 = por %p87, %p88
      %p90 = scmp.ne.s32.totalorder %s81, %s82
      %p91 = scmp.eq.s32.totalorder %s29, 0
      %p92 = por %p90, %p91
      %p93 = scmp.ne.s32.totalorder %s81, %s82
      %p94 = scmp.eq.s32.totalorder %s30, 1
      %p95 = por %p93, %p94
      %p97 = scmp.ne.s32.totalorder %s82, %s96
      %p98 = scmp.eq.s32.totalorder %s30, 0
      %p99 = por %p97, %p98
      %s101 = sadd.s32 %s100, 1
      %p104 = scmp.eq.s32.totalorder %s24, 1
      %p105 = scmp.ne.s32.totalorder %s100, %s102
      %p106 = scmp.eq.s32.totalorder %s24, 0
      %p107 = por %p105, %p106
      %p108 = scmp.ne.s32.totalorder %s100, %s102
      %p109 = scmp.eq.s32.totalorder %s29, 1
      %p110 = por %p108, %p109
      %p111 = scmp.ne.s32.totalorder %s102, %s103
      %p112 = scmp.eq.s32.totalorder %s29, 0
      %p113 = por %p111, %p112
      %p114 = scmp.ne.s32.totalorder %s102, %s103
      %p115 = scmp.eq.s32.totalorder %s30, 1
      %p116 = por %p114, %p115
      %p118 = scmp.ne.s32.totalorder %s103, %s117
      %p119 = scmp.eq.s32.totalorder %s30, 0
      %p120 = por %p118, %p119
      %s122 = sadd.s32 %s121, 1
      %p125 = scmp.eq.s32.totalorder %s24, 1
      %p126 = scmp.ne.s32.totalorder %s121, %s123
      %p127 = scmp.eq.s32.totalorder %s24, 0
      %p128 = por %p126, %p127
      %p129 = scmp.ne.s32.totalorder %s121, %s123
      %p130 = scmp.eq.s32.totalorder %s29, 1
      %p131 = por %p129, %p130
      %p132 = scmp.ne.s32.totalorder %s123, %s124
      %p133 = scmp.eq.s32.totalorder %s29, 0
      %p134 = por %p132, %p133
      %p135 = scmp.ne.s32.totalorder %s123, %s124
      %p136 = scmp.eq.s32.totalorder %s30, 1
      %p137 = por %p135, %p136
      %p139 = scmp.ne.s32.totalorder %s124, %s138
      %p140 = scmp.eq.s32.totalorder %s30, 0
      %p141 = por %p139, %p140
      %s143 = sadd.s32 %s142, 1
      %p146 = scmp.eq.s32.totalorder %s24, 1
      %p147 = scmp.ne.s32.totalorder %s142, %s144
      %p148 = scmp.eq.s32.totalorder %s24, 0
      %p149 = por %p147, %p148
      %p150 = scmp.ne.s32.totalorder %s142, %s144
      %p151 = scmp.eq.s32.totalorder %s29, 1
      %p152 = por %p150, %p151
      %p153 = scmp.ne.s32.totalorder %s144, %s145
      %p154 = scmp.eq.s32.totalorder %s29, 0
      %p155 = por %p153, %p154
      %p156 = scmp.ne.s32.totalorder %s144, %s145
      %p157 = scmp.eq.s32.totalorder %s30, 1
      %p158 = por %p156, %p157
      %p160 = scmp.ne.s32.totalorder %s145, %s159
      %p161 = scmp.eq.s32.totalorder %s30, 0
      %p162 = por %p160, %p161
      %s164 = sadd.s32 %s163, 1
      %p167 = scmp.eq.s32.totalorder %s24, 1
      %p168 = scmp.ne.s32.totalorder %s163, %s165
      %p169 = scmp.eq.s32.totalorder %s24, 0
      %p170 = por %p168, %p169
      %p171 = scmp.ne.s32.totalorder %s163, %s165
      %p172 = scmp.eq.s32.totalorder %s29, 1
      %p173 = por %p171, %p172
      %p174 = scmp.ne.s32.totalorder %s165, %s166
      %p175 = scmp.eq.s32.totalorder %s29, 0
      %p176 = por %p174, %p175
      %p177 = scmp.ne.s32.totalorder %s165, %s166
      %p178 = scmp.eq.s32.totalorder %s30, 1
      %p179 = por %p177, %p178
      %p181 = scmp.ne.s32.totalorder %s166, %s180
      %p182 = scmp.eq.s32.totalorder %s30, 0
      %p183 = por %p181, %p182
      %s185 = sadd.s32 %s184, 1
      %p188 = scmp.eq.s32.totalorder %s24, 1
      %p189 = scmp.ne.s32.totalorder %s184, %s186
      %p190 = scmp.eq.s32.totalorder %s24, 0
      %p191 = por %p189, %p190
      %p192 = scmp.ne.s32.totalorder %s184, %s186
      %p193 = scmp.eq.s32.totalorder %s29, 1
      %p194 = por %p192, %p193
      %p195 = scmp.ne.s32.totalorder %s186, %s187
      %p196 = scmp.eq.s32.totalorder %s29, 0
      %p197 = por %p195, %p196
      %p198 = scmp.ne.s32.totalorder %s186, %s187
      %p199 = scmp.eq.s32.totalorder %s30, 1
      %p200 = por %p198, %p199
      %p202 = scmp.ne.s32.totalorder %s187, %s201
      %p203 = scmp.eq.s32.totalorder %s30, 0
      %p204 = por %p202, %p203
      %s206 = sadd.s32 %s205, 1
      %p209 = scmp.eq.s32.totalorder %s24, 1
      %p210 = scmp.ne.s32.totalorder %s205, %s207
      %p211 = scmp.eq.s32.totalorder %s24, 0
      %p212 = por %p210, %p211
      %p213 = scmp.ne.s32.totalorder %s205, %s207
      %p214 = scmp.eq.s32.totalorder %s29, 1
      %p215 = por %p213, %p214
      %p216 = scmp.ne.s32.totalorder %s207, %s208
      %p217 = scmp.eq.s32.totalorder %s29, 0
      %p218 = por %p216, %p217
      %p219 = scmp.ne.s32.totalorder %s207, %s208
      %p220 = scmp.eq.s32.totalorder %s30, 1
      %p221 = por %p219, %p220
      %p223 = scmp.ne.s32.totalorder %s208, %s222
      %p224 = scmp.eq.s32.totalorder %s30, 0
      %p225 = por %p223, %p224
      %s227 = sadd.s32 %s226, 1
      %p230 = scmp.eq.s32.totalorder %s24, 1
      %p231 = scmp.ne.s32.totalorder %s226, %s228
      %p232 = scmp.eq.s32.totalorder %s24, 0
      %p233 = por %p231, %p232
      %p234 = scmp.ne.s32.totalorder %s226, %s228
      %p235 = scmp.eq.s32.totalorder %s29, 1
      %p236 = por %p234, %p235
      %p237 = scmp.ne.s32.totalorder %s228, %s229
      %p238 = scmp.eq.s32.totalorder %s29, 0
      %p239 = por %p237, %p238
      %p240 = scmp.ne.s32.totalorder %s228, %s229
      %p241 = scmp.eq.s32.totalorder %s30, 1
      %p242 = por %p240, %p241
      %p244 = scmp.ne.s32.totalorder %s229, %s243
      %p245 = scmp.eq.s32.totalorder %s30, 0
      %p246 = por %p244, %p245
      %s248 = sadd.s32 %s247, 1
      %p251 = scmp.eq.s32.totalorder %s24, 1
      %p252 = scmp.ne.s32.totalorder %s247, %s249
      %p253 = scmp.eq.s32.totalorder %s24, 0
      %p254 = por %p252, %p253
      %p255 = scmp.ne.s32.totalorder %s247, %s249
      %p256 = scmp.eq.s32.totalorder %s29, 1
      %p257 = por %p255, %p256
      %p258 = scmp.ne.s32.totalorder %s249, %s250
      %p259 = scmp.eq.s32.totalorder %s29, 0
      %p260 = por %p258, %p259
      %p261 = scmp.ne.s32.totalorder %s249, %s250
      %p262 = scmp.eq.s32.totalorder %s30, 1
      %p263 = por %p261, %p262
      %p265 = scmp.ne.s32.totalorder %s250, %s264
      %p266 = scmp.eq.s32.totalorder %s30, 0
      %p267 = por %p265, %p266
      %s269 = sadd.s32 %s268, 1
      %p272 = scmp.eq.s32.totalorder %s24, 1
      %p273 = scmp.ne.s32.totalorder %s268, %s270
      %p274 = scmp.eq.s32.totalorder %s24, 0
      %p275 = por %p273, %p274
      %p276 = scmp.ne.s32.totalorder %s268, %s270
      %p277 = scmp.eq.s32.totalorder %s29, 1
      %p278 = por %p276, %p277
      %p279 = scmp.ne.s32.totalorder %s270, %s271
      %p280 = scmp.eq.s32.totalorder %s29, 0
      %p281 = por %p279, %p280
      %p282 = scmp.ne.s32.totalorder %s270, %s271
      %p283 = scmp.eq.s32.totalorder %s30, 1
      %p284 = por %p282, %p283
      %p286 = scmp.ne.s32.totalorder %s271, %s285
      %p287 = scmp.eq.s32.totalorder %s30, 0
      %p288 = por %p286, %p287
      %s290 = sadd.s32 %s289, 1
      %p293 = scmp.eq.s32.totalorder %s24, 1
      %p294 = scmp.ne.s32.totalorder %s289, %s291
      %p295 = scmp.eq.s32.totalorder %s24, 0
      %p296 = por %p294, %p295
      %p297 = scmp.ne.s32.totalorder %s289, %s291
      %p298 = scmp.eq.s32.totalorder %s29, 1
      %p299 = por %p297, %p298
      %p300 = scmp.ne.s32.totalorder %s291, %s292
      %p301 = scmp.eq.s32.totalorder %s29, 0
      %p302 = por %p300, %p301
      %p303 = scmp.ne.s32.totalorder %s291, %s292
      %p304 = scmp.eq.s32.totalorder %s30, 1
      %p305 = por %p303, %p304
      %p307 = scmp.ne.s32.totalorder %s292, %s306
      %p308 = scmp.eq.s32.totalorder %s30, 0
      %p309 = por %p307, %p308
      %s311 = sadd.s32 %s310, 1
      %p314 = scmp.eq.s32.totalorder %s24, 1
      %p315 = scmp.ne.s32.totalorder %s310, %s312
      %p316 = scmp.eq.s32.totalorder %s24, 0
      %p317 = por %p315, %p316
      %p318 = scmp.ne.s32.totalorder %s310, %s312
      %p319 = scmp.eq.s32.totalorder %s29, 1
      %p320 = por %p318, %p319
      %p321 = scmp.ne.s32.totalorder %s312, %s313
      %p322 = scmp.eq.s32.totalorder %s29, 0
      %p323 = por %p321, %p322
      %p324 = scmp.ne.s32.totalorder %s312, %s313
      %p325 = scmp.eq.s32.totalorder %s30, 1
      %p326 = por %p324, %p325
      %p328 = scmp.ne.s32.totalorder %s313, %s327
      %p329 = scmp.eq.s32.totalorder %s30, 0
      %p330 = por %p328, %p329
      %s332 = sadd.s32 %s331, 1
      %p335 = scmp.eq.s32.totalorder %s24, 1
      %p336 = scmp.ne.s32.totalorder %s331, %s333
      %p337 = scmp.eq.s32.totalorder %s24, 0
      %p338 = por %p336, %p337
      %p339 = scmp.ne.s32.totalorder %s331, %s333
      %p340 = scmp.eq.s32.totalorder %s29, 1
      %p341 = por %p339, %p340
      %p342 = scmp.ne.s32.totalorder %s333, %s334
      %p343 = scmp.eq.s32.totalorder %s29, 0
      %p344 = por %p342, %p343
      %p345 = scmp.ne.s32.totalorder %s333, %s334
      %p346 = scmp.eq.s32.totalorder %s30, 1
      %p347 = por %p345, %p346
      %p349 = scmp.ne.s32.totalorder %s334, %s348
      %p350 = scmp.eq.s32.totalorder %s30, 0
      %p351 = por %p349, %p350
      %s352 = ssub.s32 %s24, %s31
      %p353 = scmp.eq.s32.totalorder %s352, 0
      %s355 = sadd.s32 %s354, 1
      %s356 = scalar_select %p353, %s354, %s355
      %p359 = pneg %p353
      %p360 = scmp.eq.s32.totalorder %s24, 1
      %p361 = por %p359, %p360
      %p362 = scmp.ne.s32.totalorder %s354, %s357
      %p363 = scmp.eq.s32.totalorder %s24, 0
      %p364 = por %p362, %p363
      %p365 = scmp.ne.s32.totalorder %s354, %s357
      %p366 = scmp.eq.s32.totalorder %s29, 1
      %p367 = por %p365, %p366
      %p368 = scmp.ne.s32.totalorder %s357, %s358
      %p369 = scmp.eq.s32.totalorder %s29, 0
      %p370 = por %p368, %p369
      %p371 = scmp.ne.s32.totalorder %s357, %s358
      %p372 = scmp.eq.s32.totalorder %s30, 1
      %p373 = por %p371, %p372
      %p375 = scmp.ne.s32.totalorder %s358, %s374
      %p376 = scmp.eq.s32.totalorder %s30, 0
      %p377 = por %p375, %p376
      %p378 = scmp.le.s32.totalorder 1, %s24
      %p379 = scmp.lt.s32.totalorder %s24, 3
      %p380 = pnand %p378, %p379
      %p381 = pneg %p380
      // Predicated region
      $region9: #{lwsrcnn_forward.1} parent=5 // pred_check
        _
      $region10: #{lwsrcnn_forward.1} parent=5 // pred_check_branch
        %383 = sbr.rel (%p380) target = $region12
      $region11: #{lwsrcnn_forward.1} parent=5 // pred_region
        %s384 = ssub.s32 %s24, 1
        // Predicated region
        $region13: #{lwsrcnn_forward.1} parent=11 // pred_check
          %p385 = pneg %p71
        $region14: #{lwsrcnn_forward.1} parent=11 // pred_check_branch
          %387 = sbr.rel (%p385) target = $region16
        $region15: #{lwsrcnn_forward.1} parent=11 // pred_region
          _
        $region16: #{lwsrcnn_forward.1} parent=11 // pred_fallthru
          _
        // Predicated region
        $region17: #{lwsrcnn_forward.1} parent=11 // pred_check
          %p388 = pneg %p92
        $region18: #{lwsrcnn_forward.1} parent=11 // pred_check_branch
          %390 = sbr.rel (%p388) target = $region20
        $region19: #{lwsrcnn_forward.1} parent=11 // pred_region
          %392 = vsyncadd [#allocation6], 0
          %s394 = sshll.u32 %s2, 4
          %s395 = int_to_ptr.hbm [resolvable:$true] %s394
          %s396 = sshll.u32 [#allocation5], 4
          %s397 = int_to_ptr.vmem [resolvable:$true] %s396
          %399 = dma.hbm_to_vmem [thread:$0]  %s395, 16, %s397, [#allocation6]
        $region20: #{lwsrcnn_forward.1} parent=11 // pred_fallthru
          _
        // Predicated region
        $region21: #{lwsrcnn_forward.1} parent=11 // pred_check
          %p400 = pneg %p113
        $region22: #{lwsrcnn_forward.1} parent=11 // pred_check_branch
          %402 = sbr.rel (%p400) target = $region24
        $region23: #{lwsrcnn_forward.1} parent=11 // pred_region
          _
        $region24: #{lwsrcnn_forward.1} parent=11 // pred_fallthru
          _
        // Predicated region
        $region25: #{lwsrcnn_forward.1} parent=11 // pred_check
          %p403 = pneg %p134
        $region26: #{lwsrcnn_forward.1} parent=11 // pred_check_branch
          %405 = sbr.rel (%p403) target = $region28
        $region27: #{lwsrcnn_forward.1} parent=11 // pred_region
          _
        $region28: #{lwsrcnn_forward.1} parent=11 // pred_fallthru
          _
        // Predicated region
        $region29: #{lwsrcnn_forward.1} parent=11 // pred_check
          %p406 = pneg %p155
        $region30: #{lwsrcnn_forward.1} parent=11 // pred_check_branch
          %408 = sbr.rel (%p406) target = $region32
        $region31: #{lwsrcnn_forward.1} parent=11 // pred_region
          _
        $region32: #{lwsrcnn_forward.1} parent=11 // pred_fallthru
          _
        // Predicated region
        $region33: #{lwsrcnn_forward.1} parent=11 // pred_check
          %p409 = pneg %p176
        $region34: #{lwsrcnn_forward.1} parent=11 // pred_check_branch
          %411 = sbr.rel (%p409) target = $region36
        $region35: #{lwsrcnn_forward.1} parent=11 // pred_region
          %413 = vsyncadd [#allocation8], 0
          %s415 = sshll.u32 %s6, 4
          %s416 = int_to_ptr.hbm [resolvable:$true] %s415
          %s417 = sshll.u32 [#allocation7], 4
          %s418 = int_to_ptr.vmem [resolvable:$true] %s417
          %420 = dma.hbm_to_vmem [thread:$0]  %s416, 16, %s418, [#allocation8]
        $region36: #{lwsrcnn_forward.1} parent=11 // pred_fallthru
          _
        // Predicated region
        $region37: #{lwsrcnn_forward.1} parent=11 // pred_check
          %p421 = pneg %p197
        $region38: #{lwsrcnn_forward.1} parent=11 // pred_check_branch
          %423 = sbr.rel (%p421) target = $region40
        $region39: #{lwsrcnn_forward.1} parent=11 // pred_region
          _
        $region40: #{lwsrcnn_forward.1} parent=11 // pred_fallthru
          _
        // Predicated region
        $region41: #{lwsrcnn_forward.1} parent=11 // pred_check
          %p424 = pneg %p218
        $region42: #{lwsrcnn_forward.1} parent=11 // pred_check_branch
          %426 = sbr.rel (%p424) target = $region44
        $region43: #{lwsrcnn_forward.1} parent=11 // pred_region
          _
        $region44: #{lwsrcnn_forward.1} parent=11 // pred_fallthru
          _
        // Predicated region
        $region45: #{lwsrcnn_forward.1} parent=11 // pred_check
          %p427 = pneg %p239
        $region46: #{lwsrcnn_forward.1} parent=11 // pred_check_branch
          %429 = sbr.rel (%p427) target = $region48
        $region47: #{lwsrcnn_forward.1} parent=11 // pred_region
          _
        $region48: #{lwsrcnn_forward.1} parent=11 // pred_fallthru
          _
        // Predicated region
        $region49: #{lwsrcnn_forward.1} parent=11 // pred_check
          %p430 = pneg %p260
        $region50: #{lwsrcnn_forward.1} parent=11 // pred_check_branch
          %432 = sbr.rel (%p430) target = $region52
        $region51: #{lwsrcnn_forward.1} parent=11 // pred_region
          %434 = vsyncadd [#allocation8], 0
          %s436 = sshll.u32 %s10, 4
          %s437 = int_to_ptr.hbm [resolvable:$true] %s436
          %s438 = sshll.u32 [#allocation9], 4
          %s439 = int_to_ptr.vmem [resolvable:$true] %s438
          %441 = dma.hbm_to_vmem [thread:$0]  %s437, 16, %s439, [#allocation8]
        $region52: #{lwsrcnn_forward.1} parent=11 // pred_fallthru
          _
        // Predicated region
        $region53: #{lwsrcnn_forward.1} parent=11 // pred_check
          %p442 = pneg %p281
        $region54: #{lwsrcnn_forward.1} parent=11 // pred_check_branch
          %444 = sbr.rel (%p442) target = $region56
        $region55: #{lwsrcnn_forward.1} parent=11 // pred_region
          _
        $region56: #{lwsrcnn_forward.1} parent=11 // pred_fallthru
          _
        // Predicated region
        $region57: #{lwsrcnn_forward.1} parent=11 // pred_check
          %p445 = pneg %p302
        $region58: #{lwsrcnn_forward.1} parent=11 // pred_check_branch
          %447 = sbr.rel (%p445) target = $region60
        $region59: #{lwsrcnn_forward.1} parent=11 // pred_region
          _
        $region60: #{lwsrcnn_forward.1} parent=11 // pred_fallthru
          _
        // Predicated region
        $region61: #{lwsrcnn_forward.1} parent=11 // pred_check
          %p448 = pneg %p323
        $region62: #{lwsrcnn_forward.1} parent=11 // pred_check_branch
          %450 = sbr.rel (%p448) target = $region64
        $region63: #{lwsrcnn_forward.1} parent=11 // pred_region
          _
        $region64: #{lwsrcnn_forward.1} parent=11 // pred_fallthru
          _
        // Predicated region
        $region65: #{lwsrcnn_forward.1} parent=11 // pred_check
          %p451 = pneg %p344
        $region66: #{lwsrcnn_forward.1} parent=11 // pred_check_branch
          %453 = sbr.rel (%p451) target = $region68
        $region67: #{lwsrcnn_forward.1} parent=11 // pred_region
          %455 = vsyncadd [#allocation11], 0
          %s457 = sshll.u32 %s14, 4
          %s458 = int_to_ptr.hbm [resolvable:$true] %s457
          %s459 = sshll.u32 [#allocation10], 4
          %s460 = int_to_ptr.vmem [resolvable:$true] %s459
          %462 = dma.hbm_to_vmem [thread:$0]  %s458, 16, %s460, [#allocation11]
        $region68: #{lwsrcnn_forward.1} parent=11 // pred_fallthru
          _
      $region12: #{lwsrcnn_forward.1} parent=5 // pred_fallthru
        _
      %p463 = scmp.lt.s32.totalorder %s24, 2
      // Predicated region
      $region69: #{lwsrcnn_forward.1} parent=5 // pred_check
        %p464 = pneg %p463
      $region70: #{lwsrcnn_forward.1} parent=5 // pred_check_branch
        %466 = sbr.rel (%p464) target = $region72
      $region71: #{lwsrcnn_forward.1} parent=5 // pred_region
        // Predicated region
        $region73: #{lwsrcnn_forward.1} parent=71 // pred_check
          %p467 = pneg %p44
        $region74: #{lwsrcnn_forward.1} parent=71 // pred_check_branch
          %469 = sbr.rel (%p467) target = $region76
        $region75: #{lwsrcnn_forward.1} parent=71 // pred_region
          %p470 = scmp.lt.s32.totalorder %s24, 1
          %s471 = scalar_select %p470, %s24, 1
          %s472 = smul.addr %s471, 32
          %s473 = smul.addr %s472, 8
          %s474 = scalar_lea.vmem %s0, %s473
        $region76: #{lwsrcnn_forward.1} parent=71 // pred_fallthru
          _
      $region72: #{lwsrcnn_forward.1} parent=5 // pred_fallthru
        _
      %p475 = scmp.le.s32.totalorder 1, %s24
      %p476 = scmp.lt.s32.totalorder %s24, 3
      %p477 = pnand %p475, %p476
      %p478 = pneg %p477
      // Predicated region
      $region77: #{lwsrcnn_forward.1} parent=5 // pred_check
        _
      $region78: #{lwsrcnn_forward.1} parent=5 // pred_check_branch
        %480 = sbr.rel (%p477) target = $region80
      $region79: #{lwsrcnn_forward.1} parent=5 // pred_region
        %s481 = ssub.s32 %s24, 1
        // Predicated region
        $region81: #{lwsrcnn_forward.1} parent=79 // pred_check
          %p482 = pneg %p92
        $region82: #{lwsrcnn_forward.1} parent=79 // pred_check_branch
          %484 = sbr.rel (%p482) target = $region84
        $region83: #{lwsrcnn_forward.1} parent=79 // pred_region
          %486 = dma.done [#allocation6], 16
        $region84: #{lwsrcnn_forward.1} parent=79 // pred_fallthru
          _
        // Predicated region
        $region85: #{lwsrcnn_forward.1} parent=79 // pred_check
          %p487 = pneg %p176
        $region86: #{lwsrcnn_forward.1} parent=79 // pred_check_branch
          %489 = sbr.rel (%p487) target = $region88
        $region87: #{lwsrcnn_forward.1} parent=79 // pred_region
          %491 = dma.done [#allocation8], 16
        $region88: #{lwsrcnn_forward.1} parent=79 // pred_fallthru
          _
        // Predicated region
        $region89: #{lwsrcnn_forward.1} parent=79 // pred_check
          %p492 = pneg %p260
        $region90: #{lwsrcnn_forward.1} parent=79 // pred_check_branch
          %494 = sbr.rel (%p492) target = $region92
        $region91: #{lwsrcnn_forward.1} parent=79 // pred_region
          %496 = dma.done [#allocation8], 16
        $region92: #{lwsrcnn_forward.1} parent=79 // pred_fallthru
          _
        // Predicated region
        $region93: #{lwsrcnn_forward.1} parent=79 // pred_check
          %p497 = pneg %p344
        $region94: #{lwsrcnn_forward.1} parent=79 // pred_check_branch
          %499 = sbr.rel (%p497) target = $region96
        $region95: #{lwsrcnn_forward.1} parent=79 // pred_region
          %501 = dma.done [#allocation11], 16
        $region96: #{lwsrcnn_forward.1} parent=79 // pred_fallthru
          _
        %p502 = scmp.lt.s32.totalorder %s29, 1
        %s503 = scalar_select %p502, %s29, 1
        %s504 = smul.addr %s503, 32
        %s505 = smul.addr %s504, 8
        %s506 = scalar_lea.vmem %s0, %s505
        %p507 = pneg %p50
        %p508 = pneg %p47
        %p509 = pneg %p71
        %p510 = pneg %p68
        %p511 = pneg %p92
        %p512 = pneg %p89
        %p513 = pneg %p113
        %p514 = pneg %p110
        %p515 = pneg %p134
        %p516 = pneg %p131
        %p517 = pneg %p155
        %p518 = pneg %p152
        %p519 = pneg %p176
        %p520 = pneg %p173
        %p521 = pneg %p197
        %p522 = pneg %p194
        %p523 = pneg %p218
        %p524 = pneg %p215
        %p525 = pneg %p239
        %p526 = pneg %p236
        %p527 = pneg %p260
        %p528 = pneg %p257
        %p529 = pneg %p281
        %p530 = pneg %p278
        %p531 = pneg %p302
        %p532 = pneg %p299
        %p533 = pneg %p323
        %p534 = pneg %p320
        %p535 = pneg %p344
        %p536 = pneg %p341
        %p537 = pneg %p370
        %p538 = pneg %p367
        %p539 = scmp.lt.s32.totalorder %s29, 1
        %s540 = scalar_select %p539, %s29, 1
        %s541 = smul.addr %s540, 32
        %s542 = smul.addr %s541, 8
        %s543 = scalar_lea.vmem %s15, %s542
        %p544 = scmp.lt.s32.totalorder %s29, 1
        %s545 = scalar_select %p544, %s29, 1
        %s546 = smul.addr %s545, 32
        %s547 = smul.addr %s546, 8
        %s548 = scalar_lea.vmem %s0, %s547
        %p549 = scmp.lt.s32.totalorder %s29, 1
        %s550 = scalar_select %p549, %s29, 1
        %s551 = smul.addr %s550, 32
        %s552 = smul.addr %s551, 8
        %s553 = scalar_lea.vmem %s15, %s552
        %vm555 = vcmask 23552
        %556 = vst.msk [vmem:[#allocation2] sm:$0xff] %vm555, 0.0
        %557 = vst.msk [vmem:[#allocation2 + $0x8] sm:$0xff] %vm555, 0.0
        %558 = vst.msk [vmem:[#allocation2 + $0x10] sm:$0xff] %vm555, 0.0
        %vm559 = vcmask 17408
        %560 = vst.msk [vmem:[#allocation2 + $0x18] sm:$0x3] %vm559, 0.0
        %561 = vst.msk [vmem:[#allocation2 + $0x20] sm:$0xff] %vm555, 0.0
        %562 = vst.msk [vmem:[#allocation2 + $0x28] sm:$0xff] %vm555, 0.0
        %563 = vst.msk [vmem:[#allocation2 + $0x30] sm:$0xff] %vm555, 0.0
        %564 = vst.msk [vmem:[#allocation2 + $0x38] sm:$0x3] %vm559, 0.0
        %565 = vst.msk [vmem:[#allocation2 + $0x40] sm:$0xff] %vm555, 0.0
        %566 = vst.msk [vmem:[#allocation2 + $0x48] sm:$0xff] %vm555, 0.0
        %567 = vst.msk [vmem:[#allocation2 + $0x50] sm:$0xff] %vm555, 0.0
        %568 = vst.msk [vmem:[#allocation2 + $0x58] sm:$0x3] %vm559, 0.0
        %569 = vst.msk [vmem:[#allocation2 + $0x60] sm:$0xff] %vm555, 0.0
        %570 = vst.msk [vmem:[#allocation2 + $0x68] sm:$0xff] %vm555, 0.0
        %571 = vst.msk [vmem:[#allocation2 + $0x70] sm:$0xff] %vm555, 0.0
        %572 = vst.msk [vmem:[#allocation2 + $0x78] sm:$0x3] %vm559, 0.0
        %573 = vst.msk [vmem:[#allocation2 + $0x80] sm:$0xff] %vm555, 0.0
        %574 = vst.msk [vmem:[#allocation2 + $0x88] sm:$0xff] %vm555, 0.0
        %575 = vst.msk [vmem:[#allocation2 + $0x90] sm:$0xff] %vm555, 0.0
        %576 = vst.msk [vmem:[#allocation2 + $0x98] sm:$0x3] %vm559, 0.0
        %577 = vst.msk [vmem:[#allocation2 + $0xa0] sm:$0xff] %vm555, 0.0
        %578 = vst.msk [vmem:[#allocation2 + $0xa8] sm:$0xff] %vm555, 0.0
        %579 = vst.msk [vmem:[#allocation2 + $0xb0] sm:$0xff] %vm555, 0.0
        %580 = vst.msk [vmem:[#allocation2 + $0xb8] sm:$0x3] %vm559, 0.0
        %581 = vst.msk [vmem:[#allocation2 + $0xc0] sm:$0xff] %vm555, 0.0
        %582 = vst.msk [vmem:[#allocation2 + $0xc8] sm:$0xff] %vm555, 0.0
        %583 = vst.msk [vmem:[#allocation2 + $0xd0] sm:$0xff] %vm555, 0.0
        %584 = vst.msk [vmem:[#allocation2 + $0xd8] sm:$0x3] %vm559, 0.0
        %585 = vst.msk [vmem:[#allocation2 + $0xe0] sm:$0xff] %vm555, 0.0
        %586 = vst.msk [vmem:[#allocation2 + $0xe8] sm:$0xff] %vm555, 0.0
        %587 = vst.msk [vmem:[#allocation2 + $0xf0] sm:$0xff] %vm555, 0.0
        %588 = vst.msk [vmem:[#allocation2 + $0xf8] sm:$0x3] %vm559, 0.0
        %589 = vst.msk [vmem:[#allocation2 + $0x100] sm:$0xff] %vm555, 0.0
        %590 = vst.msk [vmem:[#allocation2 + $0x108] sm:$0xff] %vm555, 0.0
        %591 = vst.msk [vmem:[#allocation2 + $0x110] sm:$0xff] %vm555, 0.0
        %592 = vst.msk [vmem:[#allocation2 + $0x118] sm:$0x3] %vm559, 0.0
        %593 = vst.msk [vmem:[#allocation2 + $0x120] sm:$0xff] %vm555, 0.0
        %594 = vst.msk [vmem:[#allocation2 + $0x128] sm:$0xff] %vm555, 0.0
        %595 = vst.msk [vmem:[#allocation2 + $0x130] sm:$0xff] %vm555, 0.0
        %596 = vst.msk [vmem:[#allocation2 + $0x138] sm:$0x3] %vm559, 0.0
        %597 = vst.msk [vmem:[#allocation2 + $0x140] sm:$0xff] %vm555, 0.0
        %598 = vst.msk [vmem:[#allocation2 + $0x148] sm:$0xff] %vm555, 0.0
        %599 = vst.msk [vmem:[#allocation2 + $0x150] sm:$0xff] %vm555, 0.0
        %600 = vst.msk [vmem:[#allocation2 + $0x158] sm:$0x3] %vm559, 0.0
        %601 = vst.msk [vmem:[#allocation2 + $0x160] sm:$0xff] %vm555, 0.0
        %602 = vst.msk [vmem:[#allocation2 + $0x168] sm:$0xff] %vm555, 0.0
        %603 = vst.msk [vmem:[#allocation2 + $0x170] sm:$0xff] %vm555, 0.0
        %604 = vst.msk [vmem:[#allocation2 + $0x178] sm:$0x3] %vm559, 0.0
        %605 = vst.msk [vmem:[#allocation2 + $0x180] sm:$0xff] %vm555, 0.0
        %606 = vst.msk [vmem:[#allocation2 + $0x188] sm:$0xff] %vm555, 0.0
        %607 = vst.msk [vmem:[#allocation2 + $0x190] sm:$0xff] %vm555, 0.0
        %608 = vst.msk [vmem:[#allocation2 + $0x198] sm:$0x3] %vm559, 0.0
        %609 = vst.msk [vmem:[#allocation2 + $0x1a0] sm:$0xff] %vm555, 0.0
        %610 = vst.msk [vmem:[#allocation2 + $0x1a8] sm:$0xff] %vm555, 0.0
        %611 = vst.msk [vmem:[#allocation2 + $0x1b0] sm:$0xff] %vm555, 0.0
        %612 = vst.msk [vmem:[#allocation2 + $0x1b8] sm:$0x3] %vm559, 0.0
        %613 = vst.msk [vmem:[#allocation2 + $0x1c0] sm:$0xff] %vm555, 0.0
        %614 = vst.msk [vmem:[#allocation2 + $0x1c8] sm:$0xff] %vm555, 0.0
        %615 = vst.msk [vmem:[#allocation2 + $0x1d0] sm:$0xff] %vm555, 0.0
        %616 = vst.msk [vmem:[#allocation2 + $0x1d8] sm:$0x3] %vm559, 0.0
        %617 = vst.msk [vmem:[#allocation2 + $0x1e0] sm:$0xff] %vm555, 0.0
        %618 = vst.msk [vmem:[#allocation2 + $0x1e8] sm:$0xff] %vm555, 0.0
        %619 = vst.msk [vmem:[#allocation2 + $0x1f0] sm:$0xff] %vm555, 0.0
        %620 = vst.msk [vmem:[#allocation2 + $0x1f8] sm:$0x3] %vm559, 0.0
        %621 = vst.msk [vmem:[#allocation2 + $0x200] sm:$0xff] %vm555, 0.0
        %622 = vst.msk [vmem:[#allocation2 + $0x208] sm:$0xff] %vm555, 0.0
        %623 = vst.msk [vmem:[#allocation2 + $0x210] sm:$0xff] %vm555, 0.0
        %624 = vst.msk [vmem:[#allocation2 + $0x218] sm:$0x3] %vm559, 0.0
        %625 = vst.msk [vmem:[#allocation2 + $0x220] sm:$0xff] %vm555, 0.0
        %626 = vst.msk [vmem:[#allocation2 + $0x228] sm:$0xff] %vm555, 0.0
        %627 = vst.msk [vmem:[#allocation2 + $0x230] sm:$0xff] %vm555, 0.0
        %628 = vst.msk [vmem:[#allocation2 + $0x238] sm:$0x3] %vm559, 0.0
        %629 = vst.msk [vmem:[#allocation2 + $0x240] sm:$0xff] %vm555, 0.0
        %630 = vst.msk [vmem:[#allocation2 + $0x248] sm:$0xff] %vm555, 0.0
        %631 = vst.msk [vmem:[#allocation2 + $0x250] sm:$0xff] %vm555, 0.0
        %632 = vst.msk [vmem:[#allocation2 + $0x258] sm:$0x3] %vm559, 0.0
        %633 = vst.msk [vmem:[#allocation2 + $0x260] sm:$0xff] %vm555, 0.0
        %634 = vst.msk [vmem:[#allocation2 + $0x268] sm:$0xff] %vm555, 0.0
        %635 = vst.msk [vmem:[#allocation2 + $0x270] sm:$0xff] %vm555, 0.0
        %636 = vst.msk [vmem:[#allocation2 + $0x278] sm:$0x3] %vm559, 0.0
        %vm637 = vcmask 228352
        %638 = vst.msk [vmem:[#allocation3] sm:$0xff] %vm637, 0.0
        %639 = vst.msk [vmem:[#allocation3 + $0x8] sm:$0xff] %vm637, 0.0
        %640 = vst.msk [vmem:[#allocation3 + $0x10] sm:$0xff] %vm637, 0.0
        %vm641 = vcmask 221184
        %642 = vst.msk [vmem:[#allocation3 + $0x18] sm:$0x1] %vm641, 0.0
        %643 = vst.msk [vmem:[#allocation3 + $0x20] sm:$0xff] %vm637, 0.0
        %644 = vst.msk [vmem:[#allocation3 + $0x28] sm:$0xff] %vm637, 0.0
        %645 = vst.msk [vmem:[#allocation3 + $0x30] sm:$0xff] %vm637, 0.0
        %646 = vst.msk [vmem:[#allocation3 + $0x38] sm:$0x1] %vm641, 0.0
        %647 = vst.msk [vmem:[#allocation3 + $0x40] sm:$0xff] %vm637, 0.0
        %648 = vst.msk [vmem:[#allocation3 + $0x48] sm:$0xff] %vm637, 0.0
        %649 = vst.msk [vmem:[#allocation3 + $0x50] sm:$0xff] %vm637, 0.0
        %650 = vst.msk [vmem:[#allocation3 + $0x58] sm:$0x1] %vm641, 0.0
        %651 = vst.msk [vmem:[#allocation3 + $0x60] sm:$0xff] %vm637, 0.0
        %652 = vst.msk [vmem:[#allocation3 + $0x68] sm:$0xff] %vm637, 0.0
        %653 = vst.msk [vmem:[#allocation3 + $0x70] sm:$0xff] %vm637, 0.0
        %654 = vst.msk [vmem:[#allocation3 + $0x78] sm:$0x1] %vm641, 0.0
        %655 = vst.msk [vmem:[#allocation3 + $0x80] sm:$0xff] %vm637, 0.0
        %656 = vst.msk [vmem:[#allocation3 + $0x88] sm:$0xff] %vm637, 0.0
        %657 = vst.msk [vmem:[#allocation3 + $0x90] sm:$0xff] %vm637, 0.0
        %658 = vst.msk [vmem:[#allocation3 + $0x98] sm:$0x1] %vm641, 0.0
        %659 = vst.msk [vmem:[#allocation3 + $0xa0] sm:$0xff] %vm637, 0.0
        %660 = vst.msk [vmem:[#allocation3 + $0xa8] sm:$0xff] %vm637, 0.0
        %661 = vst.msk [vmem:[#allocation3 + $0xb0] sm:$0xff] %vm637, 0.0
        %662 = vst.msk [vmem:[#allocation3 + $0xb8] sm:$0x1] %vm641, 0.0
        %663 = vst.msk [vmem:[#allocation3 + $0xc0] sm:$0xff] %vm637, 0.0
        %664 = vst.msk [vmem:[#allocation3 + $0xc8] sm:$0xff] %vm637, 0.0
        %665 = vst.msk [vmem:[#allocation3 + $0xd0] sm:$0xff] %vm637, 0.0
        %666 = vst.msk [vmem:[#allocation3 + $0xd8] sm:$0x1] %vm641, 0.0
        %667 = vst.msk [vmem:[#allocation3 + $0xe0] sm:$0xff] %vm637, 0.0
        %668 = vst.msk [vmem:[#allocation3 + $0xe8] sm:$0xff] %vm637, 0.0
        %669 = vst.msk [vmem:[#allocation3 + $0xf0] sm:$0xff] %vm637, 0.0
        %670 = vst.msk [vmem:[#allocation3 + $0xf8] sm:$0x1] %vm641, 0.0
        %671 = vst.msk [vmem:[#allocation3 + $0x100] sm:$0xff] %vm637, 0.0
        %672 = vst.msk [vmem:[#allocation3 + $0x108] sm:$0xff] %vm637, 0.0
        %673 = vst.msk [vmem:[#allocation3 + $0x110] sm:$0xff] %vm637, 0.0
        %674 = vst.msk [vmem:[#allocation3 + $0x118] sm:$0x1] %vm641, 0.0
        %675 = vst.msk [vmem:[#allocation3 + $0x120] sm:$0xff] %vm637, 0.0
        %676 = vst.msk [vmem:[#allocation3 + $0x128] sm:$0xff] %vm637, 0.0
        %677 = vst.msk [vmem:[#allocation3 + $0x130] sm:$0xff] %vm637, 0.0
        %678 = vst.msk [vmem:[#allocation3 + $0x138] sm:$0x1] %vm641, 0.0
        %679 = vst.msk [vmem:[#allocation3 + $0x140] sm:$0xff] %vm637, 0.0
        %680 = vst.msk [vmem:[#allocation3 + $0x148] sm:$0xff] %vm637, 0.0
        %681 = vst.msk [vmem:[#allocation3 + $0x150] sm:$0xff] %vm637, 0.0
        %682 = vst.msk [vmem:[#allocation3 + $0x158] sm:$0x1] %vm641, 0.0
        %683 = vst.msk [vmem:[#allocation3 + $0x160] sm:$0xff] %vm637, 0.0
        %684 = vst.msk [vmem:[#allocation3 + $0x168] sm:$0xff] %vm637, 0.0
        %685 = vst.msk [vmem:[#allocation3 + $0x170] sm:$0xff] %vm637, 0.0
        %686 = vst.msk [vmem:[#allocation3 + $0x178] sm:$0x1] %vm641, 0.0
        %687 = vst.msk [vmem:[#allocation3 + $0x180] sm:$0xff] %vm637, 0.0
        %688 = vst.msk [vmem:[#allocation3 + $0x188] sm:$0xff] %vm637, 0.0
        %689 = vst.msk [vmem:[#allocation3 + $0x190] sm:$0xff] %vm637, 0.0
        %690 = vst.msk [vmem:[#allocation3 + $0x198] sm:$0x1] %vm641, 0.0
        %691 = vst.msk [vmem:[#allocation3 + $0x1a0] sm:$0xff] %vm637, 0.0
        %692 = vst.msk [vmem:[#allocation3 + $0x1a8] sm:$0xff] %vm637, 0.0
        %693 = vst.msk [vmem:[#allocation3 + $0x1b0] sm:$0xff] %vm637, 0.0
        %694 = vst.msk [vmem:[#allocation3 + $0x1b8] sm:$0x1] %vm641, 0.0
        %695 = vst.msk [vmem:[#allocation3 + $0x1c0] sm:$0xff] %vm637, 0.0
        %696 = vst.msk [vmem:[#allocation3 + $0x1c8] sm:$0xff] %vm637, 0.0
        %697 = vst.msk [vmem:[#allocation3 + $0x1d0] sm:$0xff] %vm637, 0.0
        %698 = vst.msk [vmem:[#allocation3 + $0x1d8] sm:$0x1] %vm641, 0.0
        %699 = vst.msk [vmem:[#allocation3 + $0x1e0] sm:$0xff] %vm637, 0.0
        %700 = vst.msk [vmem:[#allocation3 + $0x1e8] sm:$0xff] %vm637, 0.0
        %701 = vst.msk [vmem:[#allocation3 + $0x1f0] sm:$0xff] %vm637, 0.0
        %702 = vst.msk [vmem:[#allocation3 + $0x1f8] sm:$0x1] %vm641, 0.0
        %703 = vst.msk [vmem:[#allocation3 + $0x200] sm:$0xff] %vm637, 0.0
        %704 = vst.msk [vmem:[#allocation3 + $0x208] sm:$0xff] %vm637, 0.0
        %705 = vst.msk [vmem:[#allocation3 + $0x210] sm:$0xff] %vm637, 0.0
        %706 = vst.msk [vmem:[#allocation3 + $0x218] sm:$0x1] %vm641, 0.0
        %707 = vst.msk [vmem:[#allocation3 + $0x220] sm:$0xff] %vm637, 0.0
        %708 = vst.msk [vmem:[#allocation3 + $0x228] sm:$0xff] %vm637, 0.0
        %709 = vst.msk [vmem:[#allocation3 + $0x230] sm:$0xff] %vm637, 0.0
        %710 = vst.msk [vmem:[#allocation3 + $0x238] sm:$0x1] %vm641, 0.0
        %vm711 = vcmask 130048
        %712 = vst.msk [vmem:[#allocation4] sm:$0xff] %vm711, 0.0
        %713 = vst.msk [vmem:[#allocation4 + $0x8] sm:$0xff] %vm711, 0.0
        %714 = vst.msk [vmem:[#allocation4 + $0x10] sm:$0xff] %vm711, 0.0
        %vm715 = vcmask 122880
        %716 = vst.msk [vmem:[#allocation4 + $0x18] sm:$0x1] %vm715, 0.0
        %717 = vst.msk [vmem:[#allocation4 + $0x20] sm:$0xff] %vm711, 0.0
        %718 = vst.msk [vmem:[#allocation4 + $0x28] sm:$0xff] %vm711, 0.0
        %719 = vst.msk [vmem:[#allocation4 + $0x30] sm:$0xff] %vm711, 0.0
        %720 = vst.msk [vmem:[#allocation4 + $0x38] sm:$0x1] %vm715, 0.0
        %721 = vst.msk [vmem:[#allocation4 + $0x40] sm:$0xff] %vm711, 0.0
        %722 = vst.msk [vmem:[#allocation4 + $0x48] sm:$0xff] %vm711, 0.0
        %723 = vst.msk [vmem:[#allocation4 + $0x50] sm:$0xff] %vm711, 0.0
        %724 = vst.msk [vmem:[#allocation4 + $0x58] sm:$0x1] %vm715, 0.0
        %725 = vst.msk [vmem:[#allocation4 + $0x60] sm:$0xff] %vm711, 0.0
        %726 = vst.msk [vmem:[#allocation4 + $0x68] sm:$0xff] %vm711, 0.0
        %727 = vst.msk [vmem:[#allocation4 + $0x70] sm:$0xff] %vm711, 0.0
        %728 = vst.msk [vmem:[#allocation4 + $0x78] sm:$0x1] %vm715, 0.0
        %729 = vst.msk [vmem:[#allocation4 + $0x80] sm:$0xff] %vm711, 0.0
        %730 = vst.msk [vmem:[#allocation4 + $0x88] sm:$0xff] %vm711, 0.0
        %731 = vst.msk [vmem:[#allocation4 + $0x90] sm:$0xff] %vm711, 0.0
        %732 = vst.msk [vmem:[#allocation4 + $0x98] sm:$0x1] %vm715, 0.0
        %733 = vst.msk [vmem:[#allocation4 + $0xa0] sm:$0xff] %vm711, 0.0
        %734 = vst.msk [vmem:[#allocation4 + $0xa8] sm:$0xff] %vm711, 0.0
        %735 = vst.msk [vmem:[#allocation4 + $0xb0] sm:$0xff] %vm711, 0.0
        %736 = vst.msk [vmem:[#allocation4 + $0xb8] sm:$0x1] %vm715, 0.0
        %737 = vst.msk [vmem:[#allocation4 + $0xc0] sm:$0xff] %vm711, 0.0
        %738 = vst.msk [vmem:[#allocation4 + $0xc8] sm:$0xff] %vm711, 0.0
        %739 = vst.msk [vmem:[#allocation4 + $0xd0] sm:$0xff] %vm711, 0.0
        %740 = vst.msk [vmem:[#allocation4 + $0xd8] sm:$0x1] %vm715, 0.0
        %741 = vst.msk [vmem:[#allocation4 + $0xe0] sm:$0xff] %vm711, 0.0
        %742 = vst.msk [vmem:[#allocation4 + $0xe8] sm:$0xff] %vm711, 0.0
        %743 = vst.msk [vmem:[#allocation4 + $0xf0] sm:$0xff] %vm711, 0.0
        %744 = vst.msk [vmem:[#allocation4 + $0xf8] sm:$0x1] %vm715, 0.0
        %745 = vst.msk [vmem:[#allocation4 + $0x100] sm:$0xff] %vm711, 0.0
        %746 = vst.msk [vmem:[#allocation4 + $0x108] sm:$0xff] %vm711, 0.0
        %747 = vst.msk [vmem:[#allocation4 + $0x110] sm:$0xff] %vm711, 0.0
        %748 = vst.msk [vmem:[#allocation4 + $0x118] sm:$0x1] %vm715, 0.0
        %749 = vst.msk [vmem:[#allocation4 + $0x120] sm:$0xff] %vm711, 0.0
        %750 = vst.msk [vmem:[#allocation4 + $0x128] sm:$0xff] %vm711, 0.0
        %751 = vst.msk [vmem:[#allocation4 + $0x130] sm:$0xff] %vm711, 0.0
        %752 = vst.msk [vmem:[#allocation4 + $0x138] sm:$0x1] %vm715, 0.0
        %753 = vst.msk [vmem:[#allocation4 + $0x140] sm:$0xff] %vm711, 0.0
        %754 = vst.msk [vmem:[#allocation4 + $0x148] sm:$0xff] %vm711, 0.0
        %755 = vst.msk [vmem:[#allocation4 + $0x150] sm:$0xff] %vm711, 0.0
        %756 = vst.msk [vmem:[#allocation4 + $0x158] sm:$0x1] %vm715, 0.0
        %757 = vst.msk [vmem:[#allocation4 + $0x160] sm:$0xff] %vm711, 0.0
        %758 = vst.msk [vmem:[#allocation4 + $0x168] sm:$0xff] %vm711, 0.0
        %759 = vst.msk [vmem:[#allocation4 + $0x170] sm:$0xff] %vm711, 0.0
        %760 = vst.msk [vmem:[#allocation4 + $0x178] sm:$0x1] %vm715, 0.0
        %761 = vst.msk [vmem:[#allocation4 + $0x180] sm:$0xff] %vm711, 0.0
        %762 = vst.msk [vmem:[#allocation4 + $0x188] sm:$0xff] %vm711, 0.0
        %763 = vst.msk [vmem:[#allocation4 + $0x190] sm:$0xff] %vm711, 0.0
        %764 = vst.msk [vmem:[#allocation4 + $0x198] sm:$0x1] %vm715, 0.0
        %765 = vst.msk [vmem:[#allocation4 + $0x1a0] sm:$0xff] %vm711, 0.0
        %766 = vst.msk [vmem:[#allocation4 + $0x1a8] sm:$0xff] %vm711, 0.0
        %767 = vst.msk [vmem:[#allocation4 + $0x1b0] sm:$0xff] %vm711, 0.0
        %768 = vst.msk [vmem:[#allocation4 + $0x1b8] sm:$0x1] %vm715, 0.0
        %769 = vst.msk [vmem:[#allocation4 + $0x1c0] sm:$0xff] %vm711, 0.0
        %770 = vst.msk [vmem:[#allocation4 + $0x1c8] sm:$0xff] %vm711, 0.0
        %771 = vst.msk [vmem:[#allocation4 + $0x1d0] sm:$0xff] %vm711, 0.0
        %772 = vst.msk [vmem:[#allocation4 + $0x1d8] sm:$0x1] %vm715, 0.0
        %773 = vst.msk [vmem:[#allocation4 + $0x1e0] sm:$0xff] %vm711, 0.0
        %774 = vst.msk [vmem:[#allocation4 + $0x1e8] sm:$0xff] %vm711, 0.0
        %775 = vst.msk [vmem:[#allocation4 + $0x1f0] sm:$0xff] %vm711, 0.0
        %776 = vst.msk [vmem:[#allocation4 + $0x1f8] sm:$0x1] %vm715, 0.0
        %777 = vst.msk [vmem:[#allocation4 + $0x200] sm:$0xff] %vm711, 0.0
        %778 = vst.msk [vmem:[#allocation4 + $0x208] sm:$0xff] %vm711, 0.0
        %779 = vst.msk [vmem:[#allocation4 + $0x210] sm:$0xff] %vm711, 0.0
        %780 = vst.msk [vmem:[#allocation4 + $0x218] sm:$0x1] %vm715, 0.0
        %781 = vst.msk [vmem:[#allocation4 + $0x220] sm:$0xff] %vm711, 0.0
        %782 = vst.msk [vmem:[#allocation4 + $0x228] sm:$0xff] %vm711, 0.0
        %783 = vst.msk [vmem:[#allocation4 + $0x230] sm:$0xff] %vm711, 0.0
        %784 = vst.msk [vmem:[#allocation4 + $0x238] sm:$0x1] %vm715, 0.0
        %v785 = vld [vmem:[%s548] sm:$0xff]
        %v786 = vld [vmem:[%s548 + $0x8] sm:$0xff]
        %v787 = vld [vmem:[%s548 + $0x10] sm:$0xff]
        %v788 = vld [vmem:[%s548 + $0x18] sm:$0xff]
        %v789 = vld [vmem:[%s548 + $0x20] sm:$0xff]
        %v790 = vld [vmem:[%s548 + $0x28] sm:$0xff]
        %v791 = vld [vmem:[%s548 + $0x30] sm:$0xff]
        %v792 = vld [vmem:[%s548 + $0x38] sm:$0xff]
        %v793 = vld [vmem:[%s548 + $0x40] sm:$0xff]
        %v794 = vld [vmem:[%s548 + $0x48] sm:$0xff]
        %v795 = vld [vmem:[%s548 + $0x50] sm:$0xff]
        %v796 = vld [vmem:[%s548 + $0x58] sm:$0xff]
        %v797 = vld [vmem:[%s548 + $0x60] sm:$0xff]
        %v798 = vld [vmem:[%s548 + $0x68] sm:$0xff]
        %v799 = vld [vmem:[%s548 + $0x70] sm:$0xff]
        %v800 = vld [vmem:[%s548 + $0x78] sm:$0xff]
        %v801 = vld [vmem:[%s548 + $0x80] sm:$0xff]
        %v802 = vld [vmem:[%s548 + $0x88] sm:$0xff]
        %v803 = vld [vmem:[%s548 + $0x90] sm:$0xff]
        %v804 = vld [vmem:[%s548 + $0x98] sm:$0xff]
        %v805 = vld [vmem:[%s548 + $0xa0] sm:$0xff]
        %v806 = vld [vmem:[%s548 + $0xa8] sm:$0xff]
        %v807 = vld [vmem:[%s548 + $0xb0] sm:$0xff]
        %v808 = vld [vmem:[%s548 + $0xb8] sm:$0xff]
        %v809 = vld [vmem:[%s548 + $0xc0] sm:$0xff]
        %v810 = vld [vmem:[%s548 + $0xc8] sm:$0xff]
        %v811 = vld [vmem:[%s548 + $0xd0] sm:$0xff]
        %v812 = vld [vmem:[%s548 + $0xd8] sm:$0xff]
        %v813 = vld [vmem:[%s548 + $0xe0] sm:$0xff]
        %v814 = vld [vmem:[%s548 + $0xe8] sm:$0xff]
        %v815 = vld [vmem:[%s548 + $0xf0] sm:$0xff]
        %v816 = vld [vmem:[%s548 + $0xf8] sm:$0xff]
        %s817 = scalar_lea.vmem [#allocation2], 64
        %818 = vst.msk [vmem:[%s817 + $0x8] sm:$0xff] %vm555, %v785
        %819 = vst.msk [vmem:[%s817 + $0x10] sm:$0xff] %vm555, %v786
        %820 = vst.msk [vmem:[%s817 + $0x28] sm:$0xff] %vm555, %v787
        %821 = vst.msk [vmem:[%s817 + $0x30] sm:$0xff] %vm555, %v788
        %822 = vst.msk [vmem:[%s817 + $0x48] sm:$0xff] %vm555, %v789
        %823 = vst.msk [vmem:[%s817 + $0x50] sm:$0xff] %vm555, %v790
        %824 = vst.msk [vmem:[%s817 + $0x68] sm:$0xff] %vm555, %v791
        %825 = vst.msk [vmem:[%s817 + $0x70] sm:$0xff] %vm555, %v792
        %826 = vst.msk [vmem:[%s817 + $0x88] sm:$0xff] %vm555, %v793
        %827 = vst.msk [vmem:[%s817 + $0x90] sm:$0xff] %vm555, %v794
        %828 = vst.msk [vmem:[%s817 + $0xa8] sm:$0xff] %vm555, %v795
        %829 = vst.msk [vmem:[%s817 + $0xb0] sm:$0xff] %vm555, %v796
        %830 = vst.msk [vmem:[%s817 + $0xc8] sm:$0xff] %vm555, %v797
        %831 = vst.msk [vmem:[%s817 + $0xd0] sm:$0xff] %vm555, %v798
        %832 = vst.msk [vmem:[%s817 + $0xe8] sm:$0xff] %vm555, %v799
        %833 = vst.msk [vmem:[%s817 + $0xf0] sm:$0xff] %vm555, %v800
        %834 = vst.msk [vmem:[%s817 + $0x108] sm:$0xff] %vm555, %v801
        %835 = vst.msk [vmem:[%s817 + $0x110] sm:$0xff] %vm555, %v802
        %836 = vst.msk [vmem:[%s817 + $0x128] sm:$0xff] %vm555, %v803
        %837 = vst.msk [vmem:[%s817 + $0x130] sm:$0xff] %vm555, %v804
        %838 = vst.msk [vmem:[%s817 + $0x148] sm:$0xff] %vm555, %v805
        %839 = vst.msk [vmem:[%s817 + $0x150] sm:$0xff] %vm555, %v806
        %840 = vst.msk [vmem:[%s817 + $0x168] sm:$0xff] %vm555, %v807
        %841 = vst.msk [vmem:[%s817 + $0x170] sm:$0xff] %vm555, %v808
        %842 = vst.msk [vmem:[%s817 + $0x188] sm:$0xff] %vm555, %v809
        %843 = vst.msk [vmem:[%s817 + $0x190] sm:$0xff] %vm555, %v810
        %844 = vst.msk [vmem:[%s817 + $0x1a8] sm:$0xff] %vm555, %v811
        %845 = vst.msk [vmem:[%s817 + $0x1b0] sm:$0xff] %vm555, %v812
        %846 = vst.msk [vmem:[%s817 + $0x1c8] sm:$0xff] %vm555, %v813
        %847 = vst.msk [vmem:[%s817 + $0x1d0] sm:$0xff] %vm555, %v814
        %848 = vst.msk [vmem:[%s817 + $0x1e8] sm:$0xff] %vm555, %v815
        %849 = vst.msk [vmem:[%s817 + $0x1f0] sm:$0xff] %vm555, %v816
        %v850 = vld [vmem:[#allocation2] sm:$0xff]
        %v851 = vld [vmem:[#allocation2 + $0x8] sm:$0xff]
        %v852 = vld [vmem:[#allocation2 + $0x10] sm:$0xff]
        %v853 = vld [vmem:[#allocation2 + $0x18] sm:$0x3]
        %v854 = vld [vmem:[#allocation2 + $0x20] sm:$0xff]
        %v855 = vld [vmem:[#allocation2 + $0x28] sm:$0xff]
        %v856 = vld [vmem:[#allocation2 + $0x30] sm:$0xff]
        %v857 = vld [vmem:[#allocation2 + $0x38] sm:$0x3]
        %v858 = vld [vmem:[#allocation2 + $0x40] sm:$0xff]
        %v859 = vld [vmem:[#allocation2 + $0x48] sm:$0xff]
        %v860 = vld [vmem:[#allocation2 + $0x50] sm:$0xff]
        %v861 = vld [vmem:[#allocation2 + $0x58] sm:$0x3]
        %v862 = vld [vmem:[#allocation2 + $0x60] sm:$0xff]
        %v863 = vld [vmem:[#allocation2 + $0x68] sm:$0xff]
        %v864 = vld [vmem:[#allocation2 + $0x70] sm:$0xff]
        %v865 = vld [vmem:[#allocation2 + $0x78] sm:$0x3]
        %v866 = vld [vmem:[#allocation2 + $0x80] sm:$0xff]
        %v867 = vld [vmem:[#allocation2 + $0x88] sm:$0xff]
        %v868 = vld [vmem:[#allocation2 + $0x90] sm:$0xff]
        %v869 = vld [vmem:[#allocation2 + $0x98] sm:$0x3]
        %v870 = vld [vmem:[#allocation2 + $0xa0] sm:$0xff]
        %v871 = vld [vmem:[#allocation2 + $0xa8] sm:$0xff]
        %v872 = vld [vmem:[#allocation2 + $0xb0] sm:$0xff]
        %v873 = vld [vmem:[#allocation2 + $0xb8] sm:$0x3]
        %v874 = vld [vmem:[#allocation2 + $0xc0] sm:$0xff]
        %v875 = vld [vmem:[#allocation2 + $0xc8] sm:$0xff]
        %v876 = vld [vmem:[#allocation2 + $0xd0] sm:$0xff]
        %v877 = vld [vmem:[#allocation2 + $0xd8] sm:$0x3]
        %v878 = vld [vmem:[#allocation2 + $0xe0] sm:$0xff]
        %v879 = vld [vmem:[#allocation2 + $0xe8] sm:$0xff]
        %v880 = vld [vmem:[#allocation2 + $0xf0] sm:$0xff]
        %v881 = vld [vmem:[#allocation2 + $0xf8] sm:$0x3]
        %v882 = vld [vmem:[#allocation2 + $0x100] sm:$0xff]
        %v883 = vld [vmem:[#allocation2 + $0x108] sm:$0xff]
        %v884 = vld [vmem:[#allocation2 + $0x110] sm:$0xff]
        %v885 = vld [vmem:[#allocation2 + $0x118] sm:$0x3]
        %v886 = vld [vmem:[#allocation2 + $0x120] sm:$0xff]
        %v887 = vld [vmem:[#allocation2 + $0x128] sm:$0xff]
        %v888 = vld [vmem:[#allocation2 + $0x130] sm:$0xff]
        %v889 = vld [vmem:[#allocation2 + $0x138] sm:$0x3]
        %v890 = vld [vmem:[#allocation2 + $0x140] sm:$0xff]
        %v891 = vld [vmem:[#allocation2 + $0x148] sm:$0xff]
        %v892 = vld [vmem:[#allocation2 + $0x150] sm:$0xff]
        %v893 = vld [vmem:[#allocation2 + $0x158] sm:$0x3]
        %v894 = vld [vmem:[#allocation2 + $0x160] sm:$0xff]
        %v895 = vld [vmem:[#allocation2 + $0x168] sm:$0xff]
        %v896 = vld [vmem:[#allocation2 + $0x170] sm:$0xff]
        %v897 = vld [vmem:[#allocation2 + $0x178] sm:$0x3]
        %v898 = vld [vmem:[#allocation2 + $0x180] sm:$0xff]
        %v899 = vld [vmem:[#allocation2 + $0x188] sm:$0xff]
        %v900 = vld [vmem:[#allocation2 + $0x190] sm:$0xff]
        %v901 = vld [vmem:[#allocation2 + $0x198] sm:$0x3]
        %v902 = vld [vmem:[#allocation2 + $0x1a0] sm:$0xff]
        %v903 = vld [vmem:[#allocation2 + $0x1a8] sm:$0xff]
        %v904 = vld [vmem:[#allocation2 + $0x1b0] sm:$0xff]
        %v905 = vld [vmem:[#allocation2 + $0x1b8] sm:$0x3]
        %v906 = vld [vmem:[#allocation2 + $0x1c0] sm:$0xff]
        %v907 = vld [vmem:[#allocation2 + $0x1c8] sm:$0xff]
        %v908 = vld [vmem:[#allocation2 + $0x1d0] sm:$0xff]
        %v909 = vld [vmem:[#allocation2 + $0x1d8] sm:$0x3]
        %v910 = vld [vmem:[#allocation2 + $0x1e0] sm:$0xff]
        %v911 = vld [vmem:[#allocation2 + $0x1e8] sm:$0xff]
        %v912 = vld [vmem:[#allocation2 + $0x1f0] sm:$0xff]
        %v913 = vld [vmem:[#allocation2 + $0x1f8] sm:$0x3]
        %v914 = vld [vmem:[#allocation2 + $0x200] sm:$0xff]
        %v915 = vld [vmem:[#allocation2 + $0x208] sm:$0xff]
        %v916 = vld [vmem:[#allocation2 + $0x210] sm:$0xff]
        %v917 = vld [vmem:[#allocation2 + $0x218] sm:$0x3]
        %v918 = vld [vmem:[#allocation2 + $0x220] sm:$0xff]
        %v919 = vld [vmem:[#allocation2 + $0x228] sm:$0xff]
        %v920 = vld [vmem:[#allocation2 + $0x230] sm:$0xff]
        %v921 = vld [vmem:[#allocation2 + $0x238] sm:$0x3]
        %v922 = vld [vmem:[#allocation2 + $0x240] sm:$0xff]
        %v923 = vld [vmem:[#allocation2 + $0x248] sm:$0xff]
        %v924 = vld [vmem:[#allocation2 + $0x250] sm:$0xff]
        %v925 = vld [vmem:[#allocation2 + $0x258] sm:$0x3]
        %v926 = vld [vmem:[#allocation2 + $0x260] sm:$0xff]
        %v927 = vld [vmem:[#allocation2 + $0x268] sm:$0xff]
        %v928 = vld [vmem:[#allocation2 + $0x270] sm:$0xff]
        %v929 = vld [vmem:[#allocation2 + $0x278] sm:$0x3]
        %vm978 = vcmask 1041408
        %v979 = vrot.slane %v850, 6
        %v980 = vrot.slane %v851, 6
        %v981 = vsel %vm978, %v979, %v980
        %v982 = vrot.slane %v852, 6
        %v983 = vsel %vm978, %v980, %v982
        %v984 = vrot.slane %v854, 6
        %v985 = vrot.slane %v855, 6
        %v986 = vsel %vm978, %v984, %v985
        %v987 = vrot.slane %v856, 6
        %v988 = vsel %vm978, %v985, %v987
        %v989 = vrot.slane %v858, 6
        %v990 = vrot.slane %v859, 6
        %v991 = vsel %vm978, %v989, %v990
        %v992 = vrot.slane %v860, 6
        %v993 = vsel %vm978, %v990, %v992
        %v994 = vrot.slane %v862, 6
        %v995 = vrot.slane %v863, 6
        %v996 = vsel %vm978, %v994, %v995
        %v997 = vrot.slane %v864, 6
        %v998 = vsel %vm978, %v995, %v997
        %v999 = vrot.slane %v866, 6
        %v1000 = vrot.slane %v867, 6
        %v1001 = vsel %vm978, %v999, %v1000
        %v1002 = vrot.slane %v868, 6
        %v1003 = vsel %vm978, %v1000, %v1002
        %v1004 = vrot.slane %v870, 6
        %v1005 = vrot.slane %v871, 6
        %v1006 = vsel %vm978, %v1004, %v1005
        %v1007 = vrot.slane %v872, 6
        %v1008 = vsel %vm978, %v1005, %v1007
        %v1009 = vrot.slane %v874, 6
        %v1010 = vrot.slane %v875, 6
        %v1011 = vsel %vm978, %v1009, %v1010
        %v1012 = vrot.slane %v876, 6
        %v1013 = vsel %vm978, %v1010, %v1012
        %v1014 = vrot.slane %v878, 6
        %v1015 = vrot.slane %v879, 6
        %v1016 = vsel %vm978, %v1014, %v1015
        %v1017 = vrot.slane %v880, 6
        %v1018 = vsel %vm978, %v1015, %v1017
        %v1019 = vrot.slane %v882, 6
        %v1020 = vrot.slane %v883, 6
        %v1021 = vsel %vm978, %v1019, %v1020
        %v1022 = vrot.slane %v884, 6
        %v1023 = vsel %vm978, %v1020, %v1022
        %v1024 = vrot.slane %v886, 6
        %v1025 = vrot.slane %v887, 6
        %v1026 = vsel %vm978, %v1024, %v1025
        %v1027 = vrot.slane %v888, 6
        %v1028 = vsel %vm978, %v1025, %v1027
        %v1029 = vrot.slane %v890, 6
        %v1030 = vrot.slane %v891, 6
        %v1031 = vsel %vm978, %v1029, %v1030
        %v1032 = vrot.slane %v892, 6
        %v1033 = vsel %vm978, %v1030, %v1032
        %v1034 = vrot.slane %v894, 6
        %v1035 = vrot.slane %v895, 6
        %v1036 = vsel %vm978, %v1034, %v1035
        %v1037 = vrot.slane %v896, 6
        %v1038 = vsel %vm978, %v1035, %v1037
        %v1039 = vrot.slane %v898, 6
        %v1040 = vrot.slane %v899, 6
        %v1041 = vsel %vm978, %v1039, %v1040
        %v1042 = vrot.slane %v900, 6
        %v1043 = vsel %vm978, %v1040, %v1042
        %v1044 = vrot.slane %v902, 6
        %v1045 = vrot.slane %v903, 6
        %v1046 = vsel %vm978, %v1044, %v1045
        %v1047 = vrot.slane %v904, 6
        %v1048 = vsel %vm978, %v1045, %v1047
        %v1049 = vrot.slane %v906, 6
        %v1050 = vrot.slane %v907, 6
        %v1051 = vsel %vm978, %v1049, %v1050
        %v1052 = vrot.slane %v908, 6
        %v1053 = vsel %vm978, %v1050, %v1052
        %v1054 = vrot.slane %v910, 6
        %v1055 = vrot.slane %v911, 6
        %v1056 = vsel %vm978, %v1054, %v1055
        %v1057 = vrot.slane %v912, 6
        %v1058 = vsel %vm978, %v1055, %v1057
        %v1091 = vpack.c.bf16 %v983, %v981
        %v1092 = vpack.c.bf16 %v988, %v986
        %v1093 = vpack.c.bf16 %v993, %v991
        %v1094 = vpack.c.bf16 %v998, %v996
        %v1095 = vpack.c.bf16 %v1003, %v1001
        %v1096 = vpack.c.bf16 %v1008, %v1006
        %v1097 = vpack.c.bf16 %v1013, %v1011
        %v1098 = vpack.c.bf16 %v1018, %v1016
        %v1099 = vpack.c.bf16 %v1023, %v1021
        %v1100 = vpack.c.bf16 %v1028, %v1026
        %v1101 = vpack.c.bf16 %v1033, %v1031
        %v1102 = vpack.c.bf16 %v1038, %v1036
        %v1103 = vpack.c.bf16 %v1043, %v1041
        %v1104 = vpack.c.bf16 %v1048, %v1046
        %v1105 = vpack.c.bf16 %v1053, %v1051
        %v1106 = vpack.c.bf16 %v1058, %v1056
        %v1107 = vld [vmem:[%s1] sm:$0x3]
        %vm1108 = vcmask 1040384
        %v1109 = vrot.slane %v850, 7
        %v1110 = vrot.slane %v851, 7
        %v1111 = vsel %vm1108, %v1109, %v1110
        %v1112 = vrot.slane %v852, 7
        %v1113 = vsel %vm1108, %v1110, %v1112
        %v1114 = vrot.slane %v854, 7
        %v1115 = vrot.slane %v855, 7
        %v1116 = vsel %vm1108, %v1114, %v1115
        %v1117 = vrot.slane %v856, 7
        %v1118 = vsel %vm1108, %v1115, %v1117
        %v1119 = vrot.slane %v858, 7
        %v1120 = vrot.slane %v859, 7
        %v1121 = vsel %vm1108, %v1119, %v1120
        %v1122 = vrot.slane %v860, 7
        %v1123 = vsel %vm1108, %v1120, %v1122
        %v1124 = vrot.slane %v862, 7
        %v1125 = vrot.slane %v863, 7
        %v1126 = vsel %vm1108, %v1124, %v1125
        %v1127 = vrot.slane %v864, 7
        %v1128 = vsel %vm1108, %v1125, %v1127
        %v1129 = vrot.slane %v866, 7
        %v1130 = vrot.slane %v867, 7
        %v1131 = vsel %vm1108, %v1129, %v1130
        %v1132 = vrot.slane %v868, 7
        %v1133 = vsel %vm1108, %v1130, %v1132
        %v1134 = vrot.slane %v870, 7
        %v1135 = vrot.slane %v871, 7
        %v1136 = vsel %vm1108, %v1134, %v1135
        %v1137 = vrot.slane %v872, 7
        %v1138 = vsel %vm1108, %v1135, %v1137
        %v1139 = vrot.slane %v874, 7
        %v1140 = vrot.slane %v875, 7
        %v1141 = vsel %vm1108, %v1139, %v1140
        %v1142 = vrot.slane %v876, 7
        %v1143 = vsel %vm1108, %v1140, %v1142
        %v1144 = vrot.slane %v878, 7
        %v1145 = vrot.slane %v879, 7
        %v1146 = vsel %vm1108, %v1144, %v1145
        %v1147 = vrot.slane %v880, 7
        %v1148 = vsel %vm1108, %v1145, %v1147
        %v1149 = vrot.slane %v882, 7
        %v1150 = vrot.slane %v883, 7
        %v1151 = vsel %vm1108, %v1149, %v1150
        %v1152 = vrot.slane %v884, 7
        %v1153 = vsel %vm1108, %v1150, %v1152
        %v1154 = vrot.slane %v886, 7
        %v1155 = vrot.slane %v887, 7
        %v1156 = vsel %vm1108, %v1154, %v1155
        %v1157 = vrot.slane %v888, 7
        %v1158 = vsel %vm1108, %v1155, %v1157
        %v1159 = vrot.slane %v890, 7
        %v1160 = vrot.slane %v891, 7
        %v1161 = vsel %vm1108, %v1159, %v1160
        %v1162 = vrot.slane %v892, 7
        %v1163 = vsel %vm1108, %v1160, %v1162
        %v1164 = vrot.slane %v894, 7
        %v1165 = vrot.slane %v895, 7
        %v1166 = vsel %vm1108, %v1164, %v1165
        %v1167 = vrot.slane %v896, 7
        %v1168 = vsel %vm1108, %v1165, %v1167
        %v1169 = vrot.slane %v898, 7
        %v1170 = vrot.slane %v899, 7
        %v1171 = vsel %vm1108, %v1169, %v1170
        %v1172 = vrot.slane %v900, 7
        %v1173 = vsel %vm1108, %v1170, %v1172
        %v1174 = vrot.slane %v902, 7
        %v1175 = vrot.slane %v903, 7
        %v1176 = vsel %vm1108, %v1174, %v1175
        %v1177 = vrot.slane %v904, 7
        %v1178 = vsel %vm1108, %v1175, %v1177
        %v1179 = vrot.slane %v906, 7
        %v1180 = vrot.slane %v907, 7
        %v1181 = vsel %vm1108, %v1179, %v1180
        %v1182 = vrot.slane %v908, 7
        %v1183 = vsel %vm1108, %v1180, %v1182
        %v1184 = vrot.slane %v910, 7
        %v1185 = vrot.slane %v911, 7
        %v1186 = vsel %vm1108, %v1184, %v1185
        %v1187 = vrot.slane %v912, 7
        %v1188 = vsel %vm1108, %v1185, %v1187
        %v1221 = vpack.c.bf16 %v1113, %v1111
        %v1222 = vpack.c.bf16 %v1118, %v1116
        %v1223 = vpack.c.bf16 %v1123, %v1121
        %v1224 = vpack.c.bf16 %v1128, %v1126
        %v1225 = vpack.c.bf16 %v1133, %v1131
        %v1226 = vpack.c.bf16 %v1138, %v1136
        %v1227 = vpack.c.bf16 %v1143, %v1141
        %v1228 = vpack.c.bf16 %v1148, %v1146
        %v1229 = vpack.c.bf16 %v1153, %v1151
        %v1230 = vpack.c.bf16 %v1158, %v1156
        %v1231 = vpack.c.bf16 %v1163, %v1161
        %v1232 = vpack.c.bf16 %v1168, %v1166
        %v1233 = vpack.c.bf16 %v1173, %v1171
        %v1234 = vpack.c.bf16 %v1178, %v1176
        %v1235 = vpack.c.bf16 %v1183, %v1181
        %v1236 = vpack.c.bf16 %v1188, %v1186
        %s1237 = scalar_lea.vmem %s1, 2
        %v1238 = vld [vmem:[%s1237] sm:$0x3]
        %v1240 = vsel %vm555, %v1221, 0
        %v1243 = vsel %vm555, %v1222, 0
        %v1246 = vsel %vm555, %v1223, 0
        %v1249 = vsel %vm555, %v1224, 0
        %v1252 = vsel %vm555, %v1225, 0
        %v1255 = vsel %vm555, %v1226, 0
        %v1258 = vsel %vm555, %v1227, 0
        %v1261 = vsel %vm555, %v1228, 0
        %v1264 = vsel %vm555, %v1229, 0
        %v1267 = vsel %vm555, %v1230, 0
        %v1270 = vsel %vm555, %v1231, 0
        %v1273 = vsel %vm555, %v1232, 0
        %v1276 = vsel %vm555, %v1233, 0
        %v1279 = vsel %vm555, %v1234, 0
        %v1282 = vsel %vm555, %v1235, 0
        %v1285 = vsel %vm555, %v1236, 0
        %v1287 = vsel %vm1108, 4294967295, 65535
        %v1288 = vsel %vm978, %v1287, 0
        %v1290 = vand.u32 %v1238, %v1288
        %1292 = vmatpush.bf16.msra.mxu0 0
        %1293 = vmatpush.bf16.msra.mxu0 0
        %1294 = vmatpush.bf16.msra.mxu0 0
        %1295 = vmatpush.bf16.msra.mxu0 0
        %1296 = vmatpush.bf16.msra.mxu0 0
        %1297 = vmatpush.bf16.msra.mxu0 0
        %1298 = vmatpush.bf16.msra.mxu0 0
        %1299 = vmatpush.bf16.msra.mxu0 %v1290
        %1300 = vmatmul.bf16.gmra.mxu0 %v1240
        %v1301 = vpop.f32.mrf.mxu0
        %v1302 = vadd.f32 0.0, %v1301
        %v1303 = vpop.f32.mrf.mxu0
        %v1304 = vadd.f32 0.0, %v1303
        %1305 = vmatmul.bf16.gmra.mxu0 %v1243
        %v1306 = vpop.f32.mrf.mxu0
        %v1307 = vadd.f32 0.0, %v1306
        %v1308 = vpop.f32.mrf.mxu0
        %v1309 = vadd.f32 0.0, %v1308
        %1310 = vmatmul.bf16.gmra.mxu0 %v1246
        %v1311 = vpop.f32.mrf.mxu0
        %v1312 = vadd.f32 0.0, %v1311
        %v1313 = vpop.f32.mrf.mxu0
        %v1314 = vadd.f32 0.0, %v1313
        %1315 = vmatmul.bf16.gmra.mxu0 %v1249
        %v1316 = vpop.f32.mrf.mxu0
        %v1317 = vadd.f32 0.0, %v1316
        %v1318 = vpop.f32.mrf.mxu0
        %v1319 = vadd.f32 0.0, %v1318
        %1320 = vmatmul.bf16.gmra.mxu0 %v1252
        %v1321 = vpop.f32.mrf.mxu0
        %v1322 = vadd.f32 0.0, %v1321
        %v1323 = vpop.f32.mrf.mxu0
        %v1324 = vadd.f32 0.0, %v1323
        %1325 = vmatmul.bf16.gmra.mxu0 %v1255
        %v1326 = vpop.f32.mrf.mxu0
        %v1327 = vadd.f32 0.0, %v1326
        %v1328 = vpop.f32.mrf.mxu0
        %v1329 = vadd.f32 0.0, %v1328
        %1330 = vmatmul.bf16.gmra.mxu0 %v1258
        %v1331 = vpop.f32.mrf.mxu0
        %v1332 = vadd.f32 0.0, %v1331
        %v1333 = vpop.f32.mrf.mxu0
        %v1334 = vadd.f32 0.0, %v1333
        %1335 = vmatmul.bf16.gmra.mxu0 %v1261
        %v1336 = vpop.f32.mrf.mxu0
        %v1337 = vadd.f32 0.0, %v1336
        %v1338 = vpop.f32.mrf.mxu0
        %v1339 = vadd.f32 0.0, %v1338
        %1340 = vmatmul.bf16.gmra.mxu0 %v1264
        %v1341 = vpop.f32.mrf.mxu0
        %v1342 = vadd.f32 0.0, %v1341
        %v1343 = vpop.f32.mrf.mxu0
        %v1344 = vadd.f32 0.0, %v1343
        %1345 = vmatmul.bf16.gmra.mxu0 %v1267
        %v1346 = vpop.f32.mrf.mxu0
        %v1347 = vadd.f32 0.0, %v1346
        %v1348 = vpop.f32.mrf.mxu0
        %v1349 = vadd.f32 0.0, %v1348
        %1350 = vmatmul.bf16.gmra.mxu0 %v1270
        %v1351 = vpop.f32.mrf.mxu0
        %v1352 = vadd.f32 0.0, %v1351
        %v1353 = vpop.f32.mrf.mxu0
        %v1354 = vadd.f32 0.0, %v1353
        %1355 = vmatmul.bf16.gmra.mxu0 %v1273
        %v1356 = vpop.f32.mrf.mxu0
        %v1357 = vadd.f32 0.0, %v1356
        %v1358 = vpop.f32.mrf.mxu0
        %v1359 = vadd.f32 0.0, %v1358
        %1360 = vmatmul.bf16.gmra.mxu0 %v1276
        %v1361 = vpop.f32.mrf.mxu0
        %v1362 = vadd.f32 0.0, %v1361
        %v1363 = vpop.f32.mrf.mxu0
        %v1364 = vadd.f32 0.0, %v1363
        %1365 = vmatmul.bf16.gmra.mxu0 %v1279
        %v1366 = vpop.f32.mrf.mxu0
        %v1367 = vadd.f32 0.0, %v1366
        %v1368 = vpop.f32.mrf.mxu0
        %v1369 = vadd.f32 0.0, %v1368
        %1370 = vmatmul.bf16.gmra.mxu0 %v1282
        %v1371 = vpop.f32.mrf.mxu0
        %v1372 = vadd.f32 0.0, %v1371
        %v1373 = vpop.f32.mrf.mxu0
        %v1374 = vadd.f32 0.0, %v1373
        %1375 = vmatmul.bf16.gmra.mxu0 %v1285
        %v1376 = vpop.f32.mrf.mxu0
        %v1377 = vadd.f32 0.0, %v1376
        %v1378 = vpop.f32.mrf.mxu0
        %v1379 = vadd.f32 0.0, %v1378
        %1380 = vdwg.mxu0
        %v1382 = vsel %vm555, %v1091, 0
        %v1385 = vsel %vm555, %v1092, 0
        %v1388 = vsel %vm555, %v1093, 0
        %v1391 = vsel %vm555, %v1094, 0
        %v1394 = vsel %vm555, %v1095, 0
        %v1397 = vsel %vm555, %v1096, 0
        %v1400 = vsel %vm555, %v1097, 0
        %v1403 = vsel %vm555, %v1098, 0
        %v1406 = vsel %vm555, %v1099, 0
        %v1409 = vsel %vm555, %v1100, 0
        %v1412 = vsel %vm555, %v1101, 0
        %v1415 = vsel %vm555, %v1102, 0
        %v1418 = vsel %vm555, %v1103, 0
        %v1421 = vsel %vm555, %v1104, 0
        %v1424 = vsel %vm555, %v1105, 0
        %v1427 = vsel %vm555, %v1106, 0
        %v1430 = vand.u32 %v1107, %v1288
        %1432 = vmatpush.bf16.msra.mxu0 0
        %1433 = vmatpush.bf16.msra.mxu0 0
        %1434 = vmatpush.bf16.msra.mxu0 0
        %1435 = vmatpush.bf16.msra.mxu0 0
        %1436 = vmatpush.bf16.msra.mxu0 0
        %1437 = vmatpush.bf16.msra.mxu0 0
        %1438 = vmatpush.bf16.msra.mxu0 0
        %1439 = vmatpush.bf16.msra.mxu0 %v1430
        %1440 = vmatmul.bf16.gmra.mxu0 %v1382
        %v1441 = vpop.f32.mrf.mxu0
        %v1442 = vadd.f32 %v1302, %v1441
        %v1443 = vpop.f32.mrf.mxu0
        %v1444 = vadd.f32 %v1304, %v1443
        %1445 = vmatmul.bf16.gmra.mxu0 %v1385
        %v1446 = vpop.f32.mrf.mxu0
        %v1447 = vadd.f32 %v1307, %v1446
        %v1448 = vpop.f32.mrf.mxu0
        %v1449 = vadd.f32 %v1309, %v1448
        %1450 = vmatmul.bf16.gmra.mxu0 %v1388
        %v1451 = vpop.f32.mrf.mxu0
        %v1452 = vadd.f32 %v1312, %v1451
        %v1453 = vpop.f32.mrf.mxu0
        %v1454 = vadd.f32 %v1314, %v1453
        %1455 = vmatmul.bf16.gmra.mxu0 %v1391
        %v1456 = vpop.f32.mrf.mxu0
        %v1457 = vadd.f32 %v1317, %v1456
        %v1458 = vpop.f32.mrf.mxu0
        %v1459 = vadd.f32 %v1319, %v1458
        %1460 = vmatmul.bf16.gmra.mxu0 %v1394
        %v1461 = vpop.f32.mrf.mxu0
        %v1462 = vadd.f32 %v1322, %v1461
        %v1463 = vpop.f32.mrf.mxu0
        %v1464 = vadd.f32 %v1324, %v1463
        %1465 = vmatmul.bf16.gmra.mxu0 %v1397
        %v1466 = vpop.f32.mrf.mxu0
        %v1467 = vadd.f32 %v1327, %v1466
        %v1468 = vpop.f32.mrf.mxu0
        %v1469 = vadd.f32 %v1329, %v1468
        %1470 = vmatmul.bf16.gmra.mxu0 %v1400
        %v1471 = vpop.f32.mrf.mxu0
        %v1472 = vadd.f32 %v1332, %v1471
        %v1473 = vpop.f32.mrf.mxu0
        %v1474 = vadd.f32 %v1334, %v1473
        %1475 = vmatmul.bf16.gmra.mxu0 %v1403
        %v1476 = vpop.f32.mrf.mxu0
        %v1477 = vadd.f32 %v1337, %v1476
        %v1478 = vpop.f32.mrf.mxu0
        %v1479 = vadd.f32 %v1339, %v1478
        %1480 = vmatmul.bf16.gmra.mxu0 %v1406
        %v1481 = vpop.f32.mrf.mxu0
        %v1482 = vadd.f32 %v1342, %v1481
        %v1483 = vpop.f32.mrf.mxu0
        %v1484 = vadd.f32 %v1344, %v1483
        %1485 = vmatmul.bf16.gmra.mxu0 %v1409
        %v1486 = vpop.f32.mrf.mxu0
        %v1487 = vadd.f32 %v1347, %v1486
        %v1488 = vpop.f32.mrf.mxu0
        %v1489 = vadd.f32 %v1349, %v1488
        %1490 = vmatmul.bf16.gmra.mxu0 %v1412
        %v1491 = vpop.f32.mrf.mxu0
        %v1492 = vadd.f32 %v1352, %v1491
        %v1493 = vpop.f32.mrf.mxu0
        %v1494 = vadd.f32 %v1354, %v1493
        %1495 = vmatmul.bf16.gmra.mxu0 %v1415
        %v1496 = vpop.f32.mrf.mxu0
        %v1497 = vadd.f32 %v1357, %v1496
        %v1498 = vpop.f32.mrf.mxu0
        %v1499 = vadd.f32 %v1359, %v1498
        %1500 = vmatmul.bf16.gmra.mxu0 %v1418
        %v1501 = vpop.f32.mrf.mxu0
        %v1502 = vadd.f32 %v1362, %v1501
        %v1503 = vpop.f32.mrf.mxu0
        %v1504 = vadd.f32 %v1364, %v1503
        %1505 = vmatmul.bf16.gmra.mxu0 %v1421
        %v1506 = vpop.f32.mrf.mxu0
        %v1507 = vadd.f32 %v1367, %v1506
        %v1508 = vpop.f32.mrf.mxu0
        %v1509 = vadd.f32 %v1369, %v1508
        %1510 = vmatmul.bf16.gmra.mxu0 %v1424
        %v1511 = vpop.f32.mrf.mxu0
        %v1512 = vadd.f32 %v1372, %v1511
        %v1513 = vpop.f32.mrf.mxu0
        %v1514 = vadd.f32 %v1374, %v1513
        %1515 = vmatmul.bf16.gmra.mxu0 %v1427
        %v1516 = vpop.f32.mrf.mxu0
        %v1517 = vadd.f32 %v1377, %v1516
        %v1518 = vpop.f32.mrf.mxu0
        %v1519 = vadd.f32 %v1379, %v1518
        %1520 = vdwg.mxu0
        %v1521 = vpack.c.bf16 %v852, %v851
        %v1522 = vpack.c.bf16 %v856, %v855
        %v1523 = vpack.c.bf16 %v860, %v859
        %v1524 = vpack.c.bf16 %v864, %v863
        %v1525 = vpack.c.bf16 %v868, %v867
        %v1526 = vpack.c.bf16 %v872, %v871
        %v1527 = vpack.c.bf16 %v876, %v875
        %v1528 = vpack.c.bf16 %v880, %v879
        %v1529 = vpack.c.bf16 %v884, %v883
        %v1530 = vpack.c.bf16 %v888, %v887
        %v1531 = vpack.c.bf16 %v892, %v891
        %v1532 = vpack.c.bf16 %v896, %v895
        %v1533 = vpack.c.bf16 %v900, %v899
        %v1534 = vpack.c.bf16 %v904, %v903
        %v1535 = vpack.c.bf16 %v908, %v907
        %v1536 = vpack.c.bf16 %v912, %v911
        %s1537 = scalar_lea.vmem %s1, 4
        %v1538 = vld [vmem:[%s1537] sm:$0x3]
        %v1540 = vsel %vm555, %v1521, 0
        %v1543 = vsel %vm555, %v1522, 0
        %v1546 = vsel %vm555, %v1523, 0
        %v1549 = vsel %vm555, %v1524, 0
        %v1552 = vsel %vm555, %v1525, 0
        %v1555 = vsel %vm555, %v1526, 0
        %v1558 = vsel %vm555, %v1527, 0
        %v1561 = vsel %vm555, %v1528, 0
        %v1564 = vsel %vm555, %v1529, 0
        %v1567 = vsel %vm555, %v1530, 0
        %v1570 = vsel %vm555, %v1531, 0
        %v1573 = vsel %vm555, %v1532, 0
        %v1576 = vsel %vm555, %v1533, 0
        %v1579 = vsel %vm555, %v1534, 0
        %v1582 = vsel %vm555, %v1535, 0
        %v1585 = vsel %vm555, %v1536, 0
        %v1588 = vand.u32 %v1538, %v1288
        %1590 = vmatpush.bf16.msra.mxu0 0
        %1591 = vmatpush.bf16.msra.mxu0 0
        %1592 = vmatpush.bf16.msra.mxu0 0
        %1593 = vmatpush.bf16.msra.mxu0 0
        %1594 = vmatpush.bf16.msra.mxu0 0
        %1595 = vmatpush.bf16.msra.mxu0 0
        %1596 = vmatpush.bf16.msra.mxu0 0
        %1597 = vmatpush.bf16.msra.mxu0 %v1588
        %1598 = vmatmul.bf16.gmra.mxu0 %v1540
        %v1599 = vpop.f32.mrf.mxu0
        %v1600 = vadd.f32 0.0, %v1599
        %v1601 = vpop.f32.mrf.mxu0
        %v1602 = vadd.f32 0.0, %v1601
        %1603 = vmatmul.bf16.gmra.mxu0 %v1543
        %v1604 = vpop.f32.mrf.mxu0
        %v1605 = vadd.f32 0.0, %v1604
        %v1606 = vpop.f32.mrf.mxu0
        %v1607 = vadd.f32 0.0, %v1606
        %1608 = vmatmul.bf16.gmra.mxu0 %v1546
        %v1609 = vpop.f32.mrf.mxu0
        %v1610 = vadd.f32 0.0, %v1609
        %v1611 = vpop.f32.mrf.mxu0
        %v1612 = vadd.f32 0.0, %v1611
        %1613 = vmatmul.bf16.gmra.mxu0 %v1549
        %v1614 = vpop.f32.mrf.mxu0
        %v1615 = vadd.f32 0.0, %v1614
        %v1616 = vpop.f32.mrf.mxu0
        %v1617 = vadd.f32 0.0, %v1616
        %1618 = vmatmul.bf16.gmra.mxu0 %v1552
        %v1619 = vpop.f32.mrf.mxu0
        %v1620 = vadd.f32 0.0, %v1619
        %v1621 = vpop.f32.mrf.mxu0
        %v1622 = vadd.f32 0.0, %v1621
        %1623 = vmatmul.bf16.gmra.mxu0 %v1555
        %v1624 = vpop.f32.mrf.mxu0
        %v1625 = vadd.f32 0.0, %v1624
        %v1626 = vpop.f32.mrf.mxu0
        %v1627 = vadd.f32 0.0, %v1626
        %1628 = vmatmul.bf16.gmra.mxu0 %v1558
        %v1629 = vpop.f32.mrf.mxu0
        %v1630 = vadd.f32 0.0, %v1629
        %v1631 = vpop.f32.mrf.mxu0
        %v1632 = vadd.f32 0.0, %v1631
        %1633 = vmatmul.bf16.gmra.mxu0 %v1561
        %v1634 = vpop.f32.mrf.mxu0
        %v1635 = vadd.f32 0.0, %v1634
        %v1636 = vpop.f32.mrf.mxu0
        %v1637 = vadd.f32 0.0, %v1636
        %1638 = vmatmul.bf16.gmra.mxu0 %v1564
        %v1639 = vpop.f32.mrf.mxu0
        %v1640 = vadd.f32 0.0, %v1639
        %v1641 = vpop.f32.mrf.mxu0
        %v1642 = vadd.f32 0.0, %v1641
        %1643 = vmatmul.bf16.gmra.mxu0 %v1567
        %v1644 = vpop.f32.mrf.mxu0
        %v1645 = vadd.f32 0.0, %v1644
        %v1646 = vpop.f32.mrf.mxu0
        %v1647 = vadd.f32 0.0, %v1646
        %1648 = vmatmul.bf16.gmra.mxu0 %v1570
        %v1649 = vpop.f32.mrf.mxu0
        %v1650 = vadd.f32 0.0, %v1649
        %v1651 = vpop.f32.mrf.mxu0
        %v1652 = vadd.f32 0.0, %v1651
        %1653 = vmatmul.bf16.gmra.mxu0 %v1573
        %v1654 = vpop.f32.mrf.mxu0
        %v1655 = vadd.f32 0.0, %v1654
        %v1656 = vpop.f32.mrf.mxu0
        %v1657 = vadd.f32 0.0, %v1656
        %1658 = vmatmul.bf16.gmra.mxu0 %v1576
        %v1659 = vpop.f32.mrf.mxu0
        %v1660 = vadd.f32 0.0, %v1659
        %v1661 = vpop.f32.mrf.mxu0
        %v1662 = vadd.f32 0.0, %v1661
        %1663 = vmatmul.bf16.gmra.mxu0 %v1579
        %v1664 = vpop.f32.mrf.mxu0
        %v1665 = vadd.f32 0.0, %v1664
        %v1666 = vpop.f32.mrf.mxu0
        %v1667 = vadd.f32 0.0, %v1666
        %1668 = vmatmul.bf16.gmra.mxu0 %v1582
        %v1669 = vpop.f32.mrf.mxu0
        %v1670 = vadd.f32 0.0, %v1669
        %v1671 = vpop.f32.mrf.mxu0
        %v1672 = vadd.f32 0.0, %v1671
        %1673 = vmatmul.bf16.gmra.mxu0 %v1585
        %v1674 = vpop.f32.mrf.mxu0
        %v1675 = vadd.f32 0.0, %v1674
        %v1676 = vpop.f32.mrf.mxu0
        %v1677 = vadd.f32 0.0, %v1676
        %1678 = vdwg.mxu0
        %v1679 = vadd.f32 %v1442, %v1600
        %v1680 = vadd.f32 %v1444, %v1602
        %v1681 = vadd.f32 %v1447, %v1605
        %v1682 = vadd.f32 %v1449, %v1607
        %v1683 = vadd.f32 %v1452, %v1610
        %v1684 = vadd.f32 %v1454, %v1612
        %v1685 = vadd.f32 %v1457, %v1615
        %v1686 = vadd.f32 %v1459, %v1617
        %v1687 = vadd.f32 %v1462, %v1620
        %v1688 = vadd.f32 %v1464, %v1622
        %v1689 = vadd.f32 %v1467, %v1625
        %v1690 = vadd.f32 %v1469, %v1627
        %v1691 = vadd.f32 %v1472, %v1630
        %v1692 = vadd.f32 %v1474, %v1632
        %v1693 = vadd.f32 %v1477, %v1635
        %v1694 = vadd.f32 %v1479, %v1637
        %v1695 = vadd.f32 %v1482, %v1640
        %v1696 = vadd.f32 %v1484, %v1642
        %v1697 = vadd.f32 %v1487, %v1645
        %v1698 = vadd.f32 %v1489, %v1647
        %v1699 = vadd.f32 %v1492, %v1650
        %v1700 = vadd.f32 %v1494, %v1652
        %v1701 = vadd.f32 %v1497, %v1655
        %v1702 = vadd.f32 %v1499, %v1657
        %v1703 = vadd.f32 %v1502, %v1660
        %v1704 = vadd.f32 %v1504, %v1662
        %v1705 = vadd.f32 %v1507, %v1665
        %v1706 = vadd.f32 %v1509, %v1667
        %v1707 = vadd.f32 %v1512, %v1670
        %v1708 = vadd.f32 %v1514, %v1672
        %v1709 = vadd.f32 %v1517, %v1675
        %v1710 = vadd.f32 %v1519, %v1677
        %vm1727 = vcmask 1046528
        %v1728 = vrot.slane %v851, 1
        %v1729 = vrot.slane %v852, 1
        %v1730 = vsel %vm1727, %v1728, %v1729
        %v1731 = vrot.slane %v853, 1
        %v1732 = vsel %vm1727, %v1729, %v1731
        %v1733 = vrot.slane %v855, 1
        %v1734 = vrot.slane %v856, 1
        %v1735 = vsel %vm1727, %v1733, %v1734
        %v1736 = vrot.slane %v857, 1
        %v1737 = vsel %vm1727, %v1734, %v1736
        %v1738 = vrot.slane %v859, 1
        %v1739 = vrot.slane %v860, 1
        %v1740 = vsel %vm1727, %v1738, %v1739
        %v1741 = vrot.slane %v861, 1
        %v1742 = vsel %vm1727, %v1739, %v1741
        %v1743 = vrot.slane %v863, 1
        %v1744 = vrot.slane %v864, 1
        %v1745 = vsel %vm1727, %v1743, %v1744
        %v1746 = vrot.slane %v865, 1
        %v1747 = vsel %vm1727, %v1744, %v1746
        %v1748 = vrot.slane %v867, 1
        %v1749 = vrot.slane %v868, 1
        %v1750 = vsel %vm1727, %v1748, %v1749
        %v1751 = vrot.slane %v869, 1
        %v1752 = vsel %vm1727, %v1749, %v1751
        %v1753 = vrot.slane %v871, 1
        %v1754 = vrot.slane %v872, 1
        %v1755 = vsel %vm1727, %v1753, %v1754
        %v1756 = vrot.slane %v873, 1
        %v1757 = vsel %vm1727, %v1754, %v1756
        %v1758 = vrot.slane %v875, 1
        %v1759 = vrot.slane %v876, 1
        %v1760 = vsel %vm1727, %v1758, %v1759
        %v1761 = vrot.slane %v877, 1
        %v1762 = vsel %vm1727, %v1759, %v1761
        %v1763 = vrot.slane %v879, 1
        %v1764 = vrot.slane %v880, 1
        %v1765 = vsel %vm1727, %v1763, %v1764
        %v1766 = vrot.slane %v881, 1
        %v1767 = vsel %vm1727, %v1764, %v1766
        %v1768 = vrot.slane %v883, 1
        %v1769 = vrot.slane %v884, 1
        %v1770 = vsel %vm1727, %v1768, %v1769
        %v1771 = vrot.slane %v885, 1
        %v1772 = vsel %vm1727, %v1769, %v1771
        %v1773 = vrot.slane %v887, 1
        %v1774 = vrot.slane %v888, 1
        %v1775 = vsel %vm1727, %v1773, %v1774
        %v1776 = vrot.slane %v889, 1
        %v1777 = vsel %vm1727, %v1774, %v1776
        %v1778 = vrot.slane %v891, 1
        %v1779 = vrot.slane %v892, 1
        %v1780 = vsel %vm1727, %v1778, %v1779
        %v1781 = vrot.slane %v893, 1
        %v1782 = vsel %vm1727, %v1779, %v1781
        %v1783 = vrot.slane %v895, 1
        %v1784 = vrot.slane %v896, 1
        %v1785 = vsel %vm1727, %v1783, %v1784
        %v1786 = vrot.slane %v897, 1
        %v1787 = vsel %vm1727, %v1784, %v1786
        %v1788 = vrot.slane %v899, 1
        %v1789 = vrot.slane %v900, 1
        %v1790 = vsel %vm1727, %v1788, %v1789
        %v1791 = vrot.slane %v901, 1
        %v1792 = vsel %vm1727, %v1789, %v1791
        %v1793 = vrot.slane %v903, 1
        %v1794 = vrot.slane %v904, 1
        %v1795 = vsel %vm1727, %v1793, %v1794
        %v1796 = vrot.slane %v905, 1
        %v1797 = vsel %vm1727, %v1794, %v1796
        %v1798 = vrot.slane %v907, 1
        %v1799 = vrot.slane %v908, 1
        %v1800 = vsel %vm1727, %v1798, %v1799
        %v1801 = vrot.slane %v909, 1
        %v1802 = vsel %vm1727, %v1799, %v1801
        %v1803 = vrot.slane %v911, 1
        %v1804 = vrot.slane %v912, 1
        %v1805 = vsel %vm1727, %v1803, %v1804
        %v1806 = vrot.slane %v913, 1
        %v1807 = vsel %vm1727, %v1804, %v1806
        %v1840 = vpack.c.bf16 %v1732, %v1730
        %v1841 = vpack.c.bf16 %v1737, %v1735
        %v1842 = vpack.c.bf16 %v1742, %v1740
        %v1843 = vpack.c.bf16 %v1747, %v1745
        %v1844 = vpack.c.bf16 %v1752, %v1750
        %v1845 = vpack.c.bf16 %v1757, %v1755
        %v1846 = vpack.c.bf16 %v1762, %v1760
        %v1847 = vpack.c.bf16 %v1767, %v1765
        %v1848 = vpack.c.bf16 %v1772, %v1770
        %v1849 = vpack.c.bf16 %v1777, %v1775
        %v1850 = vpack.c.bf16 %v1782, %v1780
        %v1851 = vpack.c.bf16 %v1787, %v1785
        %v1852 = vpack.c.bf16 %v1792, %v1790
        %v1853 = vpack.c.bf16 %v1797, %v1795
        %v1854 = vpack.c.bf16 %v1802, %v1800
        %v1855 = vpack.c.bf16 %v1807, %v1805
        %s1856 = scalar_lea.vmem %s1, 6
        %v1857 = vld [vmem:[%s1856] sm:$0x3]
        %v1859 = vsel %vm555, %v1840, 0
        %v1862 = vsel %vm555, %v1841, 0
        %v1865 = vsel %vm555, %v1842, 0
        %v1868 = vsel %vm555, %v1843, 0
        %v1871 = vsel %vm555, %v1844, 0
        %v1874 = vsel %vm555, %v1845, 0
        %v1877 = vsel %vm555, %v1846, 0
        %v1880 = vsel %vm555, %v1847, 0
        %v1883 = vsel %vm555, %v1848, 0
        %v1886 = vsel %vm555, %v1849, 0
        %v1889 = vsel %vm555, %v1850, 0
        %v1892 = vsel %vm555, %v1851, 0
        %v1895 = vsel %vm555, %v1852, 0
        %v1898 = vsel %vm555, %v1853, 0
        %v1901 = vsel %vm555, %v1854, 0
        %v1904 = vsel %vm555, %v1855, 0
        %v1907 = vand.u32 %v1857, %v1288
        %1909 = vmatpush.bf16.msra.mxu0 0
        %1910 = vmatpush.bf16.msra.mxu0 0
        %1911 = vmatpush.bf16.msra.mxu0 0
        %1912 = vmatpush.bf16.msra.mxu0 0
        %1913 = vmatpush.bf16.msra.mxu0 0
        %1914 = vmatpush.bf16.msra.mxu0 0
        %1915 = vmatpush.bf16.msra.mxu0 0
        %1916 = vmatpush.bf16.msra.mxu0 %v1907
        %1917 = vmatmul.bf16.gmra.mxu0 %v1859
        %v1918 = vpop.f32.mrf.mxu0
        %v1919 = vadd.f32 0.0, %v1918
        %v1920 = vpop.f32.mrf.mxu0
        %v1921 = vadd.f32 0.0, %v1920
        %1922 = vmatmul.bf16.gmra.mxu0 %v1862
        %v1923 = vpop.f32.mrf.mxu0
        %v1924 = vadd.f32 0.0, %v1923
        %v1925 = vpop.f32.mrf.mxu0
        %v1926 = vadd.f32 0.0, %v1925
        %1927 = vmatmul.bf16.gmra.mxu0 %v1865
        %v1928 = vpop.f32.mrf.mxu0
        %v1929 = vadd.f32 0.0, %v1928
        %v1930 = vpop.f32.mrf.mxu0
        %v1931 = vadd.f32 0.0, %v1930
        %1932 = vmatmul.bf16.gmra.mxu0 %v1868
        %v1933 = vpop.f32.mrf.mxu0
        %v1934 = vadd.f32 0.0, %v1933
        %v1935 = vpop.f32.mrf.mxu0
        %v1936 = vadd.f32 0.0, %v1935
        %1937 = vmatmul.bf16.gmra.mxu0 %v1871
        %v1938 = vpop.f32.mrf.mxu0
        %v1939 = vadd.f32 0.0, %v1938
        %v1940 = vpop.f32.mrf.mxu0
        %v1941 = vadd.f32 0.0, %v1940
        %1942 = vmatmul.bf16.gmra.mxu0 %v1874
        %v1943 = vpop.f32.mrf.mxu0
        %v1944 = vadd.f32 0.0, %v1943
        %v1945 = vpop.f32.mrf.mxu0
        %v1946 = vadd.f32 0.0, %v1945
        %1947 = vmatmul.bf16.gmra.mxu0 %v1877
        %v1948 = vpop.f32.mrf.mxu0
        %v1949 = vadd.f32 0.0, %v1948
        %v1950 = vpop.f32.mrf.mxu0
        %v1951 = vadd.f32 0.0, %v1950
        %1952 = vmatmul.bf16.gmra.mxu0 %v1880
        %v1953 = vpop.f32.mrf.mxu0
        %v1954 = vadd.f32 0.0, %v1953
        %v1955 = vpop.f32.mrf.mxu0
        %v1956 = vadd.f32 0.0, %v1955
        %1957 = vmatmul.bf16.gmra.mxu0 %v1883
        %v1958 = vpop.f32.mrf.mxu0
        %v1959 = vadd.f32 0.0, %v1958
        %v1960 = vpop.f32.mrf.mxu0
        %v1961 = vadd.f32 0.0, %v1960
        %1962 = vmatmul.bf16.gmra.mxu0 %v1886
        %v1963 = vpop.f32.mrf.mxu0
        %v1964 = vadd.f32 0.0, %v1963
        %v1965 = vpop.f32.mrf.mxu0
        %v1966 = vadd.f32 0.0, %v1965
        %1967 = vmatmul.bf16.gmra.mxu0 %v1889
        %v1968 = vpop.f32.mrf.mxu0
        %v1969 = vadd.f32 0.0, %v1968
        %v1970 = vpop.f32.mrf.mxu0
        %v1971 = vadd.f32 0.0, %v1970
        %1972 = vmatmul.bf16.gmra.mxu0 %v1892
        %v1973 = vpop.f32.mrf.mxu0
        %v1974 = vadd.f32 0.0, %v1973
        %v1975 = vpop.f32.mrf.mxu0
        %v1976 = vadd.f32 0.0, %v1975
        %1977 = vmatmul.bf16.gmra.mxu0 %v1895
        %v1978 = vpop.f32.mrf.mxu0
        %v1979 = vadd.f32 0.0, %v1978
        %v1980 = vpop.f32.mrf.mxu0
        %v1981 = vadd.f32 0.0, %v1980
        %1982 = vmatmul.bf16.gmra.mxu0 %v1898
        %v1983 = vpop.f32.mrf.mxu0
        %v1984 = vadd.f32 0.0, %v1983
        %v1985 = vpop.f32.mrf.mxu0
        %v1986 = vadd.f32 0.0, %v1985
        %1987 = vmatmul.bf16.gmra.mxu0 %v1901
        %v1988 = vpop.f32.mrf.mxu0
        %v1989 = vadd.f32 0.0, %v1988
        %v1990 = vpop.f32.mrf.mxu0
        %v1991 = vadd.f32 0.0, %v1990
        %1992 = vmatmul.bf16.gmra.mxu0 %v1904
        %v1993 = vpop.f32.mrf.mxu0
        %v1994 = vadd.f32 0.0, %v1993
        %v1995 = vpop.f32.mrf.mxu0
        %v1996 = vadd.f32 0.0, %v1995
        %1997 = vdwg.mxu0
        %v1998 = vadd.f32 %v1679, %v1919
        %v1999 = vadd.f32 %v1680, %v1921
        %v2000 = vadd.f32 %v1681, %v1924
        %v2001 = vadd.f32 %v1682, %v1926
        %v2002 = vadd.f32 %v1683, %v1929
        %v2003 = vadd.f32 %v1684, %v1931
        %v2004 = vadd.f32 %v1685, %v1934
        %v2005 = vadd.f32 %v1686, %v1936
        %v2006 = vadd.f32 %v1687, %v1939
        %v2007 = vadd.f32 %v1688, %v1941
        %v2008 = vadd.f32 %v1689, %v1944
        %v2009 = vadd.f32 %v1690, %v1946
        %v2010 = vadd.f32 %v1691, %v1949
        %v2011 = vadd.f32 %v1692, %v1951
        %v2012 = vadd.f32 %v1693, %v1954
        %v2013 = vadd.f32 %v1694, %v1956
        %v2014 = vadd.f32 %v1695, %v1959
        %v2015 = vadd.f32 %v1696, %v1961
        %v2016 = vadd.f32 %v1697, %v1964
        %v2017 = vadd.f32 %v1698, %v1966
        %v2018 = vadd.f32 %v1699, %v1969
        %v2019 = vadd.f32 %v1700, %v1971
        %v2020 = vadd.f32 %v1701, %v1974
        %v2021 = vadd.f32 %v1702, %v1976
        %v2022 = vadd.f32 %v1703, %v1979
        %v2023 = vadd.f32 %v1704, %v1981
        %v2024 = vadd.f32 %v1705, %v1984
        %v2025 = vadd.f32 %v1706, %v1986
        %v2026 = vadd.f32 %v1707, %v1989
        %v2027 = vadd.f32 %v1708, %v1991
        %v2028 = vadd.f32 %v1709, %v1994
        %v2029 = vadd.f32 %v1710, %v1996
        %vm2030 = vcmask 1045504
        %v2031 = vrot.slane %v851, 2
        %v2032 = vrot.slane %v852, 2
        %v2033 = vsel %vm2030, %v2031, %v2032
        %v2034 = vrot.slane %v853, 2
        %v2035 = vsel %vm2030, %v2032, %v2034
        %v2036 = vrot.slane %v855, 2
        %v2037 = vrot.slane %v856, 2
        %v2038 = vsel %vm2030, %v2036, %v2037
        %v2039 = vrot.slane %v857, 2
        %v2040 = vsel %vm2030, %v2037, %v2039
        %v2041 = vrot.slane %v859, 2
        %v2042 = vrot.slane %v860, 2
        %v2043 = vsel %vm2030, %v2041, %v2042
        %v2044 = vrot.slane %v861, 2
        %v2045 = vsel %vm2030, %v2042, %v2044
        %v2046 = vrot.slane %v863, 2
        %v2047 = vrot.slane %v864, 2
        %v2048 = vsel %vm2030, %v2046, %v2047
        %v2049 = vrot.slane %v865, 2
        %v2050 = vsel %vm2030, %v2047, %v2049
        %v2051 = vrot.slane %v867, 2
        %v2052 = vrot.slane %v868, 2
        %v2053 = vsel %vm2030, %v2051, %v2052
        %v2054 = vrot.slane %v869, 2
        %v2055 = vsel %vm2030, %v2052, %v2054
        %v2056 = vrot.slane %v871, 2
        %v2057 = vrot.slane %v872, 2
        %v2058 = vsel %vm2030, %v2056, %v2057
        %v2059 = vrot.slane %v873, 2
        %v2060 = vsel %vm2030, %v2057, %v2059
        %v2061 = vrot.slane %v875, 2
        %v2062 = vrot.slane %v876, 2
        %v2063 = vsel %vm2030, %v2061, %v2062
        %v2064 = vrot.slane %v877, 2
        %v2065 = vsel %vm2030, %v2062, %v2064
        %v2066 = vrot.slane %v879, 2
        %v2067 = vrot.slane %v880, 2
        %v2068 = vsel %vm2030, %v2066, %v2067
        %v2069 = vrot.slane %v881, 2
        %v2070 = vsel %vm2030, %v2067, %v2069
        %v2071 = vrot.slane %v883, 2
        %v2072 = vrot.slane %v884, 2
        %v2073 = vsel %vm2030, %v2071, %v2072
        %v2074 = vrot.slane %v885, 2
        %v2075 = vsel %vm2030, %v2072, %v2074
        %v2076 = vrot.slane %v887, 2
        %v2077 = vrot.slane %v888, 2
        %v2078 = vsel %vm2030, %v2076, %v2077
        %v2079 = vrot.slane %v889, 2
        %v2080 = vsel %vm2030, %v2077, %v2079
        %v2081 = vrot.slane %v891, 2
        %v2082 = vrot.slane %v892, 2
        %v2083 = vsel %vm2030, %v2081, %v2082
        %v2084 = vrot.slane %v893, 2
        %v2085 = vsel %vm2030, %v2082, %v2084
        %v2086 = vrot.slane %v895, 2
        %v2087 = vrot.slane %v896, 2
        %v2088 = vsel %vm2030, %v2086, %v2087
        %v2089 = vrot.slane %v897, 2
        %v2090 = vsel %vm2030, %v2087, %v2089
        %v2091 = vrot.slane %v899, 2
        %v2092 = vrot.slane %v900, 2
        %v2093 = vsel %vm2030, %v2091, %v2092
        %v2094 = vrot.slane %v901, 2
        %v2095 = vsel %vm2030, %v2092, %v2094
        %v2096 = vrot.slane %v903, 2
        %v2097 = vrot.slane %v904, 2
        %v2098 = vsel %vm2030, %v2096, %v2097
        %v2099 = vrot.slane %v905, 2
        %v2100 = vsel %vm2030, %v2097, %v2099
        %v2101 = vrot.slane %v907, 2
        %v2102 = vrot.slane %v908, 2
        %v2103 = vsel %vm2030, %v2101, %v2102
        %v2104 = vrot.slane %v909, 2
        %v2105 = vsel %vm2030, %v2102, %v2104
        %v2106 = vrot.slane %v911, 2
        %v2107 = vrot.slane %v912, 2
        %v2108 = vsel %vm2030, %v2106, %v2107
        %v2109 = vrot.slane %v913, 2
        %v2110 = vsel %vm2030, %v2107, %v2109
        %v2143 = vpack.c.bf16 %v2035, %v2033
        %v2144 = vpack.c.bf16 %v2040, %v2038
        %v2145 = vpack.c.bf16 %v2045, %v2043
        %v2146 = vpack.c.bf16 %v2050, %v2048
        %v2147 = vpack.c.bf16 %v2055, %v2053
        %v2148 = vpack.c.bf16 %v2060, %v2058
        %v2149 = vpack.c.bf16 %v2065, %v2063
        %v2150 = vpack.c.bf16 %v2070, %v2068
        %v2151 = vpack.c.bf16 %v2075, %v2073
        %v2152 = vpack.c.bf16 %v2080, %v2078
        %v2153 = vpack.c.bf16 %v2085, %v2083
        %v2154 = vpack.c.bf16 %v2090, %v2088
        %v2155 = vpack.c.bf16 %v2095, %v2093
        %v2156 = vpack.c.bf16 %v2100, %v2098
        %v2157 = vpack.c.bf16 %v2105, %v2103
        %v2158 = vpack.c.bf16 %v2110, %v2108
        %s2159 = scalar_lea.vmem %s1, 8
        %v2160 = vld [vmem:[%s2159] sm:$0x3]
        %v2162 = vsel %vm555, %v2143, 0
        %v2165 = vsel %vm555, %v2144, 0
        %v2168 = vsel %vm555, %v2145, 0
        %v2171 = vsel %vm555, %v2146, 0
        %v2174 = vsel %vm555, %v2147, 0
        %v2177 = vsel %vm555, %v2148, 0
        %v2180 = vsel %vm555, %v2149, 0
        %v2183 = vsel %vm555, %v2150, 0
        %v2186 = vsel %vm555, %v2151, 0
        %v2189 = vsel %vm555, %v2152, 0
        %v2192 = vsel %vm555, %v2153, 0
        %v2195 = vsel %vm555, %v2154, 0
        %v2198 = vsel %vm555, %v2155, 0
        %v2201 = vsel %vm555, %v2156, 0
        %v2204 = vsel %vm555, %v2157, 0
        %v2207 = vsel %vm555, %v2158, 0
        %v2210 = vand.u32 %v2160, %v1288
        %2212 = vmatpush.bf16.msra.mxu0 0
        %2213 = vmatpush.bf16.msra.mxu0 0
        %2214 = vmatpush.bf16.msra.mxu0 0
        %2215 = vmatpush.bf16.msra.mxu0 0
        %2216 = vmatpush.bf16.msra.mxu0 0
        %2217 = vmatpush.bf16.msra.mxu0 0
        %2218 = vmatpush.bf16.msra.mxu0 0
        %2219 = vmatpush.bf16.msra.mxu0 %v2210
        %2220 = vmatmul.bf16.gmra.mxu0 %v2162
        %v2221 = vpop.f32.mrf.mxu0
        %v2222 = vadd.f32 0.0, %v2221
        %v2223 = vpop.f32.mrf.mxu0
        %v2224 = vadd.f32 0.0, %v2223
        %2225 = vmatmul.bf16.gmra.mxu0 %v2165
        %v2226 = vpop.f32.mrf.mxu0
        %v2227 = vadd.f32 0.0, %v2226
        %v2228 = vpop.f32.mrf.mxu0
        %v2229 = vadd.f32 0.0, %v2228
        %2230 = vmatmul.bf16.gmra.mxu0 %v2168
        %v2231 = vpop.f32.mrf.mxu0
        %v2232 = vadd.f32 0.0, %v2231
        %v2233 = vpop.f32.mrf.mxu0
        %v2234 = vadd.f32 0.0, %v2233
        %2235 = vmatmul.bf16.gmra.mxu0 %v2171
        %v2236 = vpop.f32.mrf.mxu0
        %v2237 = vadd.f32 0.0, %v2236
        %v2238 = vpop.f32.mrf.mxu0
        %v2239 = vadd.f32 0.0, %v2238
        %2240 = vmatmul.bf16.gmra.mxu0 %v2174
        %v2241 = vpop.f32.mrf.mxu0
        %v2242 = vadd.f32 0.0, %v2241
        %v2243 = vpop.f32.mrf.mxu0
        %v2244 = vadd.f32 0.0, %v2243
        %2245 = vmatmul.bf16.gmra.mxu0 %v2177
        %v2246 = vpop.f32.mrf.mxu0
        %v2247 = vadd.f32 0.0, %v2246
        %v2248 = vpop.f32.mrf.mxu0
        %v2249 = vadd.f32 0.0, %v2248
        %2250 = vmatmul.bf16.gmra.mxu0 %v2180
        %v2251 = vpop.f32.mrf.mxu0
        %v2252 = vadd.f32 0.0, %v2251
        %v2253 = vpop.f32.mrf.mxu0
        %v2254 = vadd.f32 0.0, %v2253
        %2255 = vmatmul.bf16.gmra.mxu0 %v2183
        %v2256 = vpop.f32.mrf.mxu0
        %v2257 = vadd.f32 0.0, %v2256
        %v2258 = vpop.f32.mrf.mxu0
        %v2259 = vadd.f32 0.0, %v2258
        %2260 = vmatmul.bf16.gmra.mxu0 %v2186
        %v2261 = vpop.f32.mrf.mxu0
        %v2262 = vadd.f32 0.0, %v2261
        %v2263 = vpop.f32.mrf.mxu0
        %v2264 = vadd.f32 0.0, %v2263
        %2265 = vmatmul.bf16.gmra.mxu0 %v2189
        %v2266 = vpop.f32.mrf.mxu0
        %v2267 = vadd.f32 0.0, %v2266
        %v2268 = vpop.f32.mrf.mxu0
        %v2269 = vadd.f32 0.0, %v2268
        %2270 = vmatmul.bf16.gmra.mxu0 %v2192
        %v2271 = vpop.f32.mrf.mxu0
        %v2272 = vadd.f32 0.0, %v2271
        %v2273 = vpop.f32.mrf.mxu0
        %v2274 = vadd.f32 0.0, %v2273
        %2275 = vmatmul.bf16.gmra.mxu0 %v2195
        %v2276 = vpop.f32.mrf.mxu0
        %v2277 = vadd.f32 0.0, %v2276
        %v2278 = vpop.f32.mrf.mxu0
        %v2279 = vadd.f32 0.0, %v2278
        %2280 = vmatmul.bf16.gmra.mxu0 %v2198
        %v2281 = vpop.f32.mrf.mxu0
        %v2282 = vadd.f32 0.0, %v2281
        %v2283 = vpop.f32.mrf.mxu0
        %v2284 = vadd.f32 0.0, %v2283
        %2285 = vmatmul.bf16.gmra.mxu0 %v2201
        %v2286 = vpop.f32.mrf.mxu0
        %v2287 = vadd.f32 0.0, %v2286
        %v2288 = vpop.f32.mrf.mxu0
        %v2289 = vadd.f32 0.0, %v2288
        %2290 = vmatmul.bf16.gmra.mxu0 %v2204
        %v2291 = vpop.f32.mrf.mxu0
        %v2292 = vadd.f32 0.0, %v2291
        %v2293 = vpop.f32.mrf.mxu0
        %v2294 = vadd.f32 0.0, %v2293
        %2295 = vmatmul.bf16.gmra.mxu0 %v2207
        %v2296 = vpop.f32.mrf.mxu0
        %v2297 = vadd.f32 0.0, %v2296
        %v2298 = vpop.f32.mrf.mxu0
        %v2299 = vadd.f32 0.0, %v2298
        %2300 = vdwg.mxu0
        %v2301 = vadd.f32 %v1998, %v2222
        %v2302 = vadd.f32 %v1999, %v2224
        %v2303 = vadd.f32 %v2000, %v2227
        %v2304 = vadd.f32 %v2001, %v2229
        %v2305 = vadd.f32 %v2002, %v2232
        %v2306 = vadd.f32 %v2003, %v2234
        %v2307 = vadd.f32 %v2004, %v2237
        %v2308 = vadd.f32 %v2005, %v2239
        %v2309 = vadd.f32 %v2006, %v2242
        %v2310 = vadd.f32 %v2007, %v2244
        %v2311 = vadd.f32 %v2008, %v2247
        %v2312 = vadd.f32 %v2009, %v2249
        %v2313 = vadd.f32 %v2010, %v2252
        %v2314 = vadd.f32 %v2011, %v2254
        %v2315 = vadd.f32 %v2012, %v2257
        %v2316 = vadd.f32 %v2013, %v2259
        %v2317 = vadd.f32 %v2014, %v2262
        %v2318 = vadd.f32 %v2015, %v2264
        %v2319 = vadd.f32 %v2016, %v2267
        %v2320 = vadd.f32 %v2017, %v2269
        %v2321 = vadd.f32 %v2018, %v2272
        %v2322 = vadd.f32 %v2019, %v2274
        %v2323 = vadd.f32 %v2020, %v2277
        %v2324 = vadd.f32 %v2021, %v2279
        %v2325 = vadd.f32 %v2022, %v2282
        %v2326 = vadd.f32 %v2023, %v2284
        %v2327 = vadd.f32 %v2024, %v2287
        %v2328 = vadd.f32 %v2025, %v2289
        %v2329 = vadd.f32 %v2026, %v2292
        %v2330 = vadd.f32 %v2027, %v2294
        %v2331 = vadd.f32 %v2028, %v2297
        %v2332 = vadd.f32 %v2029, %v2299
        %v2336 = vrot.slane %v914, 6
        %v2337 = vrot.slane %v915, 6
        %v2338 = vsel %vm978, %v2336, %v2337
        %v2339 = vrot.slane %v916, 6
        %v2340 = vsel %vm978, %v2337, %v2339
        %v2343 = vpack.c.bf16 %v2340, %v2338
        %s2344 = scalar_lea.vmem %s1, 10
        %v2345 = vld [vmem:[%s2344] sm:$0x3]
        %v2347 = vsel %vm555, %v2343, 0
        %v2350 = vand.u32 %v2345, %v1288
        %2352 = vmatpush.bf16.msra.mxu0 0
        %2353 = vmatpush.bf16.msra.mxu0 0
        %2354 = vmatpush.bf16.msra.mxu0 0
        %2355 = vmatpush.bf16.msra.mxu0 0
        %2356 = vmatpush.bf16.msra.mxu0 0
        %2357 = vmatpush.bf16.msra.mxu0 0
        %2358 = vmatpush.bf16.msra.mxu0 0
        %2359 = vmatpush.bf16.msra.mxu0 %v2350
        %2360 = vmatmul.bf16.gmra.mxu0 %v1385
        %v2361 = vpop.f32.mrf.mxu0
        %v2362 = vadd.f32 0.0, %v2361
        %v2363 = vpop.f32.mrf.mxu0
        %v2364 = vadd.f32 0.0, %v2363
        %2365 = vmatmul.bf16.gmra.mxu0 %v1388
        %v2366 = vpop.f32.mrf.mxu0
        %v2367 = vadd.f32 0.0, %v2366
        %v2368 = vpop.f32.mrf.mxu0
        %v2369 = vadd.f32 0.0, %v2368
        %2370 = vmatmul.bf16.gmra.mxu0 %v1391
        %v2371 = vpop.f32.mrf.mxu0
        %v2372 = vadd.f32 0.0, %v2371
        %v2373 = vpop.f32.mrf.mxu0
        %v2374 = vadd.f32 0.0, %v2373
        %2375 = vmatmul.bf16.gmra.mxu0 %v1394
        %v2376 = vpop.f32.mrf.mxu0
        %v2377 = vadd.f32 0.0, %v2376
        %v2378 = vpop.f32.mrf.mxu0
        %v2379 = vadd.f32 0.0, %v2378
        %2380 = vmatmul.bf16.gmra.mxu0 %v1397
        %v2381 = vpop.f32.mrf.mxu0
        %v2382 = vadd.f32 0.0, %v2381
        %v2383 = vpop.f32.mrf.mxu0
        %v2384 = vadd.f32 0.0, %v2383
        %2385 = vmatmul.bf16.gmra.mxu0 %v1400
        %v2386 = vpop.f32.mrf.mxu0
        %v2387 = vadd.f32 0.0, %v2386
        %v2388 = vpop.f32.mrf.mxu0
        %v2389 = vadd.f32 0.0, %v2388
        %2390 = vmatmul.bf16.gmra.mxu0 %v1403
        %v2391 = vpop.f32.mrf.mxu0
        %v2392 = vadd.f32 0.0, %v2391
        %v2393 = vpop.f32.mrf.mxu0
        %v2394 = vadd.f32 0.0, %v2393
        %2395 = vmatmul.bf16.gmra.mxu0 %v1406
        %v2396 = vpop.f32.mrf.mxu0
        %v2397 = vadd.f32 0.0, %v2396
        %v2398 = vpop.f32.mrf.mxu0
        %v2399 = vadd.f32 0.0, %v2398
        %2400 = vmatmul.bf16.gmra.mxu0 %v1409
        %v2401 = vpop.f32.mrf.mxu0
        %v2402 = vadd.f32 0.0, %v2401
        %v2403 = vpop.f32.mrf.mxu0
        %v2404 = vadd.f32 0.0, %v2403
        %2405 = vmatmul.bf16.gmra.mxu0 %v1412
        %v2406 = vpop.f32.mrf.mxu0
        %v2407 = vadd.f32 0.0, %v2406
        %v2408 = vpop.f32.mrf.mxu0
        %v2409 = vadd.f32 0.0, %v2408
        %2410 = vmatmul.bf16.gmra.mxu0 %v1415
        %v2411 = vpop.f32.mrf.mxu0
        %v2412 = vadd.f32 0.0, %v2411
        %v2413 = vpop.f32.mrf.mxu0
        %v2414 = vadd.f32 0.0, %v2413
        %2415 = vmatmul.bf16.gmra.mxu0 %v1418
        %v2416 = vpop.f32.mrf.mxu0
        %v2417 = vadd.f32 0.0, %v2416
        %v2418 = vpop.f32.mrf.mxu0
        %v2419 = vadd.f32 0.0, %v2418
        %2420 = vmatmul.bf16.gmra.mxu0 %v1421
        %v2421 = vpop.f32.mrf.mxu0
        %v2422 = vadd.f32 0.0, %v2421
        %v2423 = vpop.f32.mrf.mxu0
        %v2424 = vadd.f32 0.0, %v2423
        %2425 = vmatmul.bf16.gmra.mxu0 %v1424
        %v2426 = vpop.f32.mrf.mxu0
        %v2427 = vadd.f32 0.0, %v2426
        %v2428 = vpop.f32.mrf.mxu0
        %v2429 = vadd.f32 0.0, %v2428
        %2430 = vmatmul.bf16.gmra.mxu0 %v1427
        %v2431 = vpop.f32.mrf.mxu0
        %v2432 = vadd.f32 0.0, %v2431
        %v2433 = vpop.f32.mrf.mxu0
        %v2434 = vadd.f32 0.0, %v2433
        %2435 = vmatmul.bf16.gmra.mxu0 %v2347
        %v2436 = vpop.f32.mrf.mxu0
        %v2437 = vadd.f32 0.0, %v2436
        %v2438 = vpop.f32.mrf.mxu0
        %v2439 = vadd.f32 0.0, %v2438
        %2440 = vdwg.mxu0
        %v2441 = vadd.f32 %v2301, %v2362
        %v2442 = vadd.f32 %v2302, %v2364
        %v2443 = vadd.f32 %v2303, %v2367
        %v2444 = vadd.f32 %v2304, %v2369
        %v2445 = vadd.f32 %v2305, %v2372
        %v2446 = vadd.f32 %v2306, %v2374
        %v2447 = vadd.f32 %v2307, %v2377
        %v2448 = vadd.f32 %v2308, %v2379
        %v2449 = vadd.f32 %v2309, %v2382
        %v2450 = vadd.f32 %v2310, %v2384
        %v2451 = vadd.f32 %v2311, %v2387
        %v2452 = vadd.f32 %v2312, %v2389
        %v2453 = vadd.f32 %v2313, %v2392
        %v2454 = vadd.f32 %v2314, %v2394
        %v2455 = vadd.f32 %v2315, %v2397
        %v2456 = vadd.f32 %v2316, %v2399
        %v2457 = vadd.f32 %v2317, %v2402
        %v2458 = vadd.f32 %v2318, %v2404
        %v2459 = vadd.f32 %v2319, %v2407
        %v2460 = vadd.f32 %v2320, %v2409
        %v2461 = vadd.f32 %v2321, %v2412
        %v2462 = vadd.f32 %v2322, %v2414
        %v2463 = vadd.f32 %v2323, %v2417
        %v2464 = vadd.f32 %v2324, %v2419
        %v2465 = vadd.f32 %v2325, %v2422
        %v2466 = vadd.f32 %v2326, %v2424
        %v2467 = vadd.f32 %v2327, %v2427
        %v2468 = vadd.f32 %v2328, %v2429
        %v2469 = vadd.f32 %v2329, %v2432
        %v2470 = vadd.f32 %v2330, %v2434
        %v2471 = vadd.f32 %v2331, %v2437
        %v2472 = vadd.f32 %v2332, %v2439
        %v2473 = vrot.slane %v914, 7
        %v2474 = vrot.slane %v915, 7
        %v2475 = vsel %vm1108, %v2473, %v2474
        %v2476 = vrot.slane %v916, 7
        %v2477 = vsel %vm1108, %v2474, %v2476
        %v2480 = vpack.c.bf16 %v2477, %v2475
        %s2481 = scalar_lea.vmem %s1, 12
        %v2482 = vld [vmem:[%s2481] sm:$0x3]
        %v2484 = vsel %vm555, %v2480, 0
        %v2487 = vand.u32 %v2482, %v1288
        %2489 = vmatpush.bf16.msra.mxu0 0
        %2490 = vmatpush.bf16.msra.mxu0 0
        %2491 = vmatpush.bf16.msra.mxu0 0
        %2492 = vmatpush.bf16.msra.mxu0 0
        %2493 = vmatpush.bf16.msra.mxu0 0
        %2494 = vmatpush.bf16.msra.mxu0 0
        %2495 = vmatpush.bf16.msra.mxu0 0
        %2496 = vmatpush.bf16.msra.mxu0 %v2487
        %2497 = vmatmul.bf16.gmra.mxu0 %v1243
        %v2498 = vpop.f32.mrf.mxu0
        %v2499 = vadd.f32 0.0, %v2498
        %v2500 = vpop.f32.mrf.mxu0
        %v2501 = vadd.f32 0.0, %v2500
        %2502 = vmatmul.bf16.gmra.mxu0 %v1246
        %v2503 = vpop.f32.mrf.mxu0
        %v2504 = vadd.f32 0.0, %v2503
        %v2505 = vpop.f32.mrf.mxu0
        %v2506 = vadd.f32 0.0, %v2505
        %2507 = vmatmul.bf16.gmra.mxu0 %v1249
        %v2508 = vpop.f32.mrf.mxu0
        %v2509 = vadd.f32 0.0, %v2508
        %v2510 = vpop.f32.mrf.mxu0
        %v2511 = vadd.f32 0.0, %v2510
        %2512 = vmatmul.bf16.gmra.mxu0 %v1252
        %v2513 = vpop.f32.mrf.mxu0
        %v2514 = vadd.f32 0.0, %v2513
        %v2515 = vpop.f32.mrf.mxu0
        %v2516 = vadd.f32 0.0, %v2515
        %2517 = vmatmul.bf16.gmra.mxu0 %v1255
        %v2518 = vpop.f32.mrf.mxu0
        %v2519 = vadd.f32 0.0, %v2518
        %v2520 = vpop.f32.mrf.mxu0
        %v2521 = vadd.f32 0.0, %v2520
        %2522 = vmatmul.bf16.gmra.mxu0 %v1258
        %v2523 = vpop.f32.mrf.mxu0
        %v2524 = vadd.f32 0.0, %v2523
        %v2525 = vpop.f32.mrf.mxu0
        %v2526 = vadd.f32 0.0, %v2525
        %2527 = vmatmul.bf16.gmra.mxu0 %v1261
        %v2528 = vpop.f32.mrf.mxu0
        %v2529 = vadd.f32 0.0, %v2528
        %v2530 = vpop.f32.mrf.mxu0
        %v2531 = vadd.f32 0.0, %v2530
        %2532 = vmatmul.bf16.gmra.mxu0 %v1264
        %v2533 = vpop.f32.mrf.mxu0
        %v2534 = vadd.f32 0.0, %v2533
        %v2535 = vpop.f32.mrf.mxu0
        %v2536 = vadd.f32 0.0, %v2535
        %2537 = vmatmul.bf16.gmra.mxu0 %v1267
        %v2538 = vpop.f32.mrf.mxu0
        %v2539 = vadd.f32 0.0, %v2538
        %v2540 = vpop.f32.mrf.mxu0
        %v2541 = vadd.f32 0.0, %v2540
        %2542 = vmatmul.bf16.gmra.mxu0 %v1270
        %v2543 = vpop.f32.mrf.mxu0
        %v2544 = vadd.f32 0.0, %v2543
        %v2545 = vpop.f32.mrf.mxu0
        %v2546 = vadd.f32 0.0, %v2545
        %2547 = vmatmul.bf16.gmra.mxu0 %v1273
        %v2548 = vpop.f32.mrf.mxu0
        %v2549 = vadd.f32 0.0, %v2548
        %v2550 = vpop.f32.mrf.mxu0
        %v2551 = vadd.f32 0.0, %v2550
        %2552 = vmatmul.bf16.gmra.mxu0 %v1276
        %v2553 = vpop.f32.mrf.mxu0
        %v2554 = vadd.f32 0.0, %v2553
        %v2555 = vpop.f32.mrf.mxu0
        %v2556 = vadd.f32 0.0, %v2555
        %2557 = vmatmul.bf16.gmra.mxu0 %v1279
        %v2558 = vpop.f32.mrf.mxu0
        %v2559 = vadd.f32 0.0, %v2558
        %v2560 = vpop.f32.mrf.mxu0
        %v2561 = vadd.f32 0.0, %v2560
        %2562 = vmatmul.bf16.gmra.mxu0 %v1282
        %v2563 = vpop.f32.mrf.mxu0
        %v2564 = vadd.f32 0.0, %v2563
        %v2565 = vpop.f32.mrf.mxu0
        %v2566 = vadd.f32 0.0, %v2565
        %2567 = vmatmul.bf16.gmra.mxu0 %v1285
        %v2568 = vpop.f32.mrf.mxu0
        %v2569 = vadd.f32 0.0, %v2568
        %v2570 = vpop.f32.mrf.mxu0
        %v2571 = vadd.f32 0.0, %v2570
        %2572 = vmatmul.bf16.gmra.mxu0 %v2484
        %v2573 = vpop.f32.mrf.mxu0
        %v2574 = vadd.f32 0.0, %v2573
        %v2575 = vpop.f32.mrf.mxu0
        %v2576 = vadd.f32 0.0, %v2575
        %2577 = vdwg.mxu0
        %v2578 = vadd.f32 %v2441, %v2499
        %v2579 = vadd.f32 %v2442, %v2501
        %v2580 = vadd.f32 %v2443, %v2504
        %v2581 = vadd.f32 %v2444, %v2506
        %v2582 = vadd.f32 %v2445, %v2509
        %v2583 = vadd.f32 %v2446, %v2511
        %v2584 = vadd.f32 %v2447, %v2514
        %v2585 = vadd.f32 %v2448, %v2516
        %v2586 = vadd.f32 %v2449, %v2519
        %v2587 = vadd.f32 %v2450, %v2521
        %v2588 = vadd.f32 %v2451, %v2524
        %v2589 = vadd.f32 %v2452, %v2526
        %v2590 = vadd.f32 %v2453, %v2529
        %v2591 = vadd.f32 %v2454, %v2531
        %v2592 = vadd.f32 %v2455, %v2534
        %v2593 = vadd.f32 %v2456, %v2536
        %v2594 = vadd.f32 %v2457, %v2539
        %v2595 = vadd.f32 %v2458, %v2541
        %v2596 = vadd.f32 %v2459, %v2544
        %v2597 = vadd.f32 %v2460, %v2546
        %v2598 = vadd.f32 %v2461, %v2549
        %v2599 = vadd.f32 %v2462, %v2551
        %v2600 = vadd.f32 %v2463, %v2554
        %v2601 = vadd.f32 %v2464, %v2556
        %v2602 = vadd.f32 %v2465, %v2559
        %v2603 = vadd.f32 %v2466, %v2561
        %v2604 = vadd.f32 %v2467, %v2564
        %v2605 = vadd.f32 %v2468, %v2566
        %v2606 = vadd.f32 %v2469, %v2569
        %v2607 = vadd.f32 %v2470, %v2571
        %v2608 = vadd.f32 %v2471, %v2574
        %v2609 = vadd.f32 %v2472, %v2576
        %v2610 = vpack.c.bf16 %v916, %v915
        %s2611 = scalar_lea.vmem %s1, 14
        %v2612 = vld [vmem:[%s2611] sm:$0x3]
        %v2614 = vsel %vm555, %v2610, 0
        %v2617 = vand.u32 %v2612, %v1288
        %2619 = vmatpush.bf16.msra.mxu0 0
        %2620 = vmatpush.bf16.msra.mxu0 0
        %2621 = vmatpush.bf16.msra.mxu0 0
        %2622 = vmatpush.bf16.msra.mxu0 0
        %2623 = vmatpush.bf16.msra.mxu0 0
        %2624 = vmatpush.bf16.msra.mxu0 0
        %2625 = vmatpush.bf16.msra.mxu0 0
        %2626 = vmatpush.bf16.msra.mxu0 %v2617
        %2627 = vmatmul.bf16.gmra.mxu0 %v1543
        %v2628 = vpop.f32.mrf.mxu0
        %v2629 = vadd.f32 0.0, %v2628
        %v2630 = vpop.f32.mrf.mxu0
        %v2631 = vadd.f32 0.0, %v2630
        %2632 = vmatmul.bf16.gmra.mxu0 %v1546
        %v2633 = vpop.f32.mrf.mxu0
        %v2634 = vadd.f32 0.0, %v2633
        %v2635 = vpop.f32.mrf.mxu0
        %v2636 = vadd.f32 0.0, %v2635
        %2637 = vmatmul.bf16.gmra.mxu0 %v1549
        %v2638 = vpop.f32.mrf.mxu0
        %v2639 = vadd.f32 0.0, %v2638
        %v2640 = vpop.f32.mrf.mxu0
        %v2641 = vadd.f32 0.0, %v2640
        %2642 = vmatmul.bf16.gmra.mxu0 %v1552
        %v2643 = vpop.f32.mrf.mxu0
        %v2644 = vadd.f32 0.0, %v2643
        %v2645 = vpop.f32.mrf.mxu0
        %v2646 = vadd.f32 0.0, %v2645
        %2647 = vmatmul.bf16.gmra.mxu0 %v1555
        %v2648 = vpop.f32.mrf.mxu0
        %v2649 = vadd.f32 0.0, %v2648
        %v2650 = vpop.f32.mrf.mxu0
        %v2651 = vadd.f32 0.0, %v2650
        %2652 = vmatmul.bf16.gmra.mxu0 %v1558
        %v2653 = vpop.f32.mrf.mxu0
        %v2654 = vadd.f32 0.0, %v2653
        %v2655 = vpop.f32.mrf.mxu0
        %v2656 = vadd.f32 0.0, %v2655
        %2657 = vmatmul.bf16.gmra.mxu0 %v1561
        %v2658 = vpop.f32.mrf.mxu0
        %v2659 = vadd.f32 0.0, %v2658
        %v2660 = vpop.f32.mrf.mxu0
        %v2661 = vadd.f32 0.0, %v2660
        %2662 = vmatmul.bf16.gmra.mxu0 %v1564
        %v2663 = vpop.f32.mrf.mxu0
        %v2664 = vadd.f32 0.0, %v2663
        %v2665 = vpop.f32.mrf.mxu0
        %v2666 = vadd.f32 0.0, %v2665
        %2667 = vmatmul.bf16.gmra.mxu0 %v1567
        %v2668 = vpop.f32.mrf.mxu0
        %v2669 = vadd.f32 0.0, %v2668
        %v2670 = vpop.f32.mrf.mxu0
        %v2671 = vadd.f32 0.0, %v2670
        %2672 = vmatmul.bf16.gmra.mxu0 %v1570
        %v2673 = vpop.f32.mrf.mxu0
        %v2674 = vadd.f32 0.0, %v2673
        %v2675 = vpop.f32.mrf.mxu0
        %v2676 = vadd.f32 0.0, %v2675
        %2677 = vmatmul.bf16.gmra.mxu0 %v1573
        %v2678 = vpop.f32.mrf.mxu0
        %v2679 = vadd.f32 0.0, %v2678
        %v2680 = vpop.f32.mrf.mxu0
        %v2681 = vadd.f32 0.0, %v2680
        %2682 = vmatmul.bf16.gmra.mxu0 %v1576
        %v2683 = vpop.f32.mrf.mxu0
        %v2684 = vadd.f32 0.0, %v2683
        %v2685 = vpop.f32.mrf.mxu0
        %v2686 = vadd.f32 0.0, %v2685
        %2687 = vmatmul.bf16.gmra.mxu0 %v1579
        %v2688 = vpop.f32.mrf.mxu0
        %v2689 = vadd.f32 0.0, %v2688
        %v2690 = vpop.f32.mrf.mxu0
        %v2691 = vadd.f32 0.0, %v2690
        %2692 = vmatmul.bf16.gmra.mxu0 %v1582
        %v2693 = vpop.f32.mrf.mxu0
        %v2694 = vadd.f32 0.0, %v2693
        %v2695 = vpop.f32.mrf.mxu0
        %v2696 = vadd.f32 0.0, %v2695
        %2697 = vmatmul.bf16.gmra.mxu0 %v1585
        %v2698 = vpop.f32.mrf.mxu0
        %v2699 = vadd.f32 0.0, %v2698
        %v2700 = vpop.f32.mrf.mxu0
        %v2701 = vadd.f32 0.0, %v2700
        %2702 = vmatmul.bf16.gmra.mxu0 %v2614
        %v2703 = vpop.f32.mrf.mxu0
        %v2704 = vadd.f32 0.0, %v2703
        %v2705 = vpop.f32.mrf.mxu0
        %v2706 = vadd.f32 0.0, %v2705
        %2707 = vdwg.mxu0
        %v2708 = vadd.f32 %v2578, %v2629
        %v2709 = vadd.f32 %v2579, %v2631
        %v2710 = vadd.f32 %v2580, %v2634
        %v2711 = vadd.f32 %v2581, %v2636
        %v2712 = vadd.f32 %v2582, %v2639
        %v2713 = vadd.f32 %v2583, %v2641
        %v2714 = vadd.f32 %v2584, %v2644
        %v2715 = vadd.f32 %v2585, %v2646
        %v2716 = vadd.f32 %v2586, %v2649
        %v2717 = vadd.f32 %v2587, %v2651
        %v2718 = vadd.f32 %v2588, %v2654
        %v2719 = vadd.f32 %v2589, %v2656
        %v2720 = vadd.f32 %v2590, %v2659
        %v2721 = vadd.f32 %v2591, %v2661
        %v2722 = vadd.f32 %v2592, %v2664
        %v2723 = vadd.f32 %v2593, %v2666
        %v2724 = vadd.f32 %v2594, %v2669
        %v2725 = vadd.f32 %v2595, %v2671
        %v2726 = vadd.f32 %v2596, %v2674
        %v2727 = vadd.f32 %v2597, %v2676
        %v2728 = vadd.f32 %v2598, %v2679
        %v2729 = vadd.f32 %v2599, %v2681
        %v2730 = vadd.f32 %v2600, %v2684
        %v2731 = vadd.f32 %v2601, %v2686
        %v2732 = vadd.f32 %v2602, %v2689
        %v2733 = vadd.f32 %v2603, %v2691
        %v2734 = vadd.f32 %v2604, %v2694
        %v2735 = vadd.f32 %v2605, %v2696
        %v2736 = vadd.f32 %v2606, %v2699
        %v2737 = vadd.f32 %v2607, %v2701
        %v2738 = vadd.f32 %v2608, %v2704
        %v2739 = vadd.f32 %v2609, %v2706
        %v2741 = vrot.slane %v915, 1
        %v2742 = vrot.slane %v916, 1
        %v2743 = vsel %vm1727, %v2741, %v2742
        %v2744 = vrot.slane %v917, 1
        %v2745 = vsel %vm1727, %v2742, %v2744
        %v2748 = vpack.c.bf16 %v2745, %v2743
        %s2749 = scalar_lea.vmem %s1, 16
        %v2750 = vld [vmem:[%s2749] sm:$0x3]
        %v2752 = vsel %vm555, %v2748, 0
        %v2755 = vand.u32 %v2750, %v1288
        %2757 = vmatpush.bf16.msra.mxu0 0
        %2758 = vmatpush.bf16.msra.mxu0 0
        %2759 = vmatpush.bf16.msra.mxu0 0
        %2760 = vmatpush.bf16.msra.mxu0 0
        %2761 = vmatpush.bf16.msra.mxu0 0
        %2762 = vmatpush.bf16.msra.mxu0 0
        %2763 = vmatpush.bf16.msra.mxu0 0
        %2764 = vmatpush.bf16.msra.mxu0 %v2755
        %2765 = vmatmul.bf16.gmra.mxu0 %v1862
        %v2766 = vpop.f32.mrf.mxu0
        %v2767 = vadd.f32 0.0, %v2766
        %v2768 = vpop.f32.mrf.mxu0
        %v2769 = vadd.f32 0.0, %v2768
        %2770 = vmatmul.bf16.gmra.mxu0 %v1865
        %v2771 = vpop.f32.mrf.mxu0
        %v2772 = vadd.f32 0.0, %v2771
        %v2773 = vpop.f32.mrf.mxu0
        %v2774 = vadd.f32 0.0, %v2773
        %2775 = vmatmul.bf16.gmra.mxu0 %v1868
        %v2776 = vpop.f32.mrf.mxu0
        %v2777 = vadd.f32 0.0, %v2776
        %v2778 = vpop.f32.mrf.mxu0
        %v2779 = vadd.f32 0.0, %v2778
        %2780 = vmatmul.bf16.gmra.mxu0 %v1871
        %v2781 = vpop.f32.mrf.mxu0
        %v2782 = vadd.f32 0.0, %v2781
        %v2783 = vpop.f32.mrf.mxu0
        %v2784 = vadd.f32 0.0, %v2783
        %2785 = vmatmul.bf16.gmra.mxu0 %v1874
        %v2786 = vpop.f32.mrf.mxu0
        %v2787 = vadd.f32 0.0, %v2786
        %v2788 = vpop.f32.mrf.mxu0
        %v2789 = vadd.f32 0.0, %v2788
        %2790 = vmatmul.bf16.gmra.mxu0 %v1877
        %v2791 = vpop.f32.mrf.mxu0
        %v2792 = vadd.f32 0.0, %v2791
        %v2793 = vpop.f32.mrf.mxu0
        %v2794 = vadd.f32 0.0, %v2793
        %2795 = vmatmul.bf16.gmra.mxu0 %v1880
        %v2796 = vpop.f32.mrf.mxu0
        %v2797 = vadd.f32 0.0, %v2796
        %v2798 = vpop.f32.mrf.mxu0
        %v2799 = vadd.f32 0.0, %v2798
        %2800 = vmatmul.bf16.gmra.mxu0 %v1883
        %v2801 = vpop.f32.mrf.mxu0
        %v2802 = vadd.f32 0.0, %v2801
        %v2803 = vpop.f32.mrf.mxu0
        %v2804 = vadd.f32 0.0, %v2803
        %2805 = vmatmul.bf16.gmra.mxu0 %v1886
        %v2806 = vpop.f32.mrf.mxu0
        %v2807 = vadd.f32 0.0, %v2806
        %v2808 = vpop.f32.mrf.mxu0
        %v2809 = vadd.f32 0.0, %v2808
        %2810 = vmatmul.bf16.gmra.mxu0 %v1889
        %v2811 = vpop.f32.mrf.mxu0
        %v2812 = vadd.f32 0.0, %v2811
        %v2813 = vpop.f32.mrf.mxu0
        %v2814 = vadd.f32 0.0, %v2813
        %2815 = vmatmul.bf16.gmra.mxu0 %v1892
        %v2816 = vpop.f32.mrf.mxu0
        %v2817 = vadd.f32 0.0, %v2816
        %v2818 = vpop.f32.mrf.mxu0
        %v2819 = vadd.f32 0.0, %v2818
        %2820 = vmatmul.bf16.gmra.mxu0 %v1895
        %v2821 = vpop.f32.mrf.mxu0
        %v2822 = vadd.f32 0.0, %v2821
        %v2823 = vpop.f32.mrf.mxu0
        %v2824 = vadd.f32 0.0, %v2823
        %2825 = vmatmul.bf16.gmra.mxu0 %v1898
        %v2826 = vpop.f32.mrf.mxu0
        %v2827 = vadd.f32 0.0, %v2826
        %v2828 = vpop.f32.mrf.mxu0
        %v2829 = vadd.f32 0.0, %v2828
        %2830 = vmatmul.bf16.gmra.mxu0 %v1901
        %v2831 = vpop.f32.mrf.mxu0
        %v2832 = vadd.f32 0.0, %v2831
        %v2833 = vpop.f32.mrf.mxu0
        %v2834 = vadd.f32 0.0, %v2833
        %2835 = vmatmul.bf16.gmra.mxu0 %v1904
        %v2836 = vpop.f32.mrf.mxu0
        %v2837 = vadd.f32 0.0, %v2836
        %v2838 = vpop.f32.mrf.mxu0
        %v2839 = vadd.f32 0.0, %v2838
        %2840 = vmatmul.bf16.gmra.mxu0 %v2752
        %v2841 = vpop.f32.mrf.mxu0
        %v2842 = vadd.f32 0.0, %v2841
        %v2843 = vpop.f32.mrf.mxu0
        %v2844 = vadd.f32 0.0, %v2843
        %2845 = vdwg.mxu0
        %v2846 = vadd.f32 %v2708, %v2767
        %v2847 = vadd.f32 %v2709, %v2769
        %v2848 = vadd.f32 %v2710, %v2772
        %v2849 = vadd.f32 %v2711, %v2774
        %v2850 = vadd.f32 %v2712, %v2777
        %v2851 = vadd.f32 %v2713, %v2779
        %v2852 = vadd.f32 %v2714, %v2782
        %v2853 = vadd.f32 %v2715, %v2784
        %v2854 = vadd.f32 %v2716, %v2787
        %v2855 = vadd.f32 %v2717, %v2789
        %v2856 = vadd.f32 %v2718, %v2792
        %v2857 = vadd.f32 %v2719, %v2794
        %v2858 = vadd.f32 %v2720, %v2797
        %v2859 = vadd.f32 %v2721, %v2799
        %v2860 = vadd.f32 %v2722, %v2802
        %v2861 = vadd.f32 %v2723, %v2804
        %v2862 = vadd.f32 %v2724, %v2807
        %v2863 = vadd.f32 %v2725, %v2809
        %v2864 = vadd.f32 %v2726, %v2812
        %v2865 = vadd.f32 %v2727, %v2814
        %v2866 = vadd.f32 %v2728, %v2817
        %v2867 = vadd.f32 %v2729, %v2819
        %v2868 = vadd.f32 %v2730, %v2822
        %v2869 = vadd.f32 %v2731, %v2824
        %v2870 = vadd.f32 %v2732, %v2827
        %v2871 = vadd.f32 %v2733, %v2829
        %v2872 = vadd.f32 %v2734, %v2832
        %v2873 = vadd.f32 %v2735, %v2834
        %v2874 = vadd.f32 %v2736, %v2837
        %v2875 = vadd.f32 %v2737, %v2839
        %v2876 = vadd.f32 %v2738, %v2842
        %v2877 = vadd.f32 %v2739, %v2844
        %v2878 = vrot.slane %v915, 2
        %v2879 = vrot.slane %v916, 2
        %v2880 = vsel %vm2030, %v2878, %v2879
        %v2881 = vrot.slane %v917, 2
        %v2882 = vsel %vm2030, %v2879, %v2881
        %v2885 = vpack.c.bf16 %v2882, %v2880
        %s2886 = scalar_lea.vmem %s1, 18
        %v2887 = vld [vmem:[%s2886] sm:$0x3]
        %v2889 = vsel %vm555, %v2885, 0
        %v2892 = vand.u32 %v2887, %v1288
        %2894 = vmatpush.bf16.msra.mxu0 0
        %2895 = vmatpush.bf16.msra.mxu0 0
        %2896 = vmatpush.bf16.msra.mxu0 0
        %2897 = vmatpush.bf16.msra.mxu0 0
        %2898 = vmatpush.bf16.msra.mxu0 0
        %2899 = vmatpush.bf16.msra.mxu0 0
        %2900 = vmatpush.bf16.msra.mxu0 0
        %2901 = vmatpush.bf16.msra.mxu0 %v2892
        %2902 = vmatmul.bf16.gmra.mxu0 %v2165
        %v2903 = vpop.f32.mrf.mxu0
        %v2904 = vadd.f32 0.0, %v2903
        %v2905 = vpop.f32.mrf.mxu0
        %v2906 = vadd.f32 0.0, %v2905
        %2907 = vmatmul.bf16.gmra.mxu0 %v2168
        %v2908 = vpop.f32.mrf.mxu0
        %v2909 = vadd.f32 0.0, %v2908
        %v2910 = vpop.f32.mrf.mxu0
        %v2911 = vadd.f32 0.0, %v2910
        %2912 = vmatmul.bf16.gmra.mxu0 %v2171
        %v2913 = vpop.f32.mrf.mxu0
        %v2914 = vadd.f32 0.0, %v2913
        %v2915 = vpop.f32.mrf.mxu0
        %v2916 = vadd.f32 0.0, %v2915
        %2917 = vmatmul.bf16.gmra.mxu0 %v2174
        %v2918 = vpop.f32.mrf.mxu0
        %v2919 = vadd.f32 0.0, %v2918
        %v2920 = vpop.f32.mrf.mxu0
        %v2921 = vadd.f32 0.0, %v2920
        %2922 = vmatmul.bf16.gmra.mxu0 %v2177
        %v2923 = vpop.f32.mrf.mxu0
        %v2924 = vadd.f32 0.0, %v2923
        %v2925 = vpop.f32.mrf.mxu0
        %v2926 = vadd.f32 0.0, %v2925
        %2927 = vmatmul.bf16.gmra.mxu0 %v2180
        %v2928 = vpop.f32.mrf.mxu0
        %v2929 = vadd.f32 0.0, %v2928
        %v2930 = vpop.f32.mrf.mxu0
        %v2931 = vadd.f32 0.0, %v2930
        %2932 = vmatmul.bf16.gmra.mxu0 %v2183
        %v2933 = vpop.f32.mrf.mxu0
        %v2934 = vadd.f32 0.0, %v2933
        %v2935 = vpop.f32.mrf.mxu0
        %v2936 = vadd.f32 0.0, %v2935
        %2937 = vmatmul.bf16.gmra.mxu0 %v2186
        %v2938 = vpop.f32.mrf.mxu0
        %v2939 = vadd.f32 0.0, %v2938
        %v2940 = vpop.f32.mrf.mxu0
        %v2941 = vadd.f32 0.0, %v2940
        %2942 = vmatmul.bf16.gmra.mxu0 %v2189
        %v2943 = vpop.f32.mrf.mxu0
        %v2944 = vadd.f32 0.0, %v2943
        %v2945 = vpop.f32.mrf.mxu0
        %v2946 = vadd.f32 0.0, %v2945
        %2947 = vmatmul.bf16.gmra.mxu0 %v2192
        %v2948 = vpop.f32.mrf.mxu0
        %v2949 = vadd.f32 0.0, %v2948
        %v2950 = vpop.f32.mrf.mxu0
        %v2951 = vadd.f32 0.0, %v2950
        %2952 = vmatmul.bf16.gmra.mxu0 %v2195
        %v2953 = vpop.f32.mrf.mxu0
        %v2954 = vadd.f32 0.0, %v2953
        %v2955 = vpop.f32.mrf.mxu0
        %v2956 = vadd.f32 0.0, %v2955
        %2957 = vmatmul.bf16.gmra.mxu0 %v2198
        %v2958 = vpop.f32.mrf.mxu0
        %v2959 = vadd.f32 0.0, %v2958
        %v2960 = vpop.f32.mrf.mxu0
        %v2961 = vadd.f32 0.0, %v2960
        %2962 = vmatmul.bf16.gmra.mxu0 %v2201
        %v2963 = vpop.f32.mrf.mxu0
        %v2964 = vadd.f32 0.0, %v2963
        %v2965 = vpop.f32.mrf.mxu0
        %v2966 = vadd.f32 0.0, %v2965
        %2967 = vmatmul.bf16.gmra.mxu0 %v2204
        %v2968 = vpop.f32.mrf.mxu0
        %v2969 = vadd.f32 0.0, %v2968
        %v2970 = vpop.f32.mrf.mxu0
        %v2971 = vadd.f32 0.0, %v2970
        %2972 = vmatmul.bf16.gmra.mxu0 %v2207
        %v2973 = vpop.f32.mrf.mxu0
        %v2974 = vadd.f32 0.0, %v2973
        %v2975 = vpop.f32.mrf.mxu0
        %v2976 = vadd.f32 0.0, %v2975
        %2977 = vmatmul.bf16.gmra.mxu0 %v2889
        %v2978 = vpop.f32.mrf.mxu0
        %v2979 = vadd.f32 0.0, %v2978
        %v2980 = vpop.f32.mrf.mxu0
        %v2981 = vadd.f32 0.0, %v2980
        %2982 = vdwg.mxu0
        %v2983 = vadd.f32 %v2846, %v2904
        %v2984 = vadd.f32 %v2847, %v2906
        %v2985 = vadd.f32 %v2848, %v2909
        %v2986 = vadd.f32 %v2849, %v2911
        %v2987 = vadd.f32 %v2850, %v2914
        %v2988 = vadd.f32 %v2851, %v2916
        %v2989 = vadd.f32 %v2852, %v2919
        %v2990 = vadd.f32 %v2853, %v2921
        %v2991 = vadd.f32 %v2854, %v2924
        %v2992 = vadd.f32 %v2855, %v2926
        %v2993 = vadd.f32 %v2856, %v2929
        %v2994 = vadd.f32 %v2857, %v2931
        %v2995 = vadd.f32 %v2858, %v2934
        %v2996 = vadd.f32 %v2859, %v2936
        %v2997 = vadd.f32 %v2860, %v2939
        %v2998 = vadd.f32 %v2861, %v2941
        %v2999 = vadd.f32 %v2862, %v2944
        %v3000 = vadd.f32 %v2863, %v2946
        %v3001 = vadd.f32 %v2864, %v2949
        %v3002 = vadd.f32 %v2865, %v2951
        %v3003 = vadd.f32 %v2866, %v2954
        %v3004 = vadd.f32 %v2867, %v2956
        %v3005 = vadd.f32 %v2868, %v2959
        %v3006 = vadd.f32 %v2869, %v2961
        %v3007 = vadd.f32 %v2870, %v2964
        %v3008 = vadd.f32 %v2871, %v2966
        %v3009 = vadd.f32 %v2872, %v2969
        %v3010 = vadd.f32 %v2873, %v2971
        %v3011 = vadd.f32 %v2874, %v2974
        %v3012 = vadd.f32 %v2875, %v2976
        %v3013 = vadd.f32 %v2876, %v2979
        %v3014 = vadd.f32 %v2877, %v2981
        %v3018 = vrot.slane %v918, 6
        %v3019 = vrot.slane %v919, 6
        %v3020 = vsel %vm978, %v3018, %v3019
        %v3021 = vrot.slane %v920, 6
        %v3022 = vsel %vm978, %v3019, %v3021
        %v3025 = vpack.c.bf16 %v3022, %v3020
        %s3026 = scalar_lea.vmem %s1, 20
        %v3027 = vld [vmem:[%s3026] sm:$0x3]
        %v3029 = vsel %vm555, %v3025, 0
        %v3032 = vand.u32 %v3027, %v1288
        %3034 = vmatpush.bf16.msra.mxu0 0
        %3035 = vmatpush.bf16.msra.mxu0 0
        %3036 = vmatpush.bf16.msra.mxu0 0
        %3037 = vmatpush.bf16.msra.mxu0 0
        %3038 = vmatpush.bf16.msra.mxu0 0
        %3039 = vmatpush.bf16.msra.mxu0 0
        %3040 = vmatpush.bf16.msra.mxu0 0
        %3041 = vmatpush.bf16.msra.mxu0 %v3032
        %3042 = vmatmul.bf16.gmra.mxu0 %v1388
        %v3043 = vpop.f32.mrf.mxu0
        %v3044 = vadd.f32 0.0, %v3043
        %v3045 = vpop.f32.mrf.mxu0
        %v3046 = vadd.f32 0.0, %v3045
        %3047 = vmatmul.bf16.gmra.mxu0 %v1391
        %v3048 = vpop.f32.mrf.mxu0
        %v3049 = vadd.f32 0.0, %v3048
        %v3050 = vpop.f32.mrf.mxu0
        %v3051 = vadd.f32 0.0, %v3050
        %3052 = vmatmul.bf16.gmra.mxu0 %v1394
        %v3053 = vpop.f32.mrf.mxu0
        %v3054 = vadd.f32 0.0, %v3053
        %v3055 = vpop.f32.mrf.mxu0
        %v3056 = vadd.f32 0.0, %v3055
        %3057 = vmatmul.bf16.gmra.mxu0 %v1397
        %v3058 = vpop.f32.mrf.mxu0
        %v3059 = vadd.f32 0.0, %v3058
        %v3060 = vpop.f32.mrf.mxu0
        %v3061 = vadd.f32 0.0, %v3060
        %3062 = vmatmul.bf16.gmra.mxu0 %v1400
        %v3063 = vpop.f32.mrf.mxu0
        %v3064 = vadd.f32 0.0, %v3063
        %v3065 = vpop.f32.mrf.mxu0
        %v3066 = vadd.f32 0.0, %v3065
        %3067 = vmatmul.bf16.gmra.mxu0 %v1403
        %v3068 = vpop.f32.mrf.mxu0
        %v3069 = vadd.f32 0.0, %v3068
        %v3070 = vpop.f32.mrf.mxu0
        %v3071 = vadd.f32 0.0, %v3070
        %3072 = vmatmul.bf16.gmra.mxu0 %v1406
        %v3073 = vpop.f32.mrf.mxu0
        %v3074 = vadd.f32 0.0, %v3073
        %v3075 = vpop.f32.mrf.mxu0
        %v3076 = vadd.f32 0.0, %v3075
        %3077 = vmatmul.bf16.gmra.mxu0 %v1409
        %v3078 = vpop.f32.mrf.mxu0
        %v3079 = vadd.f32 0.0, %v3078
        %v3080 = vpop.f32.mrf.mxu0
        %v3081 = vadd.f32 0.0, %v3080
        %3082 = vmatmul.bf16.gmra.mxu0 %v1412
        %v3083 = vpop.f32.mrf.mxu0
        %v3084 = vadd.f32 0.0, %v3083
        %v3085 = vpop.f32.mrf.mxu0
        %v3086 = vadd.f32 0.0, %v3085
        %3087 = vmatmul.bf16.gmra.mxu0 %v1415
        %v3088 = vpop.f32.mrf.mxu0
        %v3089 = vadd.f32 0.0, %v3088
        %v3090 = vpop.f32.mrf.mxu0
        %v3091 = vadd.f32 0.0, %v3090
        %3092 = vmatmul.bf16.gmra.mxu0 %v1418
        %v3093 = vpop.f32.mrf.mxu0
        %v3094 = vadd.f32 0.0, %v3093
        %v3095 = vpop.f32.mrf.mxu0
        %v3096 = vadd.f32 0.0, %v3095
        %3097 = vmatmul.bf16.gmra.mxu0 %v1421
        %v3098 = vpop.f32.mrf.mxu0
        %v3099 = vadd.f32 0.0, %v3098
        %v3100 = vpop.f32.mrf.mxu0
        %v3101 = vadd.f32 0.0, %v3100
        %3102 = vmatmul.bf16.gmra.mxu0 %v1424
        %v3103 = vpop.f32.mrf.mxu0
        %v3104 = vadd.f32 0.0, %v3103
        %v3105 = vpop.f32.mrf.mxu0
        %v3106 = vadd.f32 0.0, %v3105
        %3107 = vmatmul.bf16.gmra.mxu0 %v1427
        %v3108 = vpop.f32.mrf.mxu0
        %v3109 = vadd.f32 0.0, %v3108
        %v3110 = vpop.f32.mrf.mxu0
        %v3111 = vadd.f32 0.0, %v3110
        %3112 = vmatmul.bf16.gmra.mxu0 %v2347
        %v3113 = vpop.f32.mrf.mxu0
        %v3114 = vadd.f32 0.0, %v3113
        %v3115 = vpop.f32.mrf.mxu0
        %v3116 = vadd.f32 0.0, %v3115
        %3117 = vmatmul.bf16.gmra.mxu0 %v3029
        %v3118 = vpop.f32.mrf.mxu0
        %v3119 = vadd.f32 0.0, %v3118
        %v3120 = vpop.f32.mrf.mxu0
        %v3121 = vadd.f32 0.0, %v3120
        %3122 = vdwg.mxu0
        %v3123 = vadd.f32 %v2983, %v3044
        %v3124 = vadd.f32 %v2984, %v3046
        %v3125 = vadd.f32 %v2985, %v3049
        %v3126 = vadd.f32 %v2986, %v3051
        %v3127 = vadd.f32 %v2987, %v3054
        %v3128 = vadd.f32 %v2988, %v3056
        %v3129 = vadd.f32 %v2989, %v3059
        %v3130 = vadd.f32 %v2990, %v3061
        %v3131 = vadd.f32 %v2991, %v3064
        %v3132 = vadd.f32 %v2992, %v3066
        %v3133 = vadd.f32 %v2993, %v3069
        %v3134 = vadd.f32 %v2994, %v3071
        %v3135 = vadd.f32 %v2995, %v3074
        %v3136 = vadd.f32 %v2996, %v3076
        %v3137 = vadd.f32 %v2997, %v3079
        %v3138 = vadd.f32 %v2998, %v3081
        %v3139 = vadd.f32 %v2999, %v3084
        %v3140 = vadd.f32 %v3000, %v3086
        %v3141 = vadd.f32 %v3001, %v3089
        %v3142 = vadd.f32 %v3002, %v3091
        %v3143 = vadd.f32 %v3003, %v3094
        %v3144 = vadd.f32 %v3004, %v3096
        %v3145 = vadd.f32 %v3005, %v3099
        %v3146 = vadd.f32 %v3006, %v3101
        %v3147 = vadd.f32 %v3007, %v3104
        %v3148 = vadd.f32 %v3008, %v3106
        %v3149 = vadd.f32 %v3009, %v3109
        %v3150 = vadd.f32 %v3010, %v3111
        %v3151 = vadd.f32 %v3011, %v3114
        %v3152 = vadd.f32 %v3012, %v3116
        %v3153 = vadd.f32 %v3013, %v3119
        %v3154 = vadd.f32 %v3014, %v3121
        %v3155 = vrot.slane %v918, 7
        %v3156 = vrot.slane %v919, 7
        %v3157 = vsel %vm1108, %v3155, %v3156
        %v3158 = vrot.slane %v920, 7
        %v3159 = vsel %vm1108, %v3156, %v3158
        %v3162 = vpack.c.bf16 %v3159, %v3157
        %s3163 = scalar_lea.vmem %s1, 22
        %v3164 = vld [vmem:[%s3163] sm:$0x3]
        %v3166 = vsel %vm555, %v3162, 0
        %v3169 = vand.u32 %v3164, %v1288
        %3171 = vmatpush.bf16.msra.mxu0 0
        %3172 = vmatpush.bf16.msra.mxu0 0
        %3173 = vmatpush.bf16.msra.mxu0 0
        %3174 = vmatpush.bf16.msra.mxu0 0
        %3175 = vmatpush.bf16.msra.mxu0 0
        %3176 = vmatpush.bf16.msra.mxu0 0
        %3177 = vmatpush.bf16.msra.mxu0 0
        %3178 = vmatpush.bf16.msra.mxu0 %v3169
        %3179 = vmatmul.bf16.gmra.mxu0 %v1246
        %v3180 = vpop.f32.mrf.mxu0
        %v3181 = vadd.f32 0.0, %v3180
        %v3182 = vpop.f32.mrf.mxu0
        %v3183 = vadd.f32 0.0, %v3182
        %3184 = vmatmul.bf16.gmra.mxu0 %v1249
        %v3185 = vpop.f32.mrf.mxu0
        %v3186 = vadd.f32 0.0, %v3185
        %v3187 = vpop.f32.mrf.mxu0
        %v3188 = vadd.f32 0.0, %v3187
        %3189 = vmatmul.bf16.gmra.mxu0 %v1252
        %v3190 = vpop.f32.mrf.mxu0
        %v3191 = vadd.f32 0.0, %v3190
        %v3192 = vpop.f32.mrf.mxu0
        %v3193 = vadd.f32 0.0, %v3192
        %3194 = vmatmul.bf16.gmra.mxu0 %v1255
        %v3195 = vpop.f32.mrf.mxu0
        %v3196 = vadd.f32 0.0, %v3195
        %v3197 = vpop.f32.mrf.mxu0
        %v3198 = vadd.f32 0.0, %v3197
        %3199 = vmatmul.bf16.gmra.mxu0 %v1258
        %v3200 = vpop.f32.mrf.mxu0
        %v3201 = vadd.f32 0.0, %v3200
        %v3202 = vpop.f32.mrf.mxu0
        %v3203 = vadd.f32 0.0, %v3202
        %3204 = vmatmul.bf16.gmra.mxu0 %v1261
        %v3205 = vpop.f32.mrf.mxu0
        %v3206 = vadd.f32 0.0, %v3205
        %v3207 = vpop.f32.mrf.mxu0
        %v3208 = vadd.f32 0.0, %v3207
        %3209 = vmatmul.bf16.gmra.mxu0 %v1264
        %v3210 = vpop.f32.mrf.mxu0
        %v3211 = vadd.f32 0.0, %v3210
        %v3212 = vpop.f32.mrf.mxu0
        %v3213 = vadd.f32 0.0, %v3212
        %3214 = vmatmul.bf16.gmra.mxu0 %v1267
        %v3215 = vpop.f32.mrf.mxu0
        %v3216 = vadd.f32 0.0, %v3215
        %v3217 = vpop.f32.mrf.mxu0
        %v3218 = vadd.f32 0.0, %v3217
        %3219 = vmatmul.bf16.gmra.mxu0 %v1270
        %v3220 = vpop.f32.mrf.mxu0
        %v3221 = vadd.f32 0.0, %v3220
        %v3222 = vpop.f32.mrf.mxu0
        %v3223 = vadd.f32 0.0, %v3222
        %3224 = vmatmul.bf16.gmra.mxu0 %v1273
        %v3225 = vpop.f32.mrf.mxu0
        %v3226 = vadd.f32 0.0, %v3225
        %v3227 = vpop.f32.mrf.mxu0
        %v3228 = vadd.f32 0.0, %v3227
        %3229 = vmatmul.bf16.gmra.mxu0 %v1276
        %v3230 = vpop.f32.mrf.mxu0
        %v3231 = vadd.f32 0.0, %v3230
        %v3232 = vpop.f32.mrf.mxu0
        %v3233 = vadd.f32 0.0, %v3232
        %3234 = vmatmul.bf16.gmra.mxu0 %v1279
        %v3235 = vpop.f32.mrf.mxu0
        %v3236 = vadd.f32 0.0, %v3235
        %v3237 = vpop.f32.mrf.mxu0
        %v3238 = vadd.f32 0.0, %v3237
        %3239 = vmatmul.bf16.gmra.mxu0 %v1282
        %v3240 = vpop.f32.mrf.mxu0
        %v3241 = vadd.f32 0.0, %v3240
        %v3242 = vpop.f32.mrf.mxu0
        %v3243 = vadd.f32 0.0, %v3242
        %3244 = vmatmul.bf16.gmra.mxu0 %v1285
        %v3245 = vpop.f32.mrf.mxu0
        %v3246 = vadd.f32 0.0, %v3245
        %v3247 = vpop.f32.mrf.mxu0
        %v3248 = vadd.f32 0.0, %v3247
        %3249 = vmatmul.bf16.gmra.mxu0 %v2484
        %v3250 = vpop.f32.mrf.mxu0
        %v3251 = vadd.f32 0.0, %v3250
        %v3252 = vpop.f32.mrf.mxu0
        %v3253 = vadd.f32 0.0, %v3252
        %3254 = vmatmul.bf16.gmra.mxu0 %v3166
        %v3255 = vpop.f32.mrf.mxu0
        %v3256 = vadd.f32 0.0, %v3255
        %v3257 = vpop.f32.mrf.mxu0
        %v3258 = vadd.f32 0.0, %v3257
        %3259 = vdwg.mxu0
        %v3260 = vadd.f32 %v3123, %v3181
        %v3261 = vadd.f32 %v3124, %v3183
        %v3262 = vadd.f32 %v3125, %v3186
        %v3263 = vadd.f32 %v3126, %v3188
        %v3264 = vadd.f32 %v3127, %v3191
        %v3265 = vadd.f32 %v3128, %v3193
        %v3266 = vadd.f32 %v3129, %v3196
        %v3267 = vadd.f32 %v3130, %v3198
        %v3268 = vadd.f32 %v3131, %v3201
        %v3269 = vadd.f32 %v3132, %v3203
        %v3270 = vadd.f32 %v3133, %v3206
        %v3271 = vadd.f32 %v3134, %v3208
        %v3272 = vadd.f32 %v3135, %v3211
        %v3273 = vadd.f32 %v3136, %v3213
        %v3274 = vadd.f32 %v3137, %v3216
        %v3275 = vadd.f32 %v3138, %v3218
        %v3276 = vadd.f32 %v3139, %v3221
        %v3277 = vadd.f32 %v3140, %v3223
        %v3278 = vadd.f32 %v3141, %v3226
        %v3279 = vadd.f32 %v3142, %v3228
        %v3280 = vadd.f32 %v3143, %v3231
        %v3281 = vadd.f32 %v3144, %v3233
        %v3282 = vadd.f32 %v3145, %v3236
        %v3283 = vadd.f32 %v3146, %v3238
        %v3284 = vadd.f32 %v3147, %v3241
        %v3285 = vadd.f32 %v3148, %v3243
        %v3286 = vadd.f32 %v3149, %v3246
        %v3287 = vadd.f32 %v3150, %v3248
        %v3288 = vadd.f32 %v3151, %v3251
        %v3289 = vadd.f32 %v3152, %v3253
        %v3290 = vadd.f32 %v3153, %v3256
        %v3291 = vadd.f32 %v3154, %v3258
        %v3292 = vpack.c.bf16 %v920, %v919
        %s3293 = scalar_lea.vmem %s1, 24
        %v3294 = vld [vmem:[%s3293] sm:$0x3]
        %v3296 = vsel %vm555, %v3292, 0
        %v3299 = vand.u32 %v3294, %v1288
        %3301 = vmatpush.bf16.msra.mxu0 0
        %3302 = vmatpush.bf16.msra.mxu0 0
        %3303 = vmatpush.bf16.msra.mxu0 0
        %3304 = vmatpush.bf16.msra.mxu0 0
        %3305 = vmatpush.bf16.msra.mxu0 0
        %3306 = vmatpush.bf16.msra.mxu0 0
        %3307 = vmatpush.bf16.msra.mxu0 0
        %3308 = vmatpush.bf16.msra.mxu0 %v3299
        %3309 = vmatmul.bf16.gmra.mxu0 %v1546
        %v3310 = vpop.f32.mrf.mxu0
        %v3311 = vadd.f32 0.0, %v3310
        %v3312 = vpop.f32.mrf.mxu0
        %v3313 = vadd.f32 0.0, %v3312
        %3314 = vmatmul.bf16.gmra.mxu0 %v1549
        %v3315 = vpop.f32.mrf.mxu0
        %v3316 = vadd.f32 0.0, %v3315
        %v3317 = vpop.f32.mrf.mxu0
        %v3318 = vadd.f32 0.0, %v3317
        %3319 = vmatmul.bf16.gmra.mxu0 %v1552
        %v3320 = vpop.f32.mrf.mxu0
        %v3321 = vadd.f32 0.0, %v3320
        %v3322 = vpop.f32.mrf.mxu0
        %v3323 = vadd.f32 0.0, %v3322
        %3324 = vmatmul.bf16.gmra.mxu0 %v1555
        %v3325 = vpop.f32.mrf.mxu0
        %v3326 = vadd.f32 0.0, %v3325
        %v3327 = vpop.f32.mrf.mxu0
        %v3328 = vadd.f32 0.0, %v3327
        %3329 = vmatmul.bf16.gmra.mxu0 %v1558
        %v3330 = vpop.f32.mrf.mxu0
        %v3331 = vadd.f32 0.0, %v3330
        %v3332 = vpop.f32.mrf.mxu0
        %v3333 = vadd.f32 0.0, %v3332
        %3334 = vmatmul.bf16.gmra.mxu0 %v1561
        %v3335 = vpop.f32.mrf.mxu0
        %v3336 = vadd.f32 0.0, %v3335
        %v3337 = vpop.f32.mrf.mxu0
        %v3338 = vadd.f32 0.0, %v3337
        %3339 = vmatmul.bf16.gmra.mxu0 %v1564
        %v3340 = vpop.f32.mrf.mxu0
        %v3341 = vadd.f32 0.0, %v3340
        %v3342 = vpop.f32.mrf.mxu0
        %v3343 = vadd.f32 0.0, %v3342
        %3344 = vmatmul.bf16.gmra.mxu0 %v1567
        %v3345 = vpop.f32.mrf.mxu0
        %v3346 = vadd.f32 0.0, %v3345
        %v3347 = vpop.f32.mrf.mxu0
        %v3348 = vadd.f32 0.0, %v3347
        %3349 = vmatmul.bf16.gmra.mxu0 %v1570
        %v3350 = vpop.f32.mrf.mxu0
        %v3351 = vadd.f32 0.0, %v3350
        %v3352 = vpop.f32.mrf.mxu0
        %v3353 = vadd.f32 0.0, %v3352
        %3354 = vmatmul.bf16.gmra.mxu0 %v1573
        %v3355 = vpop.f32.mrf.mxu0
        %v3356 = vadd.f32 0.0, %v3355
        %v3357 = vpop.f32.mrf.mxu0
        %v3358 = vadd.f32 0.0, %v3357
        %3359 = vmatmul.bf16.gmra.mxu0 %v1576
        %v3360 = vpop.f32.mrf.mxu0
        %v3361 = vadd.f32 0.0, %v3360
        %v3362 = vpop.f32.mrf.mxu0
        %v3363 = vadd.f32 0.0, %v3362
        %3364 = vmatmul.bf16.gmra.mxu0 %v1579
        %v3365 = vpop.f32.mrf.mxu0
        %v3366 = vadd.f32 0.0, %v3365
        %v3367 = vpop.f32.mrf.mxu0
        %v3368 = vadd.f32 0.0, %v3367
        %3369 = vmatmul.bf16.gmra.mxu0 %v1582
        %v3370 = vpop.f32.mrf.mxu0
        %v3371 = vadd.f32 0.0, %v3370
        %v3372 = vpop.f32.mrf.mxu0
        %v3373 = vadd.f32 0.0, %v3372
        %3374 = vmatmul.bf16.gmra.mxu0 %v1585
        %v3375 = vpop.f32.mrf.mxu0
        %v3376 = vadd.f32 0.0, %v3375
        %v3377 = vpop.f32.mrf.mxu0
        %v3378 = vadd.f32 0.0, %v3377
        %3379 = vmatmul.bf16.gmra.mxu0 %v2614
        %v3380 = vpop.f32.mrf.mxu0
        %v3381 = vadd.f32 0.0, %v3380
        %v3382 = vpop.f32.mrf.mxu0
        %v3383 = vadd.f32 0.0, %v3382
        %3384 = vmatmul.bf16.gmra.mxu0 %v3296
        %v3385 = vpop.f32.mrf.mxu0
        %v3386 = vadd.f32 0.0, %v3385
        %v3387 = vpop.f32.mrf.mxu0
        %v3388 = vadd.f32 0.0, %v3387
        %3389 = vdwg.mxu0
        %v3390 = vadd.f32 %v3260, %v3311
        %v3391 = vadd.f32 %v3261, %v3313
        %v3392 = vadd.f32 %v3262, %v3316
        %v3393 = vadd.f32 %v3263, %v3318
        %v3394 = vadd.f32 %v3264, %v3321
        %v3395 = vadd.f32 %v3265, %v3323
        %v3396 = vadd.f32 %v3266, %v3326
        %v3397 = vadd.f32 %v3267, %v3328
        %v3398 = vadd.f32 %v3268, %v3331
        %v3399 = vadd.f32 %v3269, %v3333
        %v3400 = vadd.f32 %v3270, %v3336
        %v3401 = vadd.f32 %v3271, %v3338
        %v3402 = vadd.f32 %v3272, %v3341
        %v3403 = vadd.f32 %v3273, %v3343
        %v3404 = vadd.f32 %v3274, %v3346
        %v3405 = vadd.f32 %v3275, %v3348
        %v3406 = vadd.f32 %v3276, %v3351
        %v3407 = vadd.f32 %v3277, %v3353
        %v3408 = vadd.f32 %v3278, %v3356
        %v3409 = vadd.f32 %v3279, %v3358
        %v3410 = vadd.f32 %v3280, %v3361
        %v3411 = vadd.f32 %v3281, %v3363
        %v3412 = vadd.f32 %v3282, %v3366
        %v3413 = vadd.f32 %v3283, %v3368
        %v3414 = vadd.f32 %v3284, %v3371
        %v3415 = vadd.f32 %v3285, %v3373
        %v3416 = vadd.f32 %v3286, %v3376
        %v3417 = vadd.f32 %v3287, %v3378
        %v3418 = vadd.f32 %v3288, %v3381
        %v3419 = vadd.f32 %v3289, %v3383
        %v3420 = vadd.f32 %v3290, %v3386
        %v3421 = vadd.f32 %v3291, %v3388
        %v3423 = vrot.slane %v919, 1
        %v3424 = vrot.slane %v920, 1
        %v3425 = vsel %vm1727, %v3423, %v3424
        %v3426 = vrot.slane %v921, 1
        %v3427 = vsel %vm1727, %v3424, %v3426
        %v3430 = vpack.c.bf16 %v3427, %v3425
        %s3431 = scalar_lea.vmem %s1, 26
        %v3432 = vld [vmem:[%s3431] sm:$0x3]
        %v3434 = vsel %vm555, %v3430, 0
        %v3437 = vand.u32 %v3432, %v1288
        %3439 = vmatpush.bf16.msra.mxu0 0
        %3440 = vmatpush.bf16.msra.mxu0 0
        %3441 = vmatpush.bf16.msra.mxu0 0
        %3442 = vmatpush.bf16.msra.mxu0 0
        %3443 = vmatpush.bf16.msra.mxu0 0
        %3444 = vmatpush.bf16.msra.mxu0 0
        %3445 = vmatpush.bf16.msra.mxu0 0
        %3446 = vmatpush.bf16.msra.mxu0 %v3437
        %3447 = vmatmul.bf16.gmra.mxu0 %v1865
        %v3448 = vpop.f32.mrf.mxu0
        %v3449 = vadd.f32 0.0, %v3448
        %v3450 = vpop.f32.mrf.mxu0
        %v3451 = vadd.f32 0.0, %v3450
        %3452 = vmatmul.bf16.gmra.mxu0 %v1868
        %v3453 = vpop.f32.mrf.mxu0
        %v3454 = vadd.f32 0.0, %v3453
        %v3455 = vpop.f32.mrf.mxu0
        %v3456 = vadd.f32 0.0, %v3455
        %3457 = vmatmul.bf16.gmra.mxu0 %v1871
        %v3458 = vpop.f32.mrf.mxu0
        %v3459 = vadd.f32 0.0, %v3458
        %v3460 = vpop.f32.mrf.mxu0
        %v3461 = vadd.f32 0.0, %v3460
        %3462 = vmatmul.bf16.gmra.mxu0 %v1874
        %v3463 = vpop.f32.mrf.mxu0
        %v3464 = vadd.f32 0.0, %v3463
        %v3465 = vpop.f32.mrf.mxu0
        %v3466 = vadd.f32 0.0, %v3465
        %3467 = vmatmul.bf16.gmra.mxu0 %v1877
        %v3468 = vpop.f32.mrf.mxu0
        %v3469 = vadd.f32 0.0, %v3468
        %v3470 = vpop.f32.mrf.mxu0
        %v3471 = vadd.f32 0.0, %v3470
        %3472 = vmatmul.bf16.gmra.mxu0 %v1880
        %v3473 = vpop.f32.mrf.mxu0
        %v3474 = vadd.f32 0.0, %v3473
        %v3475 = vpop.f32.mrf.mxu0
        %v3476 = vadd.f32 0.0, %v3475
        %3477 = vmatmul.bf16.gmra.mxu0 %v1883
        %v3478 = vpop.f32.mrf.mxu0
        %v3479 = vadd.f32 0.0, %v3478
        %v3480 = vpop.f32.mrf.mxu0
        %v3481 = vadd.f32 0.0, %v3480
        %3482 = vmatmul.bf16.gmra.mxu0 %v1886
        %v3483 = vpop.f32.mrf.mxu0
        %v3484 = vadd.f32 0.0, %v3483
        %v3485 = vpop.f32.mrf.mxu0
        %v3486 = vadd.f32 0.0, %v3485
        %3487 = vmatmul.bf16.gmra.mxu0 %v1889
        %v3488 = vpop.f32.mrf.mxu0
        %v3489 = vadd.f32 0.0, %v3488
        %v3490 = vpop.f32.mrf.mxu0
        %v3491 = vadd.f32 0.0, %v3490
        %3492 = vmatmul.bf16.gmra.mxu0 %v1892
        %v3493 = vpop.f32.mrf.mxu0
        %v3494 = vadd.f32 0.0, %v3493
        %v3495 = vpop.f32.mrf.mxu0
        %v3496 = vadd.f32 0.0, %v3495
        %3497 = vmatmul.bf16.gmra.mxu0 %v1895
        %v3498 = vpop.f32.mrf.mxu0
        %v3499 = vadd.f32 0.0, %v3498
        %v3500 = vpop.f32.mrf.mxu0
        %v3501 = vadd.f32 0.0, %v3500
        %3502 = vmatmul.bf16.gmra.mxu0 %v1898
        %v3503 = vpop.f32.mrf.mxu0
        %v3504 = vadd.f32 0.0, %v3503
        %v3505 = vpop.f32.mrf.mxu0
        %v3506 = vadd.f32 0.0, %v3505
        %3507 = vmatmul.bf16.gmra.mxu0 %v1901
        %v3508 = vpop.f32.mrf.mxu0
        %v3509 = vadd.f32 0.0, %v3508
        %v3510 = vpop.f32.mrf.mxu0
        %v3511 = vadd.f32 0.0, %v3510
        %3512 = vmatmul.bf16.gmra.mxu0 %v1904
        %v3513 = vpop.f32.mrf.mxu0
        %v3514 = vadd.f32 0.0, %v3513
        %v3515 = vpop.f32.mrf.mxu0
        %v3516 = vadd.f32 0.0, %v3515
        %3517 = vmatmul.bf16.gmra.mxu0 %v2752
        %v3518 = vpop.f32.mrf.mxu0
        %v3519 = vadd.f32 0.0, %v3518
        %v3520 = vpop.f32.mrf.mxu0
        %v3521 = vadd.f32 0.0, %v3520
        %3522 = vmatmul.bf16.gmra.mxu0 %v3434
        %v3523 = vpop.f32.mrf.mxu0
        %v3524 = vadd.f32 0.0, %v3523
        %v3525 = vpop.f32.mrf.mxu0
        %v3526 = vadd.f32 0.0, %v3525
        %3527 = vdwg.mxu0
        %v3528 = vadd.f32 %v3390, %v3449
        %v3529 = vadd.f32 %v3391, %v3451
        %v3530 = vadd.f32 %v3392, %v3454
        %v3531 = vadd.f32 %v3393, %v3456
        %v3532 = vadd.f32 %v3394, %v3459
        %v3533 = vadd.f32 %v3395, %v3461
        %v3534 = vadd.f32 %v3396, %v3464
        %v3535 = vadd.f32 %v3397, %v3466
        %v3536 = vadd.f32 %v3398, %v3469
        %v3537 = vadd.f32 %v3399, %v3471
        %v3538 = vadd.f32 %v3400, %v3474
        %v3539 = vadd.f32 %v3401, %v3476
        %v3540 = vadd.f32 %v3402, %v3479
        %v3541 = vadd.f32 %v3403, %v3481
        %v3542 = vadd.f32 %v3404, %v3484
        %v3543 = vadd.f32 %v3405, %v3486
        %v3544 = vadd.f32 %v3406, %v3489
        %v3545 = vadd.f32 %v3407, %v3491
        %v3546 = vadd.f32 %v3408, %v3494
        %v3547 = vadd.f32 %v3409, %v3496
        %v3548 = vadd.f32 %v3410, %v3499
        %v3549 = vadd.f32 %v3411, %v3501
        %v3550 = vadd.f32 %v3412, %v3504
        %v3551 = vadd.f32 %v3413, %v3506
        %v3552 = vadd.f32 %v3414, %v3509
        %v3553 = vadd.f32 %v3415, %v3511
        %v3554 = vadd.f32 %v3416, %v3514
        %v3555 = vadd.f32 %v3417, %v3516
        %v3556 = vadd.f32 %v3418, %v3519
        %v3557 = vadd.f32 %v3419, %v3521
        %v3558 = vadd.f32 %v3420, %v3524
        %v3559 = vadd.f32 %v3421, %v3526
        %v3560 = vrot.slane %v919, 2
        %v3561 = vrot.slane %v920, 2
        %v3562 = vsel %vm2030, %v3560, %v3561
        %v3563 = vrot.slane %v921, 2
        %v3564 = vsel %vm2030, %v3561, %v3563
        %v3567 = vpack.c.bf16 %v3564, %v3562
        %s3568 = scalar_lea.vmem %s1, 28
        %v3569 = vld [vmem:[%s3568] sm:$0x3]
        %v3571 = vsel %vm555, %v3567, 0
        %v3574 = vand.u32 %v3569, %v1288
        %3576 = vmatpush.bf16.msra.mxu0 0
        %3577 = vmatpush.bf16.msra.mxu0 0
        %3578 = vmatpush.bf16.msra.mxu0 0
        %3579 = vmatpush.bf16.msra.mxu0 0
        %3580 = vmatpush.bf16.msra.mxu0 0
        %3581 = vmatpush.bf16.msra.mxu0 0
        %3582 = vmatpush.bf16.msra.mxu0 0
        %3583 = vmatpush.bf16.msra.mxu0 %v3574
        %3584 = vmatmul.bf16.gmra.mxu0 %v2168
        %v3585 = vpop.f32.mrf.mxu0
        %v3586 = vadd.f32 0.0, %v3585
        %v3587 = vpop.f32.mrf.mxu0
        %v3588 = vadd.f32 0.0, %v3587
        %3589 = vmatmul.bf16.gmra.mxu0 %v2171
        %v3590 = vpop.f32.mrf.mxu0
        %v3591 = vadd.f32 0.0, %v3590
        %v3592 = vpop.f32.mrf.mxu0
        %v3593 = vadd.f32 0.0, %v3592
        %3594 = vmatmul.bf16.gmra.mxu0 %v2174
        %v3595 = vpop.f32.mrf.mxu0
        %v3596 = vadd.f32 0.0, %v3595
        %v3597 = vpop.f32.mrf.mxu0
        %v3598 = vadd.f32 0.0, %v3597
        %3599 = vmatmul.bf16.gmra.mxu0 %v2177
        %v3600 = vpop.f32.mrf.mxu0
        %v3601 = vadd.f32 0.0, %v3600
        %v3602 = vpop.f32.mrf.mxu0
        %v3603 = vadd.f32 0.0, %v3602
        %3604 = vmatmul.bf16.gmra.mxu0 %v2180
        %v3605 = vpop.f32.mrf.mxu0
        %v3606 = vadd.f32 0.0, %v3605
        %v3607 = vpop.f32.mrf.mxu0
        %v3608 = vadd.f32 0.0, %v3607
        %3609 = vmatmul.bf16.gmra.mxu0 %v2183
        %v3610 = vpop.f32.mrf.mxu0
        %v3611 = vadd.f32 0.0, %v3610
        %v3612 = vpop.f32.mrf.mxu0
        %v3613 = vadd.f32 0.0, %v3612
        %3614 = vmatmul.bf16.gmra.mxu0 %v2186
        %v3615 = vpop.f32.mrf.mxu0
        %v3616 = vadd.f32 0.0, %v3615
        %v3617 = vpop.f32.mrf.mxu0
        %v3618 = vadd.f32 0.0, %v3617
        %3619 = vmatmul.bf16.gmra.mxu0 %v2189
        %v3620 = vpop.f32.mrf.mxu0
        %v3621 = vadd.f32 0.0, %v3620
        %v3622 = vpop.f32.mrf.mxu0
        %v3623 = vadd.f32 0.0, %v3622
        %3624 = vmatmul.bf16.gmra.mxu0 %v2192
        %v3625 = vpop.f32.mrf.mxu0
        %v3626 = vadd.f32 0.0, %v3625
        %v3627 = vpop.f32.mrf.mxu0
        %v3628 = vadd.f32 0.0, %v3627
        %3629 = vmatmul.bf16.gmra.mxu0 %v2195
        %v3630 = vpop.f32.mrf.mxu0
        %v3631 = vadd.f32 0.0, %v3630
        %v3632 = vpop.f32.mrf.mxu0
        %v3633 = vadd.f32 0.0, %v3632
        %3634 = vmatmul.bf16.gmra.mxu0 %v2198
        %v3635 = vpop.f32.mrf.mxu0
        %v3636 = vadd.f32 0.0, %v3635
        %v3637 = vpop.f32.mrf.mxu0
        %v3638 = vadd.f32 0.0, %v3637
        %3639 = vmatmul.bf16.gmra.mxu0 %v2201
        %v3640 = vpop.f32.mrf.mxu0
        %v3641 = vadd.f32 0.0, %v3640
        %v3642 = vpop.f32.mrf.mxu0
        %v3643 = vadd.f32 0.0, %v3642
        %3644 = vmatmul.bf16.gmra.mxu0 %v2204
        %v3645 = vpop.f32.mrf.mxu0
        %v3646 = vadd.f32 0.0, %v3645
        %v3647 = vpop.f32.mrf.mxu0
        %v3648 = vadd.f32 0.0, %v3647
        %3649 = vmatmul.bf16.gmra.mxu0 %v2207
        %v3650 = vpop.f32.mrf.mxu0
        %v3651 = vadd.f32 0.0, %v3650
        %v3652 = vpop.f32.mrf.mxu0
        %v3653 = vadd.f32 0.0, %v3652
        %3654 = vmatmul.bf16.gmra.mxu0 %v2889
        %v3655 = vpop.f32.mrf.mxu0
        %v3656 = vadd.f32 0.0, %v3655
        %v3657 = vpop.f32.mrf.mxu0
        %v3658 = vadd.f32 0.0, %v3657
        %3659 = vmatmul.bf16.gmra.mxu0 %v3571
        %v3660 = vpop.f32.mrf.mxu0
        %v3661 = vadd.f32 0.0, %v3660
        %v3662 = vpop.f32.mrf.mxu0
        %v3663 = vadd.f32 0.0, %v3662
        %3664 = vdwg.mxu0
        %v3665 = vadd.f32 %v3528, %v3586
        %v3666 = vadd.f32 %v3529, %v3588
        %v3667 = vadd.f32 %v3530, %v3591
        %v3668 = vadd.f32 %v3531, %v3593
        %v3669 = vadd.f32 %v3532, %v3596
        %v3670 = vadd.f32 %v3533, %v3598
        %v3671 = vadd.f32 %v3534, %v3601
        %v3672 = vadd.f32 %v3535, %v3603
        %v3673 = vadd.f32 %v3536, %v3606
        %v3674 = vadd.f32 %v3537, %v3608
        %v3675 = vadd.f32 %v3538, %v3611
        %v3676 = vadd.f32 %v3539, %v3613
        %v3677 = vadd.f32 %v3540, %v3616
        %v3678 = vadd.f32 %v3541, %v3618
        %v3679 = vadd.f32 %v3542, %v3621
        %v3680 = vadd.f32 %v3543, %v3623
        %v3681 = vadd.f32 %v3544, %v3626
        %v3682 = vadd.f32 %v3545, %v3628
        %v3683 = vadd.f32 %v3546, %v3631
        %v3684 = vadd.f32 %v3547, %v3633
        %v3685 = vadd.f32 %v3548, %v3636
        %v3686 = vadd.f32 %v3549, %v3638
        %v3687 = vadd.f32 %v3550, %v3641
        %v3688 = vadd.f32 %v3551, %v3643
        %v3689 = vadd.f32 %v3552, %v3646
        %v3690 = vadd.f32 %v3553, %v3648
        %v3691 = vadd.f32 %v3554, %v3651
        %v3692 = vadd.f32 %v3555, %v3653
        %v3693 = vadd.f32 %v3556, %v3656
        %v3694 = vadd.f32 %v3557, %v3658
        %v3695 = vadd.f32 %v3558, %v3661
        %v3696 = vadd.f32 %v3559, %v3663
        %v3700 = vrot.slane %v922, 6
        %v3701 = vrot.slane %v923, 6
        %v3702 = vsel %vm978, %v3700, %v3701
        %v3703 = vrot.slane %v924, 6
        %v3704 = vsel %vm978, %v3701, %v3703
        %v3707 = vpack.c.bf16 %v3704, %v3702
        %s3708 = scalar_lea.vmem %s1, 30
        %v3709 = vld [vmem:[%s3708] sm:$0x3]
        %v3711 = vsel %vm555, %v3707, 0
        %v3714 = vand.u32 %v3709, %v1288
        %3716 = vmatpush.bf16.msra.mxu0 0
        %3717 = vmatpush.bf16.msra.mxu0 0
        %3718 = vmatpush.bf16.msra.mxu0 0
        %3719 = vmatpush.bf16.msra.mxu0 0
        %3720 = vmatpush.bf16.msra.mxu0 0
        %3721 = vmatpush.bf16.msra.mxu0 0
        %3722 = vmatpush.bf16.msra.mxu0 0
        %3723 = vmatpush.bf16.msra.mxu0 %v3714
        %3724 = vmatmul.bf16.gmra.mxu0 %v1391
        %v3725 = vpop.f32.mrf.mxu0
        %v3726 = vadd.f32 0.0, %v3725
        %v3727 = vpop.f32.mrf.mxu0
        %v3728 = vadd.f32 0.0, %v3727
        %3729 = vmatmul.bf16.gmra.mxu0 %v1394
        %v3730 = vpop.f32.mrf.mxu0
        %v3731 = vadd.f32 0.0, %v3730
        %v3732 = vpop.f32.mrf.mxu0
        %v3733 = vadd.f32 0.0, %v3732
        %3734 = vmatmul.bf16.gmra.mxu0 %v1397
        %v3735 = vpop.f32.mrf.mxu0
        %v3736 = vadd.f32 0.0, %v3735
        %v3737 = vpop.f32.mrf.mxu0
        %v3738 = vadd.f32 0.0, %v3737
        %3739 = vmatmul.bf16.gmra.mxu0 %v1400
        %v3740 = vpop.f32.mrf.mxu0
        %v3741 = vadd.f32 0.0, %v3740
        %v3742 = vpop.f32.mrf.mxu0
        %v3743 = vadd.f32 0.0, %v3742
        %3744 = vmatmul.bf16.gmra.mxu0 %v1403
        %v3745 = vpop.f32.mrf.mxu0
        %v3746 = vadd.f32 0.0, %v3745
        %v3747 = vpop.f32.mrf.mxu0
        %v3748 = vadd.f32 0.0, %v3747
        %3749 = vmatmul.bf16.gmra.mxu0 %v1406
        %v3750 = vpop.f32.mrf.mxu0
        %v3751 = vadd.f32 0.0, %v3750
        %v3752 = vpop.f32.mrf.mxu0
        %v3753 = vadd.f32 0.0, %v3752
        %3754 = vmatmul.bf16.gmra.mxu0 %v1409
        %v3755 = vpop.f32.mrf.mxu0
        %v3756 = vadd.f32 0.0, %v3755
        %v3757 = vpop.f32.mrf.mxu0
        %v3758 = vadd.f32 0.0, %v3757
        %3759 = vmatmul.bf16.gmra.mxu0 %v1412
        %v3760 = vpop.f32.mrf.mxu0
        %v3761 = vadd.f32 0.0, %v3760
        %v3762 = vpop.f32.mrf.mxu0
        %v3763 = vadd.f32 0.0, %v3762
        %3764 = vmatmul.bf16.gmra.mxu0 %v1415
        %v3765 = vpop.f32.mrf.mxu0
        %v3766 = vadd.f32 0.0, %v3765
        %v3767 = vpop.f32.mrf.mxu0
        %v3768 = vadd.f32 0.0, %v3767
        %3769 = vmatmul.bf16.gmra.mxu0 %v1418
        %v3770 = vpop.f32.mrf.mxu0
        %v3771 = vadd.f32 0.0, %v3770
        %v3772 = vpop.f32.mrf.mxu0
        %v3773 = vadd.f32 0.0, %v3772
        %3774 = vmatmul.bf16.gmra.mxu0 %v1421
        %v3775 = vpop.f32.mrf.mxu0
        %v3776 = vadd.f32 0.0, %v3775
        %v3777 = vpop.f32.mrf.mxu0
        %v3778 = vadd.f32 0.0, %v3777
        %3779 = vmatmul.bf16.gmra.mxu0 %v1424
        %v3780 = vpop.f32.mrf.mxu0
        %v3781 = vadd.f32 0.0, %v3780
        %v3782 = vpop.f32.mrf.mxu0
        %v3783 = vadd.f32 0.0, %v3782
        %3784 = vmatmul.bf16.gmra.mxu0 %v1427
        %v3785 = vpop.f32.mrf.mxu0
        %v3786 = vadd.f32 0.0, %v3785
        %v3787 = vpop.f32.mrf.mxu0
        %v3788 = vadd.f32 0.0, %v3787
        %3789 = vmatmul.bf16.gmra.mxu0 %v2347
        %v3790 = vpop.f32.mrf.mxu0
        %v3791 = vadd.f32 0.0, %v3790
        %v3792 = vpop.f32.mrf.mxu0
        %v3793 = vadd.f32 0.0, %v3792
        %3794 = vmatmul.bf16.gmra.mxu0 %v3029
        %v3795 = vpop.f32.mrf.mxu0
        %v3796 = vadd.f32 0.0, %v3795
        %v3797 = vpop.f32.mrf.mxu0
        %v3798 = vadd.f32 0.0, %v3797
        %3799 = vmatmul.bf16.gmra.mxu0 %v3711
        %v3800 = vpop.f32.mrf.mxu0
        %v3801 = vadd.f32 0.0, %v3800
        %v3802 = vpop.f32.mrf.mxu0
        %v3803 = vadd.f32 0.0, %v3802
        %3804 = vdwg.mxu0
        %v3805 = vadd.f32 %v3665, %v3726
        %v3806 = vadd.f32 %v3666, %v3728
        %v3807 = vadd.f32 %v3667, %v3731
        %v3808 = vadd.f32 %v3668, %v3733
        %v3809 = vadd.f32 %v3669, %v3736
        %v3810 = vadd.f32 %v3670, %v3738
        %v3811 = vadd.f32 %v3671, %v3741
        %v3812 = vadd.f32 %v3672, %v3743
        %v3813 = vadd.f32 %v3673, %v3746
        %v3814 = vadd.f32 %v3674, %v3748
        %v3815 = vadd.f32 %v3675, %v3751
        %v3816 = vadd.f32 %v3676, %v3753
        %v3817 = vadd.f32 %v3677, %v3756
        %v3818 = vadd.f32 %v3678, %v3758
        %v3819 = vadd.f32 %v3679, %v3761
        %v3820 = vadd.f32 %v3680, %v3763
        %v3821 = vadd.f32 %v3681, %v3766
        %v3822 = vadd.f32 %v3682, %v3768
        %v3823 = vadd.f32 %v3683, %v3771
        %v3824 = vadd.f32 %v3684, %v3773
        %v3825 = vadd.f32 %v3685, %v3776
        %v3826 = vadd.f32 %v3686, %v3778
        %v3827 = vadd.f32 %v3687, %v3781
        %v3828 = vadd.f32 %v3688, %v3783
        %v3829 = vadd.f32 %v3689, %v3786
        %v3830 = vadd.f32 %v3690, %v3788
        %v3831 = vadd.f32 %v3691, %v3791
        %v3832 = vadd.f32 %v3692, %v3793
        %v3833 = vadd.f32 %v3693, %v3796
        %v3834 = vadd.f32 %v3694, %v3798
        %v3835 = vadd.f32 %v3695, %v3801
        %v3836 = vadd.f32 %v3696, %v3803
        %v3837 = vrot.slane %v922, 7
        %v3838 = vrot.slane %v923, 7
        %v3839 = vsel %vm1108, %v3837, %v3838
        %v3840 = vrot.slane %v924, 7
        %v3841 = vsel %vm1108, %v3838, %v3840
        %v3844 = vpack.c.bf16 %v3841, %v3839
        %s3845 = scalar_lea.vmem %s1, 32
        %v3846 = vld [vmem:[%s3845] sm:$0x3]
        %v3848 = vsel %vm555, %v3844, 0
        %v3851 = vand.u32 %v3846, %v1288
        %3853 = vmatpush.bf16.msra.mxu0 0
        %3854 = vmatpush.bf16.msra.mxu0 0
        %3855 = vmatpush.bf16.msra.mxu0 0
        %3856 = vmatpush.bf16.msra.mxu0 0
        %3857 = vmatpush.bf16.msra.mxu0 0
        %3858 = vmatpush.bf16.msra.mxu0 0
        %3859 = vmatpush.bf16.msra.mxu0 0
        %3860 = vmatpush.bf16.msra.mxu0 %v3851
        %3861 = vmatmul.bf16.gmra.mxu0 %v1249
        %v3862 = vpop.f32.mrf.mxu0
        %v3863 = vadd.f32 0.0, %v3862
        %v3864 = vpop.f32.mrf.mxu0
        %v3865 = vadd.f32 0.0, %v3864
        %3866 = vmatmul.bf16.gmra.mxu0 %v1252
        %v3867 = vpop.f32.mrf.mxu0
        %v3868 = vadd.f32 0.0, %v3867
        %v3869 = vpop.f32.mrf.mxu0
        %v3870 = vadd.f32 0.0, %v3869
        %3871 = vmatmul.bf16.gmra.mxu0 %v1255
        %v3872 = vpop.f32.mrf.mxu0
        %v3873 = vadd.f32 0.0, %v3872
        %v3874 = vpop.f32.mrf.mxu0
        %v3875 = vadd.f32 0.0, %v3874
        %3876 = vmatmul.bf16.gmra.mxu0 %v1258
        %v3877 = vpop.f32.mrf.mxu0
        %v3878 = vadd.f32 0.0, %v3877
        %v3879 = vpop.f32.mrf.mxu0
        %v3880 = vadd.f32 0.0, %v3879
        %3881 = vmatmul.bf16.gmra.mxu0 %v1261
        %v3882 = vpop.f32.mrf.mxu0
        %v3883 = vadd.f32 0.0, %v3882
        %v3884 = vpop.f32.mrf.mxu0
        %v3885 = vadd.f32 0.0, %v3884
        %3886 = vmatmul.bf16.gmra.mxu0 %v1264
        %v3887 = vpop.f32.mrf.mxu0
        %v3888 = vadd.f32 0.0, %v3887
        %v3889 = vpop.f32.mrf.mxu0
        %v3890 = vadd.f32 0.0, %v3889
        %3891 = vmatmul.bf16.gmra.mxu0 %v1267
        %v3892 = vpop.f32.mrf.mxu0
        %v3893 = vadd.f32 0.0, %v3892
        %v3894 = vpop.f32.mrf.mxu0
        %v3895 = vadd.f32 0.0, %v3894
        %3896 = vmatmul.bf16.gmra.mxu0 %v1270
        %v3897 = vpop.f32.mrf.mxu0
        %v3898 = vadd.f32 0.0, %v3897
        %v3899 = vpop.f32.mrf.mxu0
        %v3900 = vadd.f32 0.0, %v3899
        %3901 = vmatmul.bf16.gmra.mxu0 %v1273
        %v3902 = vpop.f32.mrf.mxu0
        %v3903 = vadd.f32 0.0, %v3902
        %v3904 = vpop.f32.mrf.mxu0
        %v3905 = vadd.f32 0.0, %v3904
        %3906 = vmatmul.bf16.gmra.mxu0 %v1276
        %v3907 = vpop.f32.mrf.mxu0
        %v3908 = vadd.f32 0.0, %v3907
        %v3909 = vpop.f32.mrf.mxu0
        %v3910 = vadd.f32 0.0, %v3909
        %3911 = vmatmul.bf16.gmra.mxu0 %v1279
        %v3912 = vpop.f32.mrf.mxu0
        %v3913 = vadd.f32 0.0, %v3912
        %v3914 = vpop.f32.mrf.mxu0
        %v3915 = vadd.f32 0.0, %v3914
        %3916 = vmatmul.bf16.gmra.mxu0 %v1282
        %v3917 = vpop.f32.mrf.mxu0
        %v3918 = vadd.f32 0.0, %v3917
        %v3919 = vpop.f32.mrf.mxu0
        %v3920 = vadd.f32 0.0, %v3919
        %3921 = vmatmul.bf16.gmra.mxu0 %v1285
        %v3922 = vpop.f32.mrf.mxu0
        %v3923 = vadd.f32 0.0, %v3922
        %v3924 = vpop.f32.mrf.mxu0
        %v3925 = vadd.f32 0.0, %v3924
        %3926 = vmatmul.bf16.gmra.mxu0 %v2484
        %v3927 = vpop.f32.mrf.mxu0
        %v3928 = vadd.f32 0.0, %v3927
        %v3929 = vpop.f32.mrf.mxu0
        %v3930 = vadd.f32 0.0, %v3929
        %3931 = vmatmul.bf16.gmra.mxu0 %v3166
        %v3932 = vpop.f32.mrf.mxu0
        %v3933 = vadd.f32 0.0, %v3932
        %v3934 = vpop.f32.mrf.mxu0
        %v3935 = vadd.f32 0.0, %v3934
        %3936 = vmatmul.bf16.gmra.mxu0 %v3848
        %v3937 = vpop.f32.mrf.mxu0
        %v3938 = vadd.f32 0.0, %v3937
        %v3939 = vpop.f32.mrf.mxu0
        %v3940 = vadd.f32 0.0, %v3939
        %3941 = vdwg.mxu0
        %v3942 = vadd.f32 %v3805, %v3863
        %v3943 = vadd.f32 %v3806, %v3865
        %v3944 = vadd.f32 %v3807, %v3868
        %v3945 = vadd.f32 %v3808, %v3870
        %v3946 = vadd.f32 %v3809, %v3873
        %v3947 = vadd.f32 %v3810, %v3875
        %v3948 = vadd.f32 %v3811, %v3878
        %v3949 = vadd.f32 %v3812, %v3880
        %v3950 = vadd.f32 %v3813, %v3883
        %v3951 = vadd.f32 %v3814, %v3885
        %v3952 = vadd.f32 %v3815, %v3888
        %v3953 = vadd.f32 %v3816, %v3890
        %v3954 = vadd.f32 %v3817, %v3893
        %v3955 = vadd.f32 %v3818, %v3895
        %v3956 = vadd.f32 %v3819, %v3898
        %v3957 = vadd.f32 %v3820, %v3900
        %v3958 = vadd.f32 %v3821, %v3903
        %v3959 = vadd.f32 %v3822, %v3905
        %v3960 = vadd.f32 %v3823, %v3908
        %v3961 = vadd.f32 %v3824, %v3910
        %v3962 = vadd.f32 %v3825, %v3913
        %v3963 = vadd.f32 %v3826, %v3915
        %v3964 = vadd.f32 %v3827, %v3918
        %v3965 = vadd.f32 %v3828, %v3920
        %v3966 = vadd.f32 %v3829, %v3923
        %v3967 = vadd.f32 %v3830, %v3925
        %v3968 = vadd.f32 %v3831, %v3928
        %v3969 = vadd.f32 %v3832, %v3930
        %v3970 = vadd.f32 %v3833, %v3933
        %v3971 = vadd.f32 %v3834, %v3935
        %v3972 = vadd.f32 %v3835, %v3938
        %v3973 = vadd.f32 %v3836, %v3940
        %v3974 = vpack.c.bf16 %v924, %v923
        %s3975 = scalar_lea.vmem %s1, 34
        %v3976 = vld [vmem:[%s3975] sm:$0x3]
        %v3978 = vsel %vm555, %v3974, 0
        %v3981 = vand.u32 %v3976, %v1288
        %3983 = vmatpush.bf16.msra.mxu0 0
        %3984 = vmatpush.bf16.msra.mxu0 0
        %3985 = vmatpush.bf16.msra.mxu0 0
        %3986 = vmatpush.bf16.msra.mxu0 0
        %3987 = vmatpush.bf16.msra.mxu0 0
        %3988 = vmatpush.bf16.msra.mxu0 0
        %3989 = vmatpush.bf16.msra.mxu0 0
        %3990 = vmatpush.bf16.msra.mxu0 %v3981
        %3991 = vmatmul.bf16.gmra.mxu0 %v1549
        %v3992 = vpop.f32.mrf.mxu0
        %v3993 = vadd.f32 0.0, %v3992
        %v3994 = vpop.f32.mrf.mxu0
        %v3995 = vadd.f32 0.0, %v3994
        %3996 = vmatmul.bf16.gmra.mxu0 %v1552
        %v3997 = vpop.f32.mrf.mxu0
        %v3998 = vadd.f32 0.0, %v3997
        %v3999 = vpop.f32.mrf.mxu0
        %v4000 = vadd.f32 0.0, %v3999
        %4001 = vmatmul.bf16.gmra.mxu0 %v1555
        %v4002 = vpop.f32.mrf.mxu0
        %v4003 = vadd.f32 0.0, %v4002
        %v4004 = vpop.f32.mrf.mxu0
        %v4005 = vadd.f32 0.0, %v4004
        %4006 = vmatmul.bf16.gmra.mxu0 %v1558
        %v4007 = vpop.f32.mrf.mxu0
        %v4008 = vadd.f32 0.0, %v4007
        %v4009 = vpop.f32.mrf.mxu0
        %v4010 = vadd.f32 0.0, %v4009
        %4011 = vmatmul.bf16.gmra.mxu0 %v1561
        %v4012 = vpop.f32.mrf.mxu0
        %v4013 = vadd.f32 0.0, %v4012
        %v4014 = vpop.f32.mrf.mxu0
        %v4015 = vadd.f32 0.0, %v4014
        %4016 = vmatmul.bf16.gmra.mxu0 %v1564
        %v4017 = vpop.f32.mrf.mxu0
        %v4018 = vadd.f32 0.0, %v4017
        %v4019 = vpop.f32.mrf.mxu0
        %v4020 = vadd.f32 0.0, %v4019
        %4021 = vmatmul.bf16.gmra.mxu0 %v1567
        %v4022 = vpop.f32.mrf.mxu0
        %v4023 = vadd.f32 0.0, %v4022
        %v4024 = vpop.f32.mrf.mxu0
        %v4025 = vadd.f32 0.0, %v4024
        %4026 = vmatmul.bf16.gmra.mxu0 %v1570
        %v4027 = vpop.f32.mrf.mxu0
        %v4028 = vadd.f32 0.0, %v4027
        %v4029 = vpop.f32.mrf.mxu0
        %v4030 = vadd.f32 0.0, %v4029
        %4031 = vmatmul.bf16.gmra.mxu0 %v1573
        %v4032 = vpop.f32.mrf.mxu0
        %v4033 = vadd.f32 0.0, %v4032
        %v4034 = vpop.f32.mrf.mxu0
        %v4035 = vadd.f32 0.0, %v4034
        %4036 = vmatmul.bf16.gmra.mxu0 %v1576
        %v4037 = vpop.f32.mrf.mxu0
        %v4038 = vadd.f32 0.0, %v4037
        %v4039 = vpop.f32.mrf.mxu0
        %v4040 = vadd.f32 0.0, %v4039
        %4041 = vmatmul.bf16.gmra.mxu0 %v1579
        %v4042 = vpop.f32.mrf.mxu0
        %v4043 = vadd.f32 0.0, %v4042
        %v4044 = vpop.f32.mrf.mxu0
        %v4045 = vadd.f32 0.0, %v4044
        %4046 = vmatmul.bf16.gmra.mxu0 %v1582
        %v4047 = vpop.f32.mrf.mxu0
        %v4048 = vadd.f32 0.0, %v4047
        %v4049 = vpop.f32.mrf.mxu0
        %v4050 = vadd.f32 0.0, %v4049
        %4051 = vmatmul.bf16.gmra.mxu0 %v1585
        %v4052 = vpop.f32.mrf.mxu0
        %v4053 = vadd.f32 0.0, %v4052
        %v4054 = vpop.f32.mrf.mxu0
        %v4055 = vadd.f32 0.0, %v4054
        %4056 = vmatmul.bf16.gmra.mxu0 %v2614
        %v4057 = vpop.f32.mrf.mxu0
        %v4058 = vadd.f32 0.0, %v4057
        %v4059 = vpop.f32.mrf.mxu0
        %v4060 = vadd.f32 0.0, %v4059
        %4061 = vmatmul.bf16.gmra.mxu0 %v3296
        %v4062 = vpop.f32.mrf.mxu0
        %v4063 = vadd.f32 0.0, %v4062
        %v4064 = vpop.f32.mrf.mxu0
        %v4065 = vadd.f32 0.0, %v4064
        %4066 = vmatmul.bf16.gmra.mxu0 %v3978
        %v4067 = vpop.f32.mrf.mxu0
        %v4068 = vadd.f32 0.0, %v4067
        %v4069 = vpop.f32.mrf.mxu0
        %v4070 = vadd.f32 0.0, %v4069
        %4071 = vdwg.mxu0
        %v4072 = vadd.f32 %v3942, %v3993
        %v4073 = vadd.f32 %v3943, %v3995
        %v4074 = vadd.f32 %v3944, %v3998
        %v4075 = vadd.f32 %v3945, %v4000
        %v4076 = vadd.f32 %v3946, %v4003
        %v4077 = vadd.f32 %v3947, %v4005
        %v4078 = vadd.f32 %v3948, %v4008
        %v4079 = vadd.f32 %v3949, %v4010
        %v4080 = vadd.f32 %v3950, %v4013
        %v4081 = vadd.f32 %v3951, %v4015
        %v4082 = vadd.f32 %v3952, %v4018
        %v4083 = vadd.f32 %v3953, %v4020
        %v4084 = vadd.f32 %v3954, %v4023
        %v4085 = vadd.f32 %v3955, %v4025
        %v4086 = vadd.f32 %v3956, %v4028
        %v4087 = vadd.f32 %v3957, %v4030
        %v4088 = vadd.f32 %v3958, %v4033
        %v4089 = vadd.f32 %v3959, %v4035
        %v4090 = vadd.f32 %v3960, %v4038
        %v4091 = vadd.f32 %v3961, %v4040
        %v4092 = vadd.f32 %v3962, %v4043
        %v4093 = vadd.f32 %v3963, %v4045
        %v4094 = vadd.f32 %v3964, %v4048
        %v4095 = vadd.f32 %v3965, %v4050
        %v4096 = vadd.f32 %v3966, %v4053
        %v4097 = vadd.f32 %v3967, %v4055
        %v4098 = vadd.f32 %v3968, %v4058
        %v4099 = vadd.f32 %v3969, %v4060
        %v4100 = vadd.f32 %v3970, %v4063
        %v4101 = vadd.f32 %v3971, %v4065
        %v4102 = vadd.f32 %v3972, %v4068
        %v4103 = vadd.f32 %v3973, %v4070
        %v4105 = vrot.slane %v923, 1
        %v4106 = vrot.slane %v924, 1
        %v4107 = vsel %vm1727, %v4105, %v4106
        %v4108 = vrot.slane %v925, 1
        %v4109 = vsel %vm1727, %v4106, %v4108
        %v4112 = vpack.c.bf16 %v4109, %v4107
        %s4113 = scalar_lea.vmem %s1, 36
        %v4114 = vld [vmem:[%s4113] sm:$0x3]
        %v4116 = vsel %vm555, %v4112, 0
        %v4119 = vand.u32 %v4114, %v1288
        %4121 = vmatpush.bf16.msra.mxu0 0
        %4122 = vmatpush.bf16.msra.mxu0 0
        %4123 = vmatpush.bf16.msra.mxu0 0
        %4124 = vmatpush.bf16.msra.mxu0 0
        %4125 = vmatpush.bf16.msra.mxu0 0
        %4126 = vmatpush.bf16.msra.mxu0 0
        %4127 = vmatpush.bf16.msra.mxu0 0
        %4128 = vmatpush.bf16.msra.mxu0 %v4119
        %4129 = vmatmul.bf16.gmra.mxu0 %v1868
        %v4130 = vpop.f32.mrf.mxu0
        %v4131 = vadd.f32 0.0, %v4130
        %v4132 = vpop.f32.mrf.mxu0
        %v4133 = vadd.f32 0.0, %v4132
        %4134 = vmatmul.bf16.gmra.mxu0 %v1871
        %v4135 = vpop.f32.mrf.mxu0
        %v4136 = vadd.f32 0.0, %v4135
        %v4137 = vpop.f32.mrf.mxu0
        %v4138 = vadd.f32 0.0, %v4137
        %4139 = vmatmul.bf16.gmra.mxu0 %v1874
        %v4140 = vpop.f32.mrf.mxu0
        %v4141 = vadd.f32 0.0, %v4140
        %v4142 = vpop.f32.mrf.mxu0
        %v4143 = vadd.f32 0.0, %v4142
        %4144 = vmatmul.bf16.gmra.mxu0 %v1877
        %v4145 = vpop.f32.mrf.mxu0
        %v4146 = vadd.f32 0.0, %v4145
        %v4147 = vpop.f32.mrf.mxu0
        %v4148 = vadd.f32 0.0, %v4147
        %4149 = vmatmul.bf16.gmra.mxu0 %v1880
        %v4150 = vpop.f32.mrf.mxu0
        %v4151 = vadd.f32 0.0, %v4150
        %v4152 = vpop.f32.mrf.mxu0
        %v4153 = vadd.f32 0.0, %v4152
        %4154 = vmatmul.bf16.gmra.mxu0 %v1883
        %v4155 = vpop.f32.mrf.mxu0
        %v4156 = vadd.f32 0.0, %v4155
        %v4157 = vpop.f32.mrf.mxu0
        %v4158 = vadd.f32 0.0, %v4157
        %4159 = vmatmul.bf16.gmra.mxu0 %v1886
        %v4160 = vpop.f32.mrf.mxu0
        %v4161 = vadd.f32 0.0, %v4160
        %v4162 = vpop.f32.mrf.mxu0
        %v4163 = vadd.f32 0.0, %v4162
        %4164 = vmatmul.bf16.gmra.mxu0 %v1889
        %v4165 = vpop.f32.mrf.mxu0
        %v4166 = vadd.f32 0.0, %v4165
        %v4167 = vpop.f32.mrf.mxu0
        %v4168 = vadd.f32 0.0, %v4167
        %4169 = vmatmul.bf16.gmra.mxu0 %v1892
        %v4170 = vpop.f32.mrf.mxu0
        %v4171 = vadd.f32 0.0, %v4170
        %v4172 = vpop.f32.mrf.mxu0
        %v4173 = vadd.f32 0.0, %v4172
        %4174 = vmatmul.bf16.gmra.mxu0 %v1895
        %v4175 = vpop.f32.mrf.mxu0
        %v4176 = vadd.f32 0.0, %v4175
        %v4177 = vpop.f32.mrf.mxu0
        %v4178 = vadd.f32 0.0, %v4177
        %4179 = vmatmul.bf16.gmra.mxu0 %v1898
        %v4180 = vpop.f32.mrf.mxu0
        %v4181 = vadd.f32 0.0, %v4180
        %v4182 = vpop.f32.mrf.mxu0
        %v4183 = vadd.f32 0.0, %v4182
        %4184 = vmatmul.bf16.gmra.mxu0 %v1901
        %v4185 = vpop.f32.mrf.mxu0
        %v4186 = vadd.f32 0.0, %v4185
        %v4187 = vpop.f32.mrf.mxu0
        %v4188 = vadd.f32 0.0, %v4187
        %4189 = vmatmul.bf16.gmra.mxu0 %v1904
        %v4190 = vpop.f32.mrf.mxu0
        %v4191 = vadd.f32 0.0, %v4190
        %v4192 = vpop.f32.mrf.mxu0
        %v4193 = vadd.f32 0.0, %v4192
        %4194 = vmatmul.bf16.gmra.mxu0 %v2752
        %v4195 = vpop.f32.mrf.mxu0
        %v4196 = vadd.f32 0.0, %v4195
        %v4197 = vpop.f32.mrf.mxu0
        %v4198 = vadd.f32 0.0, %v4197
        %4199 = vmatmul.bf16.gmra.mxu0 %v3434
        %v4200 = vpop.f32.mrf.mxu0
        %v4201 = vadd.f32 0.0, %v4200
        %v4202 = vpop.f32.mrf.mxu0
        %v4203 = vadd.f32 0.0, %v4202
        %4204 = vmatmul.bf16.gmra.mxu0 %v4116
        %v4205 = vpop.f32.mrf.mxu0
        %v4206 = vadd.f32 0.0, %v4205
        %v4207 = vpop.f32.mrf.mxu0
        %v4208 = vadd.f32 0.0, %v4207
        %4209 = vdwg.mxu0
        %v4210 = vadd.f32 %v4072, %v4131
        %v4211 = vadd.f32 %v4073, %v4133
        %v4212 = vadd.f32 %v4074, %v4136
        %v4213 = vadd.f32 %v4075, %v4138
        %v4214 = vadd.f32 %v4076, %v4141
        %v4215 = vadd.f32 %v4077, %v4143
        %v4216 = vadd.f32 %v4078, %v4146
        %v4217 = vadd.f32 %v4079, %v4148
        %v4218 = vadd.f32 %v4080, %v4151
        %v4219 = vadd.f32 %v4081, %v4153
        %v4220 = vadd.f32 %v4082, %v4156
        %v4221 = vadd.f32 %v4083, %v4158
        %v4222 = vadd.f32 %v4084, %v4161
        %v4223 = vadd.f32 %v4085, %v4163
        %v4224 = vadd.f32 %v4086, %v4166
        %v4225 = vadd.f32 %v4087, %v4168
        %v4226 = vadd.f32 %v4088, %v4171
        %v4227 = vadd.f32 %v4089, %v4173
        %v4228 = vadd.f32 %v4090, %v4176
        %v4229 = vadd.f32 %v4091, %v4178
        %v4230 = vadd.f32 %v4092, %v4181
        %v4231 = vadd.f32 %v4093, %v4183
        %v4232 = vadd.f32 %v4094, %v4186
        %v4233 = vadd.f32 %v4095, %v4188
        %v4234 = vadd.f32 %v4096, %v4191
        %v4235 = vadd.f32 %v4097, %v4193
        %v4236 = vadd.f32 %v4098, %v4196
        %v4237 = vadd.f32 %v4099, %v4198
        %v4238 = vadd.f32 %v4100, %v4201
        %v4239 = vadd.f32 %v4101, %v4203
        %v4240 = vadd.f32 %v4102, %v4206
        %v4241 = vadd.f32 %v4103, %v4208
        %v4242 = vrot.slane %v923, 2
        %v4243 = vrot.slane %v924, 2
        %v4244 = vsel %vm2030, %v4242, %v4243
        %v4245 = vrot.slane %v925, 2
        %v4246 = vsel %vm2030, %v4243, %v4245
        %v4249 = vpack.c.bf16 %v4246, %v4244
        %s4250 = scalar_lea.vmem %s1, 38
        %v4251 = vld [vmem:[%s4250] sm:$0x3]
        %v4253 = vsel %vm555, %v4249, 0
        %v4256 = vand.u32 %v4251, %v1288
        %4258 = vmatpush.bf16.msra.mxu0 0
        %4259 = vmatpush.bf16.msra.mxu0 0
        %4260 = vmatpush.bf16.msra.mxu0 0
        %4261 = vmatpush.bf16.msra.mxu0 0
        %4262 = vmatpush.bf16.msra.mxu0 0
        %4263 = vmatpush.bf16.msra.mxu0 0
        %4264 = vmatpush.bf16.msra.mxu0 0
        %4265 = vmatpush.bf16.msra.mxu0 %v4256
        %4266 = vmatmul.bf16.gmra.mxu0 %v2171
        %v4267 = vpop.f32.mrf.mxu0
        %v4268 = vadd.f32 0.0, %v4267
        %v4269 = vpop.f32.mrf.mxu0
        %v4270 = vadd.f32 0.0, %v4269
        %4271 = vmatmul.bf16.gmra.mxu0 %v2174
        %v4272 = vpop.f32.mrf.mxu0
        %v4273 = vadd.f32 0.0, %v4272
        %v4274 = vpop.f32.mrf.mxu0
        %v4275 = vadd.f32 0.0, %v4274
        %4276 = vmatmul.bf16.gmra.mxu0 %v2177
        %v4277 = vpop.f32.mrf.mxu0
        %v4278 = vadd.f32 0.0, %v4277
        %v4279 = vpop.f32.mrf.mxu0
        %v4280 = vadd.f32 0.0, %v4279
        %4281 = vmatmul.bf16.gmra.mxu0 %v2180
        %v4282 = vpop.f32.mrf.mxu0
        %v4283 = vadd.f32 0.0, %v4282
        %v4284 = vpop.f32.mrf.mxu0
        %v4285 = vadd.f32 0.0, %v4284
        %4286 = vmatmul.bf16.gmra.mxu0 %v2183
        %v4287 = vpop.f32.mrf.mxu0
        %v4288 = vadd.f32 0.0, %v4287
        %v4289 = vpop.f32.mrf.mxu0
        %v4290 = vadd.f32 0.0, %v4289
        %4291 = vmatmul.bf16.gmra.mxu0 %v2186
        %v4292 = vpop.f32.mrf.mxu0
        %v4293 = vadd.f32 0.0, %v4292
        %v4294 = vpop.f32.mrf.mxu0
        %v4295 = vadd.f32 0.0, %v4294
        %4296 = vmatmul.bf16.gmra.mxu0 %v2189
        %v4297 = vpop.f32.mrf.mxu0
        %v4298 = vadd.f32 0.0, %v4297
        %v4299 = vpop.f32.mrf.mxu0
        %v4300 = vadd.f32 0.0, %v4299
        %4301 = vmatmul.bf16.gmra.mxu0 %v2192
        %v4302 = vpop.f32.mrf.mxu0
        %v4303 = vadd.f32 0.0, %v4302
        %v4304 = vpop.f32.mrf.mxu0
        %v4305 = vadd.f32 0.0, %v4304
        %4306 = vmatmul.bf16.gmra.mxu0 %v2195
        %v4307 = vpop.f32.mrf.mxu0
        %v4308 = vadd.f32 0.0, %v4307
        %v4309 = vpop.f32.mrf.mxu0
        %v4310 = vadd.f32 0.0, %v4309
        %4311 = vmatmul.bf16.gmra.mxu0 %v2198
        %v4312 = vpop.f32.mrf.mxu0
        %v4313 = vadd.f32 0.0, %v4312
        %v4314 = vpop.f32.mrf.mxu0
        %v4315 = vadd.f32 0.0, %v4314
        %4316 = vmatmul.bf16.gmra.mxu0 %v2201
        %v4317 = vpop.f32.mrf.mxu0
        %v4318 = vadd.f32 0.0, %v4317
        %v4319 = vpop.f32.mrf.mxu0
        %v4320 = vadd.f32 0.0, %v4319
        %4321 = vmatmul.bf16.gmra.mxu0 %v2204
        %v4322 = vpop.f32.mrf.mxu0
        %v4323 = vadd.f32 0.0, %v4322
        %v4324 = vpop.f32.mrf.mxu0
        %v4325 = vadd.f32 0.0, %v4324
        %4326 = vmatmul.bf16.gmra.mxu0 %v2207
        %v4327 = vpop.f32.mrf.mxu0
        %v4328 = vadd.f32 0.0, %v4327
        %v4329 = vpop.f32.mrf.mxu0
        %v4330 = vadd.f32 0.0, %v4329
        %4331 = vmatmul.bf16.gmra.mxu0 %v2889
        %v4332 = vpop.f32.mrf.mxu0
        %v4333 = vadd.f32 0.0, %v4332
        %v4334 = vpop.f32.mrf.mxu0
        %v4335 = vadd.f32 0.0, %v4334
        %4336 = vmatmul.bf16.gmra.mxu0 %v3571
        %v4337 = vpop.f32.mrf.mxu0
        %v4338 = vadd.f32 0.0, %v4337
        %v4339 = vpop.f32.mrf.mxu0
        %v4340 = vadd.f32 0.0, %v4339
        %4341 = vmatmul.bf16.gmra.mxu0 %v4253
        %v4342 = vpop.f32.mrf.mxu0
        %v4343 = vadd.f32 0.0, %v4342
        %v4344 = vpop.f32.mrf.mxu0
        %v4345 = vadd.f32 0.0, %v4344
        %4346 = vdwg.mxu0
        %v4347 = vadd.f32 %v4210, %v4268
        %v4348 = vadd.f32 %v4211, %v4270
        %v4349 = vadd.f32 %v4212, %v4273
        %v4350 = vadd.f32 %v4213, %v4275
        %v4351 = vadd.f32 %v4214, %v4278
        %v4352 = vadd.f32 %v4215, %v4280
        %v4353 = vadd.f32 %v4216, %v4283
        %v4354 = vadd.f32 %v4217, %v4285
        %v4355 = vadd.f32 %v4218, %v4288
        %v4356 = vadd.f32 %v4219, %v4290
        %v4357 = vadd.f32 %v4220, %v4293
        %v4358 = vadd.f32 %v4221, %v4295
        %v4359 = vadd.f32 %v4222, %v4298
        %v4360 = vadd.f32 %v4223, %v4300
        %v4361 = vadd.f32 %v4224, %v4303
        %v4362 = vadd.f32 %v4225, %v4305
        %v4363 = vadd.f32 %v4226, %v4308
        %v4364 = vadd.f32 %v4227, %v4310
        %v4365 = vadd.f32 %v4228, %v4313
        %v4366 = vadd.f32 %v4229, %v4315
        %v4367 = vadd.f32 %v4230, %v4318
        %v4368 = vadd.f32 %v4231, %v4320
        %v4369 = vadd.f32 %v4232, %v4323
        %v4370 = vadd.f32 %v4233, %v4325
        %v4371 = vadd.f32 %v4234, %v4328
        %v4372 = vadd.f32 %v4235, %v4330
        %v4373 = vadd.f32 %v4236, %v4333
        %v4374 = vadd.f32 %v4237, %v4335
        %v4375 = vadd.f32 %v4238, %v4338
        %v4376 = vadd.f32 %v4239, %v4340
        %v4377 = vadd.f32 %v4240, %v4343
        %v4378 = vadd.f32 %v4241, %v4345
        %v4382 = vrot.slane %v926, 6
        %v4383 = vrot.slane %v927, 6
        %v4384 = vsel %vm978, %v4382, %v4383
        %v4385 = vrot.slane %v928, 6
        %v4386 = vsel %vm978, %v4383, %v4385
        %v4389 = vpack.c.bf16 %v4386, %v4384
        %s4390 = scalar_lea.vmem %s1, 40
        %v4391 = vld [vmem:[%s4390] sm:$0x3]
        %v4393 = vsel %vm555, %v4389, 0
        %v4396 = vand.u32 %v4391, %v1288
        %4398 = vmatpush.bf16.msra.mxu0 0
        %4399 = vmatpush.bf16.msra.mxu0 0
        %4400 = vmatpush.bf16.msra.mxu0 0
        %4401 = vmatpush.bf16.msra.mxu0 0
        %4402 = vmatpush.bf16.msra.mxu0 0
        %4403 = vmatpush.bf16.msra.mxu0 0
        %4404 = vmatpush.bf16.msra.mxu0 0
        %4405 = vmatpush.bf16.msra.mxu0 %v4396
        %4406 = vmatmul.bf16.gmra.mxu0 %v1394
        %v4407 = vpop.f32.mrf.mxu0
        %v4408 = vadd.f32 0.0, %v4407
        %v4409 = vpop.f32.mrf.mxu0
        %v4410 = vadd.f32 0.0, %v4409
        %4411 = vmatmul.bf16.gmra.mxu0 %v1397
        %v4412 = vpop.f32.mrf.mxu0
        %v4413 = vadd.f32 0.0, %v4412
        %v4414 = vpop.f32.mrf.mxu0
        %v4415 = vadd.f32 0.0, %v4414
        %4416 = vmatmul.bf16.gmra.mxu0 %v1400
        %v4417 = vpop.f32.mrf.mxu0
        %v4418 = vadd.f32 0.0, %v4417
        %v4419 = vpop.f32.mrf.mxu0
        %v4420 = vadd.f32 0.0, %v4419
        %4421 = vmatmul.bf16.gmra.mxu0 %v1403
        %v4422 = vpop.f32.mrf.mxu0
        %v4423 = vadd.f32 0.0, %v4422
        %v4424 = vpop.f32.mrf.mxu0
        %v4425 = vadd.f32 0.0, %v4424
        %4426 = vmatmul.bf16.gmra.mxu0 %v1406
        %v4427 = vpop.f32.mrf.mxu0
        %v4428 = vadd.f32 0.0, %v4427
        %v4429 = vpop.f32.mrf.mxu0
        %v4430 = vadd.f32 0.0, %v4429
        %4431 = vmatmul.bf16.gmra.mxu0 %v1409
        %v4432 = vpop.f32.mrf.mxu0
        %v4433 = vadd.f32 0.0, %v4432
        %v4434 = vpop.f32.mrf.mxu0
        %v4435 = vadd.f32 0.0, %v4434
        %4436 = vmatmul.bf16.gmra.mxu0 %v1412
        %v4437 = vpop.f32.mrf.mxu0
        %v4438 = vadd.f32 0.0, %v4437
        %v4439 = vpop.f32.mrf.mxu0
        %v4440 = vadd.f32 0.0, %v4439
        %4441 = vmatmul.bf16.gmra.mxu0 %v1415
        %v4442 = vpop.f32.mrf.mxu0
        %v4443 = vadd.f32 0.0, %v4442
        %v4444 = vpop.f32.mrf.mxu0
        %v4445 = vadd.f32 0.0, %v4444
        %4446 = vmatmul.bf16.gmra.mxu0 %v1418
        %v4447 = vpop.f32.mrf.mxu0
        %v4448 = vadd.f32 0.0, %v4447
        %v4449 = vpop.f32.mrf.mxu0
        %v4450 = vadd.f32 0.0, %v4449
        %4451 = vmatmul.bf16.gmra.mxu0 %v1421
        %v4452 = vpop.f32.mrf.mxu0
        %v4453 = vadd.f32 0.0, %v4452
        %v4454 = vpop.f32.mrf.mxu0
        %v4455 = vadd.f32 0.0, %v4454
        %4456 = vmatmul.bf16.gmra.mxu0 %v1424
        %v4457 = vpop.f32.mrf.mxu0
        %v4458 = vadd.f32 0.0, %v4457
        %v4459 = vpop.f32.mrf.mxu0
        %v4460 = vadd.f32 0.0, %v4459
        %4461 = vmatmul.bf16.gmra.mxu0 %v1427
        %v4462 = vpop.f32.mrf.mxu0
        %v4463 = vadd.f32 0.0, %v4462
        %v4464 = vpop.f32.mrf.mxu0
        %v4465 = vadd.f32 0.0, %v4464
        %4466 = vmatmul.bf16.gmra.mxu0 %v2347
        %v4467 = vpop.f32.mrf.mxu0
        %v4468 = vadd.f32 0.0, %v4467
        %v4469 = vpop.f32.mrf.mxu0
        %v4470 = vadd.f32 0.0, %v4469
        %4471 = vmatmul.bf16.gmra.mxu0 %v3029
        %v4472 = vpop.f32.mrf.mxu0
        %v4473 = vadd.f32 0.0, %v4472
        %v4474 = vpop.f32.mrf.mxu0
        %v4475 = vadd.f32 0.0, %v4474
        %4476 = vmatmul.bf16.gmra.mxu0 %v3711
        %v4477 = vpop.f32.mrf.mxu0
        %v4478 = vadd.f32 0.0, %v4477
        %v4479 = vpop.f32.mrf.mxu0
        %v4480 = vadd.f32 0.0, %v4479
        %4481 = vmatmul.bf16.gmra.mxu0 %v4393
        %v4482 = vpop.f32.mrf.mxu0
        %v4483 = vadd.f32 0.0, %v4482
        %v4484 = vpop.f32.mrf.mxu0
        %v4485 = vadd.f32 0.0, %v4484
        %4486 = vdwg.mxu0
        %v4487 = vadd.f32 %v4347, %v4408
        %v4488 = vadd.f32 %v4348, %v4410
        %v4489 = vadd.f32 %v4349, %v4413
        %v4490 = vadd.f32 %v4350, %v4415
        %v4491 = vadd.f32 %v4351, %v4418
        %v4492 = vadd.f32 %v4352, %v4420
        %v4493 = vadd.f32 %v4353, %v4423
        %v4494 = vadd.f32 %v4354, %v4425
        %v4495 = vadd.f32 %v4355, %v4428
        %v4496 = vadd.f32 %v4356, %v4430
        %v4497 = vadd.f32 %v4357, %v4433
        %v4498 = vadd.f32 %v4358, %v4435
        %v4499 = vadd.f32 %v4359, %v4438
        %v4500 = vadd.f32 %v4360, %v4440
        %v4501 = vadd.f32 %v4361, %v4443
        %v4502 = vadd.f32 %v4362, %v4445
        %v4503 = vadd.f32 %v4363, %v4448
        %v4504 = vadd.f32 %v4364, %v4450
        %v4505 = vadd.f32 %v4365, %v4453
        %v4506 = vadd.f32 %v4366, %v4455
        %v4507 = vadd.f32 %v4367, %v4458
        %v4508 = vadd.f32 %v4368, %v4460
        %v4509 = vadd.f32 %v4369, %v4463
        %v4510 = vadd.f32 %v4370, %v4465
        %v4511 = vadd.f32 %v4371, %v4468
        %v4512 = vadd.f32 %v4372, %v4470
        %v4513 = vadd.f32 %v4373, %v4473
        %v4514 = vadd.f32 %v4374, %v4475
        %v4515 = vadd.f32 %v4375, %v4478
        %v4516 = vadd.f32 %v4376, %v4480
        %v4517 = vadd.f32 %v4377, %v4483
        %v4518 = vadd.f32 %v4378, %v4485
        %v4519 = vrot.slane %v926, 7
        %v4520 = vrot.slane %v927, 7
        %v4521 = vsel %vm1108, %v4519, %v4520
        %v4522 = vrot.slane %v928, 7
        %v4523 = vsel %vm1108, %v4520, %v4522
        %v4526 = vpack.c.bf16 %v4523, %v4521
        %s4527 = scalar_lea.vmem %s1, 42
        %v4528 = vld [vmem:[%s4527] sm:$0x3]
        %v4530 = vsel %vm555, %v4526, 0
        %v4533 = vand.u32 %v4528, %v1288
        %4535 = vmatpush.bf16.msra.mxu0 0
        %4536 = vmatpush.bf16.msra.mxu0 0
        %4537 = vmatpush.bf16.msra.mxu0 0
        %4538 = vmatpush.bf16.msra.mxu0 0
        %4539 = vmatpush.bf16.msra.mxu0 0
        %4540 = vmatpush.bf16.msra.mxu0 0
        %4541 = vmatpush.bf16.msra.mxu0 0
        %4542 = vmatpush.bf16.msra.mxu0 %v4533
        %4543 = vmatmul.bf16.gmra.mxu0 %v1252
        %v4544 = vpop.f32.mrf.mxu0
        %v4545 = vadd.f32 0.0, %v4544
        %v4546 = vpop.f32.mrf.mxu0
        %v4547 = vadd.f32 0.0, %v4546
        %4548 = vmatmul.bf16.gmra.mxu0 %v1255
        %v4549 = vpop.f32.mrf.mxu0
        %v4550 = vadd.f32 0.0, %v4549
        %v4551 = vpop.f32.mrf.mxu0
        %v4552 = vadd.f32 0.0, %v4551
        %4553 = vmatmul.bf16.gmra.mxu0 %v1258
        %v4554 = vpop.f32.mrf.mxu0
        %v4555 = vadd.f32 0.0, %v4554
        %v4556 = vpop.f32.mrf.mxu0
        %v4557 = vadd.f32 0.0, %v4556
        %4558 = vmatmul.bf16.gmra.mxu0 %v1261
        %v4559 = vpop.f32.mrf.mxu0
        %v4560 = vadd.f32 0.0, %v4559
        %v4561 = vpop.f32.mrf.mxu0
        %v4562 = vadd.f32 0.0, %v4561
        %4563 = vmatmul.bf16.gmra.mxu0 %v1264
        %v4564 = vpop.f32.mrf.mxu0
        %v4565 = vadd.f32 0.0, %v4564
        %v4566 = vpop.f32.mrf.mxu0
        %v4567 = vadd.f32 0.0, %v4566
        %4568 = vmatmul.bf16.gmra.mxu0 %v1267
        %v4569 = vpop.f32.mrf.mxu0
        %v4570 = vadd.f32 0.0, %v4569
        %v4571 = vpop.f32.mrf.mxu0
        %v4572 = vadd.f32 0.0, %v4571
        %4573 = vmatmul.bf16.gmra.mxu0 %v1270
        %v4574 = vpop.f32.mrf.mxu0
        %v4575 = vadd.f32 0.0, %v4574
        %v4576 = vpop.f32.mrf.mxu0
        %v4577 = vadd.f32 0.0, %v4576
        %4578 = vmatmul.bf16.gmra.mxu0 %v1273
        %v4579 = vpop.f32.mrf.mxu0
        %v4580 = vadd.f32 0.0, %v4579
        %v4581 = vpop.f32.mrf.mxu0
        %v4582 = vadd.f32 0.0, %v4581
        %4583 = vmatmul.bf16.gmra.mxu0 %v1276
        %v4584 = vpop.f32.mrf.mxu0
        %v4585 = vadd.f32 0.0, %v4584
        %v4586 = vpop.f32.mrf.mxu0
        %v4587 = vadd.f32 0.0, %v4586
        %4588 = vmatmul.bf16.gmra.mxu0 %v1279
        %v4589 = vpop.f32.mrf.mxu0
        %v4590 = vadd.f32 0.0, %v4589
        %v4591 = vpop.f32.mrf.mxu0
        %v4592 = vadd.f32 0.0, %v4591
        %4593 = vmatmul.bf16.gmra.mxu0 %v1282
        %v4594 = vpop.f32.mrf.mxu0
        %v4595 = vadd.f32 0.0, %v4594
        %v4596 = vpop.f32.mrf.mxu0
        %v4597 = vadd.f32 0.0, %v4596
        %4598 = vmatmul.bf16.gmra.mxu0 %v1285
        %v4599 = vpop.f32.mrf.mxu0
        %v4600 = vadd.f32 0.0, %v4599
        %v4601 = vpop.f32.mrf.mxu0
        %v4602 = vadd.f32 0.0, %v4601
        %4603 = vmatmul.bf16.gmra.mxu0 %v2484
        %v4604 = vpop.f32.mrf.mxu0
        %v4605 = vadd.f32 0.0, %v4604
        %v4606 = vpop.f32.mrf.mxu0
        %v4607 = vadd.f32 0.0, %v4606
        %4608 = vmatmul.bf16.gmra.mxu0 %v3166
        %v4609 = vpop.f32.mrf.mxu0
        %v4610 = vadd.f32 0.0, %v4609
        %v4611 = vpop.f32.mrf.mxu0
        %v4612 = vadd.f32 0.0, %v4611
        %4613 = vmatmul.bf16.gmra.mxu0 %v3848
        %v4614 = vpop.f32.mrf.mxu0
        %v4615 = vadd.f32 0.0, %v4614
        %v4616 = vpop.f32.mrf.mxu0
        %v4617 = vadd.f32 0.0, %v4616
        %4618 = vmatmul.bf16.gmra.mxu0 %v4530
        %v4619 = vpop.f32.mrf.mxu0
        %v4620 = vadd.f32 0.0, %v4619
        %v4621 = vpop.f32.mrf.mxu0
        %v4622 = vadd.f32 0.0, %v4621
        %4623 = vdwg.mxu0
        %v4624 = vadd.f32 %v4487, %v4545
        %v4625 = vadd.f32 %v4488, %v4547
        %v4626 = vadd.f32 %v4489, %v4550
        %v4627 = vadd.f32 %v4490, %v4552
        %v4628 = vadd.f32 %v4491, %v4555
        %v4629 = vadd.f32 %v4492, %v4557
        %v4630 = vadd.f32 %v4493, %v4560
        %v4631 = vadd.f32 %v4494, %v4562
        %v4632 = vadd.f32 %v4495, %v4565
        %v4633 = vadd.f32 %v4496, %v4567
        %v4634 = vadd.f32 %v4497, %v4570
        %v4635 = vadd.f32 %v4498, %v4572
        %v4636 = vadd.f32 %v4499, %v4575
        %v4637 = vadd.f32 %v4500, %v4577
        %v4638 = vadd.f32 %v4501, %v4580
        %v4639 = vadd.f32 %v4502, %v4582
        %v4640 = vadd.f32 %v4503, %v4585
        %v4641 = vadd.f32 %v4504, %v4587
        %v4642 = vadd.f32 %v4505, %v4590
        %v4643 = vadd.f32 %v4506, %v4592
        %v4644 = vadd.f32 %v4507, %v4595
        %v4645 = vadd.f32 %v4508, %v4597
        %v4646 = vadd.f32 %v4509, %v4600
        %v4647 = vadd.f32 %v4510, %v4602
        %v4648 = vadd.f32 %v4511, %v4605
        %v4649 = vadd.f32 %v4512, %v4607
        %v4650 = vadd.f32 %v4513, %v4610
        %v4651 = vadd.f32 %v4514, %v4612
        %v4652 = vadd.f32 %v4515, %v4615
        %v4653 = vadd.f32 %v4516, %v4617
        %v4654 = vadd.f32 %v4517, %v4620
        %v4655 = vadd.f32 %v4518, %v4622
        %v4656 = vpack.c.bf16 %v928, %v927
        %s4657 = scalar_lea.vmem %s1, 44
        %v4658 = vld [vmem:[%s4657] sm:$0x3]
        %v4660 = vsel %vm555, %v4656, 0
        %v4663 = vand.u32 %v4658, %v1288
        %4665 = vmatpush.bf16.msra.mxu0 0
        %4666 = vmatpush.bf16.msra.mxu0 0
        %4667 = vmatpush.bf16.msra.mxu0 0
        %4668 = vmatpush.bf16.msra.mxu0 0
        %4669 = vmatpush.bf16.msra.mxu0 0
        %4670 = vmatpush.bf16.msra.mxu0 0
        %4671 = vmatpush.bf16.msra.mxu0 0
        %4672 = vmatpush.bf16.msra.mxu0 %v4663
        %4673 = vmatmul.bf16.gmra.mxu0 %v1552
        %v4674 = vpop.f32.mrf.mxu0
        %v4675 = vadd.f32 0.0, %v4674
        %v4676 = vpop.f32.mrf.mxu0
        %v4677 = vadd.f32 0.0, %v4676
        %4678 = vmatmul.bf16.gmra.mxu0 %v1555
        %v4679 = vpop.f32.mrf.mxu0
        %v4680 = vadd.f32 0.0, %v4679
        %v4681 = vpop.f32.mrf.mxu0
        %v4682 = vadd.f32 0.0, %v4681
        %4683 = vmatmul.bf16.gmra.mxu0 %v1558
        %v4684 = vpop.f32.mrf.mxu0
        %v4685 = vadd.f32 0.0, %v4684
        %v4686 = vpop.f32.mrf.mxu0
        %v4687 = vadd.f32 0.0, %v4686
        %4688 = vmatmul.bf16.gmra.mxu0 %v1561
        %v4689 = vpop.f32.mrf.mxu0
        %v4690 = vadd.f32 0.0, %v4689
        %v4691 = vpop.f32.mrf.mxu0
        %v4692 = vadd.f32 0.0, %v4691
        %4693 = vmatmul.bf16.gmra.mxu0 %v1564
        %v4694 = vpop.f32.mrf.mxu0
        %v4695 = vadd.f32 0.0, %v4694
        %v4696 = vpop.f32.mrf.mxu0
        %v4697 = vadd.f32 0.0, %v4696
        %4698 = vmatmul.bf16.gmra.mxu0 %v1567
        %v4699 = vpop.f32.mrf.mxu0
        %v4700 = vadd.f32 0.0, %v4699
        %v4701 = vpop.f32.mrf.mxu0
        %v4702 = vadd.f32 0.0, %v4701
        %4703 = vmatmul.bf16.gmra.mxu0 %v1570
        %v4704 = vpop.f32.mrf.mxu0
        %v4705 = vadd.f32 0.0, %v4704
        %v4706 = vpop.f32.mrf.mxu0
        %v4707 = vadd.f32 0.0, %v4706
        %4708 = vmatmul.bf16.gmra.mxu0 %v1573
        %v4709 = vpop.f32.mrf.mxu0
        %v4710 = vadd.f32 0.0, %v4709
        %v4711 = vpop.f32.mrf.mxu0
        %v4712 = vadd.f32 0.0, %v4711
        %4713 = vmatmul.bf16.gmra.mxu0 %v1576
        %v4714 = vpop.f32.mrf.mxu0
        %v4715 = vadd.f32 0.0, %v4714
        %v4716 = vpop.f32.mrf.mxu0
        %v4717 = vadd.f32 0.0, %v4716
        %4718 = vmatmul.bf16.gmra.mxu0 %v1579
        %v4719 = vpop.f32.mrf.mxu0
        %v4720 = vadd.f32 0.0, %v4719
        %v4721 = vpop.f32.mrf.mxu0
        %v4722 = vadd.f32 0.0, %v4721
        %4723 = vmatmul.bf16.gmra.mxu0 %v1582
        %v4724 = vpop.f32.mrf.mxu0
        %v4725 = vadd.f32 0.0, %v4724
        %v4726 = vpop.f32.mrf.mxu0
        %v4727 = vadd.f32 0.0, %v4726
        %4728 = vmatmul.bf16.gmra.mxu0 %v1585
        %v4729 = vpop.f32.mrf.mxu0
        %v4730 = vadd.f32 0.0, %v4729
        %v4731 = vpop.f32.mrf.mxu0
        %v4732 = vadd.f32 0.0, %v4731
        %4733 = vmatmul.bf16.gmra.mxu0 %v2614
        %v4734 = vpop.f32.mrf.mxu0
        %v4735 = vadd.f32 0.0, %v4734
        %v4736 = vpop.f32.mrf.mxu0
        %v4737 = vadd.f32 0.0, %v4736
        %4738 = vmatmul.bf16.gmra.mxu0 %v3296
        %v4739 = vpop.f32.mrf.mxu0
        %v4740 = vadd.f32 0.0, %v4739
        %v4741 = vpop.f32.mrf.mxu0
        %v4742 = vadd.f32 0.0, %v4741
        %4743 = vmatmul.bf16.gmra.mxu0 %v3978
        %v4744 = vpop.f32.mrf.mxu0
        %v4745 = vadd.f32 0.0, %v4744
        %v4746 = vpop.f32.mrf.mxu0
        %v4747 = vadd.f32 0.0, %v4746
        %4748 = vmatmul.bf16.gmra.mxu0 %v4660
        %v4749 = vpop.f32.mrf.mxu0
        %v4750 = vadd.f32 0.0, %v4749
        %v4751 = vpop.f32.mrf.mxu0
        %v4752 = vadd.f32 0.0, %v4751
        %4753 = vdwg.mxu0
        %v4754 = vadd.f32 %v4624, %v4675
        %v4755 = vadd.f32 %v4625, %v4677
        %v4756 = vadd.f32 %v4626, %v4680
        %v4757 = vadd.f32 %v4627, %v4682
        %v4758 = vadd.f32 %v4628, %v4685
        %v4759 = vadd.f32 %v4629, %v4687
        %v4760 = vadd.f32 %v4630, %v4690
        %v4761 = vadd.f32 %v4631, %v4692
        %v4762 = vadd.f32 %v4632, %v4695
        %v4763 = vadd.f32 %v4633, %v4697
        %v4764 = vadd.f32 %v4634, %v4700
        %v4765 = vadd.f32 %v4635, %v4702
        %v4766 = vadd.f32 %v4636, %v4705
        %v4767 = vadd.f32 %v4637, %v4707
        %v4768 = vadd.f32 %v4638, %v4710
        %v4769 = vadd.f32 %v4639, %v4712
        %v4770 = vadd.f32 %v4640, %v4715
        %v4771 = vadd.f32 %v4641, %v4717
        %v4772 = vadd.f32 %v4642, %v4720
        %v4773 = vadd.f32 %v4643, %v4722
        %v4774 = vadd.f32 %v4644, %v4725
        %v4775 = vadd.f32 %v4645, %v4727
        %v4776 = vadd.f32 %v4646, %v4730
        %v4777 = vadd.f32 %v4647, %v4732
        %v4778 = vadd.f32 %v4648, %v4735
        %v4779 = vadd.f32 %v4649, %v4737
        %v4780 = vadd.f32 %v4650, %v4740
        %v4781 = vadd.f32 %v4651, %v4742
        %v4782 = vadd.f32 %v4652, %v4745
        %v4783 = vadd.f32 %v4653, %v4747
        %v4784 = vadd.f32 %v4654, %v4750
        %v4785 = vadd.f32 %v4655, %v4752
        %v4787 = vrot.slane %v927, 1
        %v4788 = vrot.slane %v928, 1
        %v4789 = vsel %vm1727, %v4787, %v4788
        %v4790 = vrot.slane %v929, 1
        %v4791 = vsel %vm1727, %v4788, %v4790
        %v4794 = vpack.c.bf16 %v4791, %v4789
        %s4795 = scalar_lea.vmem %s1, 46
        %v4796 = vld [vmem:[%s4795] sm:$0x3]
        %v4798 = vsel %vm555, %v4794, 0
        %v4801 = vand.u32 %v4796, %v1288
        %4803 = vmatpush.bf16.msra.mxu0 0
        %4804 = vmatpush.bf16.msra.mxu0 0
        %4805 = vmatpush.bf16.msra.mxu0 0
        %4806 = vmatpush.bf16.msra.mxu0 0
        %4807 = vmatpush.bf16.msra.mxu0 0
        %4808 = vmatpush.bf16.msra.mxu0 0
        %4809 = vmatpush.bf16.msra.mxu0 0
        %4810 = vmatpush.bf16.msra.mxu0 %v4801
        %4811 = vmatmul.bf16.gmra.mxu0 %v1871
        %v4812 = vpop.f32.mrf.mxu0
        %v4813 = vadd.f32 0.0, %v4812
        %v4814 = vpop.f32.mrf.mxu0
        %v4815 = vadd.f32 0.0, %v4814
        %4816 = vmatmul.bf16.gmra.mxu0 %v1874
        %v4817 = vpop.f32.mrf.mxu0
        %v4818 = vadd.f32 0.0, %v4817
        %v4819 = vpop.f32.mrf.mxu0
        %v4820 = vadd.f32 0.0, %v4819
        %4821 = vmatmul.bf16.gmra.mxu0 %v1877
        %v4822 = vpop.f32.mrf.mxu0
        %v4823 = vadd.f32 0.0, %v4822
        %v4824 = vpop.f32.mrf.mxu0
        %v4825 = vadd.f32 0.0, %v4824
        %4826 = vmatmul.bf16.gmra.mxu0 %v1880
        %v4827 = vpop.f32.mrf.mxu0
        %v4828 = vadd.f32 0.0, %v4827
        %v4829 = vpop.f32.mrf.mxu0
        %v4830 = vadd.f32 0.0, %v4829
        %4831 = vmatmul.bf16.gmra.mxu0 %v1883
        %v4832 = vpop.f32.mrf.mxu0
        %v4833 = vadd.f32 0.0, %v4832
        %v4834 = vpop.f32.mrf.mxu0
        %v4835 = vadd.f32 0.0, %v4834
        %4836 = vmatmul.bf16.gmra.mxu0 %v1886
        %v4837 = vpop.f32.mrf.mxu0
        %v4838 = vadd.f32 0.0, %v4837
        %v4839 = vpop.f32.mrf.mxu0
        %v4840 = vadd.f32 0.0, %v4839
        %4841 = vmatmul.bf16.gmra.mxu0 %v1889
        %v4842 = vpop.f32.mrf.mxu0
        %v4843 = vadd.f32 0.0, %v4842
        %v4844 = vpop.f32.mrf.mxu0
        %v4845 = vadd.f32 0.0, %v4844
        %4846 = vmatmul.bf16.gmra.mxu0 %v1892
        %v4847 = vpop.f32.mrf.mxu0
        %v4848 = vadd.f32 0.0, %v4847
        %v4849 = vpop.f32.mrf.mxu0
        %v4850 = vadd.f32 0.0, %v4849
        %4851 = vmatmul.bf16.gmra.mxu0 %v1895
        %v4852 = vpop.f32.mrf.mxu0
        %v4853 = vadd.f32 0.0, %v4852
        %v4854 = vpop.f32.mrf.mxu0
        %v4855 = vadd.f32 0.0, %v4854
        %4856 = vmatmul.bf16.gmra.mxu0 %v1898
        %v4857 = vpop.f32.mrf.mxu0
        %v4858 = vadd.f32 0.0, %v4857
        %v4859 = vpop.f32.mrf.mxu0
        %v4860 = vadd.f32 0.0, %v4859
        %4861 = vmatmul.bf16.gmra.mxu0 %v1901
        %v4862 = vpop.f32.mrf.mxu0
        %v4863 = vadd.f32 0.0, %v4862
        %v4864 = vpop.f32.mrf.mxu0
        %v4865 = vadd.f32 0.0, %v4864
        %4866 = vmatmul.bf16.gmra.mxu0 %v1904
        %v4867 = vpop.f32.mrf.mxu0
        %v4868 = vadd.f32 0.0, %v4867
        %v4869 = vpop.f32.mrf.mxu0
        %v4870 = vadd.f32 0.0, %v4869
        %4871 = vmatmul.bf16.gmra.mxu0 %v2752
        %v4872 = vpop.f32.mrf.mxu0
        %v4873 = vadd.f32 0.0, %v4872
        %v4874 = vpop.f32.mrf.mxu0
        %v4875 = vadd.f32 0.0, %v4874
        %4876 = vmatmul.bf16.gmra.mxu0 %v3434
        %v4877 = vpop.f32.mrf.mxu0
        %v4878 = vadd.f32 0.0, %v4877
        %v4879 = vpop.f32.mrf.mxu0
        %v4880 = vadd.f32 0.0, %v4879
        %4881 = vmatmul.bf16.gmra.mxu0 %v4116
        %v4882 = vpop.f32.mrf.mxu0
        %v4883 = vadd.f32 0.0, %v4882
        %v4884 = vpop.f32.mrf.mxu0
        %v4885 = vadd.f32 0.0, %v4884
        %4886 = vmatmul.bf16.gmra.mxu0 %v4798
        %v4887 = vpop.f32.mrf.mxu0
        %v4888 = vadd.f32 0.0, %v4887
        %v4889 = vpop.f32.mrf.mxu0
        %v4890 = vadd.f32 0.0, %v4889
        %4891 = vdwg.mxu0
        %v4892 = vadd.f32 %v4754, %v4813
        %v4893 = vadd.f32 %v4755, %v4815
        %v4894 = vadd.f32 %v4756, %v4818
        %v4895 = vadd.f32 %v4757, %v4820
        %v4896 = vadd.f32 %v4758, %v4823
        %v4897 = vadd.f32 %v4759, %v4825
        %v4898 = vadd.f32 %v4760, %v4828
        %v4899 = vadd.f32 %v4761, %v4830
        %v4900 = vadd.f32 %v4762, %v4833
        %v4901 = vadd.f32 %v4763, %v4835
        %v4902 = vadd.f32 %v4764, %v4838
        %v4903 = vadd.f32 %v4765, %v4840
        %v4904 = vadd.f32 %v4766, %v4843
        %v4905 = vadd.f32 %v4767, %v4845
        %v4906 = vadd.f32 %v4768, %v4848
        %v4907 = vadd.f32 %v4769, %v4850
        %v4908 = vadd.f32 %v4770, %v4853
        %v4909 = vadd.f32 %v4771, %v4855
        %v4910 = vadd.f32 %v4772, %v4858
        %v4911 = vadd.f32 %v4773, %v4860
        %v4912 = vadd.f32 %v4774, %v4863
        %v4913 = vadd.f32 %v4775, %v4865
        %v4914 = vadd.f32 %v4776, %v4868
        %v4915 = vadd.f32 %v4777, %v4870
        %v4916 = vadd.f32 %v4778, %v4873
        %v4917 = vadd.f32 %v4779, %v4875
        %v4918 = vadd.f32 %v4780, %v4878
        %v4919 = vadd.f32 %v4781, %v4880
        %v4920 = vadd.f32 %v4782, %v4883
        %v4921 = vadd.f32 %v4783, %v4885
        %v4922 = vadd.f32 %v4784, %v4888
        %v4923 = vadd.f32 %v4785, %v4890
        %v4924 = vrot.slane %v927, 2
        %v4925 = vrot.slane %v928, 2
        %v4926 = vsel %vm2030, %v4924, %v4925
        %v4927 = vrot.slane %v929, 2
        %v4928 = vsel %vm2030, %v4925, %v4927
        %v4931 = vpack.c.bf16 %v4928, %v4926
        %s4932 = scalar_lea.vmem %s1, 48
        %v4933 = vld [vmem:[%s4932] sm:$0x3]
        %v4935 = vsel %vm555, %v4931, 0
        %v4938 = vand.u32 %v4933, %v1288
        %4940 = vmatpush.bf16.msra.mxu0 0
        %4941 = vmatpush.bf16.msra.mxu0 0
        %4942 = vmatpush.bf16.msra.mxu0 0
        %4943 = vmatpush.bf16.msra.mxu0 0
        %4944 = vmatpush.bf16.msra.mxu0 0
        %4945 = vmatpush.bf16.msra.mxu0 0
        %4946 = vmatpush.bf16.msra.mxu0 0
        %4947 = vmatpush.bf16.msra.mxu0 %v4938
        %4948 = vmatmul.bf16.gmra.mxu0 %v2174
        %v4949 = vpop.f32.mrf.mxu0
        %v4950 = vadd.f32 0.0, %v4949
        %v4951 = vpop.f32.mrf.mxu0
        %v4952 = vadd.f32 0.0, %v4951
        %4953 = vmatmul.bf16.gmra.mxu0 %v2177
        %v4954 = vpop.f32.mrf.mxu0
        %v4955 = vadd.f32 0.0, %v4954
        %v4956 = vpop.f32.mrf.mxu0
        %v4957 = vadd.f32 0.0, %v4956
        %4958 = vmatmul.bf16.gmra.mxu0 %v2180
        %v4959 = vpop.f32.mrf.mxu0
        %v4960 = vadd.f32 0.0, %v4959
        %v4961 = vpop.f32.mrf.mxu0
        %v4962 = vadd.f32 0.0, %v4961
        %4963 = vmatmul.bf16.gmra.mxu0 %v2183
        %v4964 = vpop.f32.mrf.mxu0
        %v4965 = vadd.f32 0.0, %v4964
        %v4966 = vpop.f32.mrf.mxu0
        %v4967 = vadd.f32 0.0, %v4966
        %4968 = vmatmul.bf16.gmra.mxu0 %v2186
        %v4969 = vpop.f32.mrf.mxu0
        %v4970 = vadd.f32 0.0, %v4969
        %v4971 = vpop.f32.mrf.mxu0
        %v4972 = vadd.f32 0.0, %v4971
        %4973 = vmatmul.bf16.gmra.mxu0 %v2189
        %v4974 = vpop.f32.mrf.mxu0
        %v4975 = vadd.f32 0.0, %v4974
        %v4976 = vpop.f32.mrf.mxu0
        %v4977 = vadd.f32 0.0, %v4976
        %4978 = vmatmul.bf16.gmra.mxu0 %v2192
        %v4979 = vpop.f32.mrf.mxu0
        %v4980 = vadd.f32 0.0, %v4979
        %v4981 = vpop.f32.mrf.mxu0
        %v4982 = vadd.f32 0.0, %v4981
        %4983 = vmatmul.bf16.gmra.mxu0 %v2195
        %v4984 = vpop.f32.mrf.mxu0
        %v4985 = vadd.f32 0.0, %v4984
        %v4986 = vpop.f32.mrf.mxu0
        %v4987 = vadd.f32 0.0, %v4986
        %4988 = vmatmul.bf16.gmra.mxu0 %v2198
        %v4989 = vpop.f32.mrf.mxu0
        %v4990 = vadd.f32 0.0, %v4989
        %v4991 = vpop.f32.mrf.mxu0
        %v4992 = vadd.f32 0.0, %v4991
        %4993 = vmatmul.bf16.gmra.mxu0 %v2201
        %v4994 = vpop.f32.mrf.mxu0
        %v4995 = vadd.f32 0.0, %v4994
        %v4996 = vpop.f32.mrf.mxu0
        %v4997 = vadd.f32 0.0, %v4996
        %4998 = vmatmul.bf16.gmra.mxu0 %v2204
        %v4999 = vpop.f32.mrf.mxu0
        %v5000 = vadd.f32 0.0, %v4999
        %v5001 = vpop.f32.mrf.mxu0
        %v5002 = vadd.f32 0.0, %v5001
        %5003 = vmatmul.bf16.gmra.mxu0 %v2207
        %v5004 = vpop.f32.mrf.mxu0
        %v5005 = vadd.f32 0.0, %v5004
        %v5006 = vpop.f32.mrf.mxu0
        %v5007 = vadd.f32 0.0, %v5006
        %5008 = vmatmul.bf16.gmra.mxu0 %v2889
        %v5009 = vpop.f32.mrf.mxu0
        %v5010 = vadd.f32 0.0, %v5009
        %v5011 = vpop.f32.mrf.mxu0
        %v5012 = vadd.f32 0.0, %v5011
        %5013 = vmatmul.bf16.gmra.mxu0 %v3571
        %v5014 = vpop.f32.mrf.mxu0
        %v5015 = vadd.f32 0.0, %v5014
        %v5016 = vpop.f32.mrf.mxu0
        %v5017 = vadd.f32 0.0, %v5016
        %5018 = vmatmul.bf16.gmra.mxu0 %v4253
        %v5019 = vpop.f32.mrf.mxu0
        %v5020 = vadd.f32 0.0, %v5019
        %v5021 = vpop.f32.mrf.mxu0
        %v5022 = vadd.f32 0.0, %v5021
        %5023 = vmatmul.bf16.gmra.mxu0 %v4935
        %v5024 = vpop.f32.mrf.mxu0
        %v5025 = vadd.f32 0.0, %v5024
        %v5026 = vpop.f32.mrf.mxu0
        %v5027 = vadd.f32 0.0, %v5026
        %5028 = vdwg.mxu0
        %v5029 = vadd.f32 %v4892, %v4950
        %v5030 = vadd.f32 %v4893, %v4952
        %v5031 = vadd.f32 %v4894, %v4955
        %v5032 = vadd.f32 %v4895, %v4957
        %v5033 = vadd.f32 %v4896, %v4960
        %v5034 = vadd.f32 %v4897, %v4962
        %v5035 = vadd.f32 %v4898, %v4965
        %v5036 = vadd.f32 %v4899, %v4967
        %v5037 = vadd.f32 %v4900, %v4970
        %v5038 = vadd.f32 %v4901, %v4972
        %v5039 = vadd.f32 %v4902, %v4975
        %v5040 = vadd.f32 %v4903, %v4977
        %v5041 = vadd.f32 %v4904, %v4980
        %v5042 = vadd.f32 %v4905, %v4982
        %v5043 = vadd.f32 %v4906, %v4985
        %v5044 = vadd.f32 %v4907, %v4987
        %v5045 = vadd.f32 %v4908, %v4990
        %v5046 = vadd.f32 %v4909, %v4992
        %v5047 = vadd.f32 %v4910, %v4995
        %v5048 = vadd.f32 %v4911, %v4997
        %v5049 = vadd.f32 %v4912, %v5000
        %v5050 = vadd.f32 %v4913, %v5002
        %v5051 = vadd.f32 %v4914, %v5005
        %v5052 = vadd.f32 %v4915, %v5007
        %v5053 = vadd.f32 %v4916, %v5010
        %v5054 = vadd.f32 %v4917, %v5012
        %v5055 = vadd.f32 %v4918, %v5015
        %v5056 = vadd.f32 %v4919, %v5017
        %v5057 = vadd.f32 %v4920, %v5020
        %v5058 = vadd.f32 %v4921, %v5022
        %v5059 = vadd.f32 %v4922, %v5025
        %v5060 = vadd.f32 %v4923, %v5027
        %v5061 = vld [vmem:[#allocation5] sm:$0x1]
        %v5063 = vperm.slane %v5061, 0
        %v5065 = vadd.f32 %v5029, %v5063
        %v5066 = vadd.f32 %v5030, %v5063
        %v5067 = vadd.f32 %v5031, %v5063
        %v5068 = vadd.f32 %v5032, %v5063
        %v5069 = vadd.f32 %v5033, %v5063
        %v5070 = vadd.f32 %v5034, %v5063
        %v5071 = vadd.f32 %v5035, %v5063
        %v5072 = vadd.f32 %v5036, %v5063
        %v5073 = vadd.f32 %v5037, %v5063
        %v5074 = vadd.f32 %v5038, %v5063
        %v5075 = vadd.f32 %v5039, %v5063
        %v5076 = vadd.f32 %v5040, %v5063
        %v5077 = vadd.f32 %v5041, %v5063
        %v5078 = vadd.f32 %v5042, %v5063
        %v5079 = vadd.f32 %v5043, %v5063
        %v5080 = vadd.f32 %v5044, %v5063
        %v5081 = vadd.f32 %v5045, %v5063
        %v5082 = vadd.f32 %v5046, %v5063
        %v5083 = vadd.f32 %v5047, %v5063
        %v5084 = vadd.f32 %v5048, %v5063
        %v5085 = vadd.f32 %v5049, %v5063
        %v5086 = vadd.f32 %v5050, %v5063
        %v5087 = vadd.f32 %v5051, %v5063
        %v5088 = vadd.f32 %v5052, %v5063
        %v5089 = vadd.f32 %v5053, %v5063
        %v5090 = vadd.f32 %v5054, %v5063
        %v5091 = vadd.f32 %v5055, %v5063
        %v5092 = vadd.f32 %v5056, %v5063
        %v5093 = vadd.f32 %v5057, %v5063
        %v5094 = vadd.f32 %v5058, %v5063
        %v5095 = vadd.f32 %v5059, %v5063
        %v5096 = vadd.f32 %v5060, %v5063
        %v5097 = vmax.f32 %v5065, 0.0
        %v5098 = vmax.f32 %v5066, 0.0
        %v5099 = vmax.f32 %v5067, 0.0
        %v5100 = vmax.f32 %v5068, 0.0
        %v5101 = vmax.f32 %v5069, 0.0
        %v5102 = vmax.f32 %v5070, 0.0
        %v5103 = vmax.f32 %v5071, 0.0
        %v5104 = vmax.f32 %v5072, 0.0
        %v5105 = vmax.f32 %v5073, 0.0
        %v5106 = vmax.f32 %v5074, 0.0
        %v5107 = vmax.f32 %v5075, 0.0
        %v5108 = vmax.f32 %v5076, 0.0
        %v5109 = vmax.f32 %v5077, 0.0
        %v5110 = vmax.f32 %v5078, 0.0
        %v5111 = vmax.f32 %v5079, 0.0
        %v5112 = vmax.f32 %v5080, 0.0
        %v5113 = vmax.f32 %v5081, 0.0
        %v5114 = vmax.f32 %v5082, 0.0
        %v5115 = vmax.f32 %v5083, 0.0
        %v5116 = vmax.f32 %v5084, 0.0
        %v5117 = vmax.f32 %v5085, 0.0
        %v5118 = vmax.f32 %v5086, 0.0
        %v5119 = vmax.f32 %v5087, 0.0
        %v5120 = vmax.f32 %v5088, 0.0
        %v5121 = vmax.f32 %v5089, 0.0
        %v5122 = vmax.f32 %v5090, 0.0
        %v5123 = vmax.f32 %v5091, 0.0
        %v5124 = vmax.f32 %v5092, 0.0
        %v5125 = vmax.f32 %v5093, 0.0
        %v5126 = vmax.f32 %v5094, 0.0
        %v5127 = vmax.f32 %v5095, 0.0
        %v5128 = vmax.f32 %v5096, 0.0
        %v5129 = vld [vmem:[%s3] sm:$0x1]
        %v5131 = vperm.slane %v5129, 0
        %v5133 = vmul.f32 %v5097, %v5131
        %v5134 = vmul.f32 %v5098, %v5131
        %v5135 = vmul.f32 %v5099, %v5131
        %v5136 = vmul.f32 %v5100, %v5131
        %v5137 = vmul.f32 %v5101, %v5131
        %v5138 = vmul.f32 %v5102, %v5131
        %v5139 = vmul.f32 %v5103, %v5131
        %v5140 = vmul.f32 %v5104, %v5131
        %v5141 = vmul.f32 %v5105, %v5131
        %v5142 = vmul.f32 %v5106, %v5131
        %v5143 = vmul.f32 %v5107, %v5131
        %v5144 = vmul.f32 %v5108, %v5131
        %v5145 = vmul.f32 %v5109, %v5131
        %v5146 = vmul.f32 %v5110, %v5131
        %v5147 = vmul.f32 %v5111, %v5131
        %v5148 = vmul.f32 %v5112, %v5131
        %v5149 = vmul.f32 %v5113, %v5131
        %v5150 = vmul.f32 %v5114, %v5131
        %v5151 = vmul.f32 %v5115, %v5131
        %v5152 = vmul.f32 %v5116, %v5131
        %v5153 = vmul.f32 %v5117, %v5131
        %v5154 = vmul.f32 %v5118, %v5131
        %v5155 = vmul.f32 %v5119, %v5131
        %v5156 = vmul.f32 %v5120, %v5131
        %v5157 = vmul.f32 %v5121, %v5131
        %v5158 = vmul.f32 %v5122, %v5131
        %v5159 = vmul.f32 %v5123, %v5131
        %v5160 = vmul.f32 %v5124, %v5131
        %v5161 = vmul.f32 %v5125, %v5131
        %v5162 = vmul.f32 %v5126, %v5131
        %v5163 = vmul.f32 %v5127, %v5131
        %v5164 = vmul.f32 %v5128, %v5131
        %v5165 = vld [vmem:[%s4] sm:$0x1]
        %v5167 = vperm.slane %v5165, 0
        %v5169 = vadd.f32 %v5133, %v5167
        %v5170 = vadd.f32 %v5134, %v5167
        %v5171 = vadd.f32 %v5135, %v5167
        %v5172 = vadd.f32 %v5136, %v5167
        %v5173 = vadd.f32 %v5137, %v5167
        %v5174 = vadd.f32 %v5138, %v5167
        %v5175 = vadd.f32 %v5139, %v5167
        %v5176 = vadd.f32 %v5140, %v5167
        %v5177 = vadd.f32 %v5141, %v5167
        %v5178 = vadd.f32 %v5142, %v5167
        %v5179 = vadd.f32 %v5143, %v5167
        %v5180 = vadd.f32 %v5144, %v5167
        %v5181 = vadd.f32 %v5145, %v5167
        %v5182 = vadd.f32 %v5146, %v5167
        %v5183 = vadd.f32 %v5147, %v5167
        %v5184 = vadd.f32 %v5148, %v5167
        %v5185 = vadd.f32 %v5149, %v5167
        %v5186 = vadd.f32 %v5150, %v5167
        %v5187 = vadd.f32 %v5151, %v5167
        %v5188 = vadd.f32 %v5152, %v5167
        %v5189 = vadd.f32 %v5153, %v5167
        %v5190 = vadd.f32 %v5154, %v5167
        %v5191 = vadd.f32 %v5155, %v5167
        %v5192 = vadd.f32 %v5156, %v5167
        %v5193 = vadd.f32 %v5157, %v5167
        %v5194 = vadd.f32 %v5158, %v5167
        %v5195 = vadd.f32 %v5159, %v5167
        %v5196 = vadd.f32 %v5160, %v5167
        %v5197 = vadd.f32 %v5161, %v5167
        %v5198 = vadd.f32 %v5162, %v5167
        %v5199 = vadd.f32 %v5163, %v5167
        %v5200 = vadd.f32 %v5164, %v5167
        %s5201 = scalar_lea.vmem [#allocation3], 32
        %5202 = vst.msk [vmem:[%s5201 + $0x8] sm:$0xff] %vm637, %v5169
        %5203 = vst.msk [vmem:[%s5201 + $0x10] sm:$0xff] %vm637, %v5170
        %5204 = vst.msk [vmem:[%s5201 + $0x28] sm:$0xff] %vm637, %v5171
        %5205 = vst.msk [vmem:[%s5201 + $0x30] sm:$0xff] %vm637, %v5172
        %5206 = vst.msk [vmem:[%s5201 + $0x48] sm:$0xff] %vm637, %v5173
        %5207 = vst.msk [vmem:[%s5201 + $0x50] sm:$0xff] %vm637, %v5174
        %5208 = vst.msk [vmem:[%s5201 + $0x68] sm:$0xff] %vm637, %v5175
        %5209 = vst.msk [vmem:[%s5201 + $0x70] sm:$0xff] %vm637, %v5176
        %5210 = vst.msk [vmem:[%s5201 + $0x88] sm:$0xff] %vm637, %v5177
        %5211 = vst.msk [vmem:[%s5201 + $0x90] sm:$0xff] %vm637, %v5178
        %5212 = vst.msk [vmem:[%s5201 + $0xa8] sm:$0xff] %vm637, %v5179
        %5213 = vst.msk [vmem:[%s5201 + $0xb0] sm:$0xff] %vm637, %v5180
        %5214 = vst.msk [vmem:[%s5201 + $0xc8] sm:$0xff] %vm637, %v5181
        %5215 = vst.msk [vmem:[%s5201 + $0xd0] sm:$0xff] %vm637, %v5182
        %5216 = vst.msk [vmem:[%s5201 + $0xe8] sm:$0xff] %vm637, %v5183
        %5217 = vst.msk [vmem:[%s5201 + $0xf0] sm:$0xff] %vm637, %v5184
        %5218 = vst.msk [vmem:[%s5201 + $0x108] sm:$0xff] %vm637, %v5185
        %5219 = vst.msk [vmem:[%s5201 + $0x110] sm:$0xff] %vm637, %v5186
        %5220 = vst.msk [vmem:[%s5201 + $0x128] sm:$0xff] %vm637, %v5187
        %5221 = vst.msk [vmem:[%s5201 + $0x130] sm:$0xff] %vm637, %v5188
        %5222 = vst.msk [vmem:[%s5201 + $0x148] sm:$0xff] %vm637, %v5189
        %5223 = vst.msk [vmem:[%s5201 + $0x150] sm:$0xff] %vm637, %v5190
        %5224 = vst.msk [vmem:[%s5201 + $0x168] sm:$0xff] %vm637, %v5191
        %5225 = vst.msk [vmem:[%s5201 + $0x170] sm:$0xff] %vm637, %v5192
        %5226 = vst.msk [vmem:[%s5201 + $0x188] sm:$0xff] %vm637, %v5193
        %5227 = vst.msk [vmem:[%s5201 + $0x190] sm:$0xff] %vm637, %v5194
        %5228 = vst.msk [vmem:[%s5201 + $0x1a8] sm:$0xff] %vm637, %v5195
        %5229 = vst.msk [vmem:[%s5201 + $0x1b0] sm:$0xff] %vm637, %v5196
        %5230 = vst.msk [vmem:[%s5201 + $0x1c8] sm:$0xff] %vm637, %v5197
        %5231 = vst.msk [vmem:[%s5201 + $0x1d0] sm:$0xff] %vm637, %v5198
        %5232 = vst.msk [vmem:[%s5201 + $0x1e8] sm:$0xff] %vm637, %v5199
        %5233 = vst.msk [vmem:[%s5201 + $0x1f0] sm:$0xff] %vm637, %v5200
        %v5234 = vld [vmem:[#allocation3] sm:$0xff]
        %v5235 = vld [vmem:[#allocation3 + $0x8] sm:$0xff]
        %v5236 = vld [vmem:[#allocation3 + $0x10] sm:$0xff]
        %v5237 = vld [vmem:[#allocation3 + $0x18] sm:$0x1]
        %v5238 = vld [vmem:[#allocation3 + $0x20] sm:$0xff]
        %v5239 = vld [vmem:[#allocation3 + $0x28] sm:$0xff]
        %v5240 = vld [vmem:[#allocation3 + $0x30] sm:$0xff]
        %v5241 = vld [vmem:[#allocation3 + $0x38] sm:$0x1]
        %v5242 = vld [vmem:[#allocation3 + $0x40] sm:$0xff]
        %v5243 = vld [vmem:[#allocation3 + $0x48] sm:$0xff]
        %v5244 = vld [vmem:[#allocation3 + $0x50] sm:$0xff]
        %v5245 = vld [vmem:[#allocation3 + $0x58] sm:$0x1]
        %v5246 = vld [vmem:[#allocation3 + $0x60] sm:$0xff]
        %v5247 = vld [vmem:[#allocation3 + $0x68] sm:$0xff]
        %v5248 = vld [vmem:[#allocation3 + $0x70] sm:$0xff]
        %v5249 = vld [vmem:[#allocation3 + $0x78] sm:$0x1]
        %v5250 = vld [vmem:[#allocation3 + $0x80] sm:$0xff]
        %v5251 = vld [vmem:[#allocation3 + $0x88] sm:$0xff]
        %v5252 = vld [vmem:[#allocation3 + $0x90] sm:$0xff]
        %v5253 = vld [vmem:[#allocation3 + $0x98] sm:$0x1]
        %v5254 = vld [vmem:[#allocation3 + $0xa0] sm:$0xff]
        %v5255 = vld [vmem:[#allocation3 + $0xa8] sm:$0xff]
        %v5256 = vld [vmem:[#allocation3 + $0xb0] sm:$0xff]
        %v5257 = vld [vmem:[#allocation3 + $0xb8] sm:$0x1]
        %v5258 = vld [vmem:[#allocation3 + $0xc0] sm:$0xff]
        %v5259 = vld [vmem:[#allocation3 + $0xc8] sm:$0xff]
        %v5260 = vld [vmem:[#allocation3 + $0xd0] sm:$0xff]
        %v5261 = vld [vmem:[#allocation3 + $0xd8] sm:$0x1]
        %v5262 = vld [vmem:[#allocation3 + $0xe0] sm:$0xff]
        %v5263 = vld [vmem:[#allocation3 + $0xe8] sm:$0xff]
        %v5264 = vld [vmem:[#allocation3 + $0xf0] sm:$0xff]
        %v5265 = vld [vmem:[#allocation3 + $0xf8] sm:$0x1]
        %v5266 = vld [vmem:[#allocation3 + $0x100] sm:$0xff]
        %v5267 = vld [vmem:[#allocation3 + $0x108] sm:$0xff]
        %v5268 = vld [vmem:[#allocation3 + $0x110] sm:$0xff]
        %v5269 = vld [vmem:[#allocation3 + $0x118] sm:$0x1]
        %v5270 = vld [vmem:[#allocation3 + $0x120] sm:$0xff]
        %v5271 = vld [vmem:[#allocation3 + $0x128] sm:$0xff]
        %v5272 = vld [vmem:[#allocation3 + $0x130] sm:$0xff]
        %v5273 = vld [vmem:[#allocation3 + $0x138] sm:$0x1]
        %v5274 = vld [vmem:[#allocation3 + $0x140] sm:$0xff]
        %v5275 = vld [vmem:[#allocation3 + $0x148] sm:$0xff]
        %v5276 = vld [vmem:[#allocation3 + $0x150] sm:$0xff]
        %v5277 = vld [vmem:[#allocation3 + $0x158] sm:$0x1]
        %v5278 = vld [vmem:[#allocation3 + $0x160] sm:$0xff]
        %v5279 = vld [vmem:[#allocation3 + $0x168] sm:$0xff]
        %v5280 = vld [vmem:[#allocation3 + $0x170] sm:$0xff]
        %v5281 = vld [vmem:[#allocation3 + $0x178] sm:$0x1]
        %v5282 = vld [vmem:[#allocation3 + $0x180] sm:$0xff]
        %v5283 = vld [vmem:[#allocation3 + $0x188] sm:$0xff]
        %v5284 = vld [vmem:[#allocation3 + $0x190] sm:$0xff]
        %v5285 = vld [vmem:[#allocation3 + $0x198] sm:$0x1]
        %v5286 = vld [vmem:[#allocation3 + $0x1a0] sm:$0xff]
        %v5287 = vld [vmem:[#allocation3 + $0x1a8] sm:$0xff]
        %v5288 = vld [vmem:[#allocation3 + $0x1b0] sm:$0xff]
        %v5289 = vld [vmem:[#allocation3 + $0x1b8] sm:$0x1]
        %v5290 = vld [vmem:[#allocation3 + $0x1c0] sm:$0xff]
        %v5291 = vld [vmem:[#allocation3 + $0x1c8] sm:$0xff]
        %v5292 = vld [vmem:[#allocation3 + $0x1d0] sm:$0xff]
        %v5293 = vld [vmem:[#allocation3 + $0x1d8] sm:$0x1]
        %v5294 = vld [vmem:[#allocation3 + $0x1e0] sm:$0xff]
        %v5295 = vld [vmem:[#allocation3 + $0x1e8] sm:$0xff]
        %v5296 = vld [vmem:[#allocation3 + $0x1f0] sm:$0xff]
        %v5297 = vld [vmem:[#allocation3 + $0x1f8] sm:$0x1]
        %v5298 = vld [vmem:[#allocation3 + $0x200] sm:$0xff]
        %v5299 = vld [vmem:[#allocation3 + $0x208] sm:$0xff]
        %v5300 = vld [vmem:[#allocation3 + $0x210] sm:$0xff]
        %v5301 = vld [vmem:[#allocation3 + $0x218] sm:$0x1]
        %v5302 = vld [vmem:[#allocation3 + $0x220] sm:$0xff]
        %v5303 = vld [vmem:[#allocation3 + $0x228] sm:$0xff]
        %v5304 = vld [vmem:[#allocation3 + $0x230] sm:$0xff]
        %v5305 = vld [vmem:[#allocation3 + $0x238] sm:$0x1]
        %v5354 = vrot.slane %v5234, 7
        %v5355 = vrot.slane %v5235, 7
        %v5356 = vsel %vm1108, %v5354, %v5355
        %v5357 = vrot.slane %v5236, 7
        %v5358 = vsel %vm1108, %v5355, %v5357
        %v5359 = vrot.slane %v5238, 7
        %v5360 = vrot.slane %v5239, 7
        %v5361 = vsel %vm1108, %v5359, %v5360
        %v5362 = vrot.slane %v5240, 7
        %v5363 = vsel %vm1108, %v5360, %v5362
        %v5364 = vrot.slane %v5242, 7
        %v5365 = vrot.slane %v5243, 7
        %v5366 = vsel %vm1108, %v5364, %v5365
        %v5367 = vrot.slane %v5244, 7
        %v5368 = vsel %vm1108, %v5365, %v5367
        %v5369 = vrot.slane %v5246, 7
        %v5370 = vrot.slane %v5247, 7
        %v5371 = vsel %vm1108, %v5369, %v5370
        %v5372 = vrot.slane %v5248, 7
        %v5373 = vsel %vm1108, %v5370, %v5372
        %v5374 = vrot.slane %v5250, 7
        %v5375 = vrot.slane %v5251, 7
        %v5376 = vsel %vm1108, %v5374, %v5375
        %v5377 = vrot.slane %v5252, 7
        %v5378 = vsel %vm1108, %v5375, %v5377
        %v5379 = vrot.slane %v5254, 7
        %v5380 = vrot.slane %v5255, 7
        %v5381 = vsel %vm1108, %v5379, %v5380
        %v5382 = vrot.slane %v5256, 7
        %v5383 = vsel %vm1108, %v5380, %v5382
        %v5384 = vrot.slane %v5258, 7
        %v5385 = vrot.slane %v5259, 7
        %v5386 = vsel %vm1108, %v5384, %v5385
        %v5387 = vrot.slane %v5260, 7
        %v5388 = vsel %vm1108, %v5385, %v5387
        %v5389 = vrot.slane %v5262, 7
        %v5390 = vrot.slane %v5263, 7
        %v5391 = vsel %vm1108, %v5389, %v5390
        %v5392 = vrot.slane %v5264, 7
        %v5393 = vsel %vm1108, %v5390, %v5392
        %v5394 = vrot.slane %v5266, 7
        %v5395 = vrot.slane %v5267, 7
        %v5396 = vsel %vm1108, %v5394, %v5395
        %v5397 = vrot.slane %v5268, 7
        %v5398 = vsel %vm1108, %v5395, %v5397
        %v5399 = vrot.slane %v5270, 7
        %v5400 = vrot.slane %v5271, 7
        %v5401 = vsel %vm1108, %v5399, %v5400
        %v5402 = vrot.slane %v5272, 7
        %v5403 = vsel %vm1108, %v5400, %v5402
        %v5404 = vrot.slane %v5274, 7
        %v5405 = vrot.slane %v5275, 7
        %v5406 = vsel %vm1108, %v5404, %v5405
        %v5407 = vrot.slane %v5276, 7
        %v5408 = vsel %vm1108, %v5405, %v5407
        %v5409 = vrot.slane %v5278, 7
        %v5410 = vrot.slane %v5279, 7
        %v5411 = vsel %vm1108, %v5409, %v5410
        %v5412 = vrot.slane %v5280, 7
        %v5413 = vsel %vm1108, %v5410, %v5412
        %v5414 = vrot.slane %v5282, 7
        %v5415 = vrot.slane %v5283, 7
        %v5416 = vsel %vm1108, %v5414, %v5415
        %v5417 = vrot.slane %v5284, 7
        %v5418 = vsel %vm1108, %v5415, %v5417
        %v5419 = vrot.slane %v5286, 7
        %v5420 = vrot.slane %v5287, 7
        %v5421 = vsel %vm1108, %v5419, %v5420
        %v5422 = vrot.slane %v5288, 7
        %v5423 = vsel %vm1108, %v5420, %v5422
        %v5424 = vrot.slane %v5290, 7
        %v5425 = vrot.slane %v5291, 7
        %v5426 = vsel %vm1108, %v5424, %v5425
        %v5427 = vrot.slane %v5292, 7
        %v5428 = vsel %vm1108, %v5425, %v5427
        %v5429 = vrot.slane %v5294, 7
        %v5430 = vrot.slane %v5295, 7
        %v5431 = vsel %vm1108, %v5429, %v5430
        %v5432 = vrot.slane %v5296, 7
        %v5433 = vsel %vm1108, %v5430, %v5432
        %v5466 = vpack.c.bf16 %v5358, %v5356
        %v5467 = vpack.c.bf16 %v5363, %v5361
        %v5468 = vpack.c.bf16 %v5368, %v5366
        %v5469 = vpack.c.bf16 %v5373, %v5371
        %v5470 = vpack.c.bf16 %v5378, %v5376
        %v5471 = vpack.c.bf16 %v5383, %v5381
        %v5472 = vpack.c.bf16 %v5388, %v5386
        %v5473 = vpack.c.bf16 %v5393, %v5391
        %v5474 = vpack.c.bf16 %v5398, %v5396
        %v5475 = vpack.c.bf16 %v5403, %v5401
        %v5476 = vpack.c.bf16 %v5408, %v5406
        %v5477 = vpack.c.bf16 %v5413, %v5411
        %v5478 = vpack.c.bf16 %v5418, %v5416
        %v5479 = vpack.c.bf16 %v5423, %v5421
        %v5480 = vpack.c.bf16 %v5428, %v5426
        %v5481 = vpack.c.bf16 %v5433, %v5431
        %v5482 = vld [vmem:[%s5] sm:$0xf]
        %v5483 = vld [vmem:[%s5 + $0x4] sm:$0xf]
        %v5484 = vld [vmem:[%s5 + $0x8] sm:$0xf]
        %v5485 = vld [vmem:[%s5 + $0xc] sm:$0x3]
        %v5486 = vpack.c.bf16 %v5236, %v5235
        %v5487 = vpack.c.bf16 %v5240, %v5239
        %v5488 = vpack.c.bf16 %v5244, %v5243
        %v5489 = vpack.c.bf16 %v5248, %v5247
        %v5490 = vpack.c.bf16 %v5252, %v5251
        %v5491 = vpack.c.bf16 %v5256, %v5255
        %v5492 = vpack.c.bf16 %v5260, %v5259
        %v5493 = vpack.c.bf16 %v5264, %v5263
        %v5494 = vpack.c.bf16 %v5268, %v5267
        %v5495 = vpack.c.bf16 %v5272, %v5271
        %v5496 = vpack.c.bf16 %v5276, %v5275
        %v5497 = vpack.c.bf16 %v5280, %v5279
        %v5498 = vpack.c.bf16 %v5284, %v5283
        %v5499 = vpack.c.bf16 %v5288, %v5287
        %v5500 = vpack.c.bf16 %v5292, %v5291
        %v5501 = vpack.c.bf16 %v5296, %v5295
        %s5502 = scalar_lea.vmem %s5, 16
        %v5503 = vld [vmem:[%s5502] sm:$0xf]
        %v5504 = vld [vmem:[%s5502 + $0x4] sm:$0xf]
        %v5505 = vld [vmem:[%s5502 + $0x8] sm:$0xf]
        %v5506 = vld [vmem:[%s5502 + $0xc] sm:$0x3]
        %v5511 = vunpack.c.l.b16 %v5503
        %v5512 = vunpack.c.l.b16 %v5504
        %v5513 = vunpack.c.l.b16 %v5505
        %v5514 = vunpack.c.l.b16 %v5506
        %v5515 = vpack.c.b16 %v5512, %v5511
        %v5516 = vpack.c.b16 %v5514, %v5513
        %v5519 = vsel %vm637, %v5486, 0
        %v5522 = vsel %vm637, %v5487, 0
        %v5525 = vsel %vm637, %v5488, 0
        %v5528 = vsel %vm637, %v5489, 0
        %v5531 = vsel %vm637, %v5490, 0
        %v5534 = vsel %vm637, %v5491, 0
        %v5537 = vsel %vm637, %v5492, 0
        %v5540 = vsel %vm637, %v5493, 0
        %v5543 = vsel %vm637, %v5494, 0
        %v5546 = vsel %vm637, %v5495, 0
        %v5549 = vsel %vm637, %v5496, 0
        %v5552 = vsel %vm637, %v5497, 0
        %v5555 = vsel %vm637, %v5498, 0
        %v5558 = vsel %vm637, %v5499, 0
        %v5561 = vsel %vm637, %v5500, 0
        %v5564 = vsel %vm637, %v5501, 0
        %v5567 = vsel %vm2030, %v5516, 0
        %5569 = vmatpush.bf16.msra.mxu0 0
        %5570 = vmatpush.bf16.msra.mxu0 0
        %5571 = vmatpush.bf16.msra.mxu0 0
        %5572 = vmatpush.bf16.msra.mxu0 0
        %5573 = vmatpush.bf16.msra.mxu0 0
        %5574 = vmatpush.bf16.msra.mxu0 0
        %5575 = vmatpush.bf16.msra.mxu0 %v5567
        %5576 = vmatpush.bf16.msra.mxu0 %v5515
        %5577 = vmatmul.bf16.gmra.mxu0 %v5519
        %v5578 = vpop.f32.mrf.mxu0
        %v5579 = vadd.f32 0.0, %v5578
        %v5580 = vpop.f32.mrf.mxu0
        %v5581 = vadd.f32 0.0, %v5580
        %5582 = vmatmul.bf16.gmra.mxu0 %v5522
        %v5583 = vpop.f32.mrf.mxu0
        %v5584 = vadd.f32 0.0, %v5583
        %v5585 = vpop.f32.mrf.mxu0
        %v5586 = vadd.f32 0.0, %v5585
        %5587 = vmatmul.bf16.gmra.mxu0 %v5525
        %v5588 = vpop.f32.mrf.mxu0
        %v5589 = vadd.f32 0.0, %v5588
        %v5590 = vpop.f32.mrf.mxu0
        %v5591 = vadd.f32 0.0, %v5590
        %5592 = vmatmul.bf16.gmra.mxu0 %v5528
        %v5593 = vpop.f32.mrf.mxu0
        %v5594 = vadd.f32 0.0, %v5593
        %v5595 = vpop.f32.mrf.mxu0
        %v5596 = vadd.f32 0.0, %v5595
        %5597 = vmatmul.bf16.gmra.mxu0 %v5531
        %v5598 = vpop.f32.mrf.mxu0
        %v5599 = vadd.f32 0.0, %v5598
        %v5600 = vpop.f32.mrf.mxu0
        %v5601 = vadd.f32 0.0, %v5600
        %5602 = vmatmul.bf16.gmra.mxu0 %v5534
        %v5603 = vpop.f32.mrf.mxu0
        %v5604 = vadd.f32 0.0, %v5603
        %v5605 = vpop.f32.mrf.mxu0
        %v5606 = vadd.f32 0.0, %v5605
        %5607 = vmatmul.bf16.gmra.mxu0 %v5537
        %v5608 = vpop.f32.mrf.mxu0
        %v5609 = vadd.f32 0.0, %v5608
        %v5610 = vpop.f32.mrf.mxu0
        %v5611 = vadd.f32 0.0, %v5610
        %5612 = vmatmul.bf16.gmra.mxu0 %v5540
        %v5613 = vpop.f32.mrf.mxu0
        %v5614 = vadd.f32 0.0, %v5613
        %v5615 = vpop.f32.mrf.mxu0
        %v5616 = vadd.f32 0.0, %v5615
        %5617 = vmatmul.bf16.gmra.mxu0 %v5543
        %v5618 = vpop.f32.mrf.mxu0
        %v5619 = vadd.f32 0.0, %v5618
        %v5620 = vpop.f32.mrf.mxu0
        %v5621 = vadd.f32 0.0, %v5620
        %5622 = vmatmul.bf16.gmra.mxu0 %v5546
        %v5623 = vpop.f32.mrf.mxu0
        %v5624 = vadd.f32 0.0, %v5623
        %v5625 = vpop.f32.mrf.mxu0
        %v5626 = vadd.f32 0.0, %v5625
        %5627 = vmatmul.bf16.gmra.mxu0 %v5549
        %v5628 = vpop.f32.mrf.mxu0
        %v5629 = vadd.f32 0.0, %v5628
        %v5630 = vpop.f32.mrf.mxu0
        %v5631 = vadd.f32 0.0, %v5630
        %5632 = vmatmul.bf16.gmra.mxu0 %v5552
        %v5633 = vpop.f32.mrf.mxu0
        %v5634 = vadd.f32 0.0, %v5633
        %v5635 = vpop.f32.mrf.mxu0
        %v5636 = vadd.f32 0.0, %v5635
        %5637 = vmatmul.bf16.gmra.mxu0 %v5555
        %v5638 = vpop.f32.mrf.mxu0
        %v5639 = vadd.f32 0.0, %v5638
        %v5640 = vpop.f32.mrf.mxu0
        %v5641 = vadd.f32 0.0, %v5640
        %5642 = vmatmul.bf16.gmra.mxu0 %v5558
        %v5643 = vpop.f32.mrf.mxu0
        %v5644 = vadd.f32 0.0, %v5643
        %v5645 = vpop.f32.mrf.mxu0
        %v5646 = vadd.f32 0.0, %v5645
        %5647 = vmatmul.bf16.gmra.mxu0 %v5561
        %v5648 = vpop.f32.mrf.mxu0
        %v5649 = vadd.f32 0.0, %v5648
        %v5650 = vpop.f32.mrf.mxu0
        %v5651 = vadd.f32 0.0, %v5650
        %5652 = vmatmul.bf16.gmra.mxu0 %v5564
        %v5653 = vpop.f32.mrf.mxu0
        %v5654 = vadd.f32 0.0, %v5653
        %v5655 = vpop.f32.mrf.mxu0
        %v5656 = vadd.f32 0.0, %v5655
        %5657 = vdwg.mxu0
        %v5662 = vunpack.c.l.b16 %v5482
        %v5663 = vunpack.c.l.b16 %v5483
        %v5664 = vunpack.c.l.b16 %v5484
        %v5665 = vunpack.c.l.b16 %v5485
        %v5666 = vpack.c.b16 %v5663, %v5662
        %v5667 = vpack.c.b16 %v5665, %v5664
        %v5670 = vsel %vm637, %v5466, 0
        %v5673 = vsel %vm637, %v5467, 0
        %v5676 = vsel %vm637, %v5468, 0
        %v5679 = vsel %vm637, %v5469, 0
        %v5682 = vsel %vm637, %v5470, 0
        %v5685 = vsel %vm637, %v5471, 0
        %v5688 = vsel %vm637, %v5472, 0
        %v5691 = vsel %vm637, %v5473, 0
        %v5694 = vsel %vm637, %v5474, 0
        %v5697 = vsel %vm637, %v5475, 0
        %v5700 = vsel %vm637, %v5476, 0
        %v5703 = vsel %vm637, %v5477, 0
        %v5706 = vsel %vm637, %v5478, 0
        %v5709 = vsel %vm637, %v5479, 0
        %v5712 = vsel %vm637, %v5480, 0
        %v5715 = vsel %vm637, %v5481, 0
        %v5718 = vsel %vm2030, %v5667, 0
        %5720 = vmatpush.bf16.msra.mxu0 0
        %5721 = vmatpush.bf16.msra.mxu0 0
        %5722 = vmatpush.bf16.msra.mxu0 0
        %5723 = vmatpush.bf16.msra.mxu0 0
        %5724 = vmatpush.bf16.msra.mxu0 0
        %5725 = vmatpush.bf16.msra.mxu0 0
        %5726 = vmatpush.bf16.msra.mxu0 %v5718
        %5727 = vmatpush.bf16.msra.mxu0 %v5666
        %5728 = vmatmul.bf16.gmra.mxu0 %v5670
        %v5729 = vpop.f32.mrf.mxu0
        %v5730 = vadd.f32 %v5579, %v5729
        %v5731 = vpop.f32.mrf.mxu0
        %v5732 = vadd.f32 %v5581, %v5731
        %5733 = vmatmul.bf16.gmra.mxu0 %v5673
        %v5734 = vpop.f32.mrf.mxu0
        %v5735 = vadd.f32 %v5584, %v5734
        %v5736 = vpop.f32.mrf.mxu0
        %v5737 = vadd.f32 %v5586, %v5736
        %5738 = vmatmul.bf16.gmra.mxu0 %v5676
        %v5739 = vpop.f32.mrf.mxu0
        %v5740 = vadd.f32 %v5589, %v5739
        %v5741 = vpop.f32.mrf.mxu0
        %v5742 = vadd.f32 %v5591, %v5741
        %5743 = vmatmul.bf16.gmra.mxu0 %v5679
        %v5744 = vpop.f32.mrf.mxu0
        %v5745 = vadd.f32 %v5594, %v5744
        %v5746 = vpop.f32.mrf.mxu0
        %v5747 = vadd.f32 %v5596, %v5746
        %5748 = vmatmul.bf16.gmra.mxu0 %v5682
        %v5749 = vpop.f32.mrf.mxu0
        %v5750 = vadd.f32 %v5599, %v5749
        %v5751 = vpop.f32.mrf.mxu0
        %v5752 = vadd.f32 %v5601, %v5751
        %5753 = vmatmul.bf16.gmra.mxu0 %v5685
        %v5754 = vpop.f32.mrf.mxu0
        %v5755 = vadd.f32 %v5604, %v5754
        %v5756 = vpop.f32.mrf.mxu0
        %v5757 = vadd.f32 %v5606, %v5756
        %5758 = vmatmul.bf16.gmra.mxu0 %v5688
        %v5759 = vpop.f32.mrf.mxu0
        %v5760 = vadd.f32 %v5609, %v5759
        %v5761 = vpop.f32.mrf.mxu0
        %v5762 = vadd.f32 %v5611, %v5761
        %5763 = vmatmul.bf16.gmra.mxu0 %v5691
        %v5764 = vpop.f32.mrf.mxu0
        %v5765 = vadd.f32 %v5614, %v5764
        %v5766 = vpop.f32.mrf.mxu0
        %v5767 = vadd.f32 %v5616, %v5766
        %5768 = vmatmul.bf16.gmra.mxu0 %v5694
        %v5769 = vpop.f32.mrf.mxu0
        %v5770 = vadd.f32 %v5619, %v5769
        %v5771 = vpop.f32.mrf.mxu0
        %v5772 = vadd.f32 %v5621, %v5771
        %5773 = vmatmul.bf16.gmra.mxu0 %v5697
        %v5774 = vpop.f32.mrf.mxu0
        %v5775 = vadd.f32 %v5624, %v5774
        %v5776 = vpop.f32.mrf.mxu0
        %v5777 = vadd.f32 %v5626, %v5776
        %5778 = vmatmul.bf16.gmra.mxu0 %v5700
        %v5779 = vpop.f32.mrf.mxu0
        %v5780 = vadd.f32 %v5629, %v5779
        %v5781 = vpop.f32.mrf.mxu0
        %v5782 = vadd.f32 %v5631, %v5781
        %5783 = vmatmul.bf16.gmra.mxu0 %v5703
        %v5784 = vpop.f32.mrf.mxu0
        %v5785 = vadd.f32 %v5634, %v5784
        %v5786 = vpop.f32.mrf.mxu0
        %v5787 = vadd.f32 %v5636, %v5786
        %5788 = vmatmul.bf16.gmra.mxu0 %v5706
        %v5789 = vpop.f32.mrf.mxu0
        %v5790 = vadd.f32 %v5639, %v5789
        %v5791 = vpop.f32.mrf.mxu0
        %v5792 = vadd.f32 %v5641, %v5791
        %5793 = vmatmul.bf16.gmra.mxu0 %v5709
        %v5794 = vpop.f32.mrf.mxu0
        %v5795 = vadd.f32 %v5644, %v5794
        %v5796 = vpop.f32.mrf.mxu0
        %v5797 = vadd.f32 %v5646, %v5796
        %5798 = vmatmul.bf16.gmra.mxu0 %v5712
        %v5799 = vpop.f32.mrf.mxu0
        %v5800 = vadd.f32 %v5649, %v5799
        %v5801 = vpop.f32.mrf.mxu0
        %v5802 = vadd.f32 %v5651, %v5801
        %5803 = vmatmul.bf16.gmra.mxu0 %v5715
        %v5804 = vpop.f32.mrf.mxu0
        %v5805 = vadd.f32 %v5654, %v5804
        %v5806 = vpop.f32.mrf.mxu0
        %v5807 = vadd.f32 %v5656, %v5806
        %5808 = vdwg.mxu0
        %v5825 = vrot.slane %v5235, 1
        %v5826 = vrot.slane %v5236, 1
        %v5827 = vsel %vm1727, %v5825, %v5826
        %v5828 = vrot.slane %v5237, 1
        %v5829 = vsel %vm1727, %v5826, %v5828
        %v5830 = vrot.slane %v5239, 1
        %v5831 = vrot.slane %v5240, 1
        %v5832 = vsel %vm1727, %v5830, %v5831
        %v5833 = vrot.slane %v5241, 1
        %v5834 = vsel %vm1727, %v5831, %v5833
        %v5835 = vrot.slane %v5243, 1
        %v5836 = vrot.slane %v5244, 1
        %v5837 = vsel %vm1727, %v5835, %v5836
        %v5838 = vrot.slane %v5245, 1
        %v5839 = vsel %vm1727, %v5836, %v5838
        %v5840 = vrot.slane %v5247, 1
        %v5841 = vrot.slane %v5248, 1
        %v5842 = vsel %vm1727, %v5840, %v5841
        %v5843 = vrot.slane %v5249, 1
        %v5844 = vsel %vm1727, %v5841, %v5843
        %v5845 = vrot.slane %v5251, 1
        %v5846 = vrot.slane %v5252, 1
        %v5847 = vsel %vm1727, %v5845, %v5846
        %v5848 = vrot.slane %v5253, 1
        %v5849 = vsel %vm1727, %v5846, %v5848
        %v5850 = vrot.slane %v5255, 1
        %v5851 = vrot.slane %v5256, 1
        %v5852 = vsel %vm1727, %v5850, %v5851
        %v5853 = vrot.slane %v5257, 1
        %v5854 = vsel %vm1727, %v5851, %v5853
        %v5855 = vrot.slane %v5259, 1
        %v5856 = vrot.slane %v5260, 1
        %v5857 = vsel %vm1727, %v5855, %v5856
        %v5858 = vrot.slane %v5261, 1
        %v5859 = vsel %vm1727, %v5856, %v5858
        %v5860 = vrot.slane %v5263, 1
        %v5861 = vrot.slane %v5264, 1
        %v5862 = vsel %vm1727, %v5860, %v5861
        %v5863 = vrot.slane %v5265, 1
        %v5864 = vsel %vm1727, %v5861, %v5863
        %v5865 = vrot.slane %v5267, 1
        %v5866 = vrot.slane %v5268, 1
        %v5867 = vsel %vm1727, %v5865, %v5866
        %v5868 = vrot.slane %v5269, 1
        %v5869 = vsel %vm1727, %v5866, %v5868
        %v5870 = vrot.slane %v5271, 1
        %v5871 = vrot.slane %v5272, 1
        %v5872 = vsel %vm1727, %v5870, %v5871
        %v5873 = vrot.slane %v5273, 1
        %v5874 = vsel %vm1727, %v5871, %v5873
        %v5875 = vrot.slane %v5275, 1
        %v5876 = vrot.slane %v5276, 1
        %v5877 = vsel %vm1727, %v5875, %v5876
        %v5878 = vrot.slane %v5277, 1
        %v5879 = vsel %vm1727, %v5876, %v5878
        %v5880 = vrot.slane %v5279, 1
        %v5881 = vrot.slane %v5280, 1
        %v5882 = vsel %vm1727, %v5880, %v5881
        %v5883 = vrot.slane %v5281, 1
        %v5884 = vsel %vm1727, %v5881, %v5883
        %v5885 = vrot.slane %v5283, 1
        %v5886 = vrot.slane %v5284, 1
        %v5887 = vsel %vm1727, %v5885, %v5886
        %v5888 = vrot.slane %v5285, 1
        %v5889 = vsel %vm1727, %v5886, %v5888
        %v5890 = vrot.slane %v5287, 1
        %v5891 = vrot.slane %v5288, 1
        %v5892 = vsel %vm1727, %v5890, %v5891
        %v5893 = vrot.slane %v5289, 1
        %v5894 = vsel %vm1727, %v5891, %v5893
        %v5895 = vrot.slane %v5291, 1
        %v5896 = vrot.slane %v5292, 1
        %v5897 = vsel %vm1727, %v5895, %v5896
        %v5898 = vrot.slane %v5293, 1
        %v5899 = vsel %vm1727, %v5896, %v5898
        %v5900 = vrot.slane %v5295, 1
        %v5901 = vrot.slane %v5296, 1
        %v5902 = vsel %vm1727, %v5900, %v5901
        %v5903 = vrot.slane %v5297, 1
        %v5904 = vsel %vm1727, %v5901, %v5903
        %v5937 = vpack.c.bf16 %v5829, %v5827
        %v5938 = vpack.c.bf16 %v5834, %v5832
        %v5939 = vpack.c.bf16 %v5839, %v5837
        %v5940 = vpack.c.bf16 %v5844, %v5842
        %v5941 = vpack.c.bf16 %v5849, %v5847
        %v5942 = vpack.c.bf16 %v5854, %v5852
        %v5943 = vpack.c.bf16 %v5859, %v5857
        %v5944 = vpack.c.bf16 %v5864, %v5862
        %v5945 = vpack.c.bf16 %v5869, %v5867
        %v5946 = vpack.c.bf16 %v5874, %v5872
        %v5947 = vpack.c.bf16 %v5879, %v5877
        %v5948 = vpack.c.bf16 %v5884, %v5882
        %v5949 = vpack.c.bf16 %v5889, %v5887
        %v5950 = vpack.c.bf16 %v5894, %v5892
        %v5951 = vpack.c.bf16 %v5899, %v5897
        %v5952 = vpack.c.bf16 %v5904, %v5902
        %s5953 = scalar_lea.vmem %s5, 32
        %v5954 = vld [vmem:[%s5953] sm:$0xf]
        %v5955 = vld [vmem:[%s5953 + $0x4] sm:$0xf]
        %v5956 = vld [vmem:[%s5953 + $0x8] sm:$0xf]
        %v5957 = vld [vmem:[%s5953 + $0xc] sm:$0x3]
        %v5962 = vunpack.c.l.b16 %v5954
        %v5963 = vunpack.c.l.b16 %v5955
        %v5964 = vunpack.c.l.b16 %v5956
        %v5965 = vunpack.c.l.b16 %v5957
        %v5966 = vpack.c.b16 %v5963, %v5962
        %v5967 = vpack.c.b16 %v5965, %v5964
        %v5970 = vsel %vm637, %v5937, 0
        %v5973 = vsel %vm637, %v5938, 0
        %v5976 = vsel %vm637, %v5939, 0
        %v5979 = vsel %vm637, %v5940, 0
        %v5982 = vsel %vm637, %v5941, 0
        %v5985 = vsel %vm637, %v5942, 0
        %v5988 = vsel %vm637, %v5943, 0
        %v5991 = vsel %vm637, %v5944, 0
        %v5994 = vsel %vm637, %v5945, 0
        %v5997 = vsel %vm637, %v5946, 0
        %v6000 = vsel %vm637, %v5947, 0
        %v6003 = vsel %vm637, %v5948, 0
        %v6006 = vsel %vm637, %v5949, 0
        %v6009 = vsel %vm637, %v5950, 0
        %v6012 = vsel %vm637, %v5951, 0
        %v6015 = vsel %vm637, %v5952, 0
        %v6018 = vsel %vm2030, %v5967, 0
        %6020 = vmatpush.bf16.msra.mxu0 0
        %6021 = vmatpush.bf16.msra.mxu0 0
        %6022 = vmatpush.bf16.msra.mxu0 0
        %6023 = vmatpush.bf16.msra.mxu0 0
        %6024 = vmatpush.bf16.msra.mxu0 0
        %6025 = vmatpush.bf16.msra.mxu0 0
        %6026 = vmatpush.bf16.msra.mxu0 %v6018
        %6027 = vmatpush.bf16.msra.mxu0 %v5966
        %6028 = vmatmul.bf16.gmra.mxu0 %v5970
        %v6029 = vpop.f32.mrf.mxu0
        %v6030 = vadd.f32 0.0, %v6029
        %v6031 = vpop.f32.mrf.mxu0
        %v6032 = vadd.f32 0.0, %v6031
        %6033 = vmatmul.bf16.gmra.mxu0 %v5973
        %v6034 = vpop.f32.mrf.mxu0
        %v6035 = vadd.f32 0.0, %v6034
        %v6036 = vpop.f32.mrf.mxu0
        %v6037 = vadd.f32 0.0, %v6036
        %6038 = vmatmul.bf16.gmra.mxu0 %v5976
        %v6039 = vpop.f32.mrf.mxu0
        %v6040 = vadd.f32 0.0, %v6039
        %v6041 = vpop.f32.mrf.mxu0
        %v6042 = vadd.f32 0.0, %v6041
        %6043 = vmatmul.bf16.gmra.mxu0 %v5979
        %v6044 = vpop.f32.mrf.mxu0
        %v6045 = vadd.f32 0.0, %v6044
        %v6046 = vpop.f32.mrf.mxu0
        %v6047 = vadd.f32 0.0, %v6046
        %6048 = vmatmul.bf16.gmra.mxu0 %v5982
        %v6049 = vpop.f32.mrf.mxu0
        %v6050 = vadd.f32 0.0, %v6049
        %v6051 = vpop.f32.mrf.mxu0
        %v6052 = vadd.f32 0.0, %v6051
        %6053 = vmatmul.bf16.gmra.mxu0 %v5985
        %v6054 = vpop.f32.mrf.mxu0
        %v6055 = vadd.f32 0.0, %v6054
        %v6056 = vpop.f32.mrf.mxu0
        %v6057 = vadd.f32 0.0, %v6056
        %6058 = vmatmul.bf16.gmra.mxu0 %v5988
        %v6059 = vpop.f32.mrf.mxu0
        %v6060 = vadd.f32 0.0, %v6059
        %v6061 = vpop.f32.mrf.mxu0
        %v6062 = vadd.f32 0.0, %v6061
        %6063 = vmatmul.bf16.gmra.mxu0 %v5991
        %v6064 = vpop.f32.mrf.mxu0
        %v6065 = vadd.f32 0.0, %v6064
        %v6066 = vpop.f32.mrf.mxu0
        %v6067 = vadd.f32 0.0, %v6066
        %6068 = vmatmul.bf16.gmra.mxu0 %v5994
        %v6069 = vpop.f32.mrf.mxu0
        %v6070 = vadd.f32 0.0, %v6069
        %v6071 = vpop.f32.mrf.mxu0
        %v6072 = vadd.f32 0.0, %v6071
        %6073 = vmatmul.bf16.gmra.mxu0 %v5997
        %v6074 = vpop.f32.mrf.mxu0
        %v6075 = vadd.f32 0.0, %v6074
        %v6076 = vpop.f32.mrf.mxu0
        %v6077 = vadd.f32 0.0, %v6076
        %6078 = vmatmul.bf16.gmra.mxu0 %v6000
        %v6079 = vpop.f32.mrf.mxu0
        %v6080 = vadd.f32 0.0, %v6079
        %v6081 = vpop.f32.mrf.mxu0
        %v6082 = vadd.f32 0.0, %v6081
        %6083 = vmatmul.bf16.gmra.mxu0 %v6003
        %v6084 = vpop.f32.mrf.mxu0
        %v6085 = vadd.f32 0.0, %v6084
        %v6086 = vpop.f32.mrf.mxu0
        %v6087 = vadd.f32 0.0, %v6086
        %6088 = vmatmul.bf16.gmra.mxu0 %v6006
        %v6089 = vpop.f32.mrf.mxu0
        %v6090 = vadd.f32 0.0, %v6089
        %v6091 = vpop.f32.mrf.mxu0
        %v6092 = vadd.f32 0.0, %v6091
        %6093 = vmatmul.bf16.gmra.mxu0 %v6009
        %v6094 = vpop.f32.mrf.mxu0
        %v6095 = vadd.f32 0.0, %v6094
        %v6096 = vpop.f32.mrf.mxu0
        %v6097 = vadd.f32 0.0, %v6096
        %6098 = vmatmul.bf16.gmra.mxu0 %v6012
        %v6099 = vpop.f32.mrf.mxu0
        %v6100 = vadd.f32 0.0, %v6099
        %v6101 = vpop.f32.mrf.mxu0
        %v6102 = vadd.f32 0.0, %v6101
        %6103 = vmatmul.bf16.gmra.mxu0 %v6015
        %v6104 = vpop.f32.mrf.mxu0
        %v6105 = vadd.f32 0.0, %v6104
        %v6106 = vpop.f32.mrf.mxu0
        %v6107 = vadd.f32 0.0, %v6106
        %6108 = vdwg.mxu0
        %v6109 = vadd.f32 %v5730, %v6030
        %v6110 = vadd.f32 %v5732, %v6032
        %v6111 = vadd.f32 %v5735, %v6035
        %v6112 = vadd.f32 %v5737, %v6037
        %v6113 = vadd.f32 %v5740, %v6040
        %v6114 = vadd.f32 %v5742, %v6042
        %v6115 = vadd.f32 %v5745, %v6045
        %v6116 = vadd.f32 %v5747, %v6047
        %v6117 = vadd.f32 %v5750, %v6050
        %v6118 = vadd.f32 %v5752, %v6052
        %v6119 = vadd.f32 %v5755, %v6055
        %v6120 = vadd.f32 %v5757, %v6057
        %v6121 = vadd.f32 %v5760, %v6060
        %v6122 = vadd.f32 %v5762, %v6062
        %v6123 = vadd.f32 %v5765, %v6065
        %v6124 = vadd.f32 %v5767, %v6067
        %v6125 = vadd.f32 %v5770, %v6070
        %v6126 = vadd.f32 %v5772, %v6072
        %v6127 = vadd.f32 %v5775, %v6075
        %v6128 = vadd.f32 %v5777, %v6077
        %v6129 = vadd.f32 %v5780, %v6080
        %v6130 = vadd.f32 %v5782, %v6082
        %v6131 = vadd.f32 %v5785, %v6085
        %v6132 = vadd.f32 %v5787, %v6087
        %v6133 = vadd.f32 %v5790, %v6090
        %v6134 = vadd.f32 %v5792, %v6092
        %v6135 = vadd.f32 %v5795, %v6095
        %v6136 = vadd.f32 %v5797, %v6097
        %v6137 = vadd.f32 %v5800, %v6100
        %v6138 = vadd.f32 %v5802, %v6102
        %v6139 = vadd.f32 %v5805, %v6105
        %v6140 = vadd.f32 %v5807, %v6107
        %v6144 = vrot.slane %v5298, 7
        %v6145 = vrot.slane %v5299, 7
        %v6146 = vsel %vm1108, %v6144, %v6145
        %v6147 = vrot.slane %v5300, 7
        %v6148 = vsel %vm1108, %v6145, %v6147
        %v6151 = vpack.c.bf16 %v6148, %v6146
        %s6152 = scalar_lea.vmem %s5, 48
        %v6153 = vld [vmem:[%s6152] sm:$0xf]
        %v6154 = vld [vmem:[%s6152 + $0x4] sm:$0xf]
        %v6155 = vld [vmem:[%s6152 + $0x8] sm:$0xf]
        %v6156 = vld [vmem:[%s6152 + $0xc] sm:$0x3]
        %v6161 = vunpack.c.l.b16 %v6153
        %v6162 = vunpack.c.l.b16 %v6154
        %v6163 = vunpack.c.l.b16 %v6155
        %v6164 = vunpack.c.l.b16 %v6156
        %v6165 = vpack.c.b16 %v6162, %v6161
        %v6166 = vpack.c.b16 %v6164, %v6163
        %v6169 = vsel %vm637, %v6151, 0
        %v6172 = vsel %vm2030, %v6166, 0
        %6174 = vmatpush.bf16.msra.mxu0 0
        %6175 = vmatpush.bf16.msra.mxu0 0
        %6176 = vmatpush.bf16.msra.mxu0 0
        %6177 = vmatpush.bf16.msra.mxu0 0
        %6178 = vmatpush.bf16.msra.mxu0 0
        %6179 = vmatpush.bf16.msra.mxu0 0
        %6180 = vmatpush.bf16.msra.mxu0 %v6172
        %6181 = vmatpush.bf16.msra.mxu0 %v6165
        %6182 = vmatmul.bf16.gmra.mxu0 %v5673
        %v6183 = vpop.f32.mrf.mxu0
        %v6184 = vadd.f32 0.0, %v6183
        %v6185 = vpop.f32.mrf.mxu0
        %v6186 = vadd.f32 0.0, %v6185
        %6187 = vmatmul.bf16.gmra.mxu0 %v5676
        %v6188 = vpop.f32.mrf.mxu0
        %v6189 = vadd.f32 0.0, %v6188
        %v6190 = vpop.f32.mrf.mxu0
        %v6191 = vadd.f32 0.0, %v6190
        %6192 = vmatmul.bf16.gmra.mxu0 %v5679
        %v6193 = vpop.f32.mrf.mxu0
        %v6194 = vadd.f32 0.0, %v6193
        %v6195 = vpop.f32.mrf.mxu0
        %v6196 = vadd.f32 0.0, %v6195
        %6197 = vmatmul.bf16.gmra.mxu0 %v5682
        %v6198 = vpop.f32.mrf.mxu0
        %v6199 = vadd.f32 0.0, %v6198
        %v6200 = vpop.f32.mrf.mxu0
        %v6201 = vadd.f32 0.0, %v6200
        %6202 = vmatmul.bf16.gmra.mxu0 %v5685
        %v6203 = vpop.f32.mrf.mxu0
        %v6204 = vadd.f32 0.0, %v6203
        %v6205 = vpop.f32.mrf.mxu0
        %v6206 = vadd.f32 0.0, %v6205
        %6207 = vmatmul.bf16.gmra.mxu0 %v5688
        %v6208 = vpop.f32.mrf.mxu0
        %v6209 = vadd.f32 0.0, %v6208
        %v6210 = vpop.f32.mrf.mxu0
        %v6211 = vadd.f32 0.0, %v6210
        %6212 = vmatmul.bf16.gmra.mxu0 %v5691
        %v6213 = vpop.f32.mrf.mxu0
        %v6214 = vadd.f32 0.0, %v6213
        %v6215 = vpop.f32.mrf.mxu0
        %v6216 = vadd.f32 0.0, %v6215
        %6217 = vmatmul.bf16.gmra.mxu0 %v5694
        %v6218 = vpop.f32.mrf.mxu0
        %v6219 = vadd.f32 0.0, %v6218
        %v6220 = vpop.f32.mrf.mxu0
        %v6221 = vadd.f32 0.0, %v6220
        %6222 = vmatmul.bf16.gmra.mxu0 %v5697
        %v6223 = vpop.f32.mrf.mxu0
        %v6224 = vadd.f32 0.0, %v6223
        %v6225 = vpop.f32.mrf.mxu0
        %v6226 = vadd.f32 0.0, %v6225
        %6227 = vmatmul.bf16.gmra.mxu0 %v5700
        %v6228 = vpop.f32.mrf.mxu0
        %v6229 = vadd.f32 0.0, %v6228
        %v6230 = vpop.f32.mrf.mxu0
        %v6231 = vadd.f32 0.0, %v6230
        %6232 = vmatmul.bf16.gmra.mxu0 %v5703
        %v6233 = vpop.f32.mrf.mxu0
        %v6234 = vadd.f32 0.0, %v6233
        %v6235 = vpop.f32.mrf.mxu0
        %v6236 = vadd.f32 0.0, %v6235
        %6237 = vmatmul.bf16.gmra.mxu0 %v5706
        %v6238 = vpop.f32.mrf.mxu0
        %v6239 = vadd.f32 0.0, %v6238
        %v6240 = vpop.f32.mrf.mxu0
        %v6241 = vadd.f32 0.0, %v6240
        %6242 = vmatmul.bf16.gmra.mxu0 %v5709
        %v6243 = vpop.f32.mrf.mxu0
        %v6244 = vadd.f32 0.0, %v6243
        %v6245 = vpop.f32.mrf.mxu0
        %v6246 = vadd.f32 0.0, %v6245
        %6247 = vmatmul.bf16.gmra.mxu0 %v5712
        %v6248 = vpop.f32.mrf.mxu0
        %v6249 = vadd.f32 0.0, %v6248
        %v6250 = vpop.f32.mrf.mxu0
        %v6251 = vadd.f32 0.0, %v6250
        %6252 = vmatmul.bf16.gmra.mxu0 %v5715
        %v6253 = vpop.f32.mrf.mxu0
        %v6254 = vadd.f32 0.0, %v6253
        %v6255 = vpop.f32.mrf.mxu0
        %v6256 = vadd.f32 0.0, %v6255
        %6257 = vmatmul.bf16.gmra.mxu0 %v6169
        %v6258 = vpop.f32.mrf.mxu0
        %v6259 = vadd.f32 0.0, %v6258
        %v6260 = vpop.f32.mrf.mxu0
        %v6261 = vadd.f32 0.0, %v6260
        %6262 = vdwg.mxu0
        %v6263 = vadd.f32 %v6109, %v6184
        %v6264 = vadd.f32 %v6110, %v6186
        %v6265 = vadd.f32 %v6111, %v6189
        %v6266 = vadd.f32 %v6112, %v6191
        %v6267 = vadd.f32 %v6113, %v6194
        %v6268 = vadd.f32 %v6114, %v6196
        %v6269 = vadd.f32 %v6115, %v6199
        %v6270 = vadd.f32 %v6116, %v6201
        %v6271 = vadd.f32 %v6117, %v6204
        %v6272 = vadd.f32 %v6118, %v6206
        %v6273 = vadd.f32 %v6119, %v6209
        %v6274 = vadd.f32 %v6120, %v6211
        %v6275 = vadd.f32 %v6121, %v6214
        %v6276 = vadd.f32 %v6122, %v6216
        %v6277 = vadd.f32 %v6123, %v6219
        %v6278 = vadd.f32 %v6124, %v6221
        %v6279 = vadd.f32 %v6125, %v6224
        %v6280 = vadd.f32 %v6126, %v6226
        %v6281 = vadd.f32 %v6127, %v6229
        %v6282 = vadd.f32 %v6128, %v6231
        %v6283 = vadd.f32 %v6129, %v6234
        %v6284 = vadd.f32 %v6130, %v6236
        %v6285 = vadd.f32 %v6131, %v6239
        %v6286 = vadd.f32 %v6132, %v6241
        %v6287 = vadd.f32 %v6133, %v6244
        %v6288 = vadd.f32 %v6134, %v6246
        %v6289 = vadd.f32 %v6135, %v6249
        %v6290 = vadd.f32 %v6136, %v6251
        %v6291 = vadd.f32 %v6137, %v6254
        %v6292 = vadd.f32 %v6138, %v6256
        %v6293 = vadd.f32 %v6139, %v6259
        %v6294 = vadd.f32 %v6140, %v6261
        %v6295 = vpack.c.bf16 %v5300, %v5299
        %s6296 = scalar_lea.vmem %s5, 64
        %v6297 = vld [vmem:[%s6296] sm:$0xf]
        %v6298 = vld [vmem:[%s6296 + $0x4] sm:$0xf]
        %v6299 = vld [vmem:[%s6296 + $0x8] sm:$0xf]
        %v6300 = vld [vmem:[%s6296 + $0xc] sm:$0x3]
        %v6305 = vunpack.c.l.b16 %v6297
        %v6306 = vunpack.c.l.b16 %v6298
        %v6307 = vunpack.c.l.b16 %v6299
        %v6308 = vunpack.c.l.b16 %v6300
        %v6309 = vpack.c.b16 %v6306, %v6305
        %v6310 = vpack.c.b16 %v6308, %v6307
        %v6313 = vsel %vm637, %v6295, 0
        %v6316 = vsel %vm2030, %v6310, 0
        %6318 = vmatpush.bf16.msra.mxu0 0
        %6319 = vmatpush.bf16.msra.mxu0 0
        %6320 = vmatpush.bf16.msra.mxu0 0
        %6321 = vmatpush.bf16.msra.mxu0 0
        %6322 = vmatpush.bf16.msra.mxu0 0
        %6323 = vmatpush.bf16.msra.mxu0 0
        %6324 = vmatpush.bf16.msra.mxu0 %v6316
        %6325 = vmatpush.bf16.msra.mxu0 %v6309
        %6326 = vmatmul.bf16.gmra.mxu0 %v5522
        %v6327 = vpop.f32.mrf.mxu0
        %v6328 = vadd.f32 0.0, %v6327
        %v6329 = vpop.f32.mrf.mxu0
        %v6330 = vadd.f32 0.0, %v6329
        %6331 = vmatmul.bf16.gmra.mxu0 %v5525
        %v6332 = vpop.f32.mrf.mxu0
        %v6333 = vadd.f32 0.0, %v6332
        %v6334 = vpop.f32.mrf.mxu0
        %v6335 = vadd.f32 0.0, %v6334
        %6336 = vmatmul.bf16.gmra.mxu0 %v5528
        %v6337 = vpop.f32.mrf.mxu0
        %v6338 = vadd.f32 0.0, %v6337
        %v6339 = vpop.f32.mrf.mxu0
        %v6340 = vadd.f32 0.0, %v6339
        %6341 = vmatmul.bf16.gmra.mxu0 %v5531
        %v6342 = vpop.f32.mrf.mxu0
        %v6343 = vadd.f32 0.0, %v6342
        %v6344 = vpop.f32.mrf.mxu0
        %v6345 = vadd.f32 0.0, %v6344
        %6346 = vmatmul.bf16.gmra.mxu0 %v5534
        %v6347 = vpop.f32.mrf.mxu0
        %v6348 = vadd.f32 0.0, %v6347
        %v6349 = vpop.f32.mrf.mxu0
        %v6350 = vadd.f32 0.0, %v6349
        %6351 = vmatmul.bf16.gmra.mxu0 %v5537
        %v6352 = vpop.f32.mrf.mxu0
        %v6353 = vadd.f32 0.0, %v6352
        %v6354 = vpop.f32.mrf.mxu0
        %v6355 = vadd.f32 0.0, %v6354
        %6356 = vmatmul.bf16.gmra.mxu0 %v5540
        %v6357 = vpop.f32.mrf.mxu0
        %v6358 = vadd.f32 0.0, %v6357
        %v6359 = vpop.f32.mrf.mxu0
        %v6360 = vadd.f32 0.0, %v6359
        %6361 = vmatmul.bf16.gmra.mxu0 %v5543
        %v6362 = vpop.f32.mrf.mxu0
        %v6363 = vadd.f32 0.0, %v6362
        %v6364 = vpop.f32.mrf.mxu0
        %v6365 = vadd.f32 0.0, %v6364
        %6366 = vmatmul.bf16.gmra.mxu0 %v5546
        %v6367 = vpop.f32.mrf.mxu0
        %v6368 = vadd.f32 0.0, %v6367
        %v6369 = vpop.f32.mrf.mxu0
        %v6370 = vadd.f32 0.0, %v6369
        %6371 = vmatmul.bf16.gmra.mxu0 %v5549
        %v6372 = vpop.f32.mrf.mxu0
        %v6373 = vadd.f32 0.0, %v6372
        %v6374 = vpop.f32.mrf.mxu0
        %v6375 = vadd.f32 0.0, %v6374
        %6376 = vmatmul.bf16.gmra.mxu0 %v5552
        %v6377 = vpop.f32.mrf.mxu0
        %v6378 = vadd.f32 0.0, %v6377
        %v6379 = vpop.f32.mrf.mxu0
        %v6380 = vadd.f32 0.0, %v6379
        %6381 = vmatmul.bf16.gmra.mxu0 %v5555
        %v6382 = vpop.f32.mrf.mxu0
        %v6383 = vadd.f32 0.0, %v6382
        %v6384 = vpop.f32.mrf.mxu0
        %v6385 = vadd.f32 0.0, %v6384
        %6386 = vmatmul.bf16.gmra.mxu0 %v5558
        %v6387 = vpop.f32.mrf.mxu0
        %v6388 = vadd.f32 0.0, %v6387
        %v6389 = vpop.f32.mrf.mxu0
        %v6390 = vadd.f32 0.0, %v6389
        %6391 = vmatmul.bf16.gmra.mxu0 %v5561
        %v6392 = vpop.f32.mrf.mxu0
        %v6393 = vadd.f32 0.0, %v6392
        %v6394 = vpop.f32.mrf.mxu0
        %v6395 = vadd.f32 0.0, %v6394
        %6396 = vmatmul.bf16.gmra.mxu0 %v5564
        %v6397 = vpop.f32.mrf.mxu0
        %v6398 = vadd.f32 0.0, %v6397
        %v6399 = vpop.f32.mrf.mxu0
        %v6400 = vadd.f32 0.0, %v6399
        %6401 = vmatmul.bf16.gmra.mxu0 %v6313
        %v6402 = vpop.f32.mrf.mxu0
        %v6403 = vadd.f32 0.0, %v6402
        %v6404 = vpop.f32.mrf.mxu0
        %v6405 = vadd.f32 0.0, %v6404
        %6406 = vdwg.mxu0
        %v6407 = vadd.f32 %v6263, %v6328
        %v6408 = vadd.f32 %v6264, %v6330
        %v6409 = vadd.f32 %v6265, %v6333
        %v6410 = vadd.f32 %v6266, %v6335
        %v6411 = vadd.f32 %v6267, %v6338
        %v6412 = vadd.f32 %v6268, %v6340
        %v6413 = vadd.f32 %v6269, %v6343
        %v6414 = vadd.f32 %v6270, %v6345
        %v6415 = vadd.f32 %v6271, %v6348
        %v6416 = vadd.f32 %v6272, %v6350
        %v6417 = vadd.f32 %v6273, %v6353
        %v6418 = vadd.f32 %v6274, %v6355
        %v6419 = vadd.f32 %v6275, %v6358
        %v6420 = vadd.f32 %v6276, %v6360
        %v6421 = vadd.f32 %v6277, %v6363
        %v6422 = vadd.f32 %v6278, %v6365
        %v6423 = vadd.f32 %v6279, %v6368
        %v6424 = vadd.f32 %v6280, %v6370
        %v6425 = vadd.f32 %v6281, %v6373
        %v6426 = vadd.f32 %v6282, %v6375
        %v6427 = vadd.f32 %v6283, %v6378
        %v6428 = vadd.f32 %v6284, %v6380
        %v6429 = vadd.f32 %v6285, %v6383
        %v6430 = vadd.f32 %v6286, %v6385
        %v6431 = vadd.f32 %v6287, %v6388
        %v6432 = vadd.f32 %v6288, %v6390
        %v6433 = vadd.f32 %v6289, %v6393
        %v6434 = vadd.f32 %v6290, %v6395
        %v6435 = vadd.f32 %v6291, %v6398
        %v6436 = vadd.f32 %v6292, %v6400
        %v6437 = vadd.f32 %v6293, %v6403
        %v6438 = vadd.f32 %v6294, %v6405
        %v6440 = vrot.slane %v5299, 1
        %v6441 = vrot.slane %v5300, 1
        %v6442 = vsel %vm1727, %v6440, %v6441
        %v6443 = vrot.slane %v5301, 1
        %v6444 = vsel %vm1727, %v6441, %v6443
        %v6447 = vpack.c.bf16 %v6444, %v6442
        %s6448 = scalar_lea.vmem %s5, 80
        %v6449 = vld [vmem:[%s6448] sm:$0xf]
        %v6450 = vld [vmem:[%s6448 + $0x4] sm:$0xf]
        %v6451 = vld [vmem:[%s6448 + $0x8] sm:$0xf]
        %v6452 = vld [vmem:[%s6448 + $0xc] sm:$0x3]
        %v6457 = vunpack.c.l.b16 %v6449
        %v6458 = vunpack.c.l.b16 %v6450
        %v6459 = vunpack.c.l.b16 %v6451
        %v6460 = vunpack.c.l.b16 %v6452
        %v6461 = vpack.c.b16 %v6458, %v6457
        %v6462 = vpack.c.b16 %v6460, %v6459
        %v6465 = vsel %vm637, %v6447, 0
        %v6468 = vsel %vm2030, %v6462, 0
        %6470 = vmatpush.bf16.msra.mxu0 0
        %6471 = vmatpush.bf16.msra.mxu0 0
        %6472 = vmatpush.bf16.msra.mxu0 0
        %6473 = vmatpush.bf16.msra.mxu0 0
        %6474 = vmatpush.bf16.msra.mxu0 0
        %6475 = vmatpush.bf16.msra.mxu0 0
        %6476 = vmatpush.bf16.msra.mxu0 %v6468
        %6477 = vmatpush.bf16.msra.mxu0 %v6461
        %6478 = vmatmul.bf16.gmra.mxu0 %v5973
        %v6479 = vpop.f32.mrf.mxu0
        %v6480 = vadd.f32 0.0, %v6479
        %v6481 = vpop.f32.mrf.mxu0
        %v6482 = vadd.f32 0.0, %v6481
        %6483 = vmatmul.bf16.gmra.mxu0 %v5976
        %v6484 = vpop.f32.mrf.mxu0
        %v6485 = vadd.f32 0.0, %v6484
        %v6486 = vpop.f32.mrf.mxu0
        %v6487 = vadd.f32 0.0, %v6486
        %6488 = vmatmul.bf16.gmra.mxu0 %v5979
        %v6489 = vpop.f32.mrf.mxu0
        %v6490 = vadd.f32 0.0, %v6489
        %v6491 = vpop.f32.mrf.mxu0
        %v6492 = vadd.f32 0.0, %v6491
        %6493 = vmatmul.bf16.gmra.mxu0 %v5982
        %v6494 = vpop.f32.mrf.mxu0
        %v6495 = vadd.f32 0.0, %v6494
        %v6496 = vpop.f32.mrf.mxu0
        %v6497 = vadd.f32 0.0, %v6496
        %6498 = vmatmul.bf16.gmra.mxu0 %v5985
        %v6499 = vpop.f32.mrf.mxu0
        %v6500 = vadd.f32 0.0, %v6499
        %v6501 = vpop.f32.mrf.mxu0
        %v6502 = vadd.f32 0.0, %v6501
        %6503 = vmatmul.bf16.gmra.mxu0 %v5988
        %v6504 = vpop.f32.mrf.mxu0
        %v6505 = vadd.f32 0.0, %v6504
        %v6506 = vpop.f32.mrf.mxu0
        %v6507 = vadd.f32 0.0, %v6506
        %6508 = vmatmul.bf16.gmra.mxu0 %v5991
        %v6509 = vpop.f32.mrf.mxu0
        %v6510 = vadd.f32 0.0, %v6509
        %v6511 = vpop.f32.mrf.mxu0
        %v6512 = vadd.f32 0.0, %v6511
        %6513 = vmatmul.bf16.gmra.mxu0 %v5994
        %v6514 = vpop.f32.mrf.mxu0
        %v6515 = vadd.f32 0.0, %v6514
        %v6516 = vpop.f32.mrf.mxu0
        %v6517 = vadd.f32 0.0, %v6516
        %6518 = vmatmul.bf16.gmra.mxu0 %v5997
        %v6519 = vpop.f32.mrf.mxu0
        %v6520 = vadd.f32 0.0, %v6519
        %v6521 = vpop.f32.mrf.mxu0
        %v6522 = vadd.f32 0.0, %v6521
        %6523 = vmatmul.bf16.gmra.mxu0 %v6000
        %v6524 = vpop.f32.mrf.mxu0
        %v6525 = vadd.f32 0.0, %v6524
        %v6526 = vpop.f32.mrf.mxu0
        %v6527 = vadd.f32 0.0, %v6526
        %6528 = vmatmul.bf16.gmra.mxu0 %v6003
        %v6529 = vpop.f32.mrf.mxu0
        %v6530 = vadd.f32 0.0, %v6529
        %v6531 = vpop.f32.mrf.mxu0
        %v6532 = vadd.f32 0.0, %v6531
        %6533 = vmatmul.bf16.gmra.mxu0 %v6006
        %v6534 = vpop.f32.mrf.mxu0
        %v6535 = vadd.f32 0.0, %v6534
        %v6536 = vpop.f32.mrf.mxu0
        %v6537 = vadd.f32 0.0, %v6536
        %6538 = vmatmul.bf16.gmra.mxu0 %v6009
        %v6539 = vpop.f32.mrf.mxu0
        %v6540 = vadd.f32 0.0, %v6539
        %v6541 = vpop.f32.mrf.mxu0
        %v6542 = vadd.f32 0.0, %v6541
        %6543 = vmatmul.bf16.gmra.mxu0 %v6012
        %v6544 = vpop.f32.mrf.mxu0
        %v6545 = vadd.f32 0.0, %v6544
        %v6546 = vpop.f32.mrf.mxu0
        %v6547 = vadd.f32 0.0, %v6546
        %6548 = vmatmul.bf16.gmra.mxu0 %v6015
        %v6549 = vpop.f32.mrf.mxu0
        %v6550 = vadd.f32 0.0, %v6549
        %v6551 = vpop.f32.mrf.mxu0
        %v6552 = vadd.f32 0.0, %v6551
        %6553 = vmatmul.bf16.gmra.mxu0 %v6465
        %v6554 = vpop.f32.mrf.mxu0
        %v6555 = vadd.f32 0.0, %v6554
        %v6556 = vpop.f32.mrf.mxu0
        %v6557 = vadd.f32 0.0, %v6556
        %6558 = vdwg.mxu0
        %v6559 = vadd.f32 %v6407, %v6480
        %v6560 = vadd.f32 %v6408, %v6482
        %v6561 = vadd.f32 %v6409, %v6485
        %v6562 = vadd.f32 %v6410, %v6487
        %v6563 = vadd.f32 %v6411, %v6490
        %v6564 = vadd.f32 %v6412, %v6492
        %v6565 = vadd.f32 %v6413, %v6495
        %v6566 = vadd.f32 %v6414, %v6497
        %v6567 = vadd.f32 %v6415, %v6500
        %v6568 = vadd.f32 %v6416, %v6502
        %v6569 = vadd.f32 %v6417, %v6505
        %v6570 = vadd.f32 %v6418, %v6507
        %v6571 = vadd.f32 %v6419, %v6510
        %v6572 = vadd.f32 %v6420, %v6512
        %v6573 = vadd.f32 %v6421, %v6515
        %v6574 = vadd.f32 %v6422, %v6517
        %v6575 = vadd.f32 %v6423, %v6520
        %v6576 = vadd.f32 %v6424, %v6522
        %v6577 = vadd.f32 %v6425, %v6525
        %v6578 = vadd.f32 %v6426, %v6527
        %v6579 = vadd.f32 %v6427, %v6530
        %v6580 = vadd.f32 %v6428, %v6532
        %v6581 = vadd.f32 %v6429, %v6535
        %v6582 = vadd.f32 %v6430, %v6537
        %v6583 = vadd.f32 %v6431, %v6540
        %v6584 = vadd.f32 %v6432, %v6542
        %v6585 = vadd.f32 %v6433, %v6545
        %v6586 = vadd.f32 %v6434, %v6547
        %v6587 = vadd.f32 %v6435, %v6550
        %v6588 = vadd.f32 %v6436, %v6552
        %v6589 = vadd.f32 %v6437, %v6555
        %v6590 = vadd.f32 %v6438, %v6557
        %v6594 = vrot.slane %v5302, 7
        %v6595 = vrot.slane %v5303, 7
        %v6596 = vsel %vm1108, %v6594, %v6595
        %v6597 = vrot.slane %v5304, 7
        %v6598 = vsel %vm1108, %v6595, %v6597
        %v6601 = vpack.c.bf16 %v6598, %v6596
        %s6602 = scalar_lea.vmem %s5, 96
        %v6603 = vld [vmem:[%s6602] sm:$0xf]
        %v6604 = vld [vmem:[%s6602 + $0x4] sm:$0xf]
        %v6605 = vld [vmem:[%s6602 + $0x8] sm:$0xf]
        %v6606 = vld [vmem:[%s6602 + $0xc] sm:$0x3]
        %v6611 = vunpack.c.l.b16 %v6603
        %v6612 = vunpack.c.l.b16 %v6604
        %v6613 = vunpack.c.l.b16 %v6605
        %v6614 = vunpack.c.l.b16 %v6606
        %v6615 = vpack.c.b16 %v6612, %v6611
        %v6616 = vpack.c.b16 %v6614, %v6613
        %v6619 = vsel %vm637, %v6601, 0
        %v6622 = vsel %vm2030, %v6616, 0
        %6624 = vmatpush.bf16.msra.mxu0 0
        %6625 = vmatpush.bf16.msra.mxu0 0
        %6626 = vmatpush.bf16.msra.mxu0 0
        %6627 = vmatpush.bf16.msra.mxu0 0
        %6628 = vmatpush.bf16.msra.mxu0 0
        %6629 = vmatpush.bf16.msra.mxu0 0
        %6630 = vmatpush.bf16.msra.mxu0 %v6622
        %6631 = vmatpush.bf16.msra.mxu0 %v6615
        %6632 = vmatmul.bf16.gmra.mxu0 %v5676
        %v6633 = vpop.f32.mrf.mxu0
        %v6634 = vadd.f32 0.0, %v6633
        %v6635 = vpop.f32.mrf.mxu0
        %v6636 = vadd.f32 0.0, %v6635
        %6637 = vmatmul.bf16.gmra.mxu0 %v5679
        %v6638 = vpop.f32.mrf.mxu0
        %v6639 = vadd.f32 0.0, %v6638
        %v6640 = vpop.f32.mrf.mxu0
        %v6641 = vadd.f32 0.0, %v6640
        %6642 = vmatmul.bf16.gmra.mxu0 %v5682
        %v6643 = vpop.f32.mrf.mxu0
        %v6644 = vadd.f32 0.0, %v6643
        %v6645 = vpop.f32.mrf.mxu0
        %v6646 = vadd.f32 0.0, %v6645
        %6647 = vmatmul.bf16.gmra.mxu0 %v5685
        %v6648 = vpop.f32.mrf.mxu0
        %v6649 = vadd.f32 0.0, %v6648
        %v6650 = vpop.f32.mrf.mxu0
        %v6651 = vadd.f32 0.0, %v6650
        %6652 = vmatmul.bf16.gmra.mxu0 %v5688
        %v6653 = vpop.f32.mrf.mxu0
        %v6654 = vadd.f32 0.0, %v6653
        %v6655 = vpop.f32.mrf.mxu0
        %v6656 = vadd.f32 0.0, %v6655
        %6657 = vmatmul.bf16.gmra.mxu0 %v5691
        %v6658 = vpop.f32.mrf.mxu0
        %v6659 = vadd.f32 0.0, %v6658
        %v6660 = vpop.f32.mrf.mxu0
        %v6661 = vadd.f32 0.0, %v6660
        %6662 = vmatmul.bf16.gmra.mxu0 %v5694
        %v6663 = vpop.f32.mrf.mxu0
        %v6664 = vadd.f32 0.0, %v6663
        %v6665 = vpop.f32.mrf.mxu0
        %v6666 = vadd.f32 0.0, %v6665
        %6667 = vmatmul.bf16.gmra.mxu0 %v5697
        %v6668 = vpop.f32.mrf.mxu0
        %v6669 = vadd.f32 0.0, %v6668
        %v6670 = vpop.f32.mrf.mxu0
        %v6671 = vadd.f32 0.0, %v6670
        %6672 = vmatmul.bf16.gmra.mxu0 %v5700
        %v6673 = vpop.f32.mrf.mxu0
        %v6674 = vadd.f32 0.0, %v6673
        %v6675 = vpop.f32.mrf.mxu0
        %v6676 = vadd.f32 0.0, %v6675
        %6677 = vmatmul.bf16.gmra.mxu0 %v5703
        %v6678 = vpop.f32.mrf.mxu0
        %v6679 = vadd.f32 0.0, %v6678
        %v6680 = vpop.f32.mrf.mxu0
        %v6681 = vadd.f32 0.0, %v6680
        %6682 = vmatmul.bf16.gmra.mxu0 %v5706
        %v6683 = vpop.f32.mrf.mxu0
        %v6684 = vadd.f32 0.0, %v6683
        %v6685 = vpop.f32.mrf.mxu0
        %v6686 = vadd.f32 0.0, %v6685
        %6687 = vmatmul.bf16.gmra.mxu0 %v5709
        %v6688 = vpop.f32.mrf.mxu0
        %v6689 = vadd.f32 0.0, %v6688
        %v6690 = vpop.f32.mrf.mxu0
        %v6691 = vadd.f32 0.0, %v6690
        %6692 = vmatmul.bf16.gmra.mxu0 %v5712
        %v6693 = vpop.f32.mrf.mxu0
        %v6694 = vadd.f32 0.0, %v6693
        %v6695 = vpop.f32.mrf.mxu0
        %v6696 = vadd.f32 0.0, %v6695
        %6697 = vmatmul.bf16.gmra.mxu0 %v5715
        %v6698 = vpop.f32.mrf.mxu0
        %v6699 = vadd.f32 0.0, %v6698
        %v6700 = vpop.f32.mrf.mxu0
        %v6701 = vadd.f32 0.0, %v6700
        %6702 = vmatmul.bf16.gmra.mxu0 %v6169
        %v6703 = vpop.f32.mrf.mxu0
        %v6704 = vadd.f32 0.0, %v6703
        %v6705 = vpop.f32.mrf.mxu0
        %v6706 = vadd.f32 0.0, %v6705
        %6707 = vmatmul.bf16.gmra.mxu0 %v6619
        %v6708 = vpop.f32.mrf.mxu0
        %v6709 = vadd.f32 0.0, %v6708
        %v6710 = vpop.f32.mrf.mxu0
        %v6711 = vadd.f32 0.0, %v6710
        %6712 = vdwg.mxu0
        %v6713 = vadd.f32 %v6559, %v6634
        %v6714 = vadd.f32 %v6560, %v6636
        %v6715 = vadd.f32 %v6561, %v6639
        %v6716 = vadd.f32 %v6562, %v6641
        %v6717 = vadd.f32 %v6563, %v6644
        %v6718 = vadd.f32 %v6564, %v6646
        %v6719 = vadd.f32 %v6565, %v6649
        %v6720 = vadd.f32 %v6566, %v6651
        %v6721 = vadd.f32 %v6567, %v6654
        %v6722 = vadd.f32 %v6568, %v6656
        %v6723 = vadd.f32 %v6569, %v6659
        %v6724 = vadd.f32 %v6570, %v6661
        %v6725 = vadd.f32 %v6571, %v6664
        %v6726 = vadd.f32 %v6572, %v6666
        %v6727 = vadd.f32 %v6573, %v6669
        %v6728 = vadd.f32 %v6574, %v6671
        %v6729 = vadd.f32 %v6575, %v6674
        %v6730 = vadd.f32 %v6576, %v6676
        %v6731 = vadd.f32 %v6577, %v6679
        %v6732 = vadd.f32 %v6578, %v6681
        %v6733 = vadd.f32 %v6579, %v6684
        %v6734 = vadd.f32 %v6580, %v6686
        %v6735 = vadd.f32 %v6581, %v6689
        %v6736 = vadd.f32 %v6582, %v6691
        %v6737 = vadd.f32 %v6583, %v6694
        %v6738 = vadd.f32 %v6584, %v6696
        %v6739 = vadd.f32 %v6585, %v6699
        %v6740 = vadd.f32 %v6586, %v6701
        %v6741 = vadd.f32 %v6587, %v6704
        %v6742 = vadd.f32 %v6588, %v6706
        %v6743 = vadd.f32 %v6589, %v6709
        %v6744 = vadd.f32 %v6590, %v6711
        %v6745 = vpack.c.bf16 %v5304, %v5303
        %s6746 = scalar_lea.vmem %s5, 112
        %v6747 = vld [vmem:[%s6746] sm:$0xf]
        %v6748 = vld [vmem:[%s6746 + $0x4] sm:$0xf]
        %v6749 = vld [vmem:[%s6746 + $0x8] sm:$0xf]
        %v6750 = vld [vmem:[%s6746 + $0xc] sm:$0x3]
        %v6755 = vunpack.c.l.b16 %v6747
        %v6756 = vunpack.c.l.b16 %v6748
        %v6757 = vunpack.c.l.b16 %v6749
        %v6758 = vunpack.c.l.b16 %v6750
        %v6759 = vpack.c.b16 %v6756, %v6755
        %v6760 = vpack.c.b16 %v6758, %v6757
        %v6763 = vsel %vm637, %v6745, 0
        %v6766 = vsel %vm2030, %v6760, 0
        %6768 = vmatpush.bf16.msra.mxu0 0
        %6769 = vmatpush.bf16.msra.mxu0 0
        %6770 = vmatpush.bf16.msra.mxu0 0
        %6771 = vmatpush.bf16.msra.mxu0 0
        %6772 = vmatpush.bf16.msra.mxu0 0
        %6773 = vmatpush.bf16.msra.mxu0 0
        %6774 = vmatpush.bf16.msra.mxu0 %v6766
        %6775 = vmatpush.bf16.msra.mxu0 %v6759
        %6776 = vmatmul.bf16.gmra.mxu0 %v5525
        %v6777 = vpop.f32.mrf.mxu0
        %v6778 = vadd.f32 0.0, %v6777
        %v6779 = vpop.f32.mrf.mxu0
        %v6780 = vadd.f32 0.0, %v6779
        %6781 = vmatmul.bf16.gmra.mxu0 %v5528
        %v6782 = vpop.f32.mrf.mxu0
        %v6783 = vadd.f32 0.0, %v6782
        %v6784 = vpop.f32.mrf.mxu0
        %v6785 = vadd.f32 0.0, %v6784
        %6786 = vmatmul.bf16.gmra.mxu0 %v5531
        %v6787 = vpop.f32.mrf.mxu0
        %v6788 = vadd.f32 0.0, %v6787
        %v6789 = vpop.f32.mrf.mxu0
        %v6790 = vadd.f32 0.0, %v6789
        %6791 = vmatmul.bf16.gmra.mxu0 %v5534
        %v6792 = vpop.f32.mrf.mxu0
        %v6793 = vadd.f32 0.0, %v6792
        %v6794 = vpop.f32.mrf.mxu0
        %v6795 = vadd.f32 0.0, %v6794
        %6796 = vmatmul.bf16.gmra.mxu0 %v5537
        %v6797 = vpop.f32.mrf.mxu0
        %v6798 = vadd.f32 0.0, %v6797
        %v6799 = vpop.f32.mrf.mxu0
        %v6800 = vadd.f32 0.0, %v6799
        %6801 = vmatmul.bf16.gmra.mxu0 %v5540
        %v6802 = vpop.f32.mrf.mxu0
        %v6803 = vadd.f32 0.0, %v6802
        %v6804 = vpop.f32.mrf.mxu0
        %v6805 = vadd.f32 0.0, %v6804
        %6806 = vmatmul.bf16.gmra.mxu0 %v5543
        %v6807 = vpop.f32.mrf.mxu0
        %v6808 = vadd.f32 0.0, %v6807
        %v6809 = vpop.f32.mrf.mxu0
        %v6810 = vadd.f32 0.0, %v6809
        %6811 = vmatmul.bf16.gmra.mxu0 %v5546
        %v6812 = vpop.f32.mrf.mxu0
        %v6813 = vadd.f32 0.0, %v6812
        %v6814 = vpop.f32.mrf.mxu0
        %v6815 = vadd.f32 0.0, %v6814
        %6816 = vmatmul.bf16.gmra.mxu0 %v5549
        %v6817 = vpop.f32.mrf.mxu0
        %v6818 = vadd.f32 0.0, %v6817
        %v6819 = vpop.f32.mrf.mxu0
        %v6820 = vadd.f32 0.0, %v6819
        %6821 = vmatmul.bf16.gmra.mxu0 %v5552
        %v6822 = vpop.f32.mrf.mxu0
        %v6823 = vadd.f32 0.0, %v6822
        %v6824 = vpop.f32.mrf.mxu0
        %v6825 = vadd.f32 0.0, %v6824
        %6826 = vmatmul.bf16.gmra.mxu0 %v5555
        %v6827 = vpop.f32.mrf.mxu0
        %v6828 = vadd.f32 0.0, %v6827
        %v6829 = vpop.f32.mrf.mxu0
        %v6830 = vadd.f32 0.0, %v6829
        %6831 = vmatmul.bf16.gmra.mxu0 %v5558
        %v6832 = vpop.f32.mrf.mxu0
        %v6833 = vadd.f32 0.0, %v6832
        %v6834 = vpop.f32.mrf.mxu0
        %v6835 = vadd.f32 0.0, %v6834
        %6836 = vmatmul.bf16.gmra.mxu0 %v5561
        %v6837 = vpop.f32.mrf.mxu0
        %v6838 = vadd.f32 0.0, %v6837
        %v6839 = vpop.f32.mrf.mxu0
        %v6840 = vadd.f32 0.0, %v6839
        %6841 = vmatmul.bf16.gmra.mxu0 %v5564
        %v6842 = vpop.f32.mrf.mxu0
        %v6843 = vadd.f32 0.0, %v6842
        %v6844 = vpop.f32.mrf.mxu0
        %v6845 = vadd.f32 0.0, %v6844
        %6846 = vmatmul.bf16.gmra.mxu0 %v6313
        %v6847 = vpop.f32.mrf.mxu0
        %v6848 = vadd.f32 0.0, %v6847
        %v6849 = vpop.f32.mrf.mxu0
        %v6850 = vadd.f32 0.0, %v6849
        %6851 = vmatmul.bf16.gmra.mxu0 %v6763
        %v6852 = vpop.f32.mrf.mxu0
        %v6853 = vadd.f32 0.0, %v6852
        %v6854 = vpop.f32.mrf.mxu0
        %v6855 = vadd.f32 0.0, %v6854
        %6856 = vdwg.mxu0
        %v6857 = vadd.f32 %v6713, %v6778
        %v6858 = vadd.f32 %v6714, %v6780
        %v6859 = vadd.f32 %v6715, %v6783
        %v6860 = vadd.f32 %v6716, %v6785
        %v6861 = vadd.f32 %v6717, %v6788
        %v6862 = vadd.f32 %v6718, %v6790
        %v6863 = vadd.f32 %v6719, %v6793
        %v6864 = vadd.f32 %v6720, %v6795
        %v6865 = vadd.f32 %v6721, %v6798
        %v6866 = vadd.f32 %v6722, %v6800
        %v6867 = vadd.f32 %v6723, %v6803
        %v6868 = vadd.f32 %v6724, %v6805
        %v6869 = vadd.f32 %v6725, %v6808
        %v6870 = vadd.f32 %v6726, %v6810
        %v6871 = vadd.f32 %v6727, %v6813
        %v6872 = vadd.f32 %v6728, %v6815
        %v6873 = vadd.f32 %v6729, %v6818
        %v6874 = vadd.f32 %v6730, %v6820
        %v6875 = vadd.f32 %v6731, %v6823
        %v6876 = vadd.f32 %v6732, %v6825
        %v6877 = vadd.f32 %v6733, %v6828
        %v6878 = vadd.f32 %v6734, %v6830
        %v6879 = vadd.f32 %v6735, %v6833
        %v6880 = vadd.f32 %v6736, %v6835
        %v6881 = vadd.f32 %v6737, %v6838
        %v6882 = vadd.f32 %v6738, %v6840
        %v6883 = vadd.f32 %v6739, %v6843
        %v6884 = vadd.f32 %v6740, %v6845
        %v6885 = vadd.f32 %v6741, %v6848
        %v6886 = vadd.f32 %v6742, %v6850
        %v6887 = vadd.f32 %v6743, %v6853
        %v6888 = vadd.f32 %v6744, %v6855
        %v6890 = vrot.slane %v5303, 1
        %v6891 = vrot.slane %v5304, 1
        %v6892 = vsel %vm1727, %v6890, %v6891
        %v6893 = vrot.slane %v5305, 1
        %v6894 = vsel %vm1727, %v6891, %v6893
        %v6897 = vpack.c.bf16 %v6894, %v6892
        %s6898 = scalar_lea.vmem %s5, 128
        %v6899 = vld [vmem:[%s6898] sm:$0xf]
        %v6900 = vld [vmem:[%s6898 + $0x4] sm:$0xf]
        %v6901 = vld [vmem:[%s6898 + $0x8] sm:$0xf]
        %v6902 = vld [vmem:[%s6898 + $0xc] sm:$0x3]
        %v6907 = vunpack.c.l.b16 %v6899
        %v6908 = vunpack.c.l.b16 %v6900
        %v6909 = vunpack.c.l.b16 %v6901
        %v6910 = vunpack.c.l.b16 %v6902
        %v6911 = vpack.c.b16 %v6908, %v6907
        %v6912 = vpack.c.b16 %v6910, %v6909
        %v6915 = vsel %vm637, %v6897, 0
        %v6918 = vsel %vm2030, %v6912, 0
        %6920 = vmatpush.bf16.msra.mxu0 0
        %6921 = vmatpush.bf16.msra.mxu0 0
        %6922 = vmatpush.bf16.msra.mxu0 0
        %6923 = vmatpush.bf16.msra.mxu0 0
        %6924 = vmatpush.bf16.msra.mxu0 0
        %6925 = vmatpush.bf16.msra.mxu0 0
        %6926 = vmatpush.bf16.msra.mxu0 %v6918
        %6927 = vmatpush.bf16.msra.mxu0 %v6911
        %6928 = vmatmul.bf16.gmra.mxu0 %v5976
        %v6929 = vpop.f32.mrf.mxu0
        %v6930 = vadd.f32 0.0, %v6929
        %v6931 = vpop.f32.mrf.mxu0
        %v6932 = vadd.f32 0.0, %v6931
        %6933 = vmatmul.bf16.gmra.mxu0 %v5979
        %v6934 = vpop.f32.mrf.mxu0
        %v6935 = vadd.f32 0.0, %v6934
        %v6936 = vpop.f32.mrf.mxu0
        %v6937 = vadd.f32 0.0, %v6936
        %6938 = vmatmul.bf16.gmra.mxu0 %v5982
        %v6939 = vpop.f32.mrf.mxu0
        %v6940 = vadd.f32 0.0, %v6939
        %v6941 = vpop.f32.mrf.mxu0
        %v6942 = vadd.f32 0.0, %v6941
        %6943 = vmatmul.bf16.gmra.mxu0 %v5985
        %v6944 = vpop.f32.mrf.mxu0
        %v6945 = vadd.f32 0.0, %v6944
        %v6946 = vpop.f32.mrf.mxu0
        %v6947 = vadd.f32 0.0, %v6946
        %6948 = vmatmul.bf16.gmra.mxu0 %v5988
        %v6949 = vpop.f32.mrf.mxu0
        %v6950 = vadd.f32 0.0, %v6949
        %v6951 = vpop.f32.mrf.mxu0
        %v6952 = vadd.f32 0.0, %v6951
        %6953 = vmatmul.bf16.gmra.mxu0 %v5991
        %v6954 = vpop.f32.mrf.mxu0
        %v6955 = vadd.f32 0.0, %v6954
        %v6956 = vpop.f32.mrf.mxu0
        %v6957 = vadd.f32 0.0, %v6956
        %6958 = vmatmul.bf16.gmra.mxu0 %v5994
        %v6959 = vpop.f32.mrf.mxu0
        %v6960 = vadd.f32 0.0, %v6959
        %v6961 = vpop.f32.mrf.mxu0
        %v6962 = vadd.f32 0.0, %v6961
        %6963 = vmatmul.bf16.gmra.mxu0 %v5997
        %v6964 = vpop.f32.mrf.mxu0
        %v6965 = vadd.f32 0.0, %v6964
        %v6966 = vpop.f32.mrf.mxu0
        %v6967 = vadd.f32 0.0, %v6966
        %6968 = vmatmul.bf16.gmra.mxu0 %v6000
        %v6969 = vpop.f32.mrf.mxu0
        %v6970 = vadd.f32 0.0, %v6969
        %v6971 = vpop.f32.mrf.mxu0
        %v6972 = vadd.f32 0.0, %v6971
        %6973 = vmatmul.bf16.gmra.mxu0 %v6003
        %v6974 = vpop.f32.mrf.mxu0
        %v6975 = vadd.f32 0.0, %v6974
        %v6976 = vpop.f32.mrf.mxu0
        %v6977 = vadd.f32 0.0, %v6976
        %6978 = vmatmul.bf16.gmra.mxu0 %v6006
        %v6979 = vpop.f32.mrf.mxu0
        %v6980 = vadd.f32 0.0, %v6979
        %v6981 = vpop.f32.mrf.mxu0
        %v6982 = vadd.f32 0.0, %v6981
        %6983 = vmatmul.bf16.gmra.mxu0 %v6009
        %v6984 = vpop.f32.mrf.mxu0
        %v6985 = vadd.f32 0.0, %v6984
        %v6986 = vpop.f32.mrf.mxu0
        %v6987 = vadd.f32 0.0, %v6986
        %6988 = vmatmul.bf16.gmra.mxu0 %v6012
        %v6989 = vpop.f32.mrf.mxu0
        %v6990 = vadd.f32 0.0, %v6989
        %v6991 = vpop.f32.mrf.mxu0
        %v6992 = vadd.f32 0.0, %v6991
        %6993 = vmatmul.bf16.gmra.mxu0 %v6015
        %v6994 = vpop.f32.mrf.mxu0
        %v6995 = vadd.f32 0.0, %v6994
        %v6996 = vpop.f32.mrf.mxu0
        %v6997 = vadd.f32 0.0, %v6996
        %6998 = vmatmul.bf16.gmra.mxu0 %v6465
        %v6999 = vpop.f32.mrf.mxu0
        %v7000 = vadd.f32 0.0, %v6999
        %v7001 = vpop.f32.mrf.mxu0
        %v7002 = vadd.f32 0.0, %v7001
        %7003 = vmatmul.bf16.gmra.mxu0 %v6915
        %v7004 = vpop.f32.mrf.mxu0
        %v7005 = vadd.f32 0.0, %v7004
        %v7006 = vpop.f32.mrf.mxu0
        %v7007 = vadd.f32 0.0, %v7006
        %7008 = vdwg.mxu0
        %v7009 = vadd.f32 %v6857, %v6930
        %v7010 = vadd.f32 %v6858, %v6932
        %v7011 = vadd.f32 %v6859, %v6935
        %v7012 = vadd.f32 %v6860, %v6937
        %v7013 = vadd.f32 %v6861, %v6940
        %v7014 = vadd.f32 %v6862, %v6942
        %v7015 = vadd.f32 %v6863, %v6945
        %v7016 = vadd.f32 %v6864, %v6947
        %v7017 = vadd.f32 %v6865, %v6950
        %v7018 = vadd.f32 %v6866, %v6952
        %v7019 = vadd.f32 %v6867, %v6955
        %v7020 = vadd.f32 %v6868, %v6957
        %v7021 = vadd.f32 %v6869, %v6960
        %v7022 = vadd.f32 %v6870, %v6962
        %v7023 = vadd.f32 %v6871, %v6965
        %v7024 = vadd.f32 %v6872, %v6967
        %v7025 = vadd.f32 %v6873, %v6970
        %v7026 = vadd.f32 %v6874, %v6972
        %v7027 = vadd.f32 %v6875, %v6975
        %v7028 = vadd.f32 %v6876, %v6977
        %v7029 = vadd.f32 %v6877, %v6980
        %v7030 = vadd.f32 %v6878, %v6982
        %v7031 = vadd.f32 %v6879, %v6985
        %v7032 = vadd.f32 %v6880, %v6987
        %v7033 = vadd.f32 %v6881, %v6990
        %v7034 = vadd.f32 %v6882, %v6992
        %v7035 = vadd.f32 %v6883, %v6995
        %v7036 = vadd.f32 %v6884, %v6997
        %v7037 = vadd.f32 %v6885, %v7000
        %v7038 = vadd.f32 %v6886, %v7002
        %v7039 = vadd.f32 %v6887, %v7005
        %v7040 = vadd.f32 %v6888, %v7007
        %v7041 = vld [vmem:[#allocation7] sm:$0x1]
        %v7043 = vperm.slane %v7041, 0
        %v7045 = vadd.f32 %v7009, %v7043
        %v7046 = vadd.f32 %v7010, %v7043
        %v7047 = vadd.f32 %v7011, %v7043
        %v7048 = vadd.f32 %v7012, %v7043
        %v7049 = vadd.f32 %v7013, %v7043
        %v7050 = vadd.f32 %v7014, %v7043
        %v7051 = vadd.f32 %v7015, %v7043
        %v7052 = vadd.f32 %v7016, %v7043
        %v7053 = vadd.f32 %v7017, %v7043
        %v7054 = vadd.f32 %v7018, %v7043
        %v7055 = vadd.f32 %v7019, %v7043
        %v7056 = vadd.f32 %v7020, %v7043
        %v7057 = vadd.f32 %v7021, %v7043
        %v7058 = vadd.f32 %v7022, %v7043
        %v7059 = vadd.f32 %v7023, %v7043
        %v7060 = vadd.f32 %v7024, %v7043
        %v7061 = vadd.f32 %v7025, %v7043
        %v7062 = vadd.f32 %v7026, %v7043
        %v7063 = vadd.f32 %v7027, %v7043
        %v7064 = vadd.f32 %v7028, %v7043
        %v7065 = vadd.f32 %v7029, %v7043
        %v7066 = vadd.f32 %v7030, %v7043
        %v7067 = vadd.f32 %v7031, %v7043
        %v7068 = vadd.f32 %v7032, %v7043
        %v7069 = vadd.f32 %v7033, %v7043
        %v7070 = vadd.f32 %v7034, %v7043
        %v7071 = vadd.f32 %v7035, %v7043
        %v7072 = vadd.f32 %v7036, %v7043
        %v7073 = vadd.f32 %v7037, %v7043
        %v7074 = vadd.f32 %v7038, %v7043
        %v7075 = vadd.f32 %v7039, %v7043
        %v7076 = vadd.f32 %v7040, %v7043
        %v7077 = vmax.f32 %v7045, 0.0
        %v7078 = vmax.f32 %v7046, 0.0
        %v7079 = vmax.f32 %v7047, 0.0
        %v7080 = vmax.f32 %v7048, 0.0
        %v7081 = vmax.f32 %v7049, 0.0
        %v7082 = vmax.f32 %v7050, 0.0
        %v7083 = vmax.f32 %v7051, 0.0
        %v7084 = vmax.f32 %v7052, 0.0
        %v7085 = vmax.f32 %v7053, 0.0
        %v7086 = vmax.f32 %v7054, 0.0
        %v7087 = vmax.f32 %v7055, 0.0
        %v7088 = vmax.f32 %v7056, 0.0
        %v7089 = vmax.f32 %v7057, 0.0
        %v7090 = vmax.f32 %v7058, 0.0
        %v7091 = vmax.f32 %v7059, 0.0
        %v7092 = vmax.f32 %v7060, 0.0
        %v7093 = vmax.f32 %v7061, 0.0
        %v7094 = vmax.f32 %v7062, 0.0
        %v7095 = vmax.f32 %v7063, 0.0
        %v7096 = vmax.f32 %v7064, 0.0
        %v7097 = vmax.f32 %v7065, 0.0
        %v7098 = vmax.f32 %v7066, 0.0
        %v7099 = vmax.f32 %v7067, 0.0
        %v7100 = vmax.f32 %v7068, 0.0
        %v7101 = vmax.f32 %v7069, 0.0
        %v7102 = vmax.f32 %v7070, 0.0
        %v7103 = vmax.f32 %v7071, 0.0
        %v7104 = vmax.f32 %v7072, 0.0
        %v7105 = vmax.f32 %v7073, 0.0
        %v7106 = vmax.f32 %v7074, 0.0
        %v7107 = vmax.f32 %v7075, 0.0
        %v7108 = vmax.f32 %v7076, 0.0
        %v7109 = vld [vmem:[%s7] sm:$0x1]
        %v7111 = vperm.slane %v7109, 0
        %v7113 = vmul.f32 %v7077, %v7111
        %v7114 = vmul.f32 %v7078, %v7111
        %v7115 = vmul.f32 %v7079, %v7111
        %v7116 = vmul.f32 %v7080, %v7111
        %v7117 = vmul.f32 %v7081, %v7111
        %v7118 = vmul.f32 %v7082, %v7111
        %v7119 = vmul.f32 %v7083, %v7111
        %v7120 = vmul.f32 %v7084, %v7111
        %v7121 = vmul.f32 %v7085, %v7111
        %v7122 = vmul.f32 %v7086, %v7111
        %v7123 = vmul.f32 %v7087, %v7111
        %v7124 = vmul.f32 %v7088, %v7111
        %v7125 = vmul.f32 %v7089, %v7111
        %v7126 = vmul.f32 %v7090, %v7111
        %v7127 = vmul.f32 %v7091, %v7111
        %v7128 = vmul.f32 %v7092, %v7111
        %v7129 = vmul.f32 %v7093, %v7111
        %v7130 = vmul.f32 %v7094, %v7111
        %v7131 = vmul.f32 %v7095, %v7111
        %v7132 = vmul.f32 %v7096, %v7111
        %v7133 = vmul.f32 %v7097, %v7111
        %v7134 = vmul.f32 %v7098, %v7111
        %v7135 = vmul.f32 %v7099, %v7111
        %v7136 = vmul.f32 %v7100, %v7111
        %v7137 = vmul.f32 %v7101, %v7111
        %v7138 = vmul.f32 %v7102, %v7111
        %v7139 = vmul.f32 %v7103, %v7111
        %v7140 = vmul.f32 %v7104, %v7111
        %v7141 = vmul.f32 %v7105, %v7111
        %v7142 = vmul.f32 %v7106, %v7111
        %v7143 = vmul.f32 %v7107, %v7111
        %v7144 = vmul.f32 %v7108, %v7111
        %v7145 = vld [vmem:[%s8] sm:$0x1]
        %v7147 = vperm.slane %v7145, 0
        %v7149 = vadd.f32 %v7113, %v7147
        %v7150 = vadd.f32 %v7114, %v7147
        %v7151 = vadd.f32 %v7115, %v7147
        %v7152 = vadd.f32 %v7116, %v7147
        %v7153 = vadd.f32 %v7117, %v7147
        %v7154 = vadd.f32 %v7118, %v7147
        %v7155 = vadd.f32 %v7119, %v7147
        %v7156 = vadd.f32 %v7120, %v7147
        %v7157 = vadd.f32 %v7121, %v7147
        %v7158 = vadd.f32 %v7122, %v7147
        %v7159 = vadd.f32 %v7123, %v7147
        %v7160 = vadd.f32 %v7124, %v7147
        %v7161 = vadd.f32 %v7125, %v7147
        %v7162 = vadd.f32 %v7126, %v7147
        %v7163 = vadd.f32 %v7127, %v7147
        %v7164 = vadd.f32 %v7128, %v7147
        %v7165 = vadd.f32 %v7129, %v7147
        %v7166 = vadd.f32 %v7130, %v7147
        %v7167 = vadd.f32 %v7131, %v7147
        %v7168 = vadd.f32 %v7132, %v7147
        %v7169 = vadd.f32 %v7133, %v7147
        %v7170 = vadd.f32 %v7134, %v7147
        %v7171 = vadd.f32 %v7135, %v7147
        %v7172 = vadd.f32 %v7136, %v7147
        %v7173 = vadd.f32 %v7137, %v7147
        %v7174 = vadd.f32 %v7138, %v7147
        %v7175 = vadd.f32 %v7139, %v7147
        %v7176 = vadd.f32 %v7140, %v7147
        %v7177 = vadd.f32 %v7141, %v7147
        %v7178 = vadd.f32 %v7142, %v7147
        %v7179 = vadd.f32 %v7143, %v7147
        %v7180 = vadd.f32 %v7144, %v7147
        %7181 = vst.msk [vmem:[%s5201 + $0x8] sm:$0xff] %vm637, %v7149
        %7182 = vst.msk [vmem:[%s5201 + $0x10] sm:$0xff] %vm637, %v7150
        %7183 = vst.msk [vmem:[%s5201 + $0x28] sm:$0xff] %vm637, %v7151
        %7184 = vst.msk [vmem:[%s5201 + $0x30] sm:$0xff] %vm637, %v7152
        %7185 = vst.msk [vmem:[%s5201 + $0x48] sm:$0xff] %vm637, %v7153
        %7186 = vst.msk [vmem:[%s5201 + $0x50] sm:$0xff] %vm637, %v7154
        %7187 = vst.msk [vmem:[%s5201 + $0x68] sm:$0xff] %vm637, %v7155
        %7188 = vst.msk [vmem:[%s5201 + $0x70] sm:$0xff] %vm637, %v7156
        %7189 = vst.msk [vmem:[%s5201 + $0x88] sm:$0xff] %vm637, %v7157
        %7190 = vst.msk [vmem:[%s5201 + $0x90] sm:$0xff] %vm637, %v7158
        %7191 = vst.msk [vmem:[%s5201 + $0xa8] sm:$0xff] %vm637, %v7159
        %7192 = vst.msk [vmem:[%s5201 + $0xb0] sm:$0xff] %vm637, %v7160
        %7193 = vst.msk [vmem:[%s5201 + $0xc8] sm:$0xff] %vm637, %v7161
        %7194 = vst.msk [vmem:[%s5201 + $0xd0] sm:$0xff] %vm637, %v7162
        %7195 = vst.msk [vmem:[%s5201 + $0xe8] sm:$0xff] %vm637, %v7163
        %7196 = vst.msk [vmem:[%s5201 + $0xf0] sm:$0xff] %vm637, %v7164
        %7197 = vst.msk [vmem:[%s5201 + $0x108] sm:$0xff] %vm637, %v7165
        %7198 = vst.msk [vmem:[%s5201 + $0x110] sm:$0xff] %vm637, %v7166
        %7199 = vst.msk [vmem:[%s5201 + $0x128] sm:$0xff] %vm637, %v7167
        %7200 = vst.msk [vmem:[%s5201 + $0x130] sm:$0xff] %vm637, %v7168
        %7201 = vst.msk [vmem:[%s5201 + $0x148] sm:$0xff] %vm637, %v7169
        %7202 = vst.msk [vmem:[%s5201 + $0x150] sm:$0xff] %vm637, %v7170
        %7203 = vst.msk [vmem:[%s5201 + $0x168] sm:$0xff] %vm637, %v7171
        %7204 = vst.msk [vmem:[%s5201 + $0x170] sm:$0xff] %vm637, %v7172
        %7205 = vst.msk [vmem:[%s5201 + $0x188] sm:$0xff] %vm637, %v7173
        %7206 = vst.msk [vmem:[%s5201 + $0x190] sm:$0xff] %vm637, %v7174
        %7207 = vst.msk [vmem:[%s5201 + $0x1a8] sm:$0xff] %vm637, %v7175
        %7208 = vst.msk [vmem:[%s5201 + $0x1b0] sm:$0xff] %vm637, %v7176
        %7209 = vst.msk [vmem:[%s5201 + $0x1c8] sm:$0xff] %vm637, %v7177
        %7210 = vst.msk [vmem:[%s5201 + $0x1d0] sm:$0xff] %vm637, %v7178
        %7211 = vst.msk [vmem:[%s5201 + $0x1e8] sm:$0xff] %vm637, %v7179
        %7212 = vst.msk [vmem:[%s5201 + $0x1f0] sm:$0xff] %vm637, %v7180
        %v7213 = vld [vmem:[#allocation3] sm:$0xff]
        %v7214 = vld [vmem:[#allocation3 + $0x8] sm:$0xff]
        %v7215 = vld [vmem:[#allocation3 + $0x10] sm:$0xff]
        %v7216 = vld [vmem:[#allocation3 + $0x18] sm:$0x1]
        %v7217 = vld [vmem:[#allocation3 + $0x20] sm:$0xff]
        %v7218 = vld [vmem:[#allocation3 + $0x28] sm:$0xff]
        %v7219 = vld [vmem:[#allocation3 + $0x30] sm:$0xff]
        %v7220 = vld [vmem:[#allocation3 + $0x38] sm:$0x1]
        %v7221 = vld [vmem:[#allocation3 + $0x40] sm:$0xff]
        %v7222 = vld [vmem:[#allocation3 + $0x48] sm:$0xff]
        %v7223 = vld [vmem:[#allocation3 + $0x50] sm:$0xff]
        %v7224 = vld [vmem:[#allocation3 + $0x58] sm:$0x1]
        %v7225 = vld [vmem:[#allocation3 + $0x60] sm:$0xff]
        %v7226 = vld [vmem:[#allocation3 + $0x68] sm:$0xff]
        %v7227 = vld [vmem:[#allocation3 + $0x70] sm:$0xff]
        %v7228 = vld [vmem:[#allocation3 + $0x78] sm:$0x1]
        %v7229 = vld [vmem:[#allocation3 + $0x80] sm:$0xff]
        %v7230 = vld [vmem:[#allocation3 + $0x88] sm:$0xff]
        %v7231 = vld [vmem:[#allocation3 + $0x90] sm:$0xff]
        %v7232 = vld [vmem:[#allocation3 + $0x98] sm:$0x1]
        %v7233 = vld [vmem:[#allocation3 + $0xa0] sm:$0xff]
        %v7234 = vld [vmem:[#allocation3 + $0xa8] sm:$0xff]
        %v7235 = vld [vmem:[#allocation3 + $0xb0] sm:$0xff]
        %v7236 = vld [vmem:[#allocation3 + $0xb8] sm:$0x1]
        %v7237 = vld [vmem:[#allocation3 + $0xc0] sm:$0xff]
        %v7238 = vld [vmem:[#allocation3 + $0xc8] sm:$0xff]
        %v7239 = vld [vmem:[#allocation3 + $0xd0] sm:$0xff]
        %v7240 = vld [vmem:[#allocation3 + $0xd8] sm:$0x1]
        %v7241 = vld [vmem:[#allocation3 + $0xe0] sm:$0xff]
        %v7242 = vld [vmem:[#allocation3 + $0xe8] sm:$0xff]
        %v7243 = vld [vmem:[#allocation3 + $0xf0] sm:$0xff]
        %v7244 = vld [vmem:[#allocation3 + $0xf8] sm:$0x1]
        %v7245 = vld [vmem:[#allocation3 + $0x100] sm:$0xff]
        %v7246 = vld [vmem:[#allocation3 + $0x108] sm:$0xff]
        %v7247 = vld [vmem:[#allocation3 + $0x110] sm:$0xff]
        %v7248 = vld [vmem:[#allocation3 + $0x118] sm:$0x1]
        %v7249 = vld [vmem:[#allocation3 + $0x120] sm:$0xff]
        %v7250 = vld [vmem:[#allocation3 + $0x128] sm:$0xff]
        %v7251 = vld [vmem:[#allocation3 + $0x130] sm:$0xff]
        %v7252 = vld [vmem:[#allocation3 + $0x138] sm:$0x1]
        %v7253 = vld [vmem:[#allocation3 + $0x140] sm:$0xff]
        %v7254 = vld [vmem:[#allocation3 + $0x148] sm:$0xff]
        %v7255 = vld [vmem:[#allocation3 + $0x150] sm:$0xff]
        %v7256 = vld [vmem:[#allocation3 + $0x158] sm:$0x1]
        %v7257 = vld [vmem:[#allocation3 + $0x160] sm:$0xff]
        %v7258 = vld [vmem:[#allocation3 + $0x168] sm:$0xff]
        %v7259 = vld [vmem:[#allocation3 + $0x170] sm:$0xff]
        %v7260 = vld [vmem:[#allocation3 + $0x178] sm:$0x1]
        %v7261 = vld [vmem:[#allocation3 + $0x180] sm:$0xff]
        %v7262 = vld [vmem:[#allocation3 + $0x188] sm:$0xff]
        %v7263 = vld [vmem:[#allocation3 + $0x190] sm:$0xff]
        %v7264 = vld [vmem:[#allocation3 + $0x198] sm:$0x1]
        %v7265 = vld [vmem:[#allocation3 + $0x1a0] sm:$0xff]
        %v7266 = vld [vmem:[#allocation3 + $0x1a8] sm:$0xff]
        %v7267 = vld [vmem:[#allocation3 + $0x1b0] sm:$0xff]
        %v7268 = vld [vmem:[#allocation3 + $0x1b8] sm:$0x1]
        %v7269 = vld [vmem:[#allocation3 + $0x1c0] sm:$0xff]
        %v7270 = vld [vmem:[#allocation3 + $0x1c8] sm:$0xff]
        %v7271 = vld [vmem:[#allocation3 + $0x1d0] sm:$0xff]
        %v7272 = vld [vmem:[#allocation3 + $0x1d8] sm:$0x1]
        %v7273 = vld [vmem:[#allocation3 + $0x1e0] sm:$0xff]
        %v7274 = vld [vmem:[#allocation3 + $0x1e8] sm:$0xff]
        %v7275 = vld [vmem:[#allocation3 + $0x1f0] sm:$0xff]
        %v7276 = vld [vmem:[#allocation3 + $0x1f8] sm:$0x1]
        %v7277 = vld [vmem:[#allocation3 + $0x200] sm:$0xff]
        %v7278 = vld [vmem:[#allocation3 + $0x208] sm:$0xff]
        %v7279 = vld [vmem:[#allocation3 + $0x210] sm:$0xff]
        %v7280 = vld [vmem:[#allocation3 + $0x218] sm:$0x1]
        %v7281 = vld [vmem:[#allocation3 + $0x220] sm:$0xff]
        %v7282 = vld [vmem:[#allocation3 + $0x228] sm:$0xff]
        %v7283 = vld [vmem:[#allocation3 + $0x230] sm:$0xff]
        %v7284 = vld [vmem:[#allocation3 + $0x238] sm:$0x1]
        %v7333 = vrot.slane %v7213, 7
        %v7334 = vrot.slane %v7214, 7
        %v7335 = vsel %vm1108, %v7333, %v7334
        %v7336 = vrot.slane %v7215, 7
        %v7337 = vsel %vm1108, %v7334, %v7336
        %v7338 = vrot.slane %v7217, 7
        %v7339 = vrot.slane %v7218, 7
        %v7340 = vsel %vm1108, %v7338, %v7339
        %v7341 = vrot.slane %v7219, 7
        %v7342 = vsel %vm1108, %v7339, %v7341
        %v7343 = vrot.slane %v7221, 7
        %v7344 = vrot.slane %v7222, 7
        %v7345 = vsel %vm1108, %v7343, %v7344
        %v7346 = vrot.slane %v7223, 7
        %v7347 = vsel %vm1108, %v7344, %v7346
        %v7348 = vrot.slane %v7225, 7
        %v7349 = vrot.slane %v7226, 7
        %v7350 = vsel %vm1108, %v7348, %v7349
        %v7351 = vrot.slane %v7227, 7
        %v7352 = vsel %vm1108, %v7349, %v7351
        %v7353 = vrot.slane %v7229, 7
        %v7354 = vrot.slane %v7230, 7
        %v7355 = vsel %vm1108, %v7353, %v7354
        %v7356 = vrot.slane %v7231, 7
        %v7357 = vsel %vm1108, %v7354, %v7356
        %v7358 = vrot.slane %v7233, 7
        %v7359 = vrot.slane %v7234, 7
        %v7360 = vsel %vm1108, %v7358, %v7359
        %v7361 = vrot.slane %v7235, 7
        %v7362 = vsel %vm1108, %v7359, %v7361
        %v7363 = vrot.slane %v7237, 7
        %v7364 = vrot.slane %v7238, 7
        %v7365 = vsel %vm1108, %v7363, %v7364
        %v7366 = vrot.slane %v7239, 7
        %v7367 = vsel %vm1108, %v7364, %v7366
        %v7368 = vrot.slane %v7241, 7
        %v7369 = vrot.slane %v7242, 7
        %v7370 = vsel %vm1108, %v7368, %v7369
        %v7371 = vrot.slane %v7243, 7
        %v7372 = vsel %vm1108, %v7369, %v7371
        %v7373 = vrot.slane %v7245, 7
        %v7374 = vrot.slane %v7246, 7
        %v7375 = vsel %vm1108, %v7373, %v7374
        %v7376 = vrot.slane %v7247, 7
        %v7377 = vsel %vm1108, %v7374, %v7376
        %v7378 = vrot.slane %v7249, 7
        %v7379 = vrot.slane %v7250, 7
        %v7380 = vsel %vm1108, %v7378, %v7379
        %v7381 = vrot.slane %v7251, 7
        %v7382 = vsel %vm1108, %v7379, %v7381
        %v7383 = vrot.slane %v7253, 7
        %v7384 = vrot.slane %v7254, 7
        %v7385 = vsel %vm1108, %v7383, %v7384
        %v7386 = vrot.slane %v7255, 7
        %v7387 = vsel %vm1108, %v7384, %v7386
        %v7388 = vrot.slane %v7257, 7
        %v7389 = vrot.slane %v7258, 7
        %v7390 = vsel %vm1108, %v7388, %v7389
        %v7391 = vrot.slane %v7259, 7
        %v7392 = vsel %vm1108, %v7389, %v7391
        %v7393 = vrot.slane %v7261, 7
        %v7394 = vrot.slane %v7262, 7
        %v7395 = vsel %vm1108, %v7393, %v7394
        %v7396 = vrot.slane %v7263, 7
        %v7397 = vsel %vm1108, %v7394, %v7396
        %v7398 = vrot.slane %v7265, 7
        %v7399 = vrot.slane %v7266, 7
        %v7400 = vsel %vm1108, %v7398, %v7399
        %v7401 = vrot.slane %v7267, 7
        %v7402 = vsel %vm1108, %v7399, %v7401
        %v7403 = vrot.slane %v7269, 7
        %v7404 = vrot.slane %v7270, 7
        %v7405 = vsel %vm1108, %v7403, %v7404
        %v7406 = vrot.slane %v7271, 7
        %v7407 = vsel %vm1108, %v7404, %v7406
        %v7408 = vrot.slane %v7273, 7
        %v7409 = vrot.slane %v7274, 7
        %v7410 = vsel %vm1108, %v7408, %v7409
        %v7411 = vrot.slane %v7275, 7
        %v7412 = vsel %vm1108, %v7409, %v7411
        %v7445 = vpack.c.bf16 %v7337, %v7335
        %v7446 = vpack.c.bf16 %v7342, %v7340
        %v7447 = vpack.c.bf16 %v7347, %v7345
        %v7448 = vpack.c.bf16 %v7352, %v7350
        %v7449 = vpack.c.bf16 %v7357, %v7355
        %v7450 = vpack.c.bf16 %v7362, %v7360
        %v7451 = vpack.c.bf16 %v7367, %v7365
        %v7452 = vpack.c.bf16 %v7372, %v7370
        %v7453 = vpack.c.bf16 %v7377, %v7375
        %v7454 = vpack.c.bf16 %v7382, %v7380
        %v7455 = vpack.c.bf16 %v7387, %v7385
        %v7456 = vpack.c.bf16 %v7392, %v7390
        %v7457 = vpack.c.bf16 %v7397, %v7395
        %v7458 = vpack.c.bf16 %v7402, %v7400
        %v7459 = vpack.c.bf16 %v7407, %v7405
        %v7460 = vpack.c.bf16 %v7412, %v7410
        %v7461 = vld [vmem:[%s9] sm:$0xf]
        %v7462 = vld [vmem:[%s9 + $0x4] sm:$0xf]
        %v7463 = vld [vmem:[%s9 + $0x8] sm:$0xf]
        %v7464 = vld [vmem:[%s9 + $0xc] sm:$0x3]
        %v7465 = vpack.c.bf16 %v7215, %v7214
        %v7466 = vpack.c.bf16 %v7219, %v7218
        %v7467 = vpack.c.bf16 %v7223, %v7222
        %v7468 = vpack.c.bf16 %v7227, %v7226
        %v7469 = vpack.c.bf16 %v7231, %v7230
        %v7470 = vpack.c.bf16 %v7235, %v7234
        %v7471 = vpack.c.bf16 %v7239, %v7238
        %v7472 = vpack.c.bf16 %v7243, %v7242
        %v7473 = vpack.c.bf16 %v7247, %v7246
        %v7474 = vpack.c.bf16 %v7251, %v7250
        %v7475 = vpack.c.bf16 %v7255, %v7254
        %v7476 = vpack.c.bf16 %v7259, %v7258
        %v7477 = vpack.c.bf16 %v7263, %v7262
        %v7478 = vpack.c.bf16 %v7267, %v7266
        %v7479 = vpack.c.bf16 %v7271, %v7270
        %v7480 = vpack.c.bf16 %v7275, %v7274
        %s7481 = scalar_lea.vmem %s9, 16
        %v7482 = vld [vmem:[%s7481] sm:$0xf]
        %v7483 = vld [vmem:[%s7481 + $0x4] sm:$0xf]
        %v7484 = vld [vmem:[%s7481 + $0x8] sm:$0xf]
        %v7485 = vld [vmem:[%s7481 + $0xc] sm:$0x3]
        %v7490 = vunpack.c.l.b16 %v7482
        %v7491 = vunpack.c.l.b16 %v7483
        %v7492 = vunpack.c.l.b16 %v7484
        %v7493 = vunpack.c.l.b16 %v7485
        %v7494 = vpack.c.b16 %v7491, %v7490
        %v7495 = vpack.c.b16 %v7493, %v7492
        %v7498 = vsel %vm637, %v7465, 0
        %v7501 = vsel %vm637, %v7466, 0
        %v7504 = vsel %vm637, %v7467, 0
        %v7507 = vsel %vm637, %v7468, 0
        %v7510 = vsel %vm637, %v7469, 0
        %v7513 = vsel %vm637, %v7470, 0
        %v7516 = vsel %vm637, %v7471, 0
        %v7519 = vsel %vm637, %v7472, 0
        %v7522 = vsel %vm637, %v7473, 0
        %v7525 = vsel %vm637, %v7474, 0
        %v7528 = vsel %vm637, %v7475, 0
        %v7531 = vsel %vm637, %v7476, 0
        %v7534 = vsel %vm637, %v7477, 0
        %v7537 = vsel %vm637, %v7478, 0
        %v7540 = vsel %vm637, %v7479, 0
        %v7543 = vsel %vm637, %v7480, 0
        %v7546 = vsel %vm2030, %v7495, 0
        %7548 = vmatpush.bf16.msra.mxu0 0
        %7549 = vmatpush.bf16.msra.mxu0 0
        %7550 = vmatpush.bf16.msra.mxu0 0
        %7551 = vmatpush.bf16.msra.mxu0 0
        %7552 = vmatpush.bf16.msra.mxu0 0
        %7553 = vmatpush.bf16.msra.mxu0 0
        %7554 = vmatpush.bf16.msra.mxu0 %v7546
        %7555 = vmatpush.bf16.msra.mxu0 %v7494
        %7556 = vmatmul.bf16.gmra.mxu0 %v7498
        %v7557 = vpop.f32.mrf.mxu0
        %v7558 = vadd.f32 0.0, %v7557
        %v7559 = vpop.f32.mrf.mxu0
        %v7560 = vadd.f32 0.0, %v7559
        %7561 = vmatmul.bf16.gmra.mxu0 %v7501
        %v7562 = vpop.f32.mrf.mxu0
        %v7563 = vadd.f32 0.0, %v7562
        %v7564 = vpop.f32.mrf.mxu0
        %v7565 = vadd.f32 0.0, %v7564
        %7566 = vmatmul.bf16.gmra.mxu0 %v7504
        %v7567 = vpop.f32.mrf.mxu0
        %v7568 = vadd.f32 0.0, %v7567
        %v7569 = vpop.f32.mrf.mxu0
        %v7570 = vadd.f32 0.0, %v7569
        %7571 = vmatmul.bf16.gmra.mxu0 %v7507
        %v7572 = vpop.f32.mrf.mxu0
        %v7573 = vadd.f32 0.0, %v7572
        %v7574 = vpop.f32.mrf.mxu0
        %v7575 = vadd.f32 0.0, %v7574
        %7576 = vmatmul.bf16.gmra.mxu0 %v7510
        %v7577 = vpop.f32.mrf.mxu0
        %v7578 = vadd.f32 0.0, %v7577
        %v7579 = vpop.f32.mrf.mxu0
        %v7580 = vadd.f32 0.0, %v7579
        %7581 = vmatmul.bf16.gmra.mxu0 %v7513
        %v7582 = vpop.f32.mrf.mxu0
        %v7583 = vadd.f32 0.0, %v7582
        %v7584 = vpop.f32.mrf.mxu0
        %v7585 = vadd.f32 0.0, %v7584
        %7586 = vmatmul.bf16.gmra.mxu0 %v7516
        %v7587 = vpop.f32.mrf.mxu0
        %v7588 = vadd.f32 0.0, %v7587
        %v7589 = vpop.f32.mrf.mxu0
        %v7590 = vadd.f32 0.0, %v7589
        %7591 = vmatmul.bf16.gmra.mxu0 %v7519
        %v7592 = vpop.f32.mrf.mxu0
        %v7593 = vadd.f32 0.0, %v7592
        %v7594 = vpop.f32.mrf.mxu0
        %v7595 = vadd.f32 0.0, %v7594
        %7596 = vmatmul.bf16.gmra.mxu0 %v7522
        %v7597 = vpop.f32.mrf.mxu0
        %v7598 = vadd.f32 0.0, %v7597
        %v7599 = vpop.f32.mrf.mxu0
        %v7600 = vadd.f32 0.0, %v7599
        %7601 = vmatmul.bf16.gmra.mxu0 %v7525
        %v7602 = vpop.f32.mrf.mxu0
        %v7603 = vadd.f32 0.0, %v7602
        %v7604 = vpop.f32.mrf.mxu0
        %v7605 = vadd.f32 0.0, %v7604
        %7606 = vmatmul.bf16.gmra.mxu0 %v7528
        %v7607 = vpop.f32.mrf.mxu0
        %v7608 = vadd.f32 0.0, %v7607
        %v7609 = vpop.f32.mrf.mxu0
        %v7610 = vadd.f32 0.0, %v7609
        %7611 = vmatmul.bf16.gmra.mxu0 %v7531
        %v7612 = vpop.f32.mrf.mxu0
        %v7613 = vadd.f32 0.0, %v7612
        %v7614 = vpop.f32.mrf.mxu0
        %v7615 = vadd.f32 0.0, %v7614
        %7616 = vmatmul.bf16.gmra.mxu0 %v7534
        %v7617 = vpop.f32.mrf.mxu0
        %v7618 = vadd.f32 0.0, %v7617
        %v7619 = vpop.f32.mrf.mxu0
        %v7620 = vadd.f32 0.0, %v7619
        %7621 = vmatmul.bf16.gmra.mxu0 %v7537
        %v7622 = vpop.f32.mrf.mxu0
        %v7623 = vadd.f32 0.0, %v7622
        %v7624 = vpop.f32.mrf.mxu0
        %v7625 = vadd.f32 0.0, %v7624
        %7626 = vmatmul.bf16.gmra.mxu0 %v7540
        %v7627 = vpop.f32.mrf.mxu0
        %v7628 = vadd.f32 0.0, %v7627
        %v7629 = vpop.f32.mrf.mxu0
        %v7630 = vadd.f32 0.0, %v7629
        %7631 = vmatmul.bf16.gmra.mxu0 %v7543
        %v7632 = vpop.f32.mrf.mxu0
        %v7633 = vadd.f32 0.0, %v7632
        %v7634 = vpop.f32.mrf.mxu0
        %v7635 = vadd.f32 0.0, %v7634
        %7636 = vdwg.mxu0
        %v7641 = vunpack.c.l.b16 %v7461
        %v7642 = vunpack.c.l.b16 %v7462
        %v7643 = vunpack.c.l.b16 %v7463
        %v7644 = vunpack.c.l.b16 %v7464
        %v7645 = vpack.c.b16 %v7642, %v7641
        %v7646 = vpack.c.b16 %v7644, %v7643
        %v7649 = vsel %vm637, %v7445, 0
        %v7652 = vsel %vm637, %v7446, 0
        %v7655 = vsel %vm637, %v7447, 0
        %v7658 = vsel %vm637, %v7448, 0
        %v7661 = vsel %vm637, %v7449, 0
        %v7664 = vsel %vm637, %v7450, 0
        %v7667 = vsel %vm637, %v7451, 0
        %v7670 = vsel %vm637, %v7452, 0
        %v7673 = vsel %vm637, %v7453, 0
        %v7676 = vsel %vm637, %v7454, 0
        %v7679 = vsel %vm637, %v7455, 0
        %v7682 = vsel %vm637, %v7456, 0
        %v7685 = vsel %vm637, %v7457, 0
        %v7688 = vsel %vm637, %v7458, 0
        %v7691 = vsel %vm637, %v7459, 0
        %v7694 = vsel %vm637, %v7460, 0
        %v7697 = vsel %vm2030, %v7646, 0
        %7699 = vmatpush.bf16.msra.mxu0 0
        %7700 = vmatpush.bf16.msra.mxu0 0
        %7701 = vmatpush.bf16.msra.mxu0 0
        %7702 = vmatpush.bf16.msra.mxu0 0
        %7703 = vmatpush.bf16.msra.mxu0 0
        %7704 = vmatpush.bf16.msra.mxu0 0
        %7705 = vmatpush.bf16.msra.mxu0 %v7697
        %7706 = vmatpush.bf16.msra.mxu0 %v7645
        %7707 = vmatmul.bf16.gmra.mxu0 %v7649
        %v7708 = vpop.f32.mrf.mxu0
        %v7709 = vadd.f32 %v7558, %v7708
        %v7710 = vpop.f32.mrf.mxu0
        %v7711 = vadd.f32 %v7560, %v7710
        %7712 = vmatmul.bf16.gmra.mxu0 %v7652
        %v7713 = vpop.f32.mrf.mxu0
        %v7714 = vadd.f32 %v7563, %v7713
        %v7715 = vpop.f32.mrf.mxu0
        %v7716 = vadd.f32 %v7565, %v7715
        %7717 = vmatmul.bf16.gmra.mxu0 %v7655
        %v7718 = vpop.f32.mrf.mxu0
        %v7719 = vadd.f32 %v7568, %v7718
        %v7720 = vpop.f32.mrf.mxu0
        %v7721 = vadd.f32 %v7570, %v7720
        %7722 = vmatmul.bf16.gmra.mxu0 %v7658
        %v7723 = vpop.f32.mrf.mxu0
        %v7724 = vadd.f32 %v7573, %v7723
        %v7725 = vpop.f32.mrf.mxu0
        %v7726 = vadd.f32 %v7575, %v7725
        %7727 = vmatmul.bf16.gmra.mxu0 %v7661
        %v7728 = vpop.f32.mrf.mxu0
        %v7729 = vadd.f32 %v7578, %v7728
        %v7730 = vpop.f32.mrf.mxu0
        %v7731 = vadd.f32 %v7580, %v7730
        %7732 = vmatmul.bf16.gmra.mxu0 %v7664
        %v7733 = vpop.f32.mrf.mxu0
        %v7734 = vadd.f32 %v7583, %v7733
        %v7735 = vpop.f32.mrf.mxu0
        %v7736 = vadd.f32 %v7585, %v7735
        %7737 = vmatmul.bf16.gmra.mxu0 %v7667
        %v7738 = vpop.f32.mrf.mxu0
        %v7739 = vadd.f32 %v7588, %v7738
        %v7740 = vpop.f32.mrf.mxu0
        %v7741 = vadd.f32 %v7590, %v7740
        %7742 = vmatmul.bf16.gmra.mxu0 %v7670
        %v7743 = vpop.f32.mrf.mxu0
        %v7744 = vadd.f32 %v7593, %v7743
        %v7745 = vpop.f32.mrf.mxu0
        %v7746 = vadd.f32 %v7595, %v7745
        %7747 = vmatmul.bf16.gmra.mxu0 %v7673
        %v7748 = vpop.f32.mrf.mxu0
        %v7749 = vadd.f32 %v7598, %v7748
        %v7750 = vpop.f32.mrf.mxu0
        %v7751 = vadd.f32 %v7600, %v7750
        %7752 = vmatmul.bf16.gmra.mxu0 %v7676
        %v7753 = vpop.f32.mrf.mxu0
        %v7754 = vadd.f32 %v7603, %v7753
        %v7755 = vpop.f32.mrf.mxu0
        %v7756 = vadd.f32 %v7605, %v7755
        %7757 = vmatmul.bf16.gmra.mxu0 %v7679
        %v7758 = vpop.f32.mrf.mxu0
        %v7759 = vadd.f32 %v7608, %v7758
        %v7760 = vpop.f32.mrf.mxu0
        %v7761 = vadd.f32 %v7610, %v7760
        %7762 = vmatmul.bf16.gmra.mxu0 %v7682
        %v7763 = vpop.f32.mrf.mxu0
        %v7764 = vadd.f32 %v7613, %v7763
        %v7765 = vpop.f32.mrf.mxu0
        %v7766 = vadd.f32 %v7615, %v7765
        %7767 = vmatmul.bf16.gmra.mxu0 %v7685
        %v7768 = vpop.f32.mrf.mxu0
        %v7769 = vadd.f32 %v7618, %v7768
        %v7770 = vpop.f32.mrf.mxu0
        %v7771 = vadd.f32 %v7620, %v7770
        %7772 = vmatmul.bf16.gmra.mxu0 %v7688
        %v7773 = vpop.f32.mrf.mxu0
        %v7774 = vadd.f32 %v7623, %v7773
        %v7775 = vpop.f32.mrf.mxu0
        %v7776 = vadd.f32 %v7625, %v7775
        %7777 = vmatmul.bf16.gmra.mxu0 %v7691
        %v7778 = vpop.f32.mrf.mxu0
        %v7779 = vadd.f32 %v7628, %v7778
        %v7780 = vpop.f32.mrf.mxu0
        %v7781 = vadd.f32 %v7630, %v7780
        %7782 = vmatmul.bf16.gmra.mxu0 %v7694
        %v7783 = vpop.f32.mrf.mxu0
        %v7784 = vadd.f32 %v7633, %v7783
        %v7785 = vpop.f32.mrf.mxu0
        %v7786 = vadd.f32 %v7635, %v7785
        %7787 = vdwg.mxu0
        %v7804 = vrot.slane %v7214, 1
        %v7805 = vrot.slane %v7215, 1
        %v7806 = vsel %vm1727, %v7804, %v7805
        %v7807 = vrot.slane %v7216, 1
        %v7808 = vsel %vm1727, %v7805, %v7807
        %v7809 = vrot.slane %v7218, 1
        %v7810 = vrot.slane %v7219, 1
        %v7811 = vsel %vm1727, %v7809, %v7810
        %v7812 = vrot.slane %v7220, 1
        %v7813 = vsel %vm1727, %v7810, %v7812
        %v7814 = vrot.slane %v7222, 1
        %v7815 = vrot.slane %v7223, 1
        %v7816 = vsel %vm1727, %v7814, %v7815
        %v7817 = vrot.slane %v7224, 1
        %v7818 = vsel %vm1727, %v7815, %v7817
        %v7819 = vrot.slane %v7226, 1
        %v7820 = vrot.slane %v7227, 1
        %v7821 = vsel %vm1727, %v7819, %v7820
        %v7822 = vrot.slane %v7228, 1
        %v7823 = vsel %vm1727, %v7820, %v7822
        %v7824 = vrot.slane %v7230, 1
        %v7825 = vrot.slane %v7231, 1
        %v7826 = vsel %vm1727, %v7824, %v7825
        %v7827 = vrot.slane %v7232, 1
        %v7828 = vsel %vm1727, %v7825, %v7827
        %v7829 = vrot.slane %v7234, 1
        %v7830 = vrot.slane %v7235, 1
        %v7831 = vsel %vm1727, %v7829, %v7830
        %v7832 = vrot.slane %v7236, 1
        %v7833 = vsel %vm1727, %v7830, %v7832
        %v7834 = vrot.slane %v7238, 1
        %v7835 = vrot.slane %v7239, 1
        %v7836 = vsel %vm1727, %v7834, %v7835
        %v7837 = vrot.slane %v7240, 1
        %v7838 = vsel %vm1727, %v7835, %v7837
        %v7839 = vrot.slane %v7242, 1
        %v7840 = vrot.slane %v7243, 1
        %v7841 = vsel %vm1727, %v7839, %v7840
        %v7842 = vrot.slane %v7244, 1
        %v7843 = vsel %vm1727, %v7840, %v7842
        %v7844 = vrot.slane %v7246, 1
        %v7845 = vrot.slane %v7247, 1
        %v7846 = vsel %vm1727, %v7844, %v7845
        %v7847 = vrot.slane %v7248, 1
        %v7848 = vsel %vm1727, %v7845, %v7847
        %v7849 = vrot.slane %v7250, 1
        %v7850 = vrot.slane %v7251, 1
        %v7851 = vsel %vm1727, %v7849, %v7850
        %v7852 = vrot.slane %v7252, 1
        %v7853 = vsel %vm1727, %v7850, %v7852
        %v7854 = vrot.slane %v7254, 1
        %v7855 = vrot.slane %v7255, 1
        %v7856 = vsel %vm1727, %v7854, %v7855
        %v7857 = vrot.slane %v7256, 1
        %v7858 = vsel %vm1727, %v7855, %v7857
        %v7859 = vrot.slane %v7258, 1
        %v7860 = vrot.slane %v7259, 1
        %v7861 = vsel %vm1727, %v7859, %v7860
        %v7862 = vrot.slane %v7260, 1
        %v7863 = vsel %vm1727, %v7860, %v7862
        %v7864 = vrot.slane %v7262, 1
        %v7865 = vrot.slane %v7263, 1
        %v7866 = vsel %vm1727, %v7864, %v7865
        %v7867 = vrot.slane %v7264, 1
        %v7868 = vsel %vm1727, %v7865, %v7867
        %v7869 = vrot.slane %v7266, 1
        %v7870 = vrot.slane %v7267, 1
        %v7871 = vsel %vm1727, %v7869, %v7870
        %v7872 = vrot.slane %v7268, 1
        %v7873 = vsel %vm1727, %v7870, %v7872
        %v7874 = vrot.slane %v7270, 1
        %v7875 = vrot.slane %v7271, 1
        %v7876 = vsel %vm1727, %v7874, %v7875
        %v7877 = vrot.slane %v7272, 1
        %v7878 = vsel %vm1727, %v7875, %v7877
        %v7879 = vrot.slane %v7274, 1
        %v7880 = vrot.slane %v7275, 1
        %v7881 = vsel %vm1727, %v7879, %v7880
        %v7882 = vrot.slane %v7276, 1
        %v7883 = vsel %vm1727, %v7880, %v7882
        %v7916 = vpack.c.bf16 %v7808, %v7806
        %v7917 = vpack.c.bf16 %v7813, %v7811
        %v7918 = vpack.c.bf16 %v7818, %v7816
        %v7919 = vpack.c.bf16 %v7823, %v7821
        %v7920 = vpack.c.bf16 %v7828, %v7826
        %v7921 = vpack.c.bf16 %v7833, %v7831
        %v7922 = vpack.c.bf16 %v7838, %v7836
        %v7923 = vpack.c.bf16 %v7843, %v7841
        %v7924 = vpack.c.bf16 %v7848, %v7846
        %v7925 = vpack.c.bf16 %v7853, %v7851
        %v7926 = vpack.c.bf16 %v7858, %v7856
        %v7927 = vpack.c.bf16 %v7863, %v7861
        %v7928 = vpack.c.bf16 %v7868, %v7866
        %v7929 = vpack.c.bf16 %v7873, %v7871
        %v7930 = vpack.c.bf16 %v7878, %v7876
        %v7931 = vpack.c.bf16 %v7883, %v7881
        %s7932 = scalar_lea.vmem %s9, 32
        %v7933 = vld [vmem:[%s7932] sm:$0xf]
        %v7934 = vld [vmem:[%s7932 + $0x4] sm:$0xf]
        %v7935 = vld [vmem:[%s7932 + $0x8] sm:$0xf]
        %v7936 = vld [vmem:[%s7932 + $0xc] sm:$0x3]
        %v7941 = vunpack.c.l.b16 %v7933
        %v7942 = vunpack.c.l.b16 %v7934
        %v7943 = vunpack.c.l.b16 %v7935
        %v7944 = vunpack.c.l.b16 %v7936
        %v7945 = vpack.c.b16 %v7942, %v7941
        %v7946 = vpack.c.b16 %v7944, %v7943
        %v7949 = vsel %vm637, %v7916, 0
        %v7952 = vsel %vm637, %v7917, 0
        %v7955 = vsel %vm637, %v7918, 0
        %v7958 = vsel %vm637, %v7919, 0
        %v7961 = vsel %vm637, %v7920, 0
        %v7964 = vsel %vm637, %v7921, 0
        %v7967 = vsel %vm637, %v7922, 0
        %v7970 = vsel %vm637, %v7923, 0
        %v7973 = vsel %vm637, %v7924, 0
        %v7976 = vsel %vm637, %v7925, 0
        %v7979 = vsel %vm637, %v7926, 0
        %v7982 = vsel %vm637, %v7927, 0
        %v7985 = vsel %vm637, %v7928, 0
        %v7988 = vsel %vm637, %v7929, 0
        %v7991 = vsel %vm637, %v7930, 0
        %v7994 = vsel %vm637, %v7931, 0
        %v7997 = vsel %vm2030, %v7946, 0
        %7999 = vmatpush.bf16.msra.mxu0 0
        %8000 = vmatpush.bf16.msra.mxu0 0
        %8001 = vmatpush.bf16.msra.mxu0 0
        %8002 = vmatpush.bf16.msra.mxu0 0
        %8003 = vmatpush.bf16.msra.mxu0 0
        %8004 = vmatpush.bf16.msra.mxu0 0
        %8005 = vmatpush.bf16.msra.mxu0 %v7997
        %8006 = vmatpush.bf16.msra.mxu0 %v7945
        %8007 = vmatmul.bf16.gmra.mxu0 %v7949
        %v8008 = vpop.f32.mrf.mxu0
        %v8009 = vadd.f32 0.0, %v8008
        %v8010 = vpop.f32.mrf.mxu0
        %v8011 = vadd.f32 0.0, %v8010
        %8012 = vmatmul.bf16.gmra.mxu0 %v7952
        %v8013 = vpop.f32.mrf.mxu0
        %v8014 = vadd.f32 0.0, %v8013
        %v8015 = vpop.f32.mrf.mxu0
        %v8016 = vadd.f32 0.0, %v8015
        %8017 = vmatmul.bf16.gmra.mxu0 %v7955
        %v8018 = vpop.f32.mrf.mxu0
        %v8019 = vadd.f32 0.0, %v8018
        %v8020 = vpop.f32.mrf.mxu0
        %v8021 = vadd.f32 0.0, %v8020
        %8022 = vmatmul.bf16.gmra.mxu0 %v7958
        %v8023 = vpop.f32.mrf.mxu0
        %v8024 = vadd.f32 0.0, %v8023
        %v8025 = vpop.f32.mrf.mxu0
        %v8026 = vadd.f32 0.0, %v8025
        %8027 = vmatmul.bf16.gmra.mxu0 %v7961
        %v8028 = vpop.f32.mrf.mxu0
        %v8029 = vadd.f32 0.0, %v8028
        %v8030 = vpop.f32.mrf.mxu0
        %v8031 = vadd.f32 0.0, %v8030
        %8032 = vmatmul.bf16.gmra.mxu0 %v7964
        %v8033 = vpop.f32.mrf.mxu0
        %v8034 = vadd.f32 0.0, %v8033
        %v8035 = vpop.f32.mrf.mxu0
        %v8036 = vadd.f32 0.0, %v8035
        %8037 = vmatmul.bf16.gmra.mxu0 %v7967
        %v8038 = vpop.f32.mrf.mxu0
        %v8039 = vadd.f32 0.0, %v8038
        %v8040 = vpop.f32.mrf.mxu0
        %v8041 = vadd.f32 0.0, %v8040
        %8042 = vmatmul.bf16.gmra.mxu0 %v7970
        %v8043 = vpop.f32.mrf.mxu0
        %v8044 = vadd.f32 0.0, %v8043
        %v8045 = vpop.f32.mrf.mxu0
        %v8046 = vadd.f32 0.0, %v8045
        %8047 = vmatmul.bf16.gmra.mxu0 %v7973
        %v8048 = vpop.f32.mrf.mxu0
        %v8049 = vadd.f32 0.0, %v8048
        %v8050 = vpop.f32.mrf.mxu0
        %v8051 = vadd.f32 0.0, %v8050
        %8052 = vmatmul.bf16.gmra.mxu0 %v7976
        %v8053 = vpop.f32.mrf.mxu0
        %v8054 = vadd.f32 0.0, %v8053
        %v8055 = vpop.f32.mrf.mxu0
        %v8056 = vadd.f32 0.0, %v8055
        %8057 = vmatmul.bf16.gmra.mxu0 %v7979
        %v8058 = vpop.f32.mrf.mxu0
        %v8059 = vadd.f32 0.0, %v8058
        %v8060 = vpop.f32.mrf.mxu0
        %v8061 = vadd.f32 0.0, %v8060
        %8062 = vmatmul.bf16.gmra.mxu0 %v7982
        %v8063 = vpop.f32.mrf.mxu0
        %v8064 = vadd.f32 0.0, %v8063
        %v8065 = vpop.f32.mrf.mxu0
        %v8066 = vadd.f32 0.0, %v8065
        %8067 = vmatmul.bf16.gmra.mxu0 %v7985
        %v8068 = vpop.f32.mrf.mxu0
        %v8069 = vadd.f32 0.0, %v8068
        %v8070 = vpop.f32.mrf.mxu0
        %v8071 = vadd.f32 0.0, %v8070
        %8072 = vmatmul.bf16.gmra.mxu0 %v7988
        %v8073 = vpop.f32.mrf.mxu0
        %v8074 = vadd.f32 0.0, %v8073
        %v8075 = vpop.f32.mrf.mxu0
        %v8076 = vadd.f32 0.0, %v8075
        %8077 = vmatmul.bf16.gmra.mxu0 %v7991
        %v8078 = vpop.f32.mrf.mxu0
        %v8079 = vadd.f32 0.0, %v8078
        %v8080 = vpop.f32.mrf.mxu0
        %v8081 = vadd.f32 0.0, %v8080
        %8082 = vmatmul.bf16.gmra.mxu0 %v7994
        %v8083 = vpop.f32.mrf.mxu0
        %v8084 = vadd.f32 0.0, %v8083
        %v8085 = vpop.f32.mrf.mxu0
        %v8086 = vadd.f32 0.0, %v8085
        %8087 = vdwg.mxu0
        %v8088 = vadd.f32 %v7709, %v8009
        %v8089 = vadd.f32 %v7711, %v8011
        %v8090 = vadd.f32 %v7714, %v8014
        %v8091 = vadd.f32 %v7716, %v8016
        %v8092 = vadd.f32 %v7719, %v8019
        %v8093 = vadd.f32 %v7721, %v8021
        %v8094 = vadd.f32 %v7724, %v8024
        %v8095 = vadd.f32 %v7726, %v8026
        %v8096 = vadd.f32 %v7729, %v8029
        %v8097 = vadd.f32 %v7731, %v8031
        %v8098 = vadd.f32 %v7734, %v8034
        %v8099 = vadd.f32 %v7736, %v8036
        %v8100 = vadd.f32 %v7739, %v8039
        %v8101 = vadd.f32 %v7741, %v8041
        %v8102 = vadd.f32 %v7744, %v8044
        %v8103 = vadd.f32 %v7746, %v8046
        %v8104 = vadd.f32 %v7749, %v8049
        %v8105 = vadd.f32 %v7751, %v8051
        %v8106 = vadd.f32 %v7754, %v8054
        %v8107 = vadd.f32 %v7756, %v8056
        %v8108 = vadd.f32 %v7759, %v8059
        %v8109 = vadd.f32 %v7761, %v8061
        %v8110 = vadd.f32 %v7764, %v8064
        %v8111 = vadd.f32 %v7766, %v8066
        %v8112 = vadd.f32 %v7769, %v8069
        %v8113 = vadd.f32 %v7771, %v8071
        %v8114 = vadd.f32 %v7774, %v8074
        %v8115 = vadd.f32 %v7776, %v8076
        %v8116 = vadd.f32 %v7779, %v8079
        %v8117 = vadd.f32 %v7781, %v8081
        %v8118 = vadd.f32 %v7784, %v8084
        %v8119 = vadd.f32 %v7786, %v8086
        %v8123 = vrot.slane %v7277, 7
        %v8124 = vrot.slane %v7278, 7
        %v8125 = vsel %vm1108, %v8123, %v8124
        %v8126 = vrot.slane %v7279, 7
        %v8127 = vsel %vm1108, %v8124, %v8126
        %v8130 = vpack.c.bf16 %v8127, %v8125
        %s8131 = scalar_lea.vmem %s9, 48
        %v8132 = vld [vmem:[%s8131] sm:$0xf]
        %v8133 = vld [vmem:[%s8131 + $0x4] sm:$0xf]
        %v8134 = vld [vmem:[%s8131 + $0x8] sm:$0xf]
        %v8135 = vld [vmem:[%s8131 + $0xc] sm:$0x3]
        %v8140 = vunpack.c.l.b16 %v8132
        %v8141 = vunpack.c.l.b16 %v8133
        %v8142 = vunpack.c.l.b16 %v8134
        %v8143 = vunpack.c.l.b16 %v8135
        %v8144 = vpack.c.b16 %v8141, %v8140
        %v8145 = vpack.c.b16 %v8143, %v8142
        %v8148 = vsel %vm637, %v8130, 0
        %v8151 = vsel %vm2030, %v8145, 0
        %8153 = vmatpush.bf16.msra.mxu0 0
        %8154 = vmatpush.bf16.msra.mxu0 0
        %8155 = vmatpush.bf16.msra.mxu0 0
        %8156 = vmatpush.bf16.msra.mxu0 0
        %8157 = vmatpush.bf16.msra.mxu0 0
        %8158 = vmatpush.bf16.msra.mxu0 0
        %8159 = vmatpush.bf16.msra.mxu0 %v8151
        %8160 = vmatpush.bf16.msra.mxu0 %v8144
        %8161 = vmatmul.bf16.gmra.mxu0 %v7652
        %v8162 = vpop.f32.mrf.mxu0
        %v8163 = vadd.f32 0.0, %v8162
        %v8164 = vpop.f32.mrf.mxu0
        %v8165 = vadd.f32 0.0, %v8164
        %8166 = vmatmul.bf16.gmra.mxu0 %v7655
        %v8167 = vpop.f32.mrf.mxu0
        %v8168 = vadd.f32 0.0, %v8167
        %v8169 = vpop.f32.mrf.mxu0
        %v8170 = vadd.f32 0.0, %v8169
        %8171 = vmatmul.bf16.gmra.mxu0 %v7658
        %v8172 = vpop.f32.mrf.mxu0
        %v8173 = vadd.f32 0.0, %v8172
        %v8174 = vpop.f32.mrf.mxu0
        %v8175 = vadd.f32 0.0, %v8174
        %8176 = vmatmul.bf16.gmra.mxu0 %v7661
        %v8177 = vpop.f32.mrf.mxu0
        %v8178 = vadd.f32 0.0, %v8177
        %v8179 = vpop.f32.mrf.mxu0
        %v8180 = vadd.f32 0.0, %v8179
        %8181 = vmatmul.bf16.gmra.mxu0 %v7664
        %v8182 = vpop.f32.mrf.mxu0
        %v8183 = vadd.f32 0.0, %v8182
        %v8184 = vpop.f32.mrf.mxu0
        %v8185 = vadd.f32 0.0, %v8184
        %8186 = vmatmul.bf16.gmra.mxu0 %v7667
        %v8187 = vpop.f32.mrf.mxu0
        %v8188 = vadd.f32 0.0, %v8187
        %v8189 = vpop.f32.mrf.mxu0
        %v8190 = vadd.f32 0.0, %v8189
        %8191 = vmatmul.bf16.gmra.mxu0 %v7670
        %v8192 = vpop.f32.mrf.mxu0
        %v8193 = vadd.f32 0.0, %v8192
        %v8194 = vpop.f32.mrf.mxu0
        %v8195 = vadd.f32 0.0, %v8194
        %8196 = vmatmul.bf16.gmra.mxu0 %v7673
        %v8197 = vpop.f32.mrf.mxu0
        %v8198 = vadd.f32 0.0, %v8197
        %v8199 = vpop.f32.mrf.mxu0
        %v8200 = vadd.f32 0.0, %v8199
        %8201 = vmatmul.bf16.gmra.mxu0 %v7676
        %v8202 = vpop.f32.mrf.mxu0
        %v8203 = vadd.f32 0.0, %v8202
        %v8204 = vpop.f32.mrf.mxu0
        %v8205 = vadd.f32 0.0, %v8204
        %8206 = vmatmul.bf16.gmra.mxu0 %v7679
        %v8207 = vpop.f32.mrf.mxu0
        %v8208 = vadd.f32 0.0, %v8207
        %v8209 = vpop.f32.mrf.mxu0
        %v8210 = vadd.f32 0.0, %v8209
        %8211 = vmatmul.bf16.gmra.mxu0 %v7682
        %v8212 = vpop.f32.mrf.mxu0
        %v8213 = vadd.f32 0.0, %v8212
        %v8214 = vpop.f32.mrf.mxu0
        %v8215 = vadd.f32 0.0, %v8214
        %8216 = vmatmul.bf16.gmra.mxu0 %v7685
        %v8217 = vpop.f32.mrf.mxu0
        %v8218 = vadd.f32 0.0, %v8217
        %v8219 = vpop.f32.mrf.mxu0
        %v8220 = vadd.f32 0.0, %v8219
        %8221 = vmatmul.bf16.gmra.mxu0 %v7688
        %v8222 = vpop.f32.mrf.mxu0
        %v8223 = vadd.f32 0.0, %v8222
        %v8224 = vpop.f32.mrf.mxu0
        %v8225 = vadd.f32 0.0, %v8224
        %8226 = vmatmul.bf16.gmra.mxu0 %v7691
        %v8227 = vpop.f32.mrf.mxu0
        %v8228 = vadd.f32 0.0, %v8227
        %v8229 = vpop.f32.mrf.mxu0
        %v8230 = vadd.f32 0.0, %v8229
        %8231 = vmatmul.bf16.gmra.mxu0 %v7694
        %v8232 = vpop.f32.mrf.mxu0
        %v8233 = vadd.f32 0.0, %v8232
        %v8234 = vpop.f32.mrf.mxu0
        %v8235 = vadd.f32 0.0, %v8234
        %8236 = vmatmul.bf16.gmra.mxu0 %v8148
        %v8237 = vpop.f32.mrf.mxu0
        %v8238 = vadd.f32 0.0, %v8237
        %v8239 = vpop.f32.mrf.mxu0
        %v8240 = vadd.f32 0.0, %v8239
        %8241 = vdwg.mxu0
        %v8242 = vadd.f32 %v8088, %v8163
        %v8243 = vadd.f32 %v8089, %v8165
        %v8244 = vadd.f32 %v8090, %v8168
        %v8245 = vadd.f32 %v8091, %v8170
        %v8246 = vadd.f32 %v8092, %v8173
        %v8247 = vadd.f32 %v8093, %v8175
        %v8248 = vadd.f32 %v8094, %v8178
        %v8249 = vadd.f32 %v8095, %v8180
        %v8250 = vadd.f32 %v8096, %v8183
        %v8251 = vadd.f32 %v8097, %v8185
        %v8252 = vadd.f32 %v8098, %v8188
        %v8253 = vadd.f32 %v8099, %v8190
        %v8254 = vadd.f32 %v8100, %v8193
        %v8255 = vadd.f32 %v8101, %v8195
        %v8256 = vadd.f32 %v8102, %v8198
        %v8257 = vadd.f32 %v8103, %v8200
        %v8258 = vadd.f32 %v8104, %v8203
        %v8259 = vadd.f32 %v8105, %v8205
        %v8260 = vadd.f32 %v8106, %v8208
        %v8261 = vadd.f32 %v8107, %v8210
        %v8262 = vadd.f32 %v8108, %v8213
        %v8263 = vadd.f32 %v8109, %v8215
        %v8264 = vadd.f32 %v8110, %v8218
        %v8265 = vadd.f32 %v8111, %v8220
        %v8266 = vadd.f32 %v8112, %v8223
        %v8267 = vadd.f32 %v8113, %v8225
        %v8268 = vadd.f32 %v8114, %v8228
        %v8269 = vadd.f32 %v8115, %v8230
        %v8270 = vadd.f32 %v8116, %v8233
        %v8271 = vadd.f32 %v8117, %v8235
        %v8272 = vadd.f32 %v8118, %v8238
        %v8273 = vadd.f32 %v8119, %v8240
        %v8274 = vpack.c.bf16 %v7279, %v7278
        %s8275 = scalar_lea.vmem %s9, 64
        %v8276 = vld [vmem:[%s8275] sm:$0xf]
        %v8277 = vld [vmem:[%s8275 + $0x4] sm:$0xf]
        %v8278 = vld [vmem:[%s8275 + $0x8] sm:$0xf]
        %v8279 = vld [vmem:[%s8275 + $0xc] sm:$0x3]
        %v8284 = vunpack.c.l.b16 %v8276
        %v8285 = vunpack.c.l.b16 %v8277
        %v8286 = vunpack.c.l.b16 %v8278
        %v8287 = vunpack.c.l.b16 %v8279
        %v8288 = vpack.c.b16 %v8285, %v8284
        %v8289 = vpack.c.b16 %v8287, %v8286
        %v8292 = vsel %vm637, %v8274, 0
        %v8295 = vsel %vm2030, %v8289, 0
        %8297 = vmatpush.bf16.msra.mxu0 0
        %8298 = vmatpush.bf16.msra.mxu0 0
        %8299 = vmatpush.bf16.msra.mxu0 0
        %8300 = vmatpush.bf16.msra.mxu0 0
        %8301 = vmatpush.bf16.msra.mxu0 0
        %8302 = vmatpush.bf16.msra.mxu0 0
        %8303 = vmatpush.bf16.msra.mxu0 %v8295
        %8304 = vmatpush.bf16.msra.mxu0 %v8288
        %8305 = vmatmul.bf16.gmra.mxu0 %v7501
        %v8306 = vpop.f32.mrf.mxu0
        %v8307 = vadd.f32 0.0, %v8306
        %v8308 = vpop.f32.mrf.mxu0
        %v8309 = vadd.f32 0.0, %v8308
        %8310 = vmatmul.bf16.gmra.mxu0 %v7504
        %v8311 = vpop.f32.mrf.mxu0
        %v8312 = vadd.f32 0.0, %v8311
        %v8313 = vpop.f32.mrf.mxu0
        %v8314 = vadd.f32 0.0, %v8313
        %8315 = vmatmul.bf16.gmra.mxu0 %v7507
        %v8316 = vpop.f32.mrf.mxu0
        %v8317 = vadd.f32 0.0, %v8316
        %v8318 = vpop.f32.mrf.mxu0
        %v8319 = vadd.f32 0.0, %v8318
        %8320 = vmatmul.bf16.gmra.mxu0 %v7510
        %v8321 = vpop.f32.mrf.mxu0
        %v8322 = vadd.f32 0.0, %v8321
        %v8323 = vpop.f32.mrf.mxu0
        %v8324 = vadd.f32 0.0, %v8323
        %8325 = vmatmul.bf16.gmra.mxu0 %v7513
        %v8326 = vpop.f32.mrf.mxu0
        %v8327 = vadd.f32 0.0, %v8326
        %v8328 = vpop.f32.mrf.mxu0
        %v8329 = vadd.f32 0.0, %v8328
        %8330 = vmatmul.bf16.gmra.mxu0 %v7516
        %v8331 = vpop.f32.mrf.mxu0
        %v8332 = vadd.f32 0.0, %v8331
        %v8333 = vpop.f32.mrf.mxu0
        %v8334 = vadd.f32 0.0, %v8333
        %8335 = vmatmul.bf16.gmra.mxu0 %v7519
        %v8336 = vpop.f32.mrf.mxu0
        %v8337 = vadd.f32 0.0, %v8336
        %v8338 = vpop.f32.mrf.mxu0
        %v8339 = vadd.f32 0.0, %v8338
        %8340 = vmatmul.bf16.gmra.mxu0 %v7522
        %v8341 = vpop.f32.mrf.mxu0
        %v8342 = vadd.f32 0.0, %v8341
        %v8343 = vpop.f32.mrf.mxu0
        %v8344 = vadd.f32 0.0, %v8343
        %8345 = vmatmul.bf16.gmra.mxu0 %v7525
        %v8346 = vpop.f32.mrf.mxu0
        %v8347 = vadd.f32 0.0, %v8346
        %v8348 = vpop.f32.mrf.mxu0
        %v8349 = vadd.f32 0.0, %v8348
        %8350 = vmatmul.bf16.gmra.mxu0 %v7528
        %v8351 = vpop.f32.mrf.mxu0
        %v8352 = vadd.f32 0.0, %v8351
        %v8353 = vpop.f32.mrf.mxu0
        %v8354 = vadd.f32 0.0, %v8353
        %8355 = vmatmul.bf16.gmra.mxu0 %v7531
        %v8356 = vpop.f32.mrf.mxu0
        %v8357 = vadd.f32 0.0, %v8356
        %v8358 = vpop.f32.mrf.mxu0
        %v8359 = vadd.f32 0.0, %v8358
        %8360 = vmatmul.bf16.gmra.mxu0 %v7534
        %v8361 = vpop.f32.mrf.mxu0
        %v8362 = vadd.f32 0.0, %v8361
        %v8363 = vpop.f32.mrf.mxu0
        %v8364 = vadd.f32 0.0, %v8363
        %8365 = vmatmul.bf16.gmra.mxu0 %v7537
        %v8366 = vpop.f32.mrf.mxu0
        %v8367 = vadd.f32 0.0, %v8366
        %v8368 = vpop.f32.mrf.mxu0
        %v8369 = vadd.f32 0.0, %v8368
        %8370 = vmatmul.bf16.gmra.mxu0 %v7540
        %v8371 = vpop.f32.mrf.mxu0
        %v8372 = vadd.f32 0.0, %v8371
        %v8373 = vpop.f32.mrf.mxu0
        %v8374 = vadd.f32 0.0, %v8373
        %8375 = vmatmul.bf16.gmra.mxu0 %v7543
        %v8376 = vpop.f32.mrf.mxu0
        %v8377 = vadd.f32 0.0, %v8376
        %v8378 = vpop.f32.mrf.mxu0
        %v8379 = vadd.f32 0.0, %v8378
        %8380 = vmatmul.bf16.gmra.mxu0 %v8292
        %v8381 = vpop.f32.mrf.mxu0
        %v8382 = vadd.f32 0.0, %v8381
        %v8383 = vpop.f32.mrf.mxu0
        %v8384 = vadd.f32 0.0, %v8383
        %8385 = vdwg.mxu0
        %v8386 = vadd.f32 %v8242, %v8307
        %v8387 = vadd.f32 %v8243, %v8309
        %v8388 = vadd.f32 %v8244, %v8312
        %v8389 = vadd.f32 %v8245, %v8314
        %v8390 = vadd.f32 %v8246, %v8317
        %v8391 = vadd.f32 %v8247, %v8319
        %v8392 = vadd.f32 %v8248, %v8322
        %v8393 = vadd.f32 %v8249, %v8324
        %v8394 = vadd.f32 %v8250, %v8327
        %v8395 = vadd.f32 %v8251, %v8329
        %v8396 = vadd.f32 %v8252, %v8332
        %v8397 = vadd.f32 %v8253, %v8334
        %v8398 = vadd.f32 %v8254, %v8337
        %v8399 = vadd.f32 %v8255, %v8339
        %v8400 = vadd.f32 %v8256, %v8342
        %v8401 = vadd.f32 %v8257, %v8344
        %v8402 = vadd.f32 %v8258, %v8347
        %v8403 = vadd.f32 %v8259, %v8349
        %v8404 = vadd.f32 %v8260, %v8352
        %v8405 = vadd.f32 %v8261, %v8354
        %v8406 = vadd.f32 %v8262, %v8357
        %v8407 = vadd.f32 %v8263, %v8359
        %v8408 = vadd.f32 %v8264, %v8362
        %v8409 = vadd.f32 %v8265, %v8364
        %v8410 = vadd.f32 %v8266, %v8367
        %v8411 = vadd.f32 %v8267, %v8369
        %v8412 = vadd.f32 %v8268, %v8372
        %v8413 = vadd.f32 %v8269, %v8374
        %v8414 = vadd.f32 %v8270, %v8377
        %v8415 = vadd.f32 %v8271, %v8379
        %v8416 = vadd.f32 %v8272, %v8382
        %v8417 = vadd.f32 %v8273, %v8384
        %v8419 = vrot.slane %v7278, 1
        %v8420 = vrot.slane %v7279, 1
        %v8421 = vsel %vm1727, %v8419, %v8420
        %v8422 = vrot.slane %v7280, 1
        %v8423 = vsel %vm1727, %v8420, %v8422
        %v8426 = vpack.c.bf16 %v8423, %v8421
        %s8427 = scalar_lea.vmem %s9, 80
        %v8428 = vld [vmem:[%s8427] sm:$0xf]
        %v8429 = vld [vmem:[%s8427 + $0x4] sm:$0xf]
        %v8430 = vld [vmem:[%s8427 + $0x8] sm:$0xf]
        %v8431 = vld [vmem:[%s8427 + $0xc] sm:$0x3]
        %v8436 = vunpack.c.l.b16 %v8428
        %v8437 = vunpack.c.l.b16 %v8429
        %v8438 = vunpack.c.l.b16 %v8430
        %v8439 = vunpack.c.l.b16 %v8431
        %v8440 = vpack.c.b16 %v8437, %v8436
        %v8441 = vpack.c.b16 %v8439, %v8438
        %v8444 = vsel %vm637, %v8426, 0
        %v8447 = vsel %vm2030, %v8441, 0
        %8449 = vmatpush.bf16.msra.mxu0 0
        %8450 = vmatpush.bf16.msra.mxu0 0
        %8451 = vmatpush.bf16.msra.mxu0 0
        %8452 = vmatpush.bf16.msra.mxu0 0
        %8453 = vmatpush.bf16.msra.mxu0 0
        %8454 = vmatpush.bf16.msra.mxu0 0
        %8455 = vmatpush.bf16.msra.mxu0 %v8447
        %8456 = vmatpush.bf16.msra.mxu0 %v8440
        %8457 = vmatmul.bf16.gmra.mxu0 %v7952
        %v8458 = vpop.f32.mrf.mxu0
        %v8459 = vadd.f32 0.0, %v8458
        %v8460 = vpop.f32.mrf.mxu0
        %v8461 = vadd.f32 0.0, %v8460
        %8462 = vmatmul.bf16.gmra.mxu0 %v7955
        %v8463 = vpop.f32.mrf.mxu0
        %v8464 = vadd.f32 0.0, %v8463
        %v8465 = vpop.f32.mrf.mxu0
        %v8466 = vadd.f32 0.0, %v8465
        %8467 = vmatmul.bf16.gmra.mxu0 %v7958
        %v8468 = vpop.f32.mrf.mxu0
        %v8469 = vadd.f32 0.0, %v8468
        %v8470 = vpop.f32.mrf.mxu0
        %v8471 = vadd.f32 0.0, %v8470
        %8472 = vmatmul.bf16.gmra.mxu0 %v7961
        %v8473 = vpop.f32.mrf.mxu0
        %v8474 = vadd.f32 0.0, %v8473
        %v8475 = vpop.f32.mrf.mxu0
        %v8476 = vadd.f32 0.0, %v8475
        %8477 = vmatmul.bf16.gmra.mxu0 %v7964
        %v8478 = vpop.f32.mrf.mxu0
        %v8479 = vadd.f32 0.0, %v8478
        %v8480 = vpop.f32.mrf.mxu0
        %v8481 = vadd.f32 0.0, %v8480
        %8482 = vmatmul.bf16.gmra.mxu0 %v7967
        %v8483 = vpop.f32.mrf.mxu0
        %v8484 = vadd.f32 0.0, %v8483
        %v8485 = vpop.f32.mrf.mxu0
        %v8486 = vadd.f32 0.0, %v8485
        %8487 = vmatmul.bf16.gmra.mxu0 %v7970
        %v8488 = vpop.f32.mrf.mxu0
        %v8489 = vadd.f32 0.0, %v8488
        %v8490 = vpop.f32.mrf.mxu0
        %v8491 = vadd.f32 0.0, %v8490
        %8492 = vmatmul.bf16.gmra.mxu0 %v7973
        %v8493 = vpop.f32.mrf.mxu0
        %v8494 = vadd.f32 0.0, %v8493
        %v8495 = vpop.f32.mrf.mxu0
        %v8496 = vadd.f32 0.0, %v8495
        %8497 = vmatmul.bf16.gmra.mxu0 %v7976
        %v8498 = vpop.f32.mrf.mxu0
        %v8499 = vadd.f32 0.0, %v8498
        %v8500 = vpop.f32.mrf.mxu0
        %v8501 = vadd.f32 0.0, %v8500
        %8502 = vmatmul.bf16.gmra.mxu0 %v7979
        %v8503 = vpop.f32.mrf.mxu0
        %v8504 = vadd.f32 0.0, %v8503
        %v8505 = vpop.f32.mrf.mxu0
        %v8506 = vadd.f32 0.0, %v8505
        %8507 = vmatmul.bf16.gmra.mxu0 %v7982
        %v8508 = vpop.f32.mrf.mxu0
        %v8509 = vadd.f32 0.0, %v8508
        %v8510 = vpop.f32.mrf.mxu0
        %v8511 = vadd.f32 0.0, %v8510
        %8512 = vmatmul.bf16.gmra.mxu0 %v7985
        %v8513 = vpop.f32.mrf.mxu0
        %v8514 = vadd.f32 0.0, %v8513
        %v8515 = vpop.f32.mrf.mxu0
        %v8516 = vadd.f32 0.0, %v8515
        %8517 = vmatmul.bf16.gmra.mxu0 %v7988
        %v8518 = vpop.f32.mrf.mxu0
        %v8519 = vadd.f32 0.0, %v8518
        %v8520 = vpop.f32.mrf.mxu0
        %v8521 = vadd.f32 0.0, %v8520
        %8522 = vmatmul.bf16.gmra.mxu0 %v7991
        %v8523 = vpop.f32.mrf.mxu0
        %v8524 = vadd.f32 0.0, %v8523
        %v8525 = vpop.f32.mrf.mxu0
        %v8526 = vadd.f32 0.0, %v8525
        %8527 = vmatmul.bf16.gmra.mxu0 %v7994
        %v8528 = vpop.f32.mrf.mxu0
        %v8529 = vadd.f32 0.0, %v8528
        %v8530 = vpop.f32.mrf.mxu0
        %v8531 = vadd.f32 0.0, %v8530
        %8532 = vmatmul.bf16.gmra.mxu0 %v8444
        %v8533 = vpop.f32.mrf.mxu0
        %v8534 = vadd.f32 0.0, %v8533
        %v8535 = vpop.f32.mrf.mxu0
        %v8536 = vadd.f32 0.0, %v8535
        %8537 = vdwg.mxu0
        %v8538 = vadd.f32 %v8386, %v8459
        %v8539 = vadd.f32 %v8387, %v8461
        %v8540 = vadd.f32 %v8388, %v8464
        %v8541 = vadd.f32 %v8389, %v8466
        %v8542 = vadd.f32 %v8390, %v8469
        %v8543 = vadd.f32 %v8391, %v8471
        %v8544 = vadd.f32 %v8392, %v8474
        %v8545 = vadd.f32 %v8393, %v8476
        %v8546 = vadd.f32 %v8394, %v8479
        %v8547 = vadd.f32 %v8395, %v8481
        %v8548 = vadd.f32 %v8396, %v8484
        %v8549 = vadd.f32 %v8397, %v8486
        %v8550 = vadd.f32 %v8398, %v8489
        %v8551 = vadd.f32 %v8399, %v8491
        %v8552 = vadd.f32 %v8400, %v8494
        %v8553 = vadd.f32 %v8401, %v8496
        %v8554 = vadd.f32 %v8402, %v8499
        %v8555 = vadd.f32 %v8403, %v8501
        %v8556 = vadd.f32 %v8404, %v8504
        %v8557 = vadd.f32 %v8405, %v8506
        %v8558 = vadd.f32 %v8406, %v8509
        %v8559 = vadd.f32 %v8407, %v8511
        %v8560 = vadd.f32 %v8408, %v8514
        %v8561 = vadd.f32 %v8409, %v8516
        %v8562 = vadd.f32 %v8410, %v8519
        %v8563 = vadd.f32 %v8411, %v8521
        %v8564 = vadd.f32 %v8412, %v8524
        %v8565 = vadd.f32 %v8413, %v8526
        %v8566 = vadd.f32 %v8414, %v8529
        %v8567 = vadd.f32 %v8415, %v8531
        %v8568 = vadd.f32 %v8416, %v8534
        %v8569 = vadd.f32 %v8417, %v8536
        %v8573 = vrot.slane %v7281, 7
        %v8574 = vrot.slane %v7282, 7
        %v8575 = vsel %vm1108, %v8573, %v8574
        %v8576 = vrot.slane %v7283, 7
        %v8577 = vsel %vm1108, %v8574, %v8576
        %v8580 = vpack.c.bf16 %v8577, %v8575
        %s8581 = scalar_lea.vmem %s9, 96
        %v8582 = vld [vmem:[%s8581] sm:$0xf]
        %v8583 = vld [vmem:[%s8581 + $0x4] sm:$0xf]
        %v8584 = vld [vmem:[%s8581 + $0x8] sm:$0xf]
        %v8585 = vld [vmem:[%s8581 + $0xc] sm:$0x3]
        %v8590 = vunpack.c.l.b16 %v8582
        %v8591 = vunpack.c.l.b16 %v8583
        %v8592 = vunpack.c.l.b16 %v8584
        %v8593 = vunpack.c.l.b16 %v8585
        %v8594 = vpack.c.b16 %v8591, %v8590
        %v8595 = vpack.c.b16 %v8593, %v8592
        %v8598 = vsel %vm637, %v8580, 0
        %v8601 = vsel %vm2030, %v8595, 0
        %8603 = vmatpush.bf16.msra.mxu0 0
        %8604 = vmatpush.bf16.msra.mxu0 0
        %8605 = vmatpush.bf16.msra.mxu0 0
        %8606 = vmatpush.bf16.msra.mxu0 0
        %8607 = vmatpush.bf16.msra.mxu0 0
        %8608 = vmatpush.bf16.msra.mxu0 0
        %8609 = vmatpush.bf16.msra.mxu0 %v8601
        %8610 = vmatpush.bf16.msra.mxu0 %v8594
        %8611 = vmatmul.bf16.gmra.mxu0 %v7655
        %v8612 = vpop.f32.mrf.mxu0
        %v8613 = vadd.f32 0.0, %v8612
        %v8614 = vpop.f32.mrf.mxu0
        %v8615 = vadd.f32 0.0, %v8614
        %8616 = vmatmul.bf16.gmra.mxu0 %v7658
        %v8617 = vpop.f32.mrf.mxu0
        %v8618 = vadd.f32 0.0, %v8617
        %v8619 = vpop.f32.mrf.mxu0
        %v8620 = vadd.f32 0.0, %v8619
        %8621 = vmatmul.bf16.gmra.mxu0 %v7661
        %v8622 = vpop.f32.mrf.mxu0
        %v8623 = vadd.f32 0.0, %v8622
        %v8624 = vpop.f32.mrf.mxu0
        %v8625 = vadd.f32 0.0, %v8624
        %8626 = vmatmul.bf16.gmra.mxu0 %v7664
        %v8627 = vpop.f32.mrf.mxu0
        %v8628 = vadd.f32 0.0, %v8627
        %v8629 = vpop.f32.mrf.mxu0
        %v8630 = vadd.f32 0.0, %v8629
        %8631 = vmatmul.bf16.gmra.mxu0 %v7667
        %v8632 = vpop.f32.mrf.mxu0
        %v8633 = vadd.f32 0.0, %v8632
        %v8634 = vpop.f32.mrf.mxu0
        %v8635 = vadd.f32 0.0, %v8634
        %8636 = vmatmul.bf16.gmra.mxu0 %v7670
        %v8637 = vpop.f32.mrf.mxu0
        %v8638 = vadd.f32 0.0, %v8637
        %v8639 = vpop.f32.mrf.mxu0
        %v8640 = vadd.f32 0.0, %v8639
        %8641 = vmatmul.bf16.gmra.mxu0 %v7673
        %v8642 = vpop.f32.mrf.mxu0
        %v8643 = vadd.f32 0.0, %v8642
        %v8644 = vpop.f32.mrf.mxu0
        %v8645 = vadd.f32 0.0, %v8644
        %8646 = vmatmul.bf16.gmra.mxu0 %v7676
        %v8647 = vpop.f32.mrf.mxu0
        %v8648 = vadd.f32 0.0, %v8647
        %v8649 = vpop.f32.mrf.mxu0
        %v8650 = vadd.f32 0.0, %v8649
        %8651 = vmatmul.bf16.gmra.mxu0 %v7679
        %v8652 = vpop.f32.mrf.mxu0
        %v8653 = vadd.f32 0.0, %v8652
        %v8654 = vpop.f32.mrf.mxu0
        %v8655 = vadd.f32 0.0, %v8654
        %8656 = vmatmul.bf16.gmra.mxu0 %v7682
        %v8657 = vpop.f32.mrf.mxu0
        %v8658 = vadd.f32 0.0, %v8657
        %v8659 = vpop.f32.mrf.mxu0
        %v8660 = vadd.f32 0.0, %v8659
        %8661 = vmatmul.bf16.gmra.mxu0 %v7685
        %v8662 = vpop.f32.mrf.mxu0
        %v8663 = vadd.f32 0.0, %v8662
        %v8664 = vpop.f32.mrf.mxu0
        %v8665 = vadd.f32 0.0, %v8664
        %8666 = vmatmul.bf16.gmra.mxu0 %v7688
        %v8667 = vpop.f32.mrf.mxu0
        %v8668 = vadd.f32 0.0, %v8667
        %v8669 = vpop.f32.mrf.mxu0
        %v8670 = vadd.f32 0.0, %v8669
        %8671 = vmatmul.bf16.gmra.mxu0 %v7691
        %v8672 = vpop.f32.mrf.mxu0
        %v8673 = vadd.f32 0.0, %v8672
        %v8674 = vpop.f32.mrf.mxu0
        %v8675 = vadd.f32 0.0, %v8674
        %8676 = vmatmul.bf16.gmra.mxu0 %v7694
        %v8677 = vpop.f32.mrf.mxu0
        %v8678 = vadd.f32 0.0, %v8677
        %v8679 = vpop.f32.mrf.mxu0
        %v8680 = vadd.f32 0.0, %v8679
        %8681 = vmatmul.bf16.gmra.mxu0 %v8148
        %v8682 = vpop.f32.mrf.mxu0
        %v8683 = vadd.f32 0.0, %v8682
        %v8684 = vpop.f32.mrf.mxu0
        %v8685 = vadd.f32 0.0, %v8684
        %8686 = vmatmul.bf16.gmra.mxu0 %v8598
        %v8687 = vpop.f32.mrf.mxu0
        %v8688 = vadd.f32 0.0, %v8687
        %v8689 = vpop.f32.mrf.mxu0
        %v8690 = vadd.f32 0.0, %v8689
        %8691 = vdwg.mxu0
        %v8692 = vadd.f32 %v8538, %v8613
        %v8693 = vadd.f32 %v8539, %v8615
        %v8694 = vadd.f32 %v8540, %v8618
        %v8695 = vadd.f32 %v8541, %v8620
        %v8696 = vadd.f32 %v8542, %v8623
        %v8697 = vadd.f32 %v8543, %v8625
        %v8698 = vadd.f32 %v8544, %v8628
        %v8699 = vadd.f32 %v8545, %v8630
        %v8700 = vadd.f32 %v8546, %v8633
        %v8701 = vadd.f32 %v8547, %v8635
        %v8702 = vadd.f32 %v8548, %v8638
        %v8703 = vadd.f32 %v8549, %v8640
        %v8704 = vadd.f32 %v8550, %v8643
        %v8705 = vadd.f32 %v8551, %v8645
        %v8706 = vadd.f32 %v8552, %v8648
        %v8707 = vadd.f32 %v8553, %v8650
        %v8708 = vadd.f32 %v8554, %v8653
        %v8709 = vadd.f32 %v8555, %v8655
        %v8710 = vadd.f32 %v8556, %v8658
        %v8711 = vadd.f32 %v8557, %v8660
        %v8712 = vadd.f32 %v8558, %v8663
        %v8713 = vadd.f32 %v8559, %v8665
        %v8714 = vadd.f32 %v8560, %v8668
        %v8715 = vadd.f32 %v8561, %v8670
        %v8716 = vadd.f32 %v8562, %v8673
        %v8717 = vadd.f32 %v8563, %v8675
        %v8718 = vadd.f32 %v8564, %v8678
        %v8719 = vadd.f32 %v8565, %v8680
        %v8720 = vadd.f32 %v8566, %v8683
        %v8721 = vadd.f32 %v8567, %v8685
        %v8722 = vadd.f32 %v8568, %v8688
        %v8723 = vadd.f32 %v8569, %v8690
        %v8724 = vpack.c.bf16 %v7283, %v7282
        %s8725 = scalar_lea.vmem %s9, 112
        %v8726 = vld [vmem:[%s8725] sm:$0xf]
        %v8727 = vld [vmem:[%s8725 + $0x4] sm:$0xf]
        %v8728 = vld [vmem:[%s8725 + $0x8] sm:$0xf]
        %v8729 = vld [vmem:[%s8725 + $0xc] sm:$0x3]
        %v8734 = vunpack.c.l.b16 %v8726
        %v8735 = vunpack.c.l.b16 %v8727
        %v8736 = vunpack.c.l.b16 %v8728
        %v8737 = vunpack.c.l.b16 %v8729
        %v8738 = vpack.c.b16 %v8735, %v8734
        %v8739 = vpack.c.b16 %v8737, %v8736
        %v8742 = vsel %vm637, %v8724, 0
        %v8745 = vsel %vm2030, %v8739, 0
        %8747 = vmatpush.bf16.msra.mxu0 0
        %8748 = vmatpush.bf16.msra.mxu0 0
        %8749 = vmatpush.bf16.msra.mxu0 0
        %8750 = vmatpush.bf16.msra.mxu0 0
        %8751 = vmatpush.bf16.msra.mxu0 0
        %8752 = vmatpush.bf16.msra.mxu0 0
        %8753 = vmatpush.bf16.msra.mxu0 %v8745
        %8754 = vmatpush.bf16.msra.mxu0 %v8738
        %8755 = vmatmul.bf16.gmra.mxu0 %v7504
        %v8756 = vpop.f32.mrf.mxu0
        %v8757 = vadd.f32 0.0, %v8756
        %v8758 = vpop.f32.mrf.mxu0
        %v8759 = vadd.f32 0.0, %v8758
        %8760 = vmatmul.bf16.gmra.mxu0 %v7507
        %v8761 = vpop.f32.mrf.mxu0
        %v8762 = vadd.f32 0.0, %v8761
        %v8763 = vpop.f32.mrf.mxu0
        %v8764 = vadd.f32 0.0, %v8763
        %8765 = vmatmul.bf16.gmra.mxu0 %v7510
        %v8766 = vpop.f32.mrf.mxu0
        %v8767 = vadd.f32 0.0, %v8766
        %v8768 = vpop.f32.mrf.mxu0
        %v8769 = vadd.f32 0.0, %v8768
        %8770 = vmatmul.bf16.gmra.mxu0 %v7513
        %v8771 = vpop.f32.mrf.mxu0
        %v8772 = vadd.f32 0.0, %v8771
        %v8773 = vpop.f32.mrf.mxu0
        %v8774 = vadd.f32 0.0, %v8773
        %8775 = vmatmul.bf16.gmra.mxu0 %v7516
        %v8776 = vpop.f32.mrf.mxu0
        %v8777 = vadd.f32 0.0, %v8776
        %v8778 = vpop.f32.mrf.mxu0
        %v8779 = vadd.f32 0.0, %v8778
        %8780 = vmatmul.bf16.gmra.mxu0 %v7519
        %v8781 = vpop.f32.mrf.mxu0
        %v8782 = vadd.f32 0.0, %v8781
        %v8783 = vpop.f32.mrf.mxu0
        %v8784 = vadd.f32 0.0, %v8783
        %8785 = vmatmul.bf16.gmra.mxu0 %v7522
        %v8786 = vpop.f32.mrf.mxu0
        %v8787 = vadd.f32 0.0, %v8786
        %v8788 = vpop.f32.mrf.mxu0
        %v8789 = vadd.f32 0.0, %v8788
        %8790 = vmatmul.bf16.gmra.mxu0 %v7525
        %v8791 = vpop.f32.mrf.mxu0
        %v8792 = vadd.f32 0.0, %v8791
        %v8793 = vpop.f32.mrf.mxu0
        %v8794 = vadd.f32 0.0, %v8793
        %8795 = vmatmul.bf16.gmra.mxu0 %v7528
        %v8796 = vpop.f32.mrf.mxu0
        %v8797 = vadd.f32 0.0, %v8796
        %v8798 = vpop.f32.mrf.mxu0
        %v8799 = vadd.f32 0.0, %v8798
        %8800 = vmatmul.bf16.gmra.mxu0 %v7531
        %v8801 = vpop.f32.mrf.mxu0
        %v8802 = vadd.f32 0.0, %v8801
        %v8803 = vpop.f32.mrf.mxu0
        %v8804 = vadd.f32 0.0, %v8803
        %8805 = vmatmul.bf16.gmra.mxu0 %v7534
        %v8806 = vpop.f32.mrf.mxu0
        %v8807 = vadd.f32 0.0, %v8806
        %v8808 = vpop.f32.mrf.mxu0
        %v8809 = vadd.f32 0.0, %v8808
        %8810 = vmatmul.bf16.gmra.mxu0 %v7537
        %v8811 = vpop.f32.mrf.mxu0
        %v8812 = vadd.f32 0.0, %v8811
        %v8813 = vpop.f32.mrf.mxu0
        %v8814 = vadd.f32 0.0, %v8813
        %8815 = vmatmul.bf16.gmra.mxu0 %v7540
        %v8816 = vpop.f32.mrf.mxu0
        %v8817 = vadd.f32 0.0, %v8816
        %v8818 = vpop.f32.mrf.mxu0
        %v8819 = vadd.f32 0.0, %v8818
        %8820 = vmatmul.bf16.gmra.mxu0 %v7543
        %v8821 = vpop.f32.mrf.mxu0
        %v8822 = vadd.f32 0.0, %v8821
        %v8823 = vpop.f32.mrf.mxu0
        %v8824 = vadd.f32 0.0, %v8823
        %8825 = vmatmul.bf16.gmra.mxu0 %v8292
        %v8826 = vpop.f32.mrf.mxu0
        %v8827 = vadd.f32 0.0, %v8826
        %v8828 = vpop.f32.mrf.mxu0
        %v8829 = vadd.f32 0.0, %v8828
        %8830 = vmatmul.bf16.gmra.mxu0 %v8742
        %v8831 = vpop.f32.mrf.mxu0
        %v8832 = vadd.f32 0.0, %v8831
        %v8833 = vpop.f32.mrf.mxu0
        %v8834 = vadd.f32 0.0, %v8833
        %8835 = vdwg.mxu0
        %v8836 = vadd.f32 %v8692, %v8757
        %v8837 = vadd.f32 %v8693, %v8759
        %v8838 = vadd.f32 %v8694, %v8762
        %v8839 = vadd.f32 %v8695, %v8764
        %v8840 = vadd.f32 %v8696, %v8767
        %v8841 = vadd.f32 %v8697, %v8769
        %v8842 = vadd.f32 %v8698, %v8772
        %v8843 = vadd.f32 %v8699, %v8774
        %v8844 = vadd.f32 %v8700, %v8777
        %v8845 = vadd.f32 %v8701, %v8779
        %v8846 = vadd.f32 %v8702, %v8782
        %v8847 = vadd.f32 %v8703, %v8784
        %v8848 = vadd.f32 %v8704, %v8787
        %v8849 = vadd.f32 %v8705, %v8789
        %v8850 = vadd.f32 %v8706, %v8792
        %v8851 = vadd.f32 %v8707, %v8794
        %v8852 = vadd.f32 %v8708, %v8797
        %v8853 = vadd.f32 %v8709, %v8799
        %v8854 = vadd.f32 %v8710, %v8802
        %v8855 = vadd.f32 %v8711, %v8804
        %v8856 = vadd.f32 %v8712, %v8807
        %v8857 = vadd.f32 %v8713, %v8809
        %v8858 = vadd.f32 %v8714, %v8812
        %v8859 = vadd.f32 %v8715, %v8814
        %v8860 = vadd.f32 %v8716, %v8817
        %v8861 = vadd.f32 %v8717, %v8819
        %v8862 = vadd.f32 %v8718, %v8822
        %v8863 = vadd.f32 %v8719, %v8824
        %v8864 = vadd.f32 %v8720, %v8827
        %v8865 = vadd.f32 %v8721, %v8829
        %v8866 = vadd.f32 %v8722, %v8832
        %v8867 = vadd.f32 %v8723, %v8834
        %v8869 = vrot.slane %v7282, 1
        %v8870 = vrot.slane %v7283, 1
        %v8871 = vsel %vm1727, %v8869, %v8870
        %v8872 = vrot.slane %v7284, 1
        %v8873 = vsel %vm1727, %v8870, %v8872
        %v8876 = vpack.c.bf16 %v8873, %v8871
        %s8877 = scalar_lea.vmem %s9, 128
        %v8878 = vld [vmem:[%s8877] sm:$0xf]
        %v8879 = vld [vmem:[%s8877 + $0x4] sm:$0xf]
        %v8880 = vld [vmem:[%s8877 + $0x8] sm:$0xf]
        %v8881 = vld [vmem:[%s8877 + $0xc] sm:$0x3]
        %v8886 = vunpack.c.l.b16 %v8878
        %v8887 = vunpack.c.l.b16 %v8879
        %v8888 = vunpack.c.l.b16 %v8880
        %v8889 = vunpack.c.l.b16 %v8881
        %v8890 = vpack.c.b16 %v8887, %v8886
        %v8891 = vpack.c.b16 %v8889, %v8888
        %v8894 = vsel %vm637, %v8876, 0
        %v8897 = vsel %vm2030, %v8891, 0
        %8899 = vmatpush.bf16.msra.mxu0 0
        %8900 = vmatpush.bf16.msra.mxu0 0
        %8901 = vmatpush.bf16.msra.mxu0 0
        %8902 = vmatpush.bf16.msra.mxu0 0
        %8903 = vmatpush.bf16.msra.mxu0 0
        %8904 = vmatpush.bf16.msra.mxu0 0
        %8905 = vmatpush.bf16.msra.mxu0 %v8897
        %8906 = vmatpush.bf16.msra.mxu0 %v8890
        %8907 = vmatmul.bf16.gmra.mxu0 %v7955
        %v8908 = vpop.f32.mrf.mxu0
        %v8909 = vadd.f32 0.0, %v8908
        %v8910 = vpop.f32.mrf.mxu0
        %v8911 = vadd.f32 0.0, %v8910
        %8912 = vmatmul.bf16.gmra.mxu0 %v7958
        %v8913 = vpop.f32.mrf.mxu0
        %v8914 = vadd.f32 0.0, %v8913
        %v8915 = vpop.f32.mrf.mxu0
        %v8916 = vadd.f32 0.0, %v8915
        %8917 = vmatmul.bf16.gmra.mxu0 %v7961
        %v8918 = vpop.f32.mrf.mxu0
        %v8919 = vadd.f32 0.0, %v8918
        %v8920 = vpop.f32.mrf.mxu0
        %v8921 = vadd.f32 0.0, %v8920
        %8922 = vmatmul.bf16.gmra.mxu0 %v7964
        %v8923 = vpop.f32.mrf.mxu0
        %v8924 = vadd.f32 0.0, %v8923
        %v8925 = vpop.f32.mrf.mxu0
        %v8926 = vadd.f32 0.0, %v8925
        %8927 = vmatmul.bf16.gmra.mxu0 %v7967
        %v8928 = vpop.f32.mrf.mxu0
        %v8929 = vadd.f32 0.0, %v8928
        %v8930 = vpop.f32.mrf.mxu0
        %v8931 = vadd.f32 0.0, %v8930
        %8932 = vmatmul.bf16.gmra.mxu0 %v7970
        %v8933 = vpop.f32.mrf.mxu0
        %v8934 = vadd.f32 0.0, %v8933
        %v8935 = vpop.f32.mrf.mxu0
        %v8936 = vadd.f32 0.0, %v8935
        %8937 = vmatmul.bf16.gmra.mxu0 %v7973
        %v8938 = vpop.f32.mrf.mxu0
        %v8939 = vadd.f32 0.0, %v8938
        %v8940 = vpop.f32.mrf.mxu0
        %v8941 = vadd.f32 0.0, %v8940
        %8942 = vmatmul.bf16.gmra.mxu0 %v7976
        %v8943 = vpop.f32.mrf.mxu0
        %v8944 = vadd.f32 0.0, %v8943
        %v8945 = vpop.f32.mrf.mxu0
        %v8946 = vadd.f32 0.0, %v8945
        %8947 = vmatmul.bf16.gmra.mxu0 %v7979
        %v8948 = vpop.f32.mrf.mxu0
        %v8949 = vadd.f32 0.0, %v8948
        %v8950 = vpop.f32.mrf.mxu0
        %v8951 = vadd.f32 0.0, %v8950
        %8952 = vmatmul.bf16.gmra.mxu0 %v7982
        %v8953 = vpop.f32.mrf.mxu0
        %v8954 = vadd.f32 0.0, %v8953
        %v8955 = vpop.f32.mrf.mxu0
        %v8956 = vadd.f32 0.0, %v8955
        %8957 = vmatmul.bf16.gmra.mxu0 %v7985
        %v8958 = vpop.f32.mrf.mxu0
        %v8959 = vadd.f32 0.0, %v8958
        %v8960 = vpop.f32.mrf.mxu0
        %v8961 = vadd.f32 0.0, %v8960
        %8962 = vmatmul.bf16.gmra.mxu0 %v7988
        %v8963 = vpop.f32.mrf.mxu0
        %v8964 = vadd.f32 0.0, %v8963
        %v8965 = vpop.f32.mrf.mxu0
        %v8966 = vadd.f32 0.0, %v8965
        %8967 = vmatmul.bf16.gmra.mxu0 %v7991
        %v8968 = vpop.f32.mrf.mxu0
        %v8969 = vadd.f32 0.0, %v8968
        %v8970 = vpop.f32.mrf.mxu0
        %v8971 = vadd.f32 0.0, %v8970
        %8972 = vmatmul.bf16.gmra.mxu0 %v7994
        %v8973 = vpop.f32.mrf.mxu0
        %v8974 = vadd.f32 0.0, %v8973
        %v8975 = vpop.f32.mrf.mxu0
        %v8976 = vadd.f32 0.0, %v8975
        %8977 = vmatmul.bf16.gmra.mxu0 %v8444
        %v8978 = vpop.f32.mrf.mxu0
        %v8979 = vadd.f32 0.0, %v8978
        %v8980 = vpop.f32.mrf.mxu0
        %v8981 = vadd.f32 0.0, %v8980
        %8982 = vmatmul.bf16.gmra.mxu0 %v8894
        %v8983 = vpop.f32.mrf.mxu0
        %v8984 = vadd.f32 0.0, %v8983
        %v8985 = vpop.f32.mrf.mxu0
        %v8986 = vadd.f32 0.0, %v8985
        %8987 = vdwg.mxu0
        %v8988 = vadd.f32 %v8836, %v8909
        %v8989 = vadd.f32 %v8837, %v8911
        %v8990 = vadd.f32 %v8838, %v8914
        %v8991 = vadd.f32 %v8839, %v8916
        %v8992 = vadd.f32 %v8840, %v8919
        %v8993 = vadd.f32 %v8841, %v8921
        %v8994 = vadd.f32 %v8842, %v8924
        %v8995 = vadd.f32 %v8843, %v8926
        %v8996 = vadd.f32 %v8844, %v8929
        %v8997 = vadd.f32 %v8845, %v8931
        %v8998 = vadd.f32 %v8846, %v8934
        %v8999 = vadd.f32 %v8847, %v8936
        %v9000 = vadd.f32 %v8848, %v8939
        %v9001 = vadd.f32 %v8849, %v8941
        %v9002 = vadd.f32 %v8850, %v8944
        %v9003 = vadd.f32 %v8851, %v8946
        %v9004 = vadd.f32 %v8852, %v8949
        %v9005 = vadd.f32 %v8853, %v8951
        %v9006 = vadd.f32 %v8854, %v8954
        %v9007 = vadd.f32 %v8855, %v8956
        %v9008 = vadd.f32 %v8856, %v8959
        %v9009 = vadd.f32 %v8857, %v8961
        %v9010 = vadd.f32 %v8858, %v8964
        %v9011 = vadd.f32 %v8859, %v8966
        %v9012 = vadd.f32 %v8860, %v8969
        %v9013 = vadd.f32 %v8861, %v8971
        %v9014 = vadd.f32 %v8862, %v8974
        %v9015 = vadd.f32 %v8863, %v8976
        %v9016 = vadd.f32 %v8864, %v8979
        %v9017 = vadd.f32 %v8865, %v8981
        %v9018 = vadd.f32 %v8866, %v8984
        %v9019 = vadd.f32 %v8867, %v8986
        %v9020 = vld [vmem:[#allocation9] sm:$0x1]
        %v9022 = vperm.slane %v9020, 0
        %v9024 = vadd.f32 %v8988, %v9022
        %v9025 = vadd.f32 %v8989, %v9022
        %v9026 = vadd.f32 %v8990, %v9022
        %v9027 = vadd.f32 %v8991, %v9022
        %v9028 = vadd.f32 %v8992, %v9022
        %v9029 = vadd.f32 %v8993, %v9022
        %v9030 = vadd.f32 %v8994, %v9022
        %v9031 = vadd.f32 %v8995, %v9022
        %v9032 = vadd.f32 %v8996, %v9022
        %v9033 = vadd.f32 %v8997, %v9022
        %v9034 = vadd.f32 %v8998, %v9022
        %v9035 = vadd.f32 %v8999, %v9022
        %v9036 = vadd.f32 %v9000, %v9022
        %v9037 = vadd.f32 %v9001, %v9022
        %v9038 = vadd.f32 %v9002, %v9022
        %v9039 = vadd.f32 %v9003, %v9022
        %v9040 = vadd.f32 %v9004, %v9022
        %v9041 = vadd.f32 %v9005, %v9022
        %v9042 = vadd.f32 %v9006, %v9022
        %v9043 = vadd.f32 %v9007, %v9022
        %v9044 = vadd.f32 %v9008, %v9022
        %v9045 = vadd.f32 %v9009, %v9022
        %v9046 = vadd.f32 %v9010, %v9022
        %v9047 = vadd.f32 %v9011, %v9022
        %v9048 = vadd.f32 %v9012, %v9022
        %v9049 = vadd.f32 %v9013, %v9022
        %v9050 = vadd.f32 %v9014, %v9022
        %v9051 = vadd.f32 %v9015, %v9022
        %v9052 = vadd.f32 %v9016, %v9022
        %v9053 = vadd.f32 %v9017, %v9022
        %v9054 = vadd.f32 %v9018, %v9022
        %v9055 = vadd.f32 %v9019, %v9022
        %v9056 = vmax.f32 %v9024, 0.0
        %v9057 = vmax.f32 %v9025, 0.0
        %v9058 = vmax.f32 %v9026, 0.0
        %v9059 = vmax.f32 %v9027, 0.0
        %v9060 = vmax.f32 %v9028, 0.0
        %v9061 = vmax.f32 %v9029, 0.0
        %v9062 = vmax.f32 %v9030, 0.0
        %v9063 = vmax.f32 %v9031, 0.0
        %v9064 = vmax.f32 %v9032, 0.0
        %v9065 = vmax.f32 %v9033, 0.0
        %v9066 = vmax.f32 %v9034, 0.0
        %v9067 = vmax.f32 %v9035, 0.0
        %v9068 = vmax.f32 %v9036, 0.0
        %v9069 = vmax.f32 %v9037, 0.0
        %v9070 = vmax.f32 %v9038, 0.0
        %v9071 = vmax.f32 %v9039, 0.0
        %v9072 = vmax.f32 %v9040, 0.0
        %v9073 = vmax.f32 %v9041, 0.0
        %v9074 = vmax.f32 %v9042, 0.0
        %v9075 = vmax.f32 %v9043, 0.0
        %v9076 = vmax.f32 %v9044, 0.0
        %v9077 = vmax.f32 %v9045, 0.0
        %v9078 = vmax.f32 %v9046, 0.0
        %v9079 = vmax.f32 %v9047, 0.0
        %v9080 = vmax.f32 %v9048, 0.0
        %v9081 = vmax.f32 %v9049, 0.0
        %v9082 = vmax.f32 %v9050, 0.0
        %v9083 = vmax.f32 %v9051, 0.0
        %v9084 = vmax.f32 %v9052, 0.0
        %v9085 = vmax.f32 %v9053, 0.0
        %v9086 = vmax.f32 %v9054, 0.0
        %v9087 = vmax.f32 %v9055, 0.0
        %v9088 = vld [vmem:[%s11] sm:$0x1]
        %v9090 = vperm.slane %v9088, 0
        %v9092 = vmul.f32 %v9056, %v9090
        %v9093 = vmul.f32 %v9057, %v9090
        %v9094 = vmul.f32 %v9058, %v9090
        %v9095 = vmul.f32 %v9059, %v9090
        %v9096 = vmul.f32 %v9060, %v9090
        %v9097 = vmul.f32 %v9061, %v9090
        %v9098 = vmul.f32 %v9062, %v9090
        %v9099 = vmul.f32 %v9063, %v9090
        %v9100 = vmul.f32 %v9064, %v9090
        %v9101 = vmul.f32 %v9065, %v9090
        %v9102 = vmul.f32 %v9066, %v9090
        %v9103 = vmul.f32 %v9067, %v9090
        %v9104 = vmul.f32 %v9068, %v9090
        %v9105 = vmul.f32 %v9069, %v9090
        %v9106 = vmul.f32 %v9070, %v9090
        %v9107 = vmul.f32 %v9071, %v9090
        %v9108 = vmul.f32 %v9072, %v9090
        %v9109 = vmul.f32 %v9073, %v9090
        %v9110 = vmul.f32 %v9074, %v9090
        %v9111 = vmul.f32 %v9075, %v9090
        %v9112 = vmul.f32 %v9076, %v9090
        %v9113 = vmul.f32 %v9077, %v9090
        %v9114 = vmul.f32 %v9078, %v9090
        %v9115 = vmul.f32 %v9079, %v9090
        %v9116 = vmul.f32 %v9080, %v9090
        %v9117 = vmul.f32 %v9081, %v9090
        %v9118 = vmul.f32 %v9082, %v9090
        %v9119 = vmul.f32 %v9083, %v9090
        %v9120 = vmul.f32 %v9084, %v9090
        %v9121 = vmul.f32 %v9085, %v9090
        %v9122 = vmul.f32 %v9086, %v9090
        %v9123 = vmul.f32 %v9087, %v9090
        %v9124 = vld [vmem:[%s12] sm:$0x1]
        %v9126 = vperm.slane %v9124, 0
        %v9128 = vadd.f32 %v9092, %v9126
        %v9129 = vadd.f32 %v9093, %v9126
        %v9130 = vadd.f32 %v9094, %v9126
        %v9131 = vadd.f32 %v9095, %v9126
        %v9132 = vadd.f32 %v9096, %v9126
        %v9133 = vadd.f32 %v9097, %v9126
        %v9134 = vadd.f32 %v9098, %v9126
        %v9135 = vadd.f32 %v9099, %v9126
        %v9136 = vadd.f32 %v9100, %v9126
        %v9137 = vadd.f32 %v9101, %v9126
        %v9138 = vadd.f32 %v9102, %v9126
        %v9139 = vadd.f32 %v9103, %v9126
        %v9140 = vadd.f32 %v9104, %v9126
        %v9141 = vadd.f32 %v9105, %v9126
        %v9142 = vadd.f32 %v9106, %v9126
        %v9143 = vadd.f32 %v9107, %v9126
        %v9144 = vadd.f32 %v9108, %v9126
        %v9145 = vadd.f32 %v9109, %v9126
        %v9146 = vadd.f32 %v9110, %v9126
        %v9147 = vadd.f32 %v9111, %v9126
        %v9148 = vadd.f32 %v9112, %v9126
        %v9149 = vadd.f32 %v9113, %v9126
        %v9150 = vadd.f32 %v9114, %v9126
        %v9151 = vadd.f32 %v9115, %v9126
        %v9152 = vadd.f32 %v9116, %v9126
        %v9153 = vadd.f32 %v9117, %v9126
        %v9154 = vadd.f32 %v9118, %v9126
        %v9155 = vadd.f32 %v9119, %v9126
        %v9156 = vadd.f32 %v9120, %v9126
        %v9157 = vadd.f32 %v9121, %v9126
        %v9158 = vadd.f32 %v9122, %v9126
        %v9159 = vadd.f32 %v9123, %v9126
        %s9160 = scalar_lea.vmem [#allocation4], 32
        %9161 = vst.msk [vmem:[%s9160 + $0x8] sm:$0xff] %vm711, %v9128
        %9162 = vst.msk [vmem:[%s9160 + $0x10] sm:$0xff] %vm711, %v9129
        %9163 = vst.msk [vmem:[%s9160 + $0x28] sm:$0xff] %vm711, %v9130
        %9164 = vst.msk [vmem:[%s9160 + $0x30] sm:$0xff] %vm711, %v9131
        %9165 = vst.msk [vmem:[%s9160 + $0x48] sm:$0xff] %vm711, %v9132
        %9166 = vst.msk [vmem:[%s9160 + $0x50] sm:$0xff] %vm711, %v9133
        %9167 = vst.msk [vmem:[%s9160 + $0x68] sm:$0xff] %vm711, %v9134
        %9168 = vst.msk [vmem:[%s9160 + $0x70] sm:$0xff] %vm711, %v9135
        %9169 = vst.msk [vmem:[%s9160 + $0x88] sm:$0xff] %vm711, %v9136
        %9170 = vst.msk [vmem:[%s9160 + $0x90] sm:$0xff] %vm711, %v9137
        %9171 = vst.msk [vmem:[%s9160 + $0xa8] sm:$0xff] %vm711, %v9138
        %9172 = vst.msk [vmem:[%s9160 + $0xb0] sm:$0xff] %vm711, %v9139
        %9173 = vst.msk [vmem:[%s9160 + $0xc8] sm:$0xff] %vm711, %v9140
        %9174 = vst.msk [vmem:[%s9160 + $0xd0] sm:$0xff] %vm711, %v9141
        %9175 = vst.msk [vmem:[%s9160 + $0xe8] sm:$0xff] %vm711, %v9142
        %9176 = vst.msk [vmem:[%s9160 + $0xf0] sm:$0xff] %vm711, %v9143
        %9177 = vst.msk [vmem:[%s9160 + $0x108] sm:$0xff] %vm711, %v9144
        %9178 = vst.msk [vmem:[%s9160 + $0x110] sm:$0xff] %vm711, %v9145
        %9179 = vst.msk [vmem:[%s9160 + $0x128] sm:$0xff] %vm711, %v9146
        %9180 = vst.msk [vmem:[%s9160 + $0x130] sm:$0xff] %vm711, %v9147
        %9181 = vst.msk [vmem:[%s9160 + $0x148] sm:$0xff] %vm711, %v9148
        %9182 = vst.msk [vmem:[%s9160 + $0x150] sm:$0xff] %vm711, %v9149
        %9183 = vst.msk [vmem:[%s9160 + $0x168] sm:$0xff] %vm711, %v9150
        %9184 = vst.msk [vmem:[%s9160 + $0x170] sm:$0xff] %vm711, %v9151
        %9185 = vst.msk [vmem:[%s9160 + $0x188] sm:$0xff] %vm711, %v9152
        %9186 = vst.msk [vmem:[%s9160 + $0x190] sm:$0xff] %vm711, %v9153
        %9187 = vst.msk [vmem:[%s9160 + $0x1a8] sm:$0xff] %vm711, %v9154
        %9188 = vst.msk [vmem:[%s9160 + $0x1b0] sm:$0xff] %vm711, %v9155
        %9189 = vst.msk [vmem:[%s9160 + $0x1c8] sm:$0xff] %vm711, %v9156
        %9190 = vst.msk [vmem:[%s9160 + $0x1d0] sm:$0xff] %vm711, %v9157
        %9191 = vst.msk [vmem:[%s9160 + $0x1e8] sm:$0xff] %vm711, %v9158
        %9192 = vst.msk [vmem:[%s9160 + $0x1f0] sm:$0xff] %vm711, %v9159
        %v9193 = vld [vmem:[#allocation4] sm:$0xff]
        %v9194 = vld [vmem:[#allocation4 + $0x8] sm:$0xff]
        %v9195 = vld [vmem:[#allocation4 + $0x10] sm:$0xff]
        %v9196 = vld [vmem:[#allocation4 + $0x18] sm:$0x1]
        %v9197 = vld [vmem:[#allocation4 + $0x20] sm:$0xff]
        %v9198 = vld [vmem:[#allocation4 + $0x28] sm:$0xff]
        %v9199 = vld [vmem:[#allocation4 + $0x30] sm:$0xff]
        %v9200 = vld [vmem:[#allocation4 + $0x38] sm:$0x1]
        %v9201 = vld [vmem:[#allocation4 + $0x40] sm:$0xff]
        %v9202 = vld [vmem:[#allocation4 + $0x48] sm:$0xff]
        %v9203 = vld [vmem:[#allocation4 + $0x50] sm:$0xff]
        %v9204 = vld [vmem:[#allocation4 + $0x58] sm:$0x1]
        %v9205 = vld [vmem:[#allocation4 + $0x60] sm:$0xff]
        %v9206 = vld [vmem:[#allocation4 + $0x68] sm:$0xff]
        %v9207 = vld [vmem:[#allocation4 + $0x70] sm:$0xff]
        %v9208 = vld [vmem:[#allocation4 + $0x78] sm:$0x1]
        %v9209 = vld [vmem:[#allocation4 + $0x80] sm:$0xff]
        %v9210 = vld [vmem:[#allocation4 + $0x88] sm:$0xff]
        %v9211 = vld [vmem:[#allocation4 + $0x90] sm:$0xff]
        %v9212 = vld [vmem:[#allocation4 + $0x98] sm:$0x1]
        %v9213 = vld [vmem:[#allocation4 + $0xa0] sm:$0xff]
        %v9214 = vld [vmem:[#allocation4 + $0xa8] sm:$0xff]
        %v9215 = vld [vmem:[#allocation4 + $0xb0] sm:$0xff]
        %v9216 = vld [vmem:[#allocation4 + $0xb8] sm:$0x1]
        %v9217 = vld [vmem:[#allocation4 + $0xc0] sm:$0xff]
        %v9218 = vld [vmem:[#allocation4 + $0xc8] sm:$0xff]
        %v9219 = vld [vmem:[#allocation4 + $0xd0] sm:$0xff]
        %v9220 = vld [vmem:[#allocation4 + $0xd8] sm:$0x1]
        %v9221 = vld [vmem:[#allocation4 + $0xe0] sm:$0xff]
        %v9222 = vld [vmem:[#allocation4 + $0xe8] sm:$0xff]
        %v9223 = vld [vmem:[#allocation4 + $0xf0] sm:$0xff]
        %v9224 = vld [vmem:[#allocation4 + $0xf8] sm:$0x1]
        %v9225 = vld [vmem:[#allocation4 + $0x100] sm:$0xff]
        %v9226 = vld [vmem:[#allocation4 + $0x108] sm:$0xff]
        %v9227 = vld [vmem:[#allocation4 + $0x110] sm:$0xff]
        %v9228 = vld [vmem:[#allocation4 + $0x118] sm:$0x1]
        %v9229 = vld [vmem:[#allocation4 + $0x120] sm:$0xff]
        %v9230 = vld [vmem:[#allocation4 + $0x128] sm:$0xff]
        %v9231 = vld [vmem:[#allocation4 + $0x130] sm:$0xff]
        %v9232 = vld [vmem:[#allocation4 + $0x138] sm:$0x1]
        %v9233 = vld [vmem:[#allocation4 + $0x140] sm:$0xff]
        %v9234 = vld [vmem:[#allocation4 + $0x148] sm:$0xff]
        %v9235 = vld [vmem:[#allocation4 + $0x150] sm:$0xff]
        %v9236 = vld [vmem:[#allocation4 + $0x158] sm:$0x1]
        %v9237 = vld [vmem:[#allocation4 + $0x160] sm:$0xff]
        %v9238 = vld [vmem:[#allocation4 + $0x168] sm:$0xff]
        %v9239 = vld [vmem:[#allocation4 + $0x170] sm:$0xff]
        %v9240 = vld [vmem:[#allocation4 + $0x178] sm:$0x1]
        %v9241 = vld [vmem:[#allocation4 + $0x180] sm:$0xff]
        %v9242 = vld [vmem:[#allocation4 + $0x188] sm:$0xff]
        %v9243 = vld [vmem:[#allocation4 + $0x190] sm:$0xff]
        %v9244 = vld [vmem:[#allocation4 + $0x198] sm:$0x1]
        %v9245 = vld [vmem:[#allocation4 + $0x1a0] sm:$0xff]
        %v9246 = vld [vmem:[#allocation4 + $0x1a8] sm:$0xff]
        %v9247 = vld [vmem:[#allocation4 + $0x1b0] sm:$0xff]
        %v9248 = vld [vmem:[#allocation4 + $0x1b8] sm:$0x1]
        %v9249 = vld [vmem:[#allocation4 + $0x1c0] sm:$0xff]
        %v9250 = vld [vmem:[#allocation4 + $0x1c8] sm:$0xff]
        %v9251 = vld [vmem:[#allocation4 + $0x1d0] sm:$0xff]
        %v9252 = vld [vmem:[#allocation4 + $0x1d8] sm:$0x1]
        %v9253 = vld [vmem:[#allocation4 + $0x1e0] sm:$0xff]
        %v9254 = vld [vmem:[#allocation4 + $0x1e8] sm:$0xff]
        %v9255 = vld [vmem:[#allocation4 + $0x1f0] sm:$0xff]
        %v9256 = vld [vmem:[#allocation4 + $0x1f8] sm:$0x1]
        %v9257 = vld [vmem:[#allocation4 + $0x200] sm:$0xff]
        %v9258 = vld [vmem:[#allocation4 + $0x208] sm:$0xff]
        %v9259 = vld [vmem:[#allocation4 + $0x210] sm:$0xff]
        %v9260 = vld [vmem:[#allocation4 + $0x218] sm:$0x1]
        %v9261 = vld [vmem:[#allocation4 + $0x220] sm:$0xff]
        %v9262 = vld [vmem:[#allocation4 + $0x228] sm:$0xff]
        %v9263 = vld [vmem:[#allocation4 + $0x230] sm:$0xff]
        %v9264 = vld [vmem:[#allocation4 + $0x238] sm:$0x1]
        %v9313 = vrot.slane %v9193, 7
        %v9314 = vrot.slane %v9194, 7
        %v9315 = vsel %vm1108, %v9313, %v9314
        %v9316 = vrot.slane %v9195, 7
        %v9317 = vsel %vm1108, %v9314, %v9316
        %v9318 = vrot.slane %v9197, 7
        %v9319 = vrot.slane %v9198, 7
        %v9320 = vsel %vm1108, %v9318, %v9319
        %v9321 = vrot.slane %v9199, 7
        %v9322 = vsel %vm1108, %v9319, %v9321
        %v9323 = vrot.slane %v9201, 7
        %v9324 = vrot.slane %v9202, 7
        %v9325 = vsel %vm1108, %v9323, %v9324
        %v9326 = vrot.slane %v9203, 7
        %v9327 = vsel %vm1108, %v9324, %v9326
        %v9328 = vrot.slane %v9205, 7
        %v9329 = vrot.slane %v9206, 7
        %v9330 = vsel %vm1108, %v9328, %v9329
        %v9331 = vrot.slane %v9207, 7
        %v9332 = vsel %vm1108, %v9329, %v9331
        %v9333 = vrot.slane %v9209, 7
        %v9334 = vrot.slane %v9210, 7
        %v9335 = vsel %vm1108, %v9333, %v9334
        %v9336 = vrot.slane %v9211, 7
        %v9337 = vsel %vm1108, %v9334, %v9336
        %v9338 = vrot.slane %v9213, 7
        %v9339 = vrot.slane %v9214, 7
        %v9340 = vsel %vm1108, %v9338, %v9339
        %v9341 = vrot.slane %v9215, 7
        %v9342 = vsel %vm1108, %v9339, %v9341
        %v9343 = vrot.slane %v9217, 7
        %v9344 = vrot.slane %v9218, 7
        %v9345 = vsel %vm1108, %v9343, %v9344
        %v9346 = vrot.slane %v9219, 7
        %v9347 = vsel %vm1108, %v9344, %v9346
        %v9348 = vrot.slane %v9221, 7
        %v9349 = vrot.slane %v9222, 7
        %v9350 = vsel %vm1108, %v9348, %v9349
        %v9351 = vrot.slane %v9223, 7
        %v9352 = vsel %vm1108, %v9349, %v9351
        %v9353 = vrot.slane %v9225, 7
        %v9354 = vrot.slane %v9226, 7
        %v9355 = vsel %vm1108, %v9353, %v9354
        %v9356 = vrot.slane %v9227, 7
        %v9357 = vsel %vm1108, %v9354, %v9356
        %v9358 = vrot.slane %v9229, 7
        %v9359 = vrot.slane %v9230, 7
        %v9360 = vsel %vm1108, %v9358, %v9359
        %v9361 = vrot.slane %v9231, 7
        %v9362 = vsel %vm1108, %v9359, %v9361
        %v9363 = vrot.slane %v9233, 7
        %v9364 = vrot.slane %v9234, 7
        %v9365 = vsel %vm1108, %v9363, %v9364
        %v9366 = vrot.slane %v9235, 7
        %v9367 = vsel %vm1108, %v9364, %v9366
        %v9368 = vrot.slane %v9237, 7
        %v9369 = vrot.slane %v9238, 7
        %v9370 = vsel %vm1108, %v9368, %v9369
        %v9371 = vrot.slane %v9239, 7
        %v9372 = vsel %vm1108, %v9369, %v9371
        %v9373 = vrot.slane %v9241, 7
        %v9374 = vrot.slane %v9242, 7
        %v9375 = vsel %vm1108, %v9373, %v9374
        %v9376 = vrot.slane %v9243, 7
        %v9377 = vsel %vm1108, %v9374, %v9376
        %v9378 = vrot.slane %v9245, 7
        %v9379 = vrot.slane %v9246, 7
        %v9380 = vsel %vm1108, %v9378, %v9379
        %v9381 = vrot.slane %v9247, 7
        %v9382 = vsel %vm1108, %v9379, %v9381
        %v9383 = vrot.slane %v9249, 7
        %v9384 = vrot.slane %v9250, 7
        %v9385 = vsel %vm1108, %v9383, %v9384
        %v9386 = vrot.slane %v9251, 7
        %v9387 = vsel %vm1108, %v9384, %v9386
        %v9388 = vrot.slane %v9253, 7
        %v9389 = vrot.slane %v9254, 7
        %v9390 = vsel %vm1108, %v9388, %v9389
        %v9391 = vrot.slane %v9255, 7
        %v9392 = vsel %vm1108, %v9389, %v9391
        %v9425 = vpack.c.bf16 %v9317, %v9315
        %v9426 = vpack.c.bf16 %v9322, %v9320
        %v9427 = vpack.c.bf16 %v9327, %v9325
        %v9428 = vpack.c.bf16 %v9332, %v9330
        %v9429 = vpack.c.bf16 %v9337, %v9335
        %v9430 = vpack.c.bf16 %v9342, %v9340
        %v9431 = vpack.c.bf16 %v9347, %v9345
        %v9432 = vpack.c.bf16 %v9352, %v9350
        %v9433 = vpack.c.bf16 %v9357, %v9355
        %v9434 = vpack.c.bf16 %v9362, %v9360
        %v9435 = vpack.c.bf16 %v9367, %v9365
        %v9436 = vpack.c.bf16 %v9372, %v9370
        %v9437 = vpack.c.bf16 %v9377, %v9375
        %v9438 = vpack.c.bf16 %v9382, %v9380
        %v9439 = vpack.c.bf16 %v9387, %v9385
        %v9440 = vpack.c.bf16 %v9392, %v9390
        %v9441 = vld [vmem:[%s13] sm:$0xf]
        %v9442 = vld [vmem:[%s13 + $0x4] sm:$0xf]
        %v9443 = vpack.c.bf16 %v9195, %v9194
        %v9444 = vpack.c.bf16 %v9199, %v9198
        %v9445 = vpack.c.bf16 %v9203, %v9202
        %v9446 = vpack.c.bf16 %v9207, %v9206
        %v9447 = vpack.c.bf16 %v9211, %v9210
        %v9448 = vpack.c.bf16 %v9215, %v9214
        %v9449 = vpack.c.bf16 %v9219, %v9218
        %v9450 = vpack.c.bf16 %v9223, %v9222
        %v9451 = vpack.c.bf16 %v9227, %v9226
        %v9452 = vpack.c.bf16 %v9231, %v9230
        %v9453 = vpack.c.bf16 %v9235, %v9234
        %v9454 = vpack.c.bf16 %v9239, %v9238
        %v9455 = vpack.c.bf16 %v9243, %v9242
        %v9456 = vpack.c.bf16 %v9247, %v9246
        %v9457 = vpack.c.bf16 %v9251, %v9250
        %v9458 = vpack.c.bf16 %v9255, %v9254
        %s9459 = scalar_lea.vmem %s13, 8
        %v9460 = vld [vmem:[%s9459] sm:$0xf]
        %v9461 = vld [vmem:[%s9459 + $0x4] sm:$0xf]
        %v9464 = vunpack.c.l.b16 %v9460
        %v9465 = vunpack.c.l.b16 %v9461
        %v9466 = vpack.c.b16 %v9465, %v9464
        %v9469 = vsel %vm711, %v9443, 0
        %v9472 = vsel %vm711, %v9444, 0
        %v9475 = vsel %vm711, %v9445, 0
        %v9478 = vsel %vm711, %v9446, 0
        %v9481 = vsel %vm711, %v9447, 0
        %v9484 = vsel %vm711, %v9448, 0
        %v9487 = vsel %vm711, %v9449, 0
        %v9490 = vsel %vm711, %v9450, 0
        %v9493 = vsel %vm711, %v9451, 0
        %v9496 = vsel %vm711, %v9452, 0
        %v9499 = vsel %vm711, %v9453, 0
        %v9502 = vsel %vm711, %v9454, 0
        %v9505 = vsel %vm711, %v9455, 0
        %v9508 = vsel %vm711, %v9456, 0
        %v9511 = vsel %vm711, %v9457, 0
        %v9514 = vsel %vm711, %v9458, 0
        %9516 = vmatpush.bf16.msra.mxu0 0
        %9517 = vmatpush.bf16.msra.mxu0 0
        %9518 = vmatpush.bf16.msra.mxu0 0
        %9519 = vmatpush.bf16.msra.mxu0 0
        %9520 = vmatpush.bf16.msra.mxu0 0
        %9521 = vmatpush.bf16.msra.mxu0 0
        %9522 = vmatpush.bf16.msra.mxu0 0
        %9523 = vmatpush.bf16.msra.mxu0 %v9466
        %9524 = vmatmul.bf16.gmra.mxu0 %v9469
        %v9525 = vpop.f32.mrf.mxu0
        %v9526 = vadd.f32 0.0, %v9525
        %v9527 = vpop.f32.mrf.mxu0
        %v9528 = vadd.f32 0.0, %v9527
        %9529 = vmatmul.bf16.gmra.mxu0 %v9472
        %v9530 = vpop.f32.mrf.mxu0
        %v9531 = vadd.f32 0.0, %v9530
        %v9532 = vpop.f32.mrf.mxu0
        %v9533 = vadd.f32 0.0, %v9532
        %9534 = vmatmul.bf16.gmra.mxu0 %v9475
        %v9535 = vpop.f32.mrf.mxu0
        %v9536 = vadd.f32 0.0, %v9535
        %v9537 = vpop.f32.mrf.mxu0
        %v9538 = vadd.f32 0.0, %v9537
        %9539 = vmatmul.bf16.gmra.mxu0 %v9478
        %v9540 = vpop.f32.mrf.mxu0
        %v9541 = vadd.f32 0.0, %v9540
        %v9542 = vpop.f32.mrf.mxu0
        %v9543 = vadd.f32 0.0, %v9542
        %9544 = vmatmul.bf16.gmra.mxu0 %v9481
        %v9545 = vpop.f32.mrf.mxu0
        %v9546 = vadd.f32 0.0, %v9545
        %v9547 = vpop.f32.mrf.mxu0
        %v9548 = vadd.f32 0.0, %v9547
        %9549 = vmatmul.bf16.gmra.mxu0 %v9484
        %v9550 = vpop.f32.mrf.mxu0
        %v9551 = vadd.f32 0.0, %v9550
        %v9552 = vpop.f32.mrf.mxu0
        %v9553 = vadd.f32 0.0, %v9552
        %9554 = vmatmul.bf16.gmra.mxu0 %v9487
        %v9555 = vpop.f32.mrf.mxu0
        %v9556 = vadd.f32 0.0, %v9555
        %v9557 = vpop.f32.mrf.mxu0
        %v9558 = vadd.f32 0.0, %v9557
        %9559 = vmatmul.bf16.gmra.mxu0 %v9490
        %v9560 = vpop.f32.mrf.mxu0
        %v9561 = vadd.f32 0.0, %v9560
        %v9562 = vpop.f32.mrf.mxu0
        %v9563 = vadd.f32 0.0, %v9562
        %9564 = vmatmul.bf16.gmra.mxu0 %v9493
        %v9565 = vpop.f32.mrf.mxu0
        %v9566 = vadd.f32 0.0, %v9565
        %v9567 = vpop.f32.mrf.mxu0
        %v9568 = vadd.f32 0.0, %v9567
        %9569 = vmatmul.bf16.gmra.mxu0 %v9496
        %v9570 = vpop.f32.mrf.mxu0
        %v9571 = vadd.f32 0.0, %v9570
        %v9572 = vpop.f32.mrf.mxu0
        %v9573 = vadd.f32 0.0, %v9572
        %9574 = vmatmul.bf16.gmra.mxu0 %v9499
        %v9575 = vpop.f32.mrf.mxu0
        %v9576 = vadd.f32 0.0, %v9575
        %v9577 = vpop.f32.mrf.mxu0
        %v9578 = vadd.f32 0.0, %v9577
        %9579 = vmatmul.bf16.gmra.mxu0 %v9502
        %v9580 = vpop.f32.mrf.mxu0
        %v9581 = vadd.f32 0.0, %v9580
        %v9582 = vpop.f32.mrf.mxu0
        %v9583 = vadd.f32 0.0, %v9582
        %9584 = vmatmul.bf16.gmra.mxu0 %v9505
        %v9585 = vpop.f32.mrf.mxu0
        %v9586 = vadd.f32 0.0, %v9585
        %v9587 = vpop.f32.mrf.mxu0
        %v9588 = vadd.f32 0.0, %v9587
        %9589 = vmatmul.bf16.gmra.mxu0 %v9508
        %v9590 = vpop.f32.mrf.mxu0
        %v9591 = vadd.f32 0.0, %v9590
        %v9592 = vpop.f32.mrf.mxu0
        %v9593 = vadd.f32 0.0, %v9592
        %9594 = vmatmul.bf16.gmra.mxu0 %v9511
        %v9595 = vpop.f32.mrf.mxu0
        %v9596 = vadd.f32 0.0, %v9595
        %v9597 = vpop.f32.mrf.mxu0
        %v9598 = vadd.f32 0.0, %v9597
        %9599 = vmatmul.bf16.gmra.mxu0 %v9514
        %v9600 = vpop.f32.mrf.mxu0
        %v9601 = vadd.f32 0.0, %v9600
        %v9602 = vpop.f32.mrf.mxu0
        %v9603 = vadd.f32 0.0, %v9602
        %9604 = vdwg.mxu0
        %v9607 = vunpack.c.l.b16 %v9441
        %v9608 = vunpack.c.l.b16 %v9442
        %v9609 = vpack.c.b16 %v9608, %v9607
        %v9612 = vsel %vm711, %v9425, 0
        %v9615 = vsel %vm711, %v9426, 0
        %v9618 = vsel %vm711, %v9427, 0
        %v9621 = vsel %vm711, %v9428, 0
        %v9624 = vsel %vm711, %v9429, 0
        %v9627 = vsel %vm711, %v9430, 0
        %v9630 = vsel %vm711, %v9431, 0
        %v9633 = vsel %vm711, %v9432, 0
        %v9636 = vsel %vm711, %v9433, 0
        %v9639 = vsel %vm711, %v9434, 0
        %v9642 = vsel %vm711, %v9435, 0
        %v9645 = vsel %vm711, %v9436, 0
        %v9648 = vsel %vm711, %v9437, 0
        %v9651 = vsel %vm711, %v9438, 0
        %v9654 = vsel %vm711, %v9439, 0
        %v9657 = vsel %vm711, %v9440, 0
        %9659 = vmatpush.bf16.msra.mxu0 0
        %9660 = vmatpush.bf16.msra.mxu0 0
        %9661 = vmatpush.bf16.msra.mxu0 0
        %9662 = vmatpush.bf16.msra.mxu0 0
        %9663 = vmatpush.bf16.msra.mxu0 0
        %9664 = vmatpush.bf16.msra.mxu0 0
        %9665 = vmatpush.bf16.msra.mxu0 0
        %9666 = vmatpush.bf16.msra.mxu0 %v9609
        %9667 = vmatmul.bf16.gmra.mxu0 %v9612
        %v9668 = vpop.f32.mrf.mxu0
        %v9669 = vadd.f32 %v9526, %v9668
        %v9670 = vpop.f32.mrf.mxu0
        %v9671 = vadd.f32 %v9528, %v9670
        %9672 = vmatmul.bf16.gmra.mxu0 %v9615
        %v9673 = vpop.f32.mrf.mxu0
        %v9674 = vadd.f32 %v9531, %v9673
        %v9675 = vpop.f32.mrf.mxu0
        %v9676 = vadd.f32 %v9533, %v9675
        %9677 = vmatmul.bf16.gmra.mxu0 %v9618
        %v9678 = vpop.f32.mrf.mxu0
        %v9679 = vadd.f32 %v9536, %v9678
        %v9680 = vpop.f32.mrf.mxu0
        %v9681 = vadd.f32 %v9538, %v9680
        %9682 = vmatmul.bf16.gmra.mxu0 %v9621
        %v9683 = vpop.f32.mrf.mxu0
        %v9684 = vadd.f32 %v9541, %v9683
        %v9685 = vpop.f32.mrf.mxu0
        %v9686 = vadd.f32 %v9543, %v9685
        %9687 = vmatmul.bf16.gmra.mxu0 %v9624
        %v9688 = vpop.f32.mrf.mxu0
        %v9689 = vadd.f32 %v9546, %v9688
        %v9690 = vpop.f32.mrf.mxu0
        %v9691 = vadd.f32 %v9548, %v9690
        %9692 = vmatmul.bf16.gmra.mxu0 %v9627
        %v9693 = vpop.f32.mrf.mxu0
        %v9694 = vadd.f32 %v9551, %v9693
        %v9695 = vpop.f32.mrf.mxu0
        %v9696 = vadd.f32 %v9553, %v9695
        %9697 = vmatmul.bf16.gmra.mxu0 %v9630
        %v9698 = vpop.f32.mrf.mxu0
        %v9699 = vadd.f32 %v9556, %v9698
        %v9700 = vpop.f32.mrf.mxu0
        %v9701 = vadd.f32 %v9558, %v9700
        %9702 = vmatmul.bf16.gmra.mxu0 %v9633
        %v9703 = vpop.f32.mrf.mxu0
        %v9704 = vadd.f32 %v9561, %v9703
        %v9705 = vpop.f32.mrf.mxu0
        %v9706 = vadd.f32 %v9563, %v9705
        %9707 = vmatmul.bf16.gmra.mxu0 %v9636
        %v9708 = vpop.f32.mrf.mxu0
        %v9709 = vadd.f32 %v9566, %v9708
        %v9710 = vpop.f32.mrf.mxu0
        %v9711 = vadd.f32 %v9568, %v9710
        %9712 = vmatmul.bf16.gmra.mxu0 %v9639
        %v9713 = vpop.f32.mrf.mxu0
        %v9714 = vadd.f32 %v9571, %v9713
        %v9715 = vpop.f32.mrf.mxu0
        %v9716 = vadd.f32 %v9573, %v9715
        %9717 = vmatmul.bf16.gmra.mxu0 %v9642
        %v9718 = vpop.f32.mrf.mxu0
        %v9719 = vadd.f32 %v9576, %v9718
        %v9720 = vpop.f32.mrf.mxu0
        %v9721 = vadd.f32 %v9578, %v9720
        %9722 = vmatmul.bf16.gmra.mxu0 %v9645
        %v9723 = vpop.f32.mrf.mxu0
        %v9724 = vadd.f32 %v9581, %v9723
        %v9725 = vpop.f32.mrf.mxu0
        %v9726 = vadd.f32 %v9583, %v9725
        %9727 = vmatmul.bf16.gmra.mxu0 %v9648
        %v9728 = vpop.f32.mrf.mxu0
        %v9729 = vadd.f32 %v9586, %v9728
        %v9730 = vpop.f32.mrf.mxu0
        %v9731 = vadd.f32 %v9588, %v9730
        %9732 = vmatmul.bf16.gmra.mxu0 %v9651
        %v9733 = vpop.f32.mrf.mxu0
        %v9734 = vadd.f32 %v9591, %v9733
        %v9735 = vpop.f32.mrf.mxu0
        %v9736 = vadd.f32 %v9593, %v9735
        %9737 = vmatmul.bf16.gmra.mxu0 %v9654
        %v9738 = vpop.f32.mrf.mxu0
        %v9739 = vadd.f32 %v9596, %v9738
        %v9740 = vpop.f32.mrf.mxu0
        %v9741 = vadd.f32 %v9598, %v9740
        %9742 = vmatmul.bf16.gmra.mxu0 %v9657
        %v9743 = vpop.f32.mrf.mxu0
        %v9744 = vadd.f32 %v9601, %v9743
        %v9745 = vpop.f32.mrf.mxu0
        %v9746 = vadd.f32 %v9603, %v9745
        %9747 = vdwg.mxu0
        %v9764 = vrot.slane %v9194, 1
        %v9765 = vrot.slane %v9195, 1
        %v9766 = vsel %vm1727, %v9764, %v9765
        %v9767 = vrot.slane %v9196, 1
        %v9768 = vsel %vm1727, %v9765, %v9767
        %v9769 = vrot.slane %v9198, 1
        %v9770 = vrot.slane %v9199, 1
        %v9771 = vsel %vm1727, %v9769, %v9770
        %v9772 = vrot.slane %v9200, 1
        %v9773 = vsel %vm1727, %v9770, %v9772
        %v9774 = vrot.slane %v9202, 1
        %v9775 = vrot.slane %v9203, 1
        %v9776 = vsel %vm1727, %v9774, %v9775
        %v9777 = vrot.slane %v9204, 1
        %v9778 = vsel %vm1727, %v9775, %v9777
        %v9779 = vrot.slane %v9206, 1
        %v9780 = vrot.slane %v9207, 1
        %v9781 = vsel %vm1727, %v9779, %v9780
        %v9782 = vrot.slane %v9208, 1
        %v9783 = vsel %vm1727, %v9780, %v9782
        %v9784 = vrot.slane %v9210, 1
        %v9785 = vrot.slane %v9211, 1
        %v9786 = vsel %vm1727, %v9784, %v9785
        %v9787 = vrot.slane %v9212, 1
        %v9788 = vsel %vm1727, %v9785, %v9787
        %v9789 = vrot.slane %v9214, 1
        %v9790 = vrot.slane %v9215, 1
        %v9791 = vsel %vm1727, %v9789, %v9790
        %v9792 = vrot.slane %v9216, 1
        %v9793 = vsel %vm1727, %v9790, %v9792
        %v9794 = vrot.slane %v9218, 1
        %v9795 = vrot.slane %v9219, 1
        %v9796 = vsel %vm1727, %v9794, %v9795
        %v9797 = vrot.slane %v9220, 1
        %v9798 = vsel %vm1727, %v9795, %v9797
        %v9799 = vrot.slane %v9222, 1
        %v9800 = vrot.slane %v9223, 1
        %v9801 = vsel %vm1727, %v9799, %v9800
        %v9802 = vrot.slane %v9224, 1
        %v9803 = vsel %vm1727, %v9800, %v9802
        %v9804 = vrot.slane %v9226, 1
        %v9805 = vrot.slane %v9227, 1
        %v9806 = vsel %vm1727, %v9804, %v9805
        %v9807 = vrot.slane %v9228, 1
        %v9808 = vsel %vm1727, %v9805, %v9807
        %v9809 = vrot.slane %v9230, 1
        %v9810 = vrot.slane %v9231, 1
        %v9811 = vsel %vm1727, %v9809, %v9810
        %v9812 = vrot.slane %v9232, 1
        %v9813 = vsel %vm1727, %v9810, %v9812
        %v9814 = vrot.slane %v9234, 1
        %v9815 = vrot.slane %v9235, 1
        %v9816 = vsel %vm1727, %v9814, %v9815
        %v9817 = vrot.slane %v9236, 1
        %v9818 = vsel %vm1727, %v9815, %v9817
        %v9819 = vrot.slane %v9238, 1
        %v9820 = vrot.slane %v9239, 1
        %v9821 = vsel %vm1727, %v9819, %v9820
        %v9822 = vrot.slane %v9240, 1
        %v9823 = vsel %vm1727, %v9820, %v9822
        %v9824 = vrot.slane %v9242, 1
        %v9825 = vrot.slane %v9243, 1
        %v9826 = vsel %vm1727, %v9824, %v9825
        %v9827 = vrot.slane %v9244, 1
        %v9828 = vsel %vm1727, %v9825, %v9827
        %v9829 = vrot.slane %v9246, 1
        %v9830 = vrot.slane %v9247, 1
        %v9831 = vsel %vm1727, %v9829, %v9830
        %v9832 = vrot.slane %v9248, 1
        %v9833 = vsel %vm1727, %v9830, %v9832
        %v9834 = vrot.slane %v9250, 1
        %v9835 = vrot.slane %v9251, 1
        %v9836 = vsel %vm1727, %v9834, %v9835
        %v9837 = vrot.slane %v9252, 1
        %v9838 = vsel %vm1727, %v9835, %v9837
        %v9839 = vrot.slane %v9254, 1
        %v9840 = vrot.slane %v9255, 1
        %v9841 = vsel %vm1727, %v9839, %v9840
        %v9842 = vrot.slane %v9256, 1
        %v9843 = vsel %vm1727, %v9840, %v9842
        %v9876 = vpack.c.bf16 %v9768, %v9766
        %v9877 = vpack.c.bf16 %v9773, %v9771
        %v9878 = vpack.c.bf16 %v9778, %v9776
        %v9879 = vpack.c.bf16 %v9783, %v9781
        %v9880 = vpack.c.bf16 %v9788, %v9786
        %v9881 = vpack.c.bf16 %v9793, %v9791
        %v9882 = vpack.c.bf16 %v9798, %v9796
        %v9883 = vpack.c.bf16 %v9803, %v9801
        %v9884 = vpack.c.bf16 %v9808, %v9806
        %v9885 = vpack.c.bf16 %v9813, %v9811
        %v9886 = vpack.c.bf16 %v9818, %v9816
        %v9887 = vpack.c.bf16 %v9823, %v9821
        %v9888 = vpack.c.bf16 %v9828, %v9826
        %v9889 = vpack.c.bf16 %v9833, %v9831
        %v9890 = vpack.c.bf16 %v9838, %v9836
        %v9891 = vpack.c.bf16 %v9843, %v9841
        %s9892 = scalar_lea.vmem %s13, 16
        %v9893 = vld [vmem:[%s9892] sm:$0xf]
        %v9894 = vld [vmem:[%s9892 + $0x4] sm:$0xf]
        %v9897 = vunpack.c.l.b16 %v9893
        %v9898 = vunpack.c.l.b16 %v9894
        %v9899 = vpack.c.b16 %v9898, %v9897
        %v9902 = vsel %vm711, %v9876, 0
        %v9905 = vsel %vm711, %v9877, 0
        %v9908 = vsel %vm711, %v9878, 0
        %v9911 = vsel %vm711, %v9879, 0
        %v9914 = vsel %vm711, %v9880, 0
        %v9917 = vsel %vm711, %v9881, 0
        %v9920 = vsel %vm711, %v9882, 0
        %v9923 = vsel %vm711, %v9883, 0
        %v9926 = vsel %vm711, %v9884, 0
        %v9929 = vsel %vm711, %v9885, 0
        %v9932 = vsel %vm711, %v9886, 0
        %v9935 = vsel %vm711, %v9887, 0
        %v9938 = vsel %vm711, %v9888, 0
        %v9941 = vsel %vm711, %v9889, 0
        %v9944 = vsel %vm711, %v9890, 0
        %v9947 = vsel %vm711, %v9891, 0
        %9949 = vmatpush.bf16.msra.mxu0 0
        %9950 = vmatpush.bf16.msra.mxu0 0
        %9951 = vmatpush.bf16.msra.mxu0 0
        %9952 = vmatpush.bf16.msra.mxu0 0
        %9953 = vmatpush.bf16.msra.mxu0 0
        %9954 = vmatpush.bf16.msra.mxu0 0
        %9955 = vmatpush.bf16.msra.mxu0 0
        %9956 = vmatpush.bf16.msra.mxu0 %v9899
        %9957 = vmatmul.bf16.gmra.mxu0 %v9902
        %v9958 = vpop.f32.mrf.mxu0
        %v9959 = vadd.f32 0.0, %v9958
        %v9960 = vpop.f32.mrf.mxu0
        %v9961 = vadd.f32 0.0, %v9960
        %9962 = vmatmul.bf16.gmra.mxu0 %v9905
        %v9963 = vpop.f32.mrf.mxu0
        %v9964 = vadd.f32 0.0, %v9963
        %v9965 = vpop.f32.mrf.mxu0
        %v9966 = vadd.f32 0.0, %v9965
        %9967 = vmatmul.bf16.gmra.mxu0 %v9908
        %v9968 = vpop.f32.mrf.mxu0
        %v9969 = vadd.f32 0.0, %v9968
        %v9970 = vpop.f32.mrf.mxu0
        %v9971 = vadd.f32 0.0, %v9970
        %9972 = vmatmul.bf16.gmra.mxu0 %v9911
        %v9973 = vpop.f32.mrf.mxu0
        %v9974 = vadd.f32 0.0, %v9973
        %v9975 = vpop.f32.mrf.mxu0
        %v9976 = vadd.f32 0.0, %v9975
        %9977 = vmatmul.bf16.gmra.mxu0 %v9914
        %v9978 = vpop.f32.mrf.mxu0
        %v9979 = vadd.f32 0.0, %v9978
        %v9980 = vpop.f32.mrf.mxu0
        %v9981 = vadd.f32 0.0, %v9980
        %9982 = vmatmul.bf16.gmra.mxu0 %v9917
        %v9983 = vpop.f32.mrf.mxu0
        %v9984 = vadd.f32 0.0, %v9983
        %v9985 = vpop.f32.mrf.mxu0
        %v9986 = vadd.f32 0.0, %v9985
        %9987 = vmatmul.bf16.gmra.mxu0 %v9920
        %v9988 = vpop.f32.mrf.mxu0
        %v9989 = vadd.f32 0.0, %v9988
        %v9990 = vpop.f32.mrf.mxu0
        %v9991 = vadd.f32 0.0, %v9990
        %9992 = vmatmul.bf16.gmra.mxu0 %v9923
        %v9993 = vpop.f32.mrf.mxu0
        %v9994 = vadd.f32 0.0, %v9993
        %v9995 = vpop.f32.mrf.mxu0
        %v9996 = vadd.f32 0.0, %v9995
        %9997 = vmatmul.bf16.gmra.mxu0 %v9926
        %v9998 = vpop.f32.mrf.mxu0
        %v9999 = vadd.f32 0.0, %v9998
        %v10000 = vpop.f32.mrf.mxu0
        %v10001 = vadd.f32 0.0, %v10000
        %10002 = vmatmul.bf16.gmra.mxu0 %v9929
        %v10003 = vpop.f32.mrf.mxu0
        %v10004 = vadd.f32 0.0, %v10003
        %v10005 = vpop.f32.mrf.mxu0
        %v10006 = vadd.f32 0.0, %v10005
        %10007 = vmatmul.bf16.gmra.mxu0 %v9932
        %v10008 = vpop.f32.mrf.mxu0
        %v10009 = vadd.f32 0.0, %v10008
        %v10010 = vpop.f32.mrf.mxu0
        %v10011 = vadd.f32 0.0, %v10010
        %10012 = vmatmul.bf16.gmra.mxu0 %v9935
        %v10013 = vpop.f32.mrf.mxu0
        %v10014 = vadd.f32 0.0, %v10013
        %v10015 = vpop.f32.mrf.mxu0
        %v10016 = vadd.f32 0.0, %v10015
        %10017 = vmatmul.bf16.gmra.mxu0 %v9938
        %v10018 = vpop.f32.mrf.mxu0
        %v10019 = vadd.f32 0.0, %v10018
        %v10020 = vpop.f32.mrf.mxu0
        %v10021 = vadd.f32 0.0, %v10020
        %10022 = vmatmul.bf16.gmra.mxu0 %v9941
        %v10023 = vpop.f32.mrf.mxu0
        %v10024 = vadd.f32 0.0, %v10023
        %v10025 = vpop.f32.mrf.mxu0
        %v10026 = vadd.f32 0.0, %v10025
        %10027 = vmatmul.bf16.gmra.mxu0 %v9944
        %v10028 = vpop.f32.mrf.mxu0
        %v10029 = vadd.f32 0.0, %v10028
        %v10030 = vpop.f32.mrf.mxu0
        %v10031 = vadd.f32 0.0, %v10030
        %10032 = vmatmul.bf16.gmra.mxu0 %v9947
        %v10033 = vpop.f32.mrf.mxu0
        %v10034 = vadd.f32 0.0, %v10033
        %v10035 = vpop.f32.mrf.mxu0
        %v10036 = vadd.f32 0.0, %v10035
        %10037 = vdwg.mxu0
        %v10038 = vadd.f32 %v9669, %v9959
        %v10039 = vadd.f32 %v9671, %v9961
        %v10040 = vadd.f32 %v9674, %v9964
        %v10041 = vadd.f32 %v9676, %v9966
        %v10042 = vadd.f32 %v9679, %v9969
        %v10043 = vadd.f32 %v9681, %v9971
        %v10044 = vadd.f32 %v9684, %v9974
        %v10045 = vadd.f32 %v9686, %v9976
        %v10046 = vadd.f32 %v9689, %v9979
        %v10047 = vadd.f32 %v9691, %v9981
        %v10048 = vadd.f32 %v9694, %v9984
        %v10049 = vadd.f32 %v9696, %v9986
        %v10050 = vadd.f32 %v9699, %v9989
        %v10051 = vadd.f32 %v9701, %v9991
        %v10052 = vadd.f32 %v9704, %v9994
        %v10053 = vadd.f32 %v9706, %v9996
        %v10054 = vadd.f32 %v9709, %v9999
        %v10055 = vadd.f32 %v9711, %v10001
        %v10056 = vadd.f32 %v9714, %v10004
        %v10057 = vadd.f32 %v9716, %v10006
        %v10058 = vadd.f32 %v9719, %v10009
        %v10059 = vadd.f32 %v9721, %v10011
        %v10060 = vadd.f32 %v9724, %v10014
        %v10061 = vadd.f32 %v9726, %v10016
        %v10062 = vadd.f32 %v9729, %v10019
        %v10063 = vadd.f32 %v9731, %v10021
        %v10064 = vadd.f32 %v9734, %v10024
        %v10065 = vadd.f32 %v9736, %v10026
        %v10066 = vadd.f32 %v9739, %v10029
        %v10067 = vadd.f32 %v9741, %v10031
        %v10068 = vadd.f32 %v9744, %v10034
        %v10069 = vadd.f32 %v9746, %v10036
        %v10073 = vrot.slane %v9257, 7
        %v10074 = vrot.slane %v9258, 7
        %v10075 = vsel %vm1108, %v10073, %v10074
        %v10076 = vrot.slane %v9259, 7
        %v10077 = vsel %vm1108, %v10074, %v10076
        %v10080 = vpack.c.bf16 %v10077, %v10075
        %s10081 = scalar_lea.vmem %s13, 24
        %v10082 = vld [vmem:[%s10081] sm:$0xf]
        %v10083 = vld [vmem:[%s10081 + $0x4] sm:$0xf]
        %v10086 = vunpack.c.l.b16 %v10082
        %v10087 = vunpack.c.l.b16 %v10083
        %v10088 = vpack.c.b16 %v10087, %v10086
        %v10091 = vsel %vm711, %v10080, 0
        %10093 = vmatpush.bf16.msra.mxu0 0
        %10094 = vmatpush.bf16.msra.mxu0 0
        %10095 = vmatpush.bf16.msra.mxu0 0
        %10096 = vmatpush.bf16.msra.mxu0 0
        %10097 = vmatpush.bf16.msra.mxu0 0
        %10098 = vmatpush.bf16.msra.mxu0 0
        %10099 = vmatpush.bf16.msra.mxu0 0
        %10100 = vmatpush.bf16.msra.mxu0 %v10088
        %10101 = vmatmul.bf16.gmra.mxu0 %v9615
        %v10102 = vpop.f32.mrf.mxu0
        %v10103 = vadd.f32 0.0, %v10102
        %v10104 = vpop.f32.mrf.mxu0
        %v10105 = vadd.f32 0.0, %v10104
        %10106 = vmatmul.bf16.gmra.mxu0 %v9618
        %v10107 = vpop.f32.mrf.mxu0
        %v10108 = vadd.f32 0.0, %v10107
        %v10109 = vpop.f32.mrf.mxu0
        %v10110 = vadd.f32 0.0, %v10109
        %10111 = vmatmul.bf16.gmra.mxu0 %v9621
        %v10112 = vpop.f32.mrf.mxu0
        %v10113 = vadd.f32 0.0, %v10112
        %v10114 = vpop.f32.mrf.mxu0
        %v10115 = vadd.f32 0.0, %v10114
        %10116 = vmatmul.bf16.gmra.mxu0 %v9624
        %v10117 = vpop.f32.mrf.mxu0
        %v10118 = vadd.f32 0.0, %v10117
        %v10119 = vpop.f32.mrf.mxu0
        %v10120 = vadd.f32 0.0, %v10119
        %10121 = vmatmul.bf16.gmra.mxu0 %v9627
        %v10122 = vpop.f32.mrf.mxu0
        %v10123 = vadd.f32 0.0, %v10122
        %v10124 = vpop.f32.mrf.mxu0
        %v10125 = vadd.f32 0.0, %v10124
        %10126 = vmatmul.bf16.gmra.mxu0 %v9630
        %v10127 = vpop.f32.mrf.mxu0
        %v10128 = vadd.f32 0.0, %v10127
        %v10129 = vpop.f32.mrf.mxu0
        %v10130 = vadd.f32 0.0, %v10129
        %10131 = vmatmul.bf16.gmra.mxu0 %v9633
        %v10132 = vpop.f32.mrf.mxu0
        %v10133 = vadd.f32 0.0, %v10132
        %v10134 = vpop.f32.mrf.mxu0
        %v10135 = vadd.f32 0.0, %v10134
        %10136 = vmatmul.bf16.gmra.mxu0 %v9636
        %v10137 = vpop.f32.mrf.mxu0
        %v10138 = vadd.f32 0.0, %v10137
        %v10139 = vpop.f32.mrf.mxu0
        %v10140 = vadd.f32 0.0, %v10139
        %10141 = vmatmul.bf16.gmra.mxu0 %v9639
        %v10142 = vpop.f32.mrf.mxu0
        %v10143 = vadd.f32 0.0, %v10142
        %v10144 = vpop.f32.mrf.mxu0
        %v10145 = vadd.f32 0.0, %v10144
        %10146 = vmatmul.bf16.gmra.mxu0 %v9642
        %v10147 = vpop.f32.mrf.mxu0
        %v10148 = vadd.f32 0.0, %v10147
        %v10149 = vpop.f32.mrf.mxu0
        %v10150 = vadd.f32 0.0, %v10149
        %10151 = vmatmul.bf16.gmra.mxu0 %v9645
        %v10152 = vpop.f32.mrf.mxu0
        %v10153 = vadd.f32 0.0, %v10152
        %v10154 = vpop.f32.mrf.mxu0
        %v10155 = vadd.f32 0.0, %v10154
        %10156 = vmatmul.bf16.gmra.mxu0 %v9648
        %v10157 = vpop.f32.mrf.mxu0
        %v10158 = vadd.f32 0.0, %v10157
        %v10159 = vpop.f32.mrf.mxu0
        %v10160 = vadd.f32 0.0, %v10159
        %10161 = vmatmul.bf16.gmra.mxu0 %v9651
        %v10162 = vpop.f32.mrf.mxu0
        %v10163 = vadd.f32 0.0, %v10162
        %v10164 = vpop.f32.mrf.mxu0
        %v10165 = vadd.f32 0.0, %v10164
        %10166 = vmatmul.bf16.gmra.mxu0 %v9654
        %v10167 = vpop.f32.mrf.mxu0
        %v10168 = vadd.f32 0.0, %v10167
        %v10169 = vpop.f32.mrf.mxu0
        %v10170 = vadd.f32 0.0, %v10169
        %10171 = vmatmul.bf16.gmra.mxu0 %v9657
        %v10172 = vpop.f32.mrf.mxu0
        %v10173 = vadd.f32 0.0, %v10172
        %v10174 = vpop.f32.mrf.mxu0
        %v10175 = vadd.f32 0.0, %v10174
        %10176 = vmatmul.bf16.gmra.mxu0 %v10091
        %v10177 = vpop.f32.mrf.mxu0
        %v10178 = vadd.f32 0.0, %v10177
        %v10179 = vpop.f32.mrf.mxu0
        %v10180 = vadd.f32 0.0, %v10179
        %10181 = vdwg.mxu0
        %v10182 = vadd.f32 %v10038, %v10103
        %v10183 = vadd.f32 %v10039, %v10105
        %v10184 = vadd.f32 %v10040, %v10108
        %v10185 = vadd.f32 %v10041, %v10110
        %v10186 = vadd.f32 %v10042, %v10113
        %v10187 = vadd.f32 %v10043, %v10115
        %v10188 = vadd.f32 %v10044, %v10118
        %v10189 = vadd.f32 %v10045, %v10120
        %v10190 = vadd.f32 %v10046, %v10123
        %v10191 = vadd.f32 %v10047, %v10125
        %v10192 = vadd.f32 %v10048, %v10128
        %v10193 = vadd.f32 %v10049, %v10130
        %v10194 = vadd.f32 %v10050, %v10133
        %v10195 = vadd.f32 %v10051, %v10135
        %v10196 = vadd.f32 %v10052, %v10138
        %v10197 = vadd.f32 %v10053, %v10140
        %v10198 = vadd.f32 %v10054, %v10143
        %v10199 = vadd.f32 %v10055, %v10145
        %v10200 = vadd.f32 %v10056, %v10148
        %v10201 = vadd.f32 %v10057, %v10150
        %v10202 = vadd.f32 %v10058, %v10153
        %v10203 = vadd.f32 %v10059, %v10155
        %v10204 = vadd.f32 %v10060, %v10158
        %v10205 = vadd.f32 %v10061, %v10160
        %v10206 = vadd.f32 %v10062, %v10163
        %v10207 = vadd.f32 %v10063, %v10165
        %v10208 = vadd.f32 %v10064, %v10168
        %v10209 = vadd.f32 %v10065, %v10170
        %v10210 = vadd.f32 %v10066, %v10173
        %v10211 = vadd.f32 %v10067, %v10175
        %v10212 = vadd.f32 %v10068, %v10178
        %v10213 = vadd.f32 %v10069, %v10180
        %v10214 = vpack.c.bf16 %v9259, %v9258
        %s10215 = scalar_lea.vmem %s13, 32
        %v10216 = vld [vmem:[%s10215] sm:$0xf]
        %v10217 = vld [vmem:[%s10215 + $0x4] sm:$0xf]
        %v10220 = vunpack.c.l.b16 %v10216
        %v10221 = vunpack.c.l.b16 %v10217
        %v10222 = vpack.c.b16 %v10221, %v10220
        %v10225 = vsel %vm711, %v10214, 0
        %10227 = vmatpush.bf16.msra.mxu0 0
        %10228 = vmatpush.bf16.msra.mxu0 0
        %10229 = vmatpush.bf16.msra.mxu0 0
        %10230 = vmatpush.bf16.msra.mxu0 0
        %10231 = vmatpush.bf16.msra.mxu0 0
        %10232 = vmatpush.bf16.msra.mxu0 0
        %10233 = vmatpush.bf16.msra.mxu0 0
        %10234 = vmatpush.bf16.msra.mxu0 %v10222
        %10235 = vmatmul.bf16.gmra.mxu0 %v9472
        %v10236 = vpop.f32.mrf.mxu0
        %v10237 = vadd.f32 0.0, %v10236
        %v10238 = vpop.f32.mrf.mxu0
        %v10239 = vadd.f32 0.0, %v10238
        %10240 = vmatmul.bf16.gmra.mxu0 %v9475
        %v10241 = vpop.f32.mrf.mxu0
        %v10242 = vadd.f32 0.0, %v10241
        %v10243 = vpop.f32.mrf.mxu0
        %v10244 = vadd.f32 0.0, %v10243
        %10245 = vmatmul.bf16.gmra.mxu0 %v9478
        %v10246 = vpop.f32.mrf.mxu0
        %v10247 = vadd.f32 0.0, %v10246
        %v10248 = vpop.f32.mrf.mxu0
        %v10249 = vadd.f32 0.0, %v10248
        %10250 = vmatmul.bf16.gmra.mxu0 %v9481
        %v10251 = vpop.f32.mrf.mxu0
        %v10252 = vadd.f32 0.0, %v10251
        %v10253 = vpop.f32.mrf.mxu0
        %v10254 = vadd.f32 0.0, %v10253
        %10255 = vmatmul.bf16.gmra.mxu0 %v9484
        %v10256 = vpop.f32.mrf.mxu0
        %v10257 = vadd.f32 0.0, %v10256
        %v10258 = vpop.f32.mrf.mxu0
        %v10259 = vadd.f32 0.0, %v10258
        %10260 = vmatmul.bf16.gmra.mxu0 %v9487
        %v10261 = vpop.f32.mrf.mxu0
        %v10262 = vadd.f32 0.0, %v10261
        %v10263 = vpop.f32.mrf.mxu0
        %v10264 = vadd.f32 0.0, %v10263
        %10265 = vmatmul.bf16.gmra.mxu0 %v9490
        %v10266 = vpop.f32.mrf.mxu0
        %v10267 = vadd.f32 0.0, %v10266
        %v10268 = vpop.f32.mrf.mxu0
        %v10269 = vadd.f32 0.0, %v10268
        %10270 = vmatmul.bf16.gmra.mxu0 %v9493
        %v10271 = vpop.f32.mrf.mxu0
        %v10272 = vadd.f32 0.0, %v10271
        %v10273 = vpop.f32.mrf.mxu0
        %v10274 = vadd.f32 0.0, %v10273
        %10275 = vmatmul.bf16.gmra.mxu0 %v9496
        %v10276 = vpop.f32.mrf.mxu0
        %v10277 = vadd.f32 0.0, %v10276
        %v10278 = vpop.f32.mrf.mxu0
        %v10279 = vadd.f32 0.0, %v10278
        %10280 = vmatmul.bf16.gmra.mxu0 %v9499
        %v10281 = vpop.f32.mrf.mxu0
        %v10282 = vadd.f32 0.0, %v10281
        %v10283 = vpop.f32.mrf.mxu0
        %v10284 = vadd.f32 0.0, %v10283
        %10285 = vmatmul.bf16.gmra.mxu0 %v9502
        %v10286 = vpop.f32.mrf.mxu0
        %v10287 = vadd.f32 0.0, %v10286
        %v10288 = vpop.f32.mrf.mxu0
        %v10289 = vadd.f32 0.0, %v10288
        %10290 = vmatmul.bf16.gmra.mxu0 %v9505
        %v10291 = vpop.f32.mrf.mxu0
        %v10292 = vadd.f32 0.0, %v10291
        %v10293 = vpop.f32.mrf.mxu0
        %v10294 = vadd.f32 0.0, %v10293
        %10295 = vmatmul.bf16.gmra.mxu0 %v9508
        %v10296 = vpop.f32.mrf.mxu0
        %v10297 = vadd.f32 0.0, %v10296
        %v10298 = vpop.f32.mrf.mxu0
        %v10299 = vadd.f32 0.0, %v10298
        %10300 = vmatmul.bf16.gmra.mxu0 %v9511
        %v10301 = vpop.f32.mrf.mxu0
        %v10302 = vadd.f32 0.0, %v10301
        %v10303 = vpop.f32.mrf.mxu0
        %v10304 = vadd.f32 0.0, %v10303
        %10305 = vmatmul.bf16.gmra.mxu0 %v9514
        %v10306 = vpop.f32.mrf.mxu0
        %v10307 = vadd.f32 0.0, %v10306
        %v10308 = vpop.f32.mrf.mxu0
        %v10309 = vadd.f32 0.0, %v10308
        %10310 = vmatmul.bf16.gmra.mxu0 %v10225
        %v10311 = vpop.f32.mrf.mxu0
        %v10312 = vadd.f32 0.0, %v10311
        %v10313 = vpop.f32.mrf.mxu0
        %v10314 = vadd.f32 0.0, %v10313
        %10315 = vdwg.mxu0
        %v10316 = vadd.f32 %v10182, %v10237
        %v10317 = vadd.f32 %v10183, %v10239
        %v10318 = vadd.f32 %v10184, %v10242
        %v10319 = vadd.f32 %v10185, %v10244
        %v10320 = vadd.f32 %v10186, %v10247
        %v10321 = vadd.f32 %v10187, %v10249
        %v10322 = vadd.f32 %v10188, %v10252
        %v10323 = vadd.f32 %v10189, %v10254
        %v10324 = vadd.f32 %v10190, %v10257
        %v10325 = vadd.f32 %v10191, %v10259
        %v10326 = vadd.f32 %v10192, %v10262
        %v10327 = vadd.f32 %v10193, %v10264
        %v10328 = vadd.f32 %v10194, %v10267
        %v10329 = vadd.f32 %v10195, %v10269
        %v10330 = vadd.f32 %v10196, %v10272
        %v10331 = vadd.f32 %v10197, %v10274
        %v10332 = vadd.f32 %v10198, %v10277
        %v10333 = vadd.f32 %v10199, %v10279
        %v10334 = vadd.f32 %v10200, %v10282
        %v10335 = vadd.f32 %v10201, %v10284
        %v10336 = vadd.f32 %v10202, %v10287
        %v10337 = vadd.f32 %v10203, %v10289
        %v10338 = vadd.f32 %v10204, %v10292
        %v10339 = vadd.f32 %v10205, %v10294
        %v10340 = vadd.f32 %v10206, %v10297
        %v10341 = vadd.f32 %v10207, %v10299
        %v10342 = vadd.f32 %v10208, %v10302
        %v10343 = vadd.f32 %v10209, %v10304
        %v10344 = vadd.f32 %v10210, %v10307
        %v10345 = vadd.f32 %v10211, %v10309
        %v10346 = vadd.f32 %v10212, %v10312
        %v10347 = vadd.f32 %v10213, %v10314
        %v10349 = vrot.slane %v9258, 1
        %v10350 = vrot.slane %v9259, 1
        %v10351 = vsel %vm1727, %v10349, %v10350
        %v10352 = vrot.slane %v9260, 1
        %v10353 = vsel %vm1727, %v10350, %v10352
        %v10356 = vpack.c.bf16 %v10353, %v10351
        %s10357 = scalar_lea.vmem %s13, 40
        %v10358 = vld [vmem:[%s10357] sm:$0xf]
        %v10359 = vld [vmem:[%s10357 + $0x4] sm:$0xf]
        %v10362 = vunpack.c.l.b16 %v10358
        %v10363 = vunpack.c.l.b16 %v10359
        %v10364 = vpack.c.b16 %v10363, %v10362
        %v10367 = vsel %vm711, %v10356, 0
        %10369 = vmatpush.bf16.msra.mxu0 0
        %10370 = vmatpush.bf16.msra.mxu0 0
        %10371 = vmatpush.bf16.msra.mxu0 0
        %10372 = vmatpush.bf16.msra.mxu0 0
        %10373 = vmatpush.bf16.msra.mxu0 0
        %10374 = vmatpush.bf16.msra.mxu0 0
        %10375 = vmatpush.bf16.msra.mxu0 0
        %10376 = vmatpush.bf16.msra.mxu0 %v10364
        %10377 = vmatmul.bf16.gmra.mxu0 %v9905
        %v10378 = vpop.f32.mrf.mxu0
        %v10379 = vadd.f32 0.0, %v10378
        %v10380 = vpop.f32.mrf.mxu0
        %v10381 = vadd.f32 0.0, %v10380
        %10382 = vmatmul.bf16.gmra.mxu0 %v9908
        %v10383 = vpop.f32.mrf.mxu0
        %v10384 = vadd.f32 0.0, %v10383
        %v10385 = vpop.f32.mrf.mxu0
        %v10386 = vadd.f32 0.0, %v10385
        %10387 = vmatmul.bf16.gmra.mxu0 %v9911
        %v10388 = vpop.f32.mrf.mxu0
        %v10389 = vadd.f32 0.0, %v10388
        %v10390 = vpop.f32.mrf.mxu0
        %v10391 = vadd.f32 0.0, %v10390
        %10392 = vmatmul.bf16.gmra.mxu0 %v9914
        %v10393 = vpop.f32.mrf.mxu0
        %v10394 = vadd.f32 0.0, %v10393
        %v10395 = vpop.f32.mrf.mxu0
        %v10396 = vadd.f32 0.0, %v10395
        %10397 = vmatmul.bf16.gmra.mxu0 %v9917
        %v10398 = vpop.f32.mrf.mxu0
        %v10399 = vadd.f32 0.0, %v10398
        %v10400 = vpop.f32.mrf.mxu0
        %v10401 = vadd.f32 0.0, %v10400
        %10402 = vmatmul.bf16.gmra.mxu0 %v9920
        %v10403 = vpop.f32.mrf.mxu0
        %v10404 = vadd.f32 0.0, %v10403
        %v10405 = vpop.f32.mrf.mxu0
        %v10406 = vadd.f32 0.0, %v10405
        %10407 = vmatmul.bf16.gmra.mxu0 %v9923
        %v10408 = vpop.f32.mrf.mxu0
        %v10409 = vadd.f32 0.0, %v10408
        %v10410 = vpop.f32.mrf.mxu0
        %v10411 = vadd.f32 0.0, %v10410
        %10412 = vmatmul.bf16.gmra.mxu0 %v9926
        %v10413 = vpop.f32.mrf.mxu0
        %v10414 = vadd.f32 0.0, %v10413
        %v10415 = vpop.f32.mrf.mxu0
        %v10416 = vadd.f32 0.0, %v10415
        %10417 = vmatmul.bf16.gmra.mxu0 %v9929
        %v10418 = vpop.f32.mrf.mxu0
        %v10419 = vadd.f32 0.0, %v10418
        %v10420 = vpop.f32.mrf.mxu0
        %v10421 = vadd.f32 0.0, %v10420
        %10422 = vmatmul.bf16.gmra.mxu0 %v9932
        %v10423 = vpop.f32.mrf.mxu0
        %v10424 = vadd.f32 0.0, %v10423
        %v10425 = vpop.f32.mrf.mxu0
        %v10426 = vadd.f32 0.0, %v10425
        %10427 = vmatmul.bf16.gmra.mxu0 %v9935
        %v10428 = vpop.f32.mrf.mxu0
        %v10429 = vadd.f32 0.0, %v10428
        %v10430 = vpop.f32.mrf.mxu0
        %v10431 = vadd.f32 0.0, %v10430
        %10432 = vmatmul.bf16.gmra.mxu0 %v9938
        %v10433 = vpop.f32.mrf.mxu0
        %v10434 = vadd.f32 0.0, %v10433
        %v10435 = vpop.f32.mrf.mxu0
        %v10436 = vadd.f32 0.0, %v10435
        %10437 = vmatmul.bf16.gmra.mxu0 %v9941
        %v10438 = vpop.f32.mrf.mxu0
        %v10439 = vadd.f32 0.0, %v10438
        %v10440 = vpop.f32.mrf.mxu0
        %v10441 = vadd.f32 0.0, %v10440
        %10442 = vmatmul.bf16.gmra.mxu0 %v9944
        %v10443 = vpop.f32.mrf.mxu0
        %v10444 = vadd.f32 0.0, %v10443
        %v10445 = vpop.f32.mrf.mxu0
        %v10446 = vadd.f32 0.0, %v10445
        %10447 = vmatmul.bf16.gmra.mxu0 %v9947
        %v10448 = vpop.f32.mrf.mxu0
        %v10449 = vadd.f32 0.0, %v10448
        %v10450 = vpop.f32.mrf.mxu0
        %v10451 = vadd.f32 0.0, %v10450
        %10452 = vmatmul.bf16.gmra.mxu0 %v10367
        %v10453 = vpop.f32.mrf.mxu0
        %v10454 = vadd.f32 0.0, %v10453
        %v10455 = vpop.f32.mrf.mxu0
        %v10456 = vadd.f32 0.0, %v10455
        %10457 = vdwg.mxu0
        %v10458 = vadd.f32 %v10316, %v10379
        %v10459 = vadd.f32 %v10317, %v10381
        %v10460 = vadd.f32 %v10318, %v10384
        %v10461 = vadd.f32 %v10319, %v10386
        %v10462 = vadd.f32 %v10320, %v10389
        %v10463 = vadd.f32 %v10321, %v10391
        %v10464 = vadd.f32 %v10322, %v10394
        %v10465 = vadd.f32 %v10323, %v10396
        %v10466 = vadd.f32 %v10324, %v10399
        %v10467 = vadd.f32 %v10325, %v10401
        %v10468 = vadd.f32 %v10326, %v10404
        %v10469 = vadd.f32 %v10327, %v10406
        %v10470 = vadd.f32 %v10328, %v10409
        %v10471 = vadd.f32 %v10329, %v10411
        %v10472 = vadd.f32 %v10330, %v10414
        %v10473 = vadd.f32 %v10331, %v10416
        %v10474 = vadd.f32 %v10332, %v10419
        %v10475 = vadd.f32 %v10333, %v10421
        %v10476 = vadd.f32 %v10334, %v10424
        %v10477 = vadd.f32 %v10335, %v10426
        %v10478 = vadd.f32 %v10336, %v10429
        %v10479 = vadd.f32 %v10337, %v10431
        %v10480 = vadd.f32 %v10338, %v10434
        %v10481 = vadd.f32 %v10339, %v10436
        %v10482 = vadd.f32 %v10340, %v10439
        %v10483 = vadd.f32 %v10341, %v10441
        %v10484 = vadd.f32 %v10342, %v10444
        %v10485 = vadd.f32 %v10343, %v10446
        %v10486 = vadd.f32 %v10344, %v10449
        %v10487 = vadd.f32 %v10345, %v10451
        %v10488 = vadd.f32 %v10346, %v10454
        %v10489 = vadd.f32 %v10347, %v10456
        %v10493 = vrot.slane %v9261, 7
        %v10494 = vrot.slane %v9262, 7
        %v10495 = vsel %vm1108, %v10493, %v10494
        %v10496 = vrot.slane %v9263, 7
        %v10497 = vsel %vm1108, %v10494, %v10496
        %v10500 = vpack.c.bf16 %v10497, %v10495
        %s10501 = scalar_lea.vmem %s13, 48
        %v10502 = vld [vmem:[%s10501] sm:$0xf]
        %v10503 = vld [vmem:[%s10501 + $0x4] sm:$0xf]
        %v10506 = vunpack.c.l.b16 %v10502
        %v10507 = vunpack.c.l.b16 %v10503
        %v10508 = vpack.c.b16 %v10507, %v10506
        %v10511 = vsel %vm711, %v10500, 0
        %10513 = vmatpush.bf16.msra.mxu0 0
        %10514 = vmatpush.bf16.msra.mxu0 0
        %10515 = vmatpush.bf16.msra.mxu0 0
        %10516 = vmatpush.bf16.msra.mxu0 0
        %10517 = vmatpush.bf16.msra.mxu0 0
        %10518 = vmatpush.bf16.msra.mxu0 0
        %10519 = vmatpush.bf16.msra.mxu0 0
        %10520 = vmatpush.bf16.msra.mxu0 %v10508
        %10521 = vmatmul.bf16.gmra.mxu0 %v9618
        %v10522 = vpop.f32.mrf.mxu0
        %v10523 = vadd.f32 0.0, %v10522
        %v10524 = vpop.f32.mrf.mxu0
        %v10525 = vadd.f32 0.0, %v10524
        %10526 = vmatmul.bf16.gmra.mxu0 %v9621
        %v10527 = vpop.f32.mrf.mxu0
        %v10528 = vadd.f32 0.0, %v10527
        %v10529 = vpop.f32.mrf.mxu0
        %v10530 = vadd.f32 0.0, %v10529
        %10531 = vmatmul.bf16.gmra.mxu0 %v9624
        %v10532 = vpop.f32.mrf.mxu0
        %v10533 = vadd.f32 0.0, %v10532
        %v10534 = vpop.f32.mrf.mxu0
        %v10535 = vadd.f32 0.0, %v10534
        %10536 = vmatmul.bf16.gmra.mxu0 %v9627
        %v10537 = vpop.f32.mrf.mxu0
        %v10538 = vadd.f32 0.0, %v10537
        %v10539 = vpop.f32.mrf.mxu0
        %v10540 = vadd.f32 0.0, %v10539
        %10541 = vmatmul.bf16.gmra.mxu0 %v9630
        %v10542 = vpop.f32.mrf.mxu0
        %v10543 = vadd.f32 0.0, %v10542
        %v10544 = vpop.f32.mrf.mxu0
        %v10545 = vadd.f32 0.0, %v10544
        %10546 = vmatmul.bf16.gmra.mxu0 %v9633
        %v10547 = vpop.f32.mrf.mxu0
        %v10548 = vadd.f32 0.0, %v10547
        %v10549 = vpop.f32.mrf.mxu0
        %v10550 = vadd.f32 0.0, %v10549
        %10551 = vmatmul.bf16.gmra.mxu0 %v9636
        %v10552 = vpop.f32.mrf.mxu0
        %v10553 = vadd.f32 0.0, %v10552
        %v10554 = vpop.f32.mrf.mxu0
        %v10555 = vadd.f32 0.0, %v10554
        %10556 = vmatmul.bf16.gmra.mxu0 %v9639
        %v10557 = vpop.f32.mrf.mxu0
        %v10558 = vadd.f32 0.0, %v10557
        %v10559 = vpop.f32.mrf.mxu0
        %v10560 = vadd.f32 0.0, %v10559
        %10561 = vmatmul.bf16.gmra.mxu0 %v9642
        %v10562 = vpop.f32.mrf.mxu0
        %v10563 = vadd.f32 0.0, %v10562
        %v10564 = vpop.f32.mrf.mxu0
        %v10565 = vadd.f32 0.0, %v10564
        %10566 = vmatmul.bf16.gmra.mxu0 %v9645
        %v10567 = vpop.f32.mrf.mxu0
        %v10568 = vadd.f32 0.0, %v10567
        %v10569 = vpop.f32.mrf.mxu0
        %v10570 = vadd.f32 0.0, %v10569
        %10571 = vmatmul.bf16.gmra.mxu0 %v9648
        %v10572 = vpop.f32.mrf.mxu0
        %v10573 = vadd.f32 0.0, %v10572
        %v10574 = vpop.f32.mrf.mxu0
        %v10575 = vadd.f32 0.0, %v10574
        %10576 = vmatmul.bf16.gmra.mxu0 %v9651
        %v10577 = vpop.f32.mrf.mxu0
        %v10578 = vadd.f32 0.0, %v10577
        %v10579 = vpop.f32.mrf.mxu0
        %v10580 = vadd.f32 0.0, %v10579
        %10581 = vmatmul.bf16.gmra.mxu0 %v9654
        %v10582 = vpop.f32.mrf.mxu0
        %v10583 = vadd.f32 0.0, %v10582
        %v10584 = vpop.f32.mrf.mxu0
        %v10585 = vadd.f32 0.0, %v10584
        %10586 = vmatmul.bf16.gmra.mxu0 %v9657
        %v10587 = vpop.f32.mrf.mxu0
        %v10588 = vadd.f32 0.0, %v10587
        %v10589 = vpop.f32.mrf.mxu0
        %v10590 = vadd.f32 0.0, %v10589
        %10591 = vmatmul.bf16.gmra.mxu0 %v10091
        %v10592 = vpop.f32.mrf.mxu0
        %v10593 = vadd.f32 0.0, %v10592
        %v10594 = vpop.f32.mrf.mxu0
        %v10595 = vadd.f32 0.0, %v10594
        %10596 = vmatmul.bf16.gmra.mxu0 %v10511
        %v10597 = vpop.f32.mrf.mxu0
        %v10598 = vadd.f32 0.0, %v10597
        %v10599 = vpop.f32.mrf.mxu0
        %v10600 = vadd.f32 0.0, %v10599
        %10601 = vdwg.mxu0
        %v10602 = vadd.f32 %v10458, %v10523
        %v10603 = vadd.f32 %v10459, %v10525
        %v10604 = vadd.f32 %v10460, %v10528
        %v10605 = vadd.f32 %v10461, %v10530
        %v10606 = vadd.f32 %v10462, %v10533
        %v10607 = vadd.f32 %v10463, %v10535
        %v10608 = vadd.f32 %v10464, %v10538
        %v10609 = vadd.f32 %v10465, %v10540
        %v10610 = vadd.f32 %v10466, %v10543
        %v10611 = vadd.f32 %v10467, %v10545
        %v10612 = vadd.f32 %v10468, %v10548
        %v10613 = vadd.f32 %v10469, %v10550
        %v10614 = vadd.f32 %v10470, %v10553
        %v10615 = vadd.f32 %v10471, %v10555
        %v10616 = vadd.f32 %v10472, %v10558
        %v10617 = vadd.f32 %v10473, %v10560
        %v10618 = vadd.f32 %v10474, %v10563
        %v10619 = vadd.f32 %v10475, %v10565
        %v10620 = vadd.f32 %v10476, %v10568
        %v10621 = vadd.f32 %v10477, %v10570
        %v10622 = vadd.f32 %v10478, %v10573
        %v10623 = vadd.f32 %v10479, %v10575
        %v10624 = vadd.f32 %v10480, %v10578
        %v10625 = vadd.f32 %v10481, %v10580
        %v10626 = vadd.f32 %v10482, %v10583
        %v10627 = vadd.f32 %v10483, %v10585
        %v10628 = vadd.f32 %v10484, %v10588
        %v10629 = vadd.f32 %v10485, %v10590
        %v10630 = vadd.f32 %v10486, %v10593
        %v10631 = vadd.f32 %v10487, %v10595
        %v10632 = vadd.f32 %v10488, %v10598
        %v10633 = vadd.f32 %v10489, %v10600
        %v10634 = vpack.c.bf16 %v9263, %v9262
        %s10635 = scalar_lea.vmem %s13, 56
        %v10636 = vld [vmem:[%s10635] sm:$0xf]
        %v10637 = vld [vmem:[%s10635 + $0x4] sm:$0xf]
        %v10640 = vunpack.c.l.b16 %v10636
        %v10641 = vunpack.c.l.b16 %v10637
        %v10642 = vpack.c.b16 %v10641, %v10640
        %v10645 = vsel %vm711, %v10634, 0
        %10647 = vmatpush.bf16.msra.mxu0 0
        %10648 = vmatpush.bf16.msra.mxu0 0
        %10649 = vmatpush.bf16.msra.mxu0 0
        %10650 = vmatpush.bf16.msra.mxu0 0
        %10651 = vmatpush.bf16.msra.mxu0 0
        %10652 = vmatpush.bf16.msra.mxu0 0
        %10653 = vmatpush.bf16.msra.mxu0 0
        %10654 = vmatpush.bf16.msra.mxu0 %v10642
        %10655 = vmatmul.bf16.gmra.mxu0 %v9475
        %v10656 = vpop.f32.mrf.mxu0
        %v10657 = vadd.f32 0.0, %v10656
        %v10658 = vpop.f32.mrf.mxu0
        %v10659 = vadd.f32 0.0, %v10658
        %10660 = vmatmul.bf16.gmra.mxu0 %v9478
        %v10661 = vpop.f32.mrf.mxu0
        %v10662 = vadd.f32 0.0, %v10661
        %v10663 = vpop.f32.mrf.mxu0
        %v10664 = vadd.f32 0.0, %v10663
        %10665 = vmatmul.bf16.gmra.mxu0 %v9481
        %v10666 = vpop.f32.mrf.mxu0
        %v10667 = vadd.f32 0.0, %v10666
        %v10668 = vpop.f32.mrf.mxu0
        %v10669 = vadd.f32 0.0, %v10668
        %10670 = vmatmul.bf16.gmra.mxu0 %v9484
        %v10671 = vpop.f32.mrf.mxu0
        %v10672 = vadd.f32 0.0, %v10671
        %v10673 = vpop.f32.mrf.mxu0
        %v10674 = vadd.f32 0.0, %v10673
        %10675 = vmatmul.bf16.gmra.mxu0 %v9487
        %v10676 = vpop.f32.mrf.mxu0
        %v10677 = vadd.f32 0.0, %v10676
        %v10678 = vpop.f32.mrf.mxu0
        %v10679 = vadd.f32 0.0, %v10678
        %10680 = vmatmul.bf16.gmra.mxu0 %v9490
        %v10681 = vpop.f32.mrf.mxu0
        %v10682 = vadd.f32 0.0, %v10681
        %v10683 = vpop.f32.mrf.mxu0
        %v10684 = vadd.f32 0.0, %v10683
        %10685 = vmatmul.bf16.gmra.mxu0 %v9493
        %v10686 = vpop.f32.mrf.mxu0
        %v10687 = vadd.f32 0.0, %v10686
        %v10688 = vpop.f32.mrf.mxu0
        %v10689 = vadd.f32 0.0, %v10688
        %10690 = vmatmul.bf16.gmra.mxu0 %v9496
        %v10691 = vpop.f32.mrf.mxu0
        %v10692 = vadd.f32 0.0, %v10691
        %v10693 = vpop.f32.mrf.mxu0
        %v10694 = vadd.f32 0.0, %v10693
        %10695 = vmatmul.bf16.gmra.mxu0 %v9499
        %v10696 = vpop.f32.mrf.mxu0
        %v10697 = vadd.f32 0.0, %v10696
        %v10698 = vpop.f32.mrf.mxu0
        %v10699 = vadd.f32 0.0, %v10698
        %10700 = vmatmul.bf16.gmra.mxu0 %v9502
        %v10701 = vpop.f32.mrf.mxu0
        %v10702 = vadd.f32 0.0, %v10701
        %v10703 = vpop.f32.mrf.mxu0
        %v10704 = vadd.f32 0.0, %v10703
        %10705 = vmatmul.bf16.gmra.mxu0 %v9505
        %v10706 = vpop.f32.mrf.mxu0
        %v10707 = vadd.f32 0.0, %v10706
        %v10708 = vpop.f32.mrf.mxu0
        %v10709 = vadd.f32 0.0, %v10708
        %10710 = vmatmul.bf16.gmra.mxu0 %v9508
        %v10711 = vpop.f32.mrf.mxu0
        %v10712 = vadd.f32 0.0, %v10711
        %v10713 = vpop.f32.mrf.mxu0
        %v10714 = vadd.f32 0.0, %v10713
        %10715 = vmatmul.bf16.gmra.mxu0 %v9511
        %v10716 = vpop.f32.mrf.mxu0
        %v10717 = vadd.f32 0.0, %v10716
        %v10718 = vpop.f32.mrf.mxu0
        %v10719 = vadd.f32 0.0, %v10718
        %10720 = vmatmul.bf16.gmra.mxu0 %v9514
        %v10721 = vpop.f32.mrf.mxu0
        %v10722 = vadd.f32 0.0, %v10721
        %v10723 = vpop.f32.mrf.mxu0
        %v10724 = vadd.f32 0.0, %v10723
        %10725 = vmatmul.bf16.gmra.mxu0 %v10225
        %v10726 = vpop.f32.mrf.mxu0
        %v10727 = vadd.f32 0.0, %v10726
        %v10728 = vpop.f32.mrf.mxu0
        %v10729 = vadd.f32 0.0, %v10728
        %10730 = vmatmul.bf16.gmra.mxu0 %v10645
        %v10731 = vpop.f32.mrf.mxu0
        %v10732 = vadd.f32 0.0, %v10731
        %v10733 = vpop.f32.mrf.mxu0
        %v10734 = vadd.f32 0.0, %v10733
        %10735 = vdwg.mxu0
        %v10736 = vadd.f32 %v10602, %v10657
        %v10737 = vadd.f32 %v10603, %v10659
        %v10738 = vadd.f32 %v10604, %v10662
        %v10739 = vadd.f32 %v10605, %v10664
        %v10740 = vadd.f32 %v10606, %v10667
        %v10741 = vadd.f32 %v10607, %v10669
        %v10742 = vadd.f32 %v10608, %v10672
        %v10743 = vadd.f32 %v10609, %v10674
        %v10744 = vadd.f32 %v10610, %v10677
        %v10745 = vadd.f32 %v10611, %v10679
        %v10746 = vadd.f32 %v10612, %v10682
        %v10747 = vadd.f32 %v10613, %v10684
        %v10748 = vadd.f32 %v10614, %v10687
        %v10749 = vadd.f32 %v10615, %v10689
        %v10750 = vadd.f32 %v10616, %v10692
        %v10751 = vadd.f32 %v10617, %v10694
        %v10752 = vadd.f32 %v10618, %v10697
        %v10753 = vadd.f32 %v10619, %v10699
        %v10754 = vadd.f32 %v10620, %v10702
        %v10755 = vadd.f32 %v10621, %v10704
        %v10756 = vadd.f32 %v10622, %v10707
        %v10757 = vadd.f32 %v10623, %v10709
        %v10758 = vadd.f32 %v10624, %v10712
        %v10759 = vadd.f32 %v10625, %v10714
        %v10760 = vadd.f32 %v10626, %v10717
        %v10761 = vadd.f32 %v10627, %v10719
        %v10762 = vadd.f32 %v10628, %v10722
        %v10763 = vadd.f32 %v10629, %v10724
        %v10764 = vadd.f32 %v10630, %v10727
        %v10765 = vadd.f32 %v10631, %v10729
        %v10766 = vadd.f32 %v10632, %v10732
        %v10767 = vadd.f32 %v10633, %v10734
        %v10769 = vrot.slane %v9262, 1
        %v10770 = vrot.slane %v9263, 1
        %v10771 = vsel %vm1727, %v10769, %v10770
        %v10772 = vrot.slane %v9264, 1
        %v10773 = vsel %vm1727, %v10770, %v10772
        %v10776 = vpack.c.bf16 %v10773, %v10771
        %s10777 = scalar_lea.vmem %s13, 64
        %v10778 = vld [vmem:[%s10777] sm:$0xf]
        %v10779 = vld [vmem:[%s10777 + $0x4] sm:$0xf]
        %v10782 = vunpack.c.l.b16 %v10778
        %v10783 = vunpack.c.l.b16 %v10779
        %v10784 = vpack.c.b16 %v10783, %v10782
        %v10787 = vsel %vm711, %v10776, 0
        %10789 = vmatpush.bf16.msra.mxu0 0
        %10790 = vmatpush.bf16.msra.mxu0 0
        %10791 = vmatpush.bf16.msra.mxu0 0
        %10792 = vmatpush.bf16.msra.mxu0 0
        %10793 = vmatpush.bf16.msra.mxu0 0
        %10794 = vmatpush.bf16.msra.mxu0 0
        %10795 = vmatpush.bf16.msra.mxu0 0
        %10796 = vmatpush.bf16.msra.mxu0 %v10784
        %10797 = vmatmul.bf16.gmra.mxu0 %v9908
        %v10798 = vpop.f32.mrf.mxu0
        %v10799 = vadd.f32 0.0, %v10798
        %v10800 = vpop.f32.mrf.mxu0
        %v10801 = vadd.f32 0.0, %v10800
        %10802 = vmatmul.bf16.gmra.mxu0 %v9911
        %v10803 = vpop.f32.mrf.mxu0
        %v10804 = vadd.f32 0.0, %v10803
        %v10805 = vpop.f32.mrf.mxu0
        %v10806 = vadd.f32 0.0, %v10805
        %10807 = vmatmul.bf16.gmra.mxu0 %v9914
        %v10808 = vpop.f32.mrf.mxu0
        %v10809 = vadd.f32 0.0, %v10808
        %v10810 = vpop.f32.mrf.mxu0
        %v10811 = vadd.f32 0.0, %v10810
        %10812 = vmatmul.bf16.gmra.mxu0 %v9917
        %v10813 = vpop.f32.mrf.mxu0
        %v10814 = vadd.f32 0.0, %v10813
        %v10815 = vpop.f32.mrf.mxu0
        %v10816 = vadd.f32 0.0, %v10815
        %10817 = vmatmul.bf16.gmra.mxu0 %v9920
        %v10818 = vpop.f32.mrf.mxu0
        %v10819 = vadd.f32 0.0, %v10818
        %v10820 = vpop.f32.mrf.mxu0
        %v10821 = vadd.f32 0.0, %v10820
        %10822 = vmatmul.bf16.gmra.mxu0 %v9923
        %v10823 = vpop.f32.mrf.mxu0
        %v10824 = vadd.f32 0.0, %v10823
        %v10825 = vpop.f32.mrf.mxu0
        %v10826 = vadd.f32 0.0, %v10825
        %10827 = vmatmul.bf16.gmra.mxu0 %v9926
        %v10828 = vpop.f32.mrf.mxu0
        %v10829 = vadd.f32 0.0, %v10828
        %v10830 = vpop.f32.mrf.mxu0
        %v10831 = vadd.f32 0.0, %v10830
        %10832 = vmatmul.bf16.gmra.mxu0 %v9929
        %v10833 = vpop.f32.mrf.mxu0
        %v10834 = vadd.f32 0.0, %v10833
        %v10835 = vpop.f32.mrf.mxu0
        %v10836 = vadd.f32 0.0, %v10835
        %10837 = vmatmul.bf16.gmra.mxu0 %v9932
        %v10838 = vpop.f32.mrf.mxu0
        %v10839 = vadd.f32 0.0, %v10838
        %v10840 = vpop.f32.mrf.mxu0
        %v10841 = vadd.f32 0.0, %v10840
        %10842 = vmatmul.bf16.gmra.mxu0 %v9935
        %v10843 = vpop.f32.mrf.mxu0
        %v10844 = vadd.f32 0.0, %v10843
        %v10845 = vpop.f32.mrf.mxu0
        %v10846 = vadd.f32 0.0, %v10845
        %10847 = vmatmul.bf16.gmra.mxu0 %v9938
        %v10848 = vpop.f32.mrf.mxu0
        %v10849 = vadd.f32 0.0, %v10848
        %v10850 = vpop.f32.mrf.mxu0
        %v10851 = vadd.f32 0.0, %v10850
        %10852 = vmatmul.bf16.gmra.mxu0 %v9941
        %v10853 = vpop.f32.mrf.mxu0
        %v10854 = vadd.f32 0.0, %v10853
        %v10855 = vpop.f32.mrf.mxu0
        %v10856 = vadd.f32 0.0, %v10855
        %10857 = vmatmul.bf16.gmra.mxu0 %v9944
        %v10858 = vpop.f32.mrf.mxu0
        %v10859 = vadd.f32 0.0, %v10858
        %v10860 = vpop.f32.mrf.mxu0
        %v10861 = vadd.f32 0.0, %v10860
        %10862 = vmatmul.bf16.gmra.mxu0 %v9947
        %v10863 = vpop.f32.mrf.mxu0
        %v10864 = vadd.f32 0.0, %v10863
        %v10865 = vpop.f32.mrf.mxu0
        %v10866 = vadd.f32 0.0, %v10865
        %10867 = vmatmul.bf16.gmra.mxu0 %v10367
        %v10868 = vpop.f32.mrf.mxu0
        %v10869 = vadd.f32 0.0, %v10868
        %v10870 = vpop.f32.mrf.mxu0
        %v10871 = vadd.f32 0.0, %v10870
        %10872 = vmatmul.bf16.gmra.mxu0 %v10787
        %v10873 = vpop.f32.mrf.mxu0
        %v10874 = vadd.f32 0.0, %v10873
        %v10875 = vpop.f32.mrf.mxu0
        %v10876 = vadd.f32 0.0, %v10875
        %10877 = vdwg.mxu0
        %v10878 = vadd.f32 %v10736, %v10799
        %v10879 = vadd.f32 %v10737, %v10801
        %v10880 = vadd.f32 %v10738, %v10804
        %v10881 = vadd.f32 %v10739, %v10806
        %v10882 = vadd.f32 %v10740, %v10809
        %v10883 = vadd.f32 %v10741, %v10811
        %v10884 = vadd.f32 %v10742, %v10814
        %v10885 = vadd.f32 %v10743, %v10816
        %v10886 = vadd.f32 %v10744, %v10819
        %v10887 = vadd.f32 %v10745, %v10821
        %v10888 = vadd.f32 %v10746, %v10824
        %v10889 = vadd.f32 %v10747, %v10826
        %v10890 = vadd.f32 %v10748, %v10829
        %v10891 = vadd.f32 %v10749, %v10831
        %v10892 = vadd.f32 %v10750, %v10834
        %v10893 = vadd.f32 %v10751, %v10836
        %v10894 = vadd.f32 %v10752, %v10839
        %v10895 = vadd.f32 %v10753, %v10841
        %v10896 = vadd.f32 %v10754, %v10844
        %v10897 = vadd.f32 %v10755, %v10846
        %v10898 = vadd.f32 %v10756, %v10849
        %v10899 = vadd.f32 %v10757, %v10851
        %v10900 = vadd.f32 %v10758, %v10854
        %v10901 = vadd.f32 %v10759, %v10856
        %v10902 = vadd.f32 %v10760, %v10859
        %v10903 = vadd.f32 %v10761, %v10861
        %v10904 = vadd.f32 %v10762, %v10864
        %v10905 = vadd.f32 %v10763, %v10866
        %v10906 = vadd.f32 %v10764, %v10869
        %v10907 = vadd.f32 %v10765, %v10871
        %v10908 = vadd.f32 %v10766, %v10874
        %v10909 = vadd.f32 %v10767, %v10876
        %v10910 = vld [vmem:[#allocation10] sm:$0x1]
        %v10912 = vperm.slane %v10910, 0
        %v10914 = vadd.f32 %v10878, %v10912
        %v10915 = vadd.f32 %v10879, %v10912
        %v10916 = vadd.f32 %v10880, %v10912
        %v10917 = vadd.f32 %v10881, %v10912
        %v10918 = vadd.f32 %v10882, %v10912
        %v10919 = vadd.f32 %v10883, %v10912
        %v10920 = vadd.f32 %v10884, %v10912
        %v10921 = vadd.f32 %v10885, %v10912
        %v10922 = vadd.f32 %v10886, %v10912
        %v10923 = vadd.f32 %v10887, %v10912
        %v10924 = vadd.f32 %v10888, %v10912
        %v10925 = vadd.f32 %v10889, %v10912
        %v10926 = vadd.f32 %v10890, %v10912
        %v10927 = vadd.f32 %v10891, %v10912
        %v10928 = vadd.f32 %v10892, %v10912
        %v10929 = vadd.f32 %v10893, %v10912
        %v10930 = vadd.f32 %v10894, %v10912
        %v10931 = vadd.f32 %v10895, %v10912
        %v10932 = vadd.f32 %v10896, %v10912
        %v10933 = vadd.f32 %v10897, %v10912
        %v10934 = vadd.f32 %v10898, %v10912
        %v10935 = vadd.f32 %v10899, %v10912
        %v10936 = vadd.f32 %v10900, %v10912
        %v10937 = vadd.f32 %v10901, %v10912
        %v10938 = vadd.f32 %v10902, %v10912
        %v10939 = vadd.f32 %v10903, %v10912
        %v10940 = vadd.f32 %v10904, %v10912
        %v10941 = vadd.f32 %v10905, %v10912
        %v10942 = vadd.f32 %v10906, %v10912
        %v10943 = vadd.f32 %v10907, %v10912
        %v10944 = vadd.f32 %v10908, %v10912
        %v10945 = vadd.f32 %v10909, %v10912
        %vm10946 = vcmask 392192
        %10947 = vst.msk [vmem:[%s553] sm:$0xff] %vm10946, %v10914
        %10948 = vst.msk [vmem:[%s553 + $0x8] sm:$0xff] %vm10946, %v10915
        %10949 = vst.msk [vmem:[%s553 + $0x10] sm:$0xff] %vm10946, %v10916
        %10950 = vst.msk [vmem:[%s553 + $0x18] sm:$0xff] %vm10946, %v10917
        %10951 = vst.msk [vmem:[%s553 + $0x20] sm:$0xff] %vm10946, %v10918
        %10952 = vst.msk [vmem:[%s553 + $0x28] sm:$0xff] %vm10946, %v10919
        %10953 = vst.msk [vmem:[%s553 + $0x30] sm:$0xff] %vm10946, %v10920
        %10954 = vst.msk [vmem:[%s553 + $0x38] sm:$0xff] %vm10946, %v10921
        %10955 = vst.msk [vmem:[%s553 + $0x40] sm:$0xff] %vm10946, %v10922
        %10956 = vst.msk [vmem:[%s553 + $0x48] sm:$0xff] %vm10946, %v10923
        %10957 = vst.msk [vmem:[%s553 + $0x50] sm:$0xff] %vm10946, %v10924
        %10958 = vst.msk [vmem:[%s553 + $0x58] sm:$0xff] %vm10946, %v10925
        %10959 = vst.msk [vmem:[%s553 + $0x60] sm:$0xff] %vm10946, %v10926
        %10960 = vst.msk [vmem:[%s553 + $0x68] sm:$0xff] %vm10946, %v10927
        %10961 = vst.msk [vmem:[%s553 + $0x70] sm:$0xff] %vm10946, %v10928
        %10962 = vst.msk [vmem:[%s553 + $0x78] sm:$0xff] %vm10946, %v10929
        %10963 = vst.msk [vmem:[%s553 + $0x80] sm:$0xff] %vm10946, %v10930
        %10964 = vst.msk [vmem:[%s553 + $0x88] sm:$0xff] %vm10946, %v10931
        %10965 = vst.msk [vmem:[%s553 + $0x90] sm:$0xff] %vm10946, %v10932
        %10966 = vst.msk [vmem:[%s553 + $0x98] sm:$0xff] %vm10946, %v10933
        %10967 = vst.msk [vmem:[%s553 + $0xa0] sm:$0xff] %vm10946, %v10934
        %10968 = vst.msk [vmem:[%s553 + $0xa8] sm:$0xff] %vm10946, %v10935
        %10969 = vst.msk [vmem:[%s553 + $0xb0] sm:$0xff] %vm10946, %v10936
        %10970 = vst.msk [vmem:[%s553 + $0xb8] sm:$0xff] %vm10946, %v10937
        %10971 = vst.msk [vmem:[%s553 + $0xc0] sm:$0xff] %vm10946, %v10938
        %10972 = vst.msk [vmem:[%s553 + $0xc8] sm:$0xff] %vm10946, %v10939
        %10973 = vst.msk [vmem:[%s553 + $0xd0] sm:$0xff] %vm10946, %v10940
        %10974 = vst.msk [vmem:[%s553 + $0xd8] sm:$0xff] %vm10946, %v10941
        %10975 = vst.msk [vmem:[%s553 + $0xe0] sm:$0xff] %vm10946, %v10942
        %10976 = vst.msk [vmem:[%s553 + $0xe8] sm:$0xff] %vm10946, %v10943
        %10977 = vst.msk [vmem:[%s553 + $0xf0] sm:$0xff] %vm10946, %v10944
        %10978 = vst.msk [vmem:[%s553 + $0xf8] sm:$0xff] %vm10946, %v10945
        %p10979 = scmp.lt.s32.totalorder %s29, 1
        %s10980 = scalar_select %p10979, %s29, 1
        %s10981 = smul.addr %s10980, 32
        %s10982 = smul.addr %s10981, 8
        %s10983 = scalar_lea.vmem %s15, %s10982
        // Predicated region
        $region97: #{lwsrcnn_forward.1} parent=79 // pred_check
          %p10984 = pneg %p367
        $region98: #{lwsrcnn_forward.1} parent=79 // pred_check_branch
          %10986 = sbr.rel (%p10984) target = $region100
        $region99: #{lwsrcnn_forward.1} parent=79 // pred_region
          _
        $region100: #{lwsrcnn_forward.1} parent=79 // pred_fallthru
          _
      $region80: #{lwsrcnn_forward.1} parent=5 // pred_fallthru
        _
      %p10987 = scmp.le.s32.totalorder 2, %s24
      // Predicated region
      $region101: #{lwsrcnn_forward.1} parent=5 // pred_check
        %p10988 = pneg %p10987
      $region102: #{lwsrcnn_forward.1} parent=5 // pred_check_branch
        %10990 = sbr.rel (%p10988) target = $region104
      $region103: #{lwsrcnn_forward.1} parent=5 // pred_region
        %s10991 = ssub.s32 %s24, 2
        // Predicated region
        $region105: #{lwsrcnn_forward.1} parent=103 // pred_check
          %p10992 = pneg %p373
        $region106: #{lwsrcnn_forward.1} parent=103 // pred_check_branch
          %10994 = sbr.rel (%p10992) target = $region108
        $region107: #{lwsrcnn_forward.1} parent=103 // pred_region
          %p10995 = scmp.lt.s32.totalorder %s30, 1
          %s10996 = scalar_select %p10995, %s30, 1
          %s10997 = smul.addr %s10996, 32
          %s10998 = smul.addr %s10997, 8
          %s10999 = scalar_lea.vmem %s15, %s10998
        $region108: #{lwsrcnn_forward.1} parent=103 // pred_fallthru
          _
      $region104: #{lwsrcnn_forward.1} parent=5 // pred_fallthru
        _
    $region6: #{lwsrcnn_forward.1} parent=1 // loop_footer
      %s28 = sadd.s32 1, %s24
    $region7: #{lwsrcnn_forward.1} parent=1 // loop_footer_branch
      %23 = sbr.rel target = $region3
    $region8: #{lwsrcnn_forward.1} parent=1 // loop_exit
      _
    %11000 = vsyncpa [#allocation6], 1
    %s11001 = scalar_lea.sflag [#allocation6], 1
    %11002 = vsyncpa %s11001, 1
    %11003 = vsyncpa [#allocation8], 1
    %11004 = vsyncpa [#allocation11], 1

</llo_original>
